<compile_context>
chip_gen: v6e
topology: v6e:2x2x1
jax: 0.10.0
libtpu: 0.0.40
codegen_flags: <defaults>
</compile_context>

<pallas_src>
import functools

import jax
import jax.numpy as jnp
from jax.experimental import pallas as pl
from jax.experimental.pallas import tpu as pltpu

F32 = jnp.float32
BF16 = jnp.bfloat16


def _vmem_limit_bytes():
    """Generous scoped-VMEM on v5e/v6e (128 MiB phys), safe on v7x (64 MiB phys)."""
    try:
        cap = getattr(pltpu.get_tpu_info(), "vmem_capacity_bytes", None)
        if cap:
            return int(min(100 * 1024 * 1024, (cap * 3) // 4))
    except Exception:
        pass
    return 32 * 1024 * 1024


VMEM_LIMIT = _vmem_limit_bytes()


def _round_up(x, m):
    return (x + m - 1) // m * m


def bn_fold(gamma, beta, mean, var, eps=1e-5):
    s = gamma / jnp.sqrt(var + eps)
    return s, beta - mean * s


# ---------------------------------------------------------------------------
# Fused matmul + BN(affine) + ReLU [+ residual] kernels (cv1 / cv2)
# ---------------------------------------------------------------------------
def _mm_affine_kernel(x_ref, w_ref, s_ref, b_ref, o_ref, *, relu):
    acc = jnp.dot(x_ref[...], w_ref[...], preferred_element_type=F32)
    acc = acc * s_ref[...] + b_ref[...]
    if relu:
        acc = jnp.maximum(acc, 0.0)
    o_ref[...] = acc.astype(o_ref.dtype)


def _mm_affine_res_kernel(x_ref, w_ref, s_ref, b_ref, r_ref, o_ref, *, relu):
    acc = jnp.dot(x_ref[...], w_ref[...], preferred_element_type=F32)
    acc = acc * s_ref[...] + b_ref[...]
    if relu:
        acc = jnp.maximum(acc, 0.0)
    acc = acc + r_ref[...].astype(F32)        # shortcut added AFTER ReLU (as in ref)
    o_ref[...] = acc.astype(o_ref.dtype)


def _choose_tiles(m, cin, cout, has_res, out_bytes):
    """Row/col tiles whose double-buffered footprint (x, w, scale/bias, residual,
    output) fits comfortably under the scoped VMEM limit."""
    tn = cout if cout <= 512 else 256          # 256 keeps MXU tiles full, /128 aligned

    def footprint(tm_):
        x = 2 * tm_ * cin                      # bf16 activation tile
        w = 2 * cin * tn                       # bf16 weight tile
        o = out_bytes * tm_ * tn               # output tile
        r = 2 * tm_ * tn if has_res else 0     # bf16 residual tile
        v = 2 * 4 * tn                         # scale + bias (f32)
        return 2 * (x + w + o + r + v)         # double buffered

    budget = max(4 * 1024 * 1024, int(VMEM_LIMIT * 0.6))
    tm = 1024
    while tm > 128 and footprint(tm) > budget:
        tm //= 2
    tm = min(tm, _round_up(m, 8))
    return tm, tn


def matmul_affine(x2d, w, scale=None, bias=None, relu=False, residual=None,
                  out_dtype=BF16):
    """(M, Cin) @ (Cin, Cout) with fused per-channel affine / ReLU / residual.

    No activation padding: the grid uses pl.cdiv and the partial boundary block
    is masked on write (rows are independent, so garbage rows are never observed).
    """
    m, cin = x2d.shape
    cout = w.shape[1]
    if scale is None:
        scale = jnp.ones((cout,), F32)
    if bias is None:
        bias = jnp.zeros((cout,), F32)
    scale = scale.reshape(1, cout).astype(F32)
    bias = bias.reshape(1, cout).astype(F32)

    out_bytes = jnp.dtype(out_dtype).itemsize
    tm, tn = _choose_tiles(m, cin, cout, residual is not None, out_bytes)
    grid = (pl.cdiv(m, tm), pl.cdiv(cout, tn))

    x_spec = pl.BlockSpec((tm, cin), lambda i, j: (i, 0))
    w_spec = pl.BlockSpec((cin, tn), lambda i, j: (0, j))
    v_spec = pl.BlockSpec((1, tn), lambda i, j: (0, j))
    o_spec = pl.BlockSpec((tm, tn), lambda i, j: (i, j))
    params = pltpu.CompilerParams(dimension_semantics=("parallel", "parallel"),
                                  vmem_limit_bytes=VMEM_LIMIT)

    if residual is None:
        return pl.pallas_call(
            functools.partial(_mm_affine_kernel, relu=relu),
            out_shape=jax.ShapeDtypeStruct((m, cout), out_dtype),
            grid=grid,
            in_specs=[x_spec, w_spec, v_spec, v_spec],
            out_specs=o_spec,
            compiler_params=params,
        )(x2d, w, scale, bias)

    r_spec = pl.BlockSpec((tm, tn), lambda i, j: (i, j))
    return pl.pallas_call(
        functools.partial(_mm_affine_res_kernel, relu=relu),
        out_shape=jax.ShapeDtypeStruct((m, cout), out_dtype),
        grid=grid,
        in_specs=[x_spec, w_spec, v_spec, v_spec, r_spec],
        out_specs=o_spec,
        compiler_params=params,
    )(x2d, w, scale, bias, residual)


# ---------------------------------------------------------------------------
# FasterNet block: one fused kernel per image
#   PConv3x3(first dc ch) -> concat -> PW expand + BN + ReLU -> PW project
# ---------------------------------------------------------------------------
def _fasternet_kernel(x_ref, pw_ref, w1_ref, s_ref, b_ref, w2_ref, o_ref, pad_ref,
                      *, H, W, dc):
    x = x_ref[0]                                             # (H, W, c) bf16
    # zero-padded halo for the partial 3x3, built entirely in VMEM (bf16)
    pad_ref[...] = jnp.zeros((H + 2, W + 2, dc), BF16)
    pad_ref[1:H + 1, 1:W + 1, :] = x[:, :, :dc]
    xp = pad_ref[...]                                        # (H+2, W+2, dc)
    taps = [xp[dh:dh + H, dw:dw + W, :] for dh in range(3) for dw in range(3)]
    patches = jnp.concatenate(taps, axis=-1).reshape(H * W, 9 * dc)   # bf16
    pout = jnp.dot(patches, pw_ref[...], preferred_element_type=F32)  # (HW, dc)
    rest = x[:, :, dc:].reshape(H * W, -1)                   # untouched channels
    xc = jnp.concatenate([pout.astype(BF16), rest], axis=-1) # (HW, c)
    # PW expand + BN + ReLU, then PW project — intermediate h never leaves VMEM
    h = jnp.dot(xc, w1_ref[...], preferred_element_type=F32)
    h = jnp.maximum(h * s_ref[...] + b_ref[...], 0.0).astype(BF16)
    out = jnp.dot(h, w2_ref[...], preferred_element_type=F32)
    o_ref[...] = out.astype(o_ref.dtype)[None]


def fasternet_block(a, fp):
    B, H, W, c = a.shape
    dc = fp["dim_conv"]
    s, b = bn_fold(fp["bn_g"], fp["bn_b"], fp["bn_m"], fp["bn_v"])
    out = pl.pallas_call(
        functools.partial(_fasternet_kernel, H=H, W=W, dc=dc),
        out_shape=jax.ShapeDtypeStruct((B, H * W, c), BF16),
        grid=(B,),
        in_specs=[
            pl.BlockSpec((1, H, W, c), lambda i: (i, 0, 0, 0)),
            pl.BlockSpec((9 * dc, dc), lambda i: (0, 0)),
            pl.BlockSpec((c, 2 * c), lambda i: (0, 0)),
            pl.BlockSpec((1, 2 * c), lambda i: (0, 0)),
            pl.BlockSpec((1, 2 * c), lambda i: (0, 0)),
            pl.BlockSpec((2 * c, c), lambda i: (0, 0)),
        ],
        out_specs=pl.BlockSpec((1, H * W, c), lambda i: (i, 0, 0)),
        scratch_shapes=[pltpu.VMEM((H + 2, W + 2, dc), BF16)],
        compiler_params=pltpu.CompilerParams(dimension_semantics=("parallel",),
                                             vmem_limit_bytes=VMEM_LIMIT),
    )(a, fp["pconv_w"], fp["conv1_w"], s.reshape(1, -1), b.reshape(1, -1),
      fp["conv2_w"])
    return out.reshape(B, H, W, c)


# ---------------------------------------------------------------------------
# EMA module + residual add: one fused kernel per image (small static group loop,
# each group's result stored immediately so only one group's temps stay live)
# ---------------------------------------------------------------------------
def _ema_residual_kernel(fn_ref, a_ref, c1w_ref, c1b_ref, c3w_ref, c3b_ref,
                         gng_ref, gnb_ref, o_ref, pad_ref, *, H, W, g, cg):
    HW = H * W
    x = fn_ref[0]                                            # (H, W, c) bf16
    a_in = a_ref[0]                                          # (HW, c)   bf16

    for j in range(g):                                       # g is small (2..8)
        lo = j * cg
        xg = x[:, :, lo:lo + cg]                             # (H, W, cg) bf16
        xgf = xg.astype(F32)

        # directional average pooling (plain reductions, no pooling matrices)
        x_h = jnp.mean(xgf, axis=1)                          # (H, cg)  mean over W
        x_w = jnp.mean(xgf, axis=0)                          # (W, cg)  mean over H
        hw_desc = jnp.concatenate([x_h, x_w], axis=0).astype(BF16)   # (H+W, cg)
        hw = jnp.dot(hw_desc, c1w_ref[...], preferred_element_type=F32) + c1b_ref[...]
        gh = jax.nn.sigmoid(hw[:H, :])                       # (H, cg)
        gw = jax.nn.sigmoid(hw[H:, :])                       # (W, cg)

        # gated branch + GroupNorm(cg, cg): per-channel norm over spatial positions
        gate = xgf * gh[:, None, :] * gw[None, :, :]         # (H, W, cg)
        gate2 = gate.reshape(HW, cg)
        mu = jnp.mean(gate2, axis=0, keepdims=True)
        var = jnp.mean(jnp.square(gate2 - mu), axis=0, keepdims=True)
        x1 = (gate2 - mu) * jax.lax.rsqrt(var + 1e-5) * gng_ref[...] + gnb_ref[...]

        # 3x3 conv branch: zero halo built in VMEM scratch (bf16), single K=9*cg dot
        pad_ref[...] = jnp.zeros((H + 2, W + 2, cg), BF16)
        pad_ref[1:H + 1, 1:W + 1, :] = xg
        xp = pad_ref[...]
        taps = [xp[dh:dh + H, dw:dw + W, :] for dh in range(3) for dw in range(3)]
        patches = jnp.concatenate(taps, axis=-1).reshape(HW, 9 * cg)
        x2 = jnp.dot(patches, c3w_ref[...], preferred_element_type=F32) + c3b_ref[...]

        # cross-spatial attention (softmax over the cg channels of pooled stats)
        m1 = jnp.mean(x1, axis=0, keepdims=True)             # (1, cg)
        m2 = jnp.mean(x2, axis=0, keepdims=True)
        e1 = jnp.exp(m1 - jnp.max(m1, axis=-1, keepdims=True))
        e2 = jnp.exp(m2 - jnp.max(m2, axis=-1, keepdims=True))
        a1 = e1 / jnp.sum(e1, axis=-1, keepdims=True)
        a2 = e2 / jnp.sum(e2, axis=-1, keepdims=True)
        wt = jax.nn.sigmoid(jnp.sum(x2 * a1, axis=-1, keepdims=True)
                            + jnp.sum(x1 * a2, axis=-1, keepdims=True))   # (HW, 1)

        ema = xgf.reshape(HW, cg) * wt
        out_g = a_in[:, lo:lo + cg].astype(F32) + ema        # residual add
        o_ref[0, :, lo:lo + cg] = out_g.astype(o_ref.dtype)


def ema_residual(a, fn_out, ep):
    """Returns a + EMA(fn_out) in a single pallas_call gridded over the batch."""
    B, H, W, c = a.shape
    g = ep["groups"]
    cg = c // g
    a2 = a.reshape(B, H * W, c)
    out = pl.pallas_call(
        functools.partial(_ema_residual_kernel, H=H, W=W, g=g, cg=cg),
        out_shape=jax.ShapeDtypeStruct((B, H * W, c), BF16),
        grid=(B,),
        in_specs=[
            pl.BlockSpec((1, H, W, c), lambda i: (i, 0, 0, 0)),
            pl.BlockSpec((1, H * W, c), lambda i: (i, 0, 0)),
            pl.BlockSpec((cg, cg), lambda i: (0, 0)),
            pl.BlockSpec((1, cg), lambda i: (0, 0)),
            pl.BlockSpec((9 * cg, cg), lambda i: (0, 0)),
            pl.BlockSpec((1, cg), lambda i: (0, 0)),
            pl.BlockSpec((1, cg), lambda i: (0, 0)),
            pl.BlockSpec((1, cg), lambda i: (0, 0)),
        ],
        out_specs=pl.BlockSpec((1, H * W, c), lambda i: (i, 0, 0)),
        scratch_shapes=[pltpu.VMEM((H + 2, W + 2, cg), BF16)],
        compiler_params=pltpu.CompilerParams(dimension_semantics=("parallel",),
                                             vmem_limit_bytes=VMEM_LIMIT),
    )(fn_out, a2, ep["c1_w"], ep["c1_b"], ep["c3_w"], ep["c3_b"],
      ep["gn_g"], ep["gn_b"])
    return out.reshape(B, H, W, c)


# ---------------------------------------------------------------------------
# C2fEMFast forward
# ---------------------------------------------------------------------------
def c2f_em_fast(x_nchw, p):
    x = jnp.transpose(x_nchw, (0, 2, 3, 1)).astype(BF16)     # NCHW -> NHWC bf16
    B, H, W, c1 = x.shape
    c = p["c"]
    c2 = p["c2"]

    y = matmul_affine(x.reshape(-1, c1), p["cv1_w"], out_dtype=BF16)   # cv1 (no BN/act)
    y = y.reshape(B, H, W, 2 * c)
    a, byp = y[..., :c], y[..., c:]

    for bp in p["bottlenecks"]:
        fn_out = fasternet_block(a, bp["fn"])
        a = ema_residual(a, fn_out, bp["ema"])               # a + EMA(FasterNet(a))

    ycat = jnp.concatenate([a, byp], axis=-1)
    s, bias = bn_fold(p["bn_g"], p["bn_b"], p["bn_m"], p["bn_v"])
    res = x.reshape(-1, c1) if p["shortcut"] else None
    # cv2 + BN + ReLU (+ shortcut after ReLU, as in the reference) in one kernel
    out2d = matmul_affine(ycat.reshape(-1, 2 * c), p["cv2_w"], s, bias,
                          relu=True, residual=res, out_dtype=F32)
    out = out2d.reshape(B, H, W, c2)
    return jnp.transpose(out, (0, 3, 1, 2))                  # NHWC -> NCHW


# ---------------------------------------------------------------------------
# Deterministic parameter initialization (synthetic weights)
# ---------------------------------------------------------------------------
def init_params(key, c1, c2, n=1, shortcut=True):
    c = c2 // 2
    keys = iter(jax.random.split(key, 256))

    def nrm(shape, scale=0.1):
        return scale * jax.random.normal(next(keys), shape, F32)

    p = {
        "c": c,
        "c2": c2,
        "shortcut": bool(shortcut and c1 == c2),
        "cv1_w": nrm((c1, 2 * c)).astype(BF16),
        "cv2_w": nrm((2 * c, c2)).astype(BF16),
        "bn_g": 1.0 + nrm((c2,)),
        "bn_b": nrm((c2,)),
        "bn_m": jnp.zeros((c2,), F32),
        "bn_v": jnp.ones((c2,), F32),
        "bottlenecks": [],
    }
    dc = max(int(c * 0.5), 1)
    groups = 2 if c % 2 == 0 else 1      # EMA group factor chosen to divide c
    cg = c // groups
    for _ in range(n):
        fn = {
            "dim_conv": dc,
            # (kH, kW, Cin, Cout) pre-flattened to (9*Cin, Cout); the in-kernel
            # im2col taps are dh-major, then dw, then cin.  (Real PyTorch weights
            # (Cout, Cin, kH, kW) would need .permute(2, 3, 1, 0) first.)
            "pconv_w": nrm((3, 3, dc, dc)).reshape(9 * dc, dc).astype(BF16),
            "conv1_w": nrm((c, 2 * c)).astype(BF16),
            "bn_g": 1.0 + nrm((2 * c,)),
            "bn_b": nrm((2 * c,)),
            "bn_m": jnp.zeros((2 * c,), F32),
            "bn_v": jnp.ones((2 * c,), F32),
            "conv2_w": nrm((2 * c, c)).astype(BF16),
        }
        ema = {
            "groups": groups,
            "c1_w": nrm((cg, cg)).astype(BF16),
            "c1_b": nrm((cg,)).reshape(1, cg),
            "c3_w": nrm((3, 3, cg, cg)).reshape(9 * cg, cg).astype(BF16),
            "c3_b": nrm((cg,)).reshape(1, cg),
            "gn_g": (1.0 + nrm((cg,))).reshape(1, cg),
            "gn_b": nrm((cg,)).reshape(1, cg),
        }
        p["bottlenecks"].append({"fn": fn, "ema": ema})
    return p


if __name__ == "__main__":
    key = jax.random.PRNGKey(0)
    kx, kp = jax.random.split(key)
    B, C1, H, W = 2, 32, 16, 16
    x = jax.random.normal(kx, (B, C1, H, W), F32)
    params = init_params(kp, c1=C1, c2=C1, n=1, shortcut=True)

    fwd = jax.jit(lambda xx: c2f_em_fast(xx, params))
    out = jax.block_until_ready(fwd(x))

    assert out.shape == (B, C1, H, W), out.shape
    assert bool(jnp.all(jnp.isfinite(out)))
    print("KERNEL_OK")
</pallas_src>

<mosaic_0001>
module attributes {stable_mosaic.version = 11 : i64} {
  func.func @_mm_affine_kernel(%arg0: i32, %arg1: i32, %arg2: memref<512x32xbf16, #tpu.memory_space<vmem>>, %arg3: memref<32x32xbf16, #tpu.memory_space<vmem>>, %arg4: memref<1x32xf32, #tpu.memory_space<vmem>>, %arg5: memref<1x32xf32, #tpu.memory_space<vmem>>, %arg6: memref<512x32xbf16, #tpu.memory_space<vmem>>) attributes {dimension_semantics = [#tpu.dimension_semantics<parallel>, #tpu.dimension_semantics<parallel>], iteration_bounds = array<i64: 1, 1>, scalar_prefetch = 0 : i64, scratch_operands = 0 : i64, tpu.core_type = #tpu.core_type<tc>, window_params = [{transform_indices = @transform_0, window_bounds = array<i64: 512, 32>}, {transform_indices = @transform_1, window_bounds = array<i64: 32, 32>}, {transform_indices = @transform_2, window_bounds = array<i64: 1, 32>}, {transform_indices = @transform_3, window_bounds = array<i64: 1, 32>}, {transform_indices = @transform_4, window_bounds = array<i64: 512, 32>}]} {
    %c0 = arith.constant 0 : index
    %c0_0 = arith.constant 0 : index
    %0 = vector.load %arg2[%c0, %c0_0] : memref<512x32xbf16, #tpu.memory_space<vmem>>, vector<512x32xbf16>
    %c0_1 = arith.constant 0 : index
    %c0_2 = arith.constant 0 : index
    %1 = vector.load %arg3[%c0_1, %c0_2] : memref<32x32xbf16, #tpu.memory_space<vmem>>, vector<32x32xbf16>
    %cst = arith.constant dense<0.000000e+00> : vector<512x32xf32>
    %2 = tpu.matmul %0, %1, %cst {dimension_numbers = #tpu.dot_dimension_numbers<[1], [0], [0], [1], [0, 0, 1, 1], [], []>} : vector<512x32xbf16>, vector<32x32xbf16>, vector<512x32xf32> -> vector<512x32xf32>
    %c0_3 = arith.constant 0 : index
    %c0_4 = arith.constant 0 : index
    %3 = vector.load %arg4[%c0_3, %c0_4] : memref<1x32xf32, #tpu.memory_space<vmem>>, vector<1x32xf32>
    %4 = vector.broadcast %3 : vector<1x32xf32> to vector<512x32xf32>
    %5 = arith.mulf %2, %4 : vector<512x32xf32>
    %c0_5 = arith.constant 0 : index
    %c0_6 = arith.constant 0 : index
    %6 = vector.load %arg5[%c0_5, %c0_6] : memref<1x32xf32, #tpu.memory_space<vmem>>, vector<1x32xf32>
    %7 = vector.broadcast %6 : vector<1x32xf32> to vector<512x32xf32>
    %8 = arith.addf %5, %7 : vector<512x32xf32>
    %9 = arith.truncf %8 : vector<512x32xf32> to vector<512x32xbf16>
    %c0_7 = arith.constant 0 : index
    %c0_8 = arith.constant 0 : index
    %10 = vector.load %arg6[%c0_7, %c0_8] : memref<512x32xbf16, #tpu.memory_space<vmem>>, vector<512x32xbf16>
    tpu.vector_store %arg6[%c0_7, %c0_8], %9 {strides = array<i32>} : memref<512x32xbf16, #tpu.memory_space<vmem>>, vector<512x32xbf16>,
    return
  }
  func.func @transform_0(%arg0: i32, %arg1: i32) -> (i32, i32) {
    %c0_i32 = arith.constant 0 : i32
    %c0_i32_0 = arith.constant 0 : i32
    return %arg0, %c0_i32 : i32, i32
  }
  func.func @transform_1(%arg0: i32, %arg1: i32) -> (i32, i32) {
    %c0_i32 = arith.constant 0 : i32
    %c0_i32_0 = arith.constant 0 : i32
    return %c0_i32, %arg1 : i32, i32
  }
  func.func @transform_2(%arg0: i32, %arg1: i32) -> (i32, i32) {
    %c0_i32 = arith.constant 0 : i32
    %c0_i32_0 = arith.constant 0 : i32
    return %c0_i32, %arg1 : i32, i32
  }
  func.func @transform_3(%arg0: i32, %arg1: i32) -> (i32, i32) {
    %c0_i32 = arith.constant 0 : i32
    %c0_i32_0 = arith.constant 0 : i32
    return %c0_i32, %arg1 : i32, i32
  }
  func.func @transform_4(%arg0: i32, %arg1: i32) -> (i32, i32) {
    %c0_i32 = arith.constant 0 : i32
    return %arg0, %arg1 : i32, i32
  }
}

module attributes {stable_mosaic.version = 11 : i64} {
  func.func @_fasternet_kernel(%arg0: i32, %arg1: memref<1x16x16x16xbf16, #tpu.memory_space<vmem>>, %arg2: memref<72x8xbf16, #tpu.memory_space<vmem>>, %arg3: memref<16x32xbf16, #tpu.memory_space<vmem>>, %arg4: memref<1x32xf32, #tpu.memory_space<vmem>>, %arg5: memref<1x32xf32, #tpu.memory_space<vmem>>, %arg6: memref<32x16xbf16, #tpu.memory_space<vmem>>, %arg7: memref<1x256x16xbf16, #tpu.memory_space<vmem>>, %arg8: memref<18x18x8xbf16, #tpu.memory_space<vmem>>) attributes {dimension_semantics = [#tpu.dimension_semantics<parallel>], iteration_bounds = array<i64: 2>, scalar_prefetch = 0 : i64, scratch_operands = 1 : i64, tpu.core_type = #tpu.core_type<tc>, window_params = [{transform_indices = @transform_0, window_bounds = array<i64: 1, 16, 16, 16>}, {pipeline_mode = #tpu.pipeline_mode<synchronous>, transform_indices = @transform_1, window_bounds = array<i64: 72, 8>}, {pipeline_mode = #tpu.pipeline_mode<synchronous>, transform_indices = @transform_2, window_bounds = array<i64: 16, 32>}, {pipeline_mode = #tpu.pipeline_mode<synchronous>, transform_indices = @transform_3, window_bounds = array<i64: 1, 32>}, {pipeline_mode = #tpu.pipeline_mode<synchronous>, transform_indices = @transform_4, window_bounds = array<i64: 1, 32>}, {pipeline_mode = #tpu.pipeline_mode<synchronous>, transform_indices = @transform_5, window_bounds = array<i64: 32, 16>}, {transform_indices = @transform_6, window_bounds = array<i64: 1, 256, 16>}]} {
    %c0 = arith.constant 0 : index
    %c0_0 = arith.constant 0 : index
    %c0_1 = arith.constant 0 : index
    %c0_2 = arith.constant 0 : index
    %0 = vector.load %arg1[%c0, %c0_0, %c0_1, %c0_2] : memref<1x16x16x16xbf16, #tpu.memory_space<vmem>>, vector<1x16x16x16xbf16>
    %1 = vector.shape_cast %0 : vector<1x16x16x16xbf16> to vector<16x16x16xbf16>
    %cst = arith.constant 0.000000e+00 : bf16
    %2 = vector.broadcast %cst : bf16 to vector<18x18x8xbf16>
    %c0_3 = arith.constant 0 : index
    %c0_4 = arith.constant 0 : index
    %c0_5 = arith.constant 0 : index
    %3 = vector.load %arg8[%c0_3, %c0_4, %c0_5] : memref<18x18x8xbf16, #tpu.memory_space<vmem>>, vector<18x18x8xbf16>
    tpu.vector_store %arg8[%c0_3, %c0_4, %c0_5], %2 {strides = array<i32>} : memref<18x18x8xbf16, #tpu.memory_space<vmem>>, vector<18x18x8xbf16>,
    %4 = vector.extract_strided_slice %1 {offsets = [0, 0, 0], sizes = [16, 16, 8], strides = [1, 1, 1]} : vector<16x16x16xbf16> to vector<16x16x8xbf16>
    %c1 = arith.constant 1 : index
    %c1_6 = arith.constant 1 : index
    %c0_7 = arith.constant 0 : index
    %5 = vector.load %arg8[%c1, %c1_6, %c0_7] : memref<18x18x8xbf16, #tpu.memory_space<vmem>>, vector<16x16x8xbf16>
    tpu.vector_store %arg8[%c1, %c1_6, %c0_7], %4 {strides = array<i32>} : memref<18x18x8xbf16, #tpu.memory_space<vmem>>, vector<16x16x8xbf16>,
    %c0_8 = arith.constant 0 : index
    %c0_9 = arith.constant 0 : index
    %c0_10 = arith.constant 0 : index
    %6 = vector.load %arg8[%c0_8, %c0_9, %c0_10] : memref<18x18x8xbf16, #tpu.memory_space<vmem>>, vector<18x18x8xbf16>
    %7 = vector.extract_strided_slice %6 {offsets = [0, 0, 0], sizes = [16, 16, 8], strides = [1, 1, 1]} : vector<18x18x8xbf16> to vector<16x16x8xbf16>
    %8 = vector.extract_strided_slice %6 {offsets = [0, 1, 0], sizes = [16, 16, 8], strides = [1, 1, 1]} : vector<18x18x8xbf16> to vector<16x16x8xbf16>
    %9 = vector.extract_strided_slice %6 {offsets = [0, 2, 0], sizes = [16, 16, 8], strides = [1, 1, 1]} : vector<18x18x8xbf16> to vector<16x16x8xbf16>
    %10 = vector.extract_strided_slice %6 {offsets = [1, 0, 0], sizes = [16, 16, 8], strides = [1, 1, 1]} : vector<18x18x8xbf16> to vector<16x16x8xbf16>
    %11 = vector.extract_strided_slice %6 {offsets = [1, 1, 0], sizes = [16, 16, 8], strides = [1, 1, 1]} : vector<18x18x8xbf16> to vector<16x16x8xbf16>
    %12 = vector.extract_strided_slice %6 {offsets = [1, 2, 0], sizes = [16, 16, 8], strides = [1, 1, 1]} : vector<18x18x8xbf16> to vector<16x16x8xbf16>
    %13 = vector.extract_strided_slice %6 {offsets = [2, 0, 0], sizes = [16, 16, 8], strides = [1, 1, 1]} : vector<18x18x8xbf16> to vector<16x16x8xbf16>
    %14 = vector.extract_strided_slice %6 {offsets = [2, 1, 0], sizes = [16, 16, 8], strides = [1, 1, 1]} : vector<18x18x8xbf16> to vector<16x16x8xbf16>
    %15 = vector.extract_strided_slice %6 {offsets = [2, 2, 0], sizes = [16, 16, 8], strides = [1, 1, 1]} : vector<18x18x8xbf16> to vector<16x16x8xbf16>
    %16 = tpu.concatenate %7, %8, %9, %10, %11, %12, %13, %14, %15 in 2 : vector<16x16x8xbf16>, vector<16x16x8xbf16>, vector<16x16x8xbf16>, vector<16x16x8xbf16>, vector<16x16x8xbf16>, vector<16x16x8xbf16>, vector<16x16x8xbf16>, vector<16x16x8xbf16>, vector<16x16x8xbf16> -> vector<16x16x72xbf16>
    %17 = vector.shape_cast %16 : vector<16x16x72xbf16> to vector<256x72xbf16>
    %c0_11 = arith.constant 0 : index
    %c0_12 = arith.constant 0 : index
    %18 = vector.load %arg2[%c0_11, %c0_12] : memref<72x8xbf16, #tpu.memory_space<vmem>>, vector<72x8xbf16>
    %cst_13 = arith.constant dense<0.000000e+00> : vector<256x8xf32>
    %19 = tpu.matmul %17, %18, %cst_13 {dimension_numbers = #tpu.dot_dimension_numbers<[1], [0], [0], [1], [0, 0, 1, 1], [], []>} : vector<256x72xbf16>, vector<72x8xbf16>, vector<256x8xf32> -> vector<256x8xf32>
    %20 = vector.extract_strided_slice %1 {offsets = [0, 0, 8], sizes = [16, 16, 8], strides = [1, 1, 1]} : vector<16x16x16xbf16> to vector<16x16x8xbf16>
    %21 = vector.shape_cast %20 : vector<16x16x8xbf16> to vector<256x8xbf16>
    %22 = arith.truncf %19 : vector<256x8xf32> to vector<256x8xbf16>
    %23 = tpu.concatenate %22, %21 in 1 : vector<256x8xbf16>, vector<256x8xbf16> -> vector<256x16xbf16>
    %c0_14 = arith.constant 0 : index
    %c0_15 = arith.constant 0 : index
    %24 = vector.load %arg3[%c0_14, %c0_15] : memref<16x32xbf16, #tpu.memory_space<vmem>>, vector<16x32xbf16>
    %cst_16 = arith.constant dense<0.000000e+00> : vector<256x32xf32>
    %25 = tpu.matmul %23, %24, %cst_16 {dimension_numbers = #tpu.dot_dimension_numbers<[1], [0], [0], [1], [0, 0, 1, 1], [], []>} : vector<256x16xbf16>, vector<16x32xbf16>, vector<256x32xf32> -> vector<256x32xf32>
    %c0_17 = arith.constant 0 : index
    %c0_18 = arith.constant 0 : index
    %26 = vector.load %arg4[%c0_17, %c0_18] : memref<1x32xf32, #tpu.memory_space<vmem>>, vector<1x32xf32>
    %27 = vector.broadcast %26 : vector<1x32xf32> to vector<256x32xf32>
    %28 = arith.mulf %25, %27 : vector<256x32xf32>
    %c0_19 = arith.constant 0 : index
    %c0_20 = arith.constant 0 : index
    %29 = vector.load %arg5[%c0_19, %c0_20] : memref<1x32xf32, #tpu.memory_space<vmem>>, vector<1x32xf32>
    %30 = vector.broadcast %29 : vector<1x32xf32> to vector<256x32xf32>
    %31 = arith.addf %28, %30 : vector<256x32xf32>
    %cst_21 = arith.constant 0.000000e+00 : f32
    %32 = vector.broadcast %cst_21 : f32 to vector<256x32xf32>
    %33 = arith.maximumf %31, %32 : vector<256x32xf32>
    %34 = arith.truncf %33 : vector<256x32xf32> to vector<256x32xbf16>
    %c0_22 = arith.constant 0 : index
    %c0_23 = arith.constant 0 : index
    %35 = vector.load %arg6[%c0_22, %c0_23] : memref<32x16xbf16, #tpu.memory_space<vmem>>, vector<32x16xbf16>
    %cst_24 = arith.constant dense<0.000000e+00> : vector<256x16xf32>
    %36 = tpu.matmul %34, %35, %cst_24 {dimension_numbers = #tpu.dot_dimension_numbers<[1], [0], [0], [1], [0, 0, 1, 1], [], []>} : vector<256x32xbf16>, vector<32x16xbf16>, vector<256x16xf32> -> vector<256x16xf32>
    %37 = arith.truncf %36 : vector<256x16xf32> to vector<256x16xbf16>
    %38 = vector.shape_cast %37 : vector<256x16xbf16> to vector<1x256x16xbf16>
    %c0_25 = arith.constant 0 : index
    %c0_26 = arith.constant 0 : index
    %c0_27 = arith.constant 0 : index
    %39 = vector.load %arg7[%c0_25, %c0_26, %c0_27] : memref<1x256x16xbf16, #tpu.memory_space<vmem>>, vector<1x256x16xbf16>
    tpu.vector_store %arg7[%c0_25, %c0_26, %c0_27], %38 {strides = array<i32>} : memref<1x256x16xbf16, #tpu.memory_space<vmem>>, vector<1x256x16xbf16>,
    return
  }
  func.func @transform_0(%arg0: i32) -> (i32, i32, i32, i32) {
    %c0_i32 = arith.constant 0 : i32
    %c0_i32_0 = arith.constant 0 : i32
    %c0_i32_1 = arith.constant 0 : i32
    %c0_i32_2 = arith.constant 0 : i32
    return %arg0, %c0_i32, %c0_i32_0, %c0_i32_1 : i32, i32, i32, i32
  }
  func.func @transform_1(%arg0: i32) -> (i32, i32) {
    %c0_i32 = arith.constant 0 : i32
    %c0_i32_0 = arith.constant 0 : i32
    %c0_i32_1 = arith.constant 0 : i32
    return %c0_i32, %c0_i32_0 : i32, i32
  }
  func.func @transform_2(%arg0: i32) -> (i32, i32) {
    %c0_i32 = arith.constant 0 : i32
    %c0_i32_0 = arith.constant 0 : i32
    %c0_i32_1 = arith.constant 0 : i32
    return %c0_i32, %c0_i32_0 : i32, i32
  }
  func.func @transform_3(%arg0: i32) -> (i32, i32) {
    %c0_i32 = arith.constant 0 : i32
    %c0_i32_0 = arith.constant 0 : i32
    %c0_i32_1 = arith.constant 0 : i32
    return %c0_i32, %c0_i32_0 : i32, i32
  }
  func.func @transform_4(%arg0: i32) -> (i32, i32) {
    %c0_i32 = arith.constant 0 : i32
    %c0_i32_0 = arith.constant 0 : i32
    %c0_i32_1 = arith.constant 0 : i32
    return %c0_i32, %c0_i32_0 : i32, i32
  }
  func.func @transform_5(%arg0: i32) -> (i32, i32) {
    %c0_i32 = arith.constant 0 : i32
    %c0_i32_0 = arith.constant 0 : i32
    %c0_i32_1 = arith.constant 0 : i32
    return %c0_i32, %c0_i32_0 : i32, i32
  }
  func.func @transform_6(%arg0: i32) -> (i32, i32, i32) {
    %c0_i32 = arith.constant 0 : i32
    %c0_i32_0 = arith.constant 0 : i32
    %c0_i32_1 = arith.constant 0 : i32
    return %arg0, %c0_i32, %c0_i32_0 : i32, i32, i32
  }
}

module attributes {stable_mosaic.version = 11 : i64} {
  func.func @_ema_residual_kernel(%arg0: i32, %arg1: memref<1x16x16x16xbf16, #tpu.memory_space<vmem>>, %arg2: memref<1x256x16xbf16, #tpu.memory_space<vmem>>, %arg3: memref<8x8xbf16, #tpu.memory_space<vmem>>, %arg4: memref<1x8xf32, #tpu.memory_space<vmem>>, %arg5: memref<72x8xbf16, #tpu.memory_space<vmem>>, %arg6: memref<1x8xf32, #tpu.memory_space<vmem>>, %arg7: memref<1x8xf32, #tpu.memory_space<vmem>>, %arg8: memref<1x8xf32, #tpu.memory_space<vmem>>, %arg9: memref<1x256x16xbf16, #tpu.memory_space<vmem>>, %arg10: memref<18x18x8xbf16, #tpu.memory_space<vmem>>) attributes {dimension_semantics = [#tpu.dimension_semantics<parallel>], iteration_bounds = array<i64: 2>, scalar_prefetch = 0 : i64, scratch_operands = 1 : i64, tpu.core_type = #tpu.core_type<tc>, window_params = [{transform_indices = @transform_0, window_bounds = array<i64: 1, 16, 16, 16>}, {transform_indices = @transform_1, window_bounds = array<i64: 1, 256, 16>}, {pipeline_mode = #tpu.pipeline_mode<synchronous>, transform_indices = @transform_2, window_bounds = array<i64: 8, 8>}, {pipeline_mode = #tpu.pipeline_mode<synchronous>, transform_indices = @transform_3, window_bounds = array<i64: 1, 8>}, {pipeline_mode = #tpu.pipeline_mode<synchronous>, transform_indices = @transform_4, window_bounds = array<i64: 72, 8>}, {pipeline_mode = #tpu.pipeline_mode<synchronous>, transform_indices = @transform_5, window_bounds = array<i64: 1, 8>}, {pipeline_mode = #tpu.pipeline_mode<synchronous>, transform_indices = @transform_6, window_bounds = array<i64: 1, 8>}, {pipeline_mode = #tpu.pipeline_mode<synchronous>, transform_indices = @transform_7, window_bounds = array<i64: 1, 8>}, {transform_indices = @transform_8, window_bounds = array<i64: 1, 256, 16>}]} {
    %c0 = arith.constant 0 : index
    %c0_0 = arith.constant 0 : index
    %c0_1 = arith.constant 0 : index
    %c0_2 = arith.constant 0 : index
    %0 = vector.load %arg1[%c0, %c0_0, %c0_1, %c0_2] : memref<1x16x16x16xbf16, #tpu.memory_space<vmem>>, vector<1x16x16x16xbf16>
    %1 = vector.shape_cast %0 : vector<1x16x16x16xbf16> to vector<16x16x16xbf16>
    %c0_3 = arith.constant 0 : index
    %c0_4 = arith.constant 0 : index
    %c0_5 = arith.constant 0 : index
    %2 = vector.load %arg2[%c0_3, %c0_4, %c0_5] : memref<1x256x16xbf16, #tpu.memory_space<vmem>>, vector<1x256x16xbf16>
    %3 = vector.shape_cast %2 : vector<1x256x16xbf16> to vector<256x16xbf16>
    %4 = vector.extract_strided_slice %1 {offsets = [0, 0, 0], sizes = [16, 16, 8], strides = [1, 1, 1]} : vector<16x16x16xbf16> to vector<16x16x8xbf16>
    %5 = arith.extf %4 : vector<16x16x8xbf16> to vector<16x16x8xf32>
    %cst = arith.constant dense<0.000000e+00> : vector<16x8xf32>
    %6 = vector.multi_reduction <add>, %5, %cst [1] : vector<16x16x8xf32> to vector<16x8xf32>
    %cst_6 = arith.constant 1.600000e+01 : f32
    %7 = vector.broadcast %cst_6 : f32 to vector<16x8xf32>
    %8 = arith.divf %6, %7 : vector<16x8xf32>
    %cst_7 = arith.constant dense<0.000000e+00> : vector<16x8xf32>
    %9 = vector.multi_reduction <add>, %5, %cst_7 [0] : vector<16x16x8xf32> to vector<16x8xf32>
    %cst_8 = arith.constant 1.600000e+01 : f32
    %10 = vector.broadcast %cst_8 : f32 to vector<16x8xf32>
    %11 = arith.divf %9, %10 : vector<16x8xf32>
    %12 = tpu.concatenate %8, %11 in 0 : vector<16x8xf32>, vector<16x8xf32> -> vector<32x8xf32>
    %13 = arith.truncf %12 : vector<32x8xf32> to vector<32x8xbf16>
    %c0_9 = arith.constant 0 : index
    %c0_10 = arith.constant 0 : index
    %14 = vector.load %arg3[%c0_9, %c0_10] : memref<8x8xbf16, #tpu.memory_space<vmem>>, vector<8x8xbf16>
    %cst_11 = arith.constant dense<0.000000e+00> : vector<32x8xf32>
    %15 = tpu.matmul %13, %14, %cst_11 {dimension_numbers = #tpu.dot_dimension_numbers<[1], [0], [0], [1], [0, 0, 1, 1], [], []>} : vector<32x8xbf16>, vector<8x8xbf16>, vector<32x8xf32> -> vector<32x8xf32>
    %c0_12 = arith.constant 0 : index
    %c0_13 = arith.constant 0 : index
    %16 = vector.load %arg4[%c0_12, %c0_13] : memref<1x8xf32, #tpu.memory_space<vmem>>, vector<1x8xf32>
    %17 = vector.broadcast %16 : vector<1x8xf32> to vector<32x8xf32>
    %18 = arith.addf %15, %17 : vector<32x8xf32>
    %19 = vector.extract_strided_slice %18 {offsets = [0, 0], sizes = [16, 8], strides = [1, 1]} : vector<32x8xf32> to vector<16x8xf32>
    %20 = arith.negf %19 : vector<16x8xf32>
    %21 = math.exp %20 : vector<16x8xf32>
    %cst_14 = arith.constant 1.000000e+00 : f32
    %22 = vector.broadcast %cst_14 : f32 to vector<16x8xf32>
    %23 = arith.addf %22, %21 : vector<16x8xf32>
    %24 = arith.divf %22, %23 : vector<16x8xf32>
    %25 = vector.extract_strided_slice %18 {offsets = [16, 0], sizes = [16, 8], strides = [1, 1]} : vector<32x8xf32> to vector<16x8xf32>
    %26 = arith.negf %25 : vector<16x8xf32>
    %27 = math.exp %26 : vector<16x8xf32>
    %cst_15 = arith.constant 1.000000e+00 : f32
    %28 = vector.broadcast %cst_15 : f32 to vector<16x8xf32>
    %29 = arith.addf %28, %27 : vector<16x8xf32>
    %30 = arith.divf %28, %29 : vector<16x8xf32>
    %31 = vector.shape_cast %24 : vector<16x8xf32> to vector<16x1x8xf32>
    %32 = vector.broadcast %31 : vector<16x1x8xf32> to vector<16x16x8xf32>
    %33 = arith.mulf %5, %32 : vector<16x16x8xf32>
    %34 = vector.shape_cast %30 : vector<16x8xf32> to vector<1x16x8xf32>
    %35 = vector.broadcast %34 : vector<1x16x8xf32> to vector<16x16x8xf32>
    %36 = arith.mulf %33, %35 : vector<16x16x8xf32>
    %37 = vector.shape_cast %36 : vector<16x16x8xf32> to vector<256x8xf32>
    %cst_16 = arith.constant dense<0.000000e+00> : vector<8xf32>
    %38 = vector.multi_reduction <add>, %37, %cst_16 [0] : vector<256x8xf32> to vector<8xf32>
    %39 = vector.shape_cast %38 : vector<8xf32> to vector<1x8xf32>
    %cst_17 = arith.constant 2.560000e+02 : f32
    %40 = vector.broadcast %cst_17 : f32 to vector<1x8xf32>
    %41 = arith.divf %39, %40 : vector<1x8xf32>
    %42 = vector.broadcast %41 : vector<1x8xf32> to vector<256x8xf32>
    %43 = arith.subf %37, %42 : vector<256x8xf32>
    %44 = arith.mulf %43, %43 : vector<256x8xf32>
    %cst_18 = arith.constant dense<0.000000e+00> : vector<8xf32>
    %45 = vector.multi_reduction <add>, %44, %cst_18 [0] : vector<256x8xf32> to vector<8xf32>
    %46 = vector.shape_cast %45 : vector<8xf32> to vector<1x8xf32>
    %cst_19 = arith.constant 2.560000e+02 : f32
    %47 = vector.broadcast %cst_19 : f32 to vector<1x8xf32>
    %48 = arith.divf %46, %47 : vector<1x8xf32>
    %49 = vector.broadcast %41 : vector<1x8xf32> to vector<256x8xf32>
    %50 = arith.subf %37, %49 : vector<256x8xf32>
    %cst_20 = arith.constant 9.99999974E-6 : f32
    %51 = vector.broadcast %cst_20 : f32 to vector<1x8xf32>
    %52 = arith.addf %48, %51 : vector<1x8xf32>
    %53 = math.rsqrt %52 : vector<1x8xf32>
    %54 = vector.broadcast %53 : vector<1x8xf32> to vector<256x8xf32>
    %55 = arith.mulf %50, %54 : vector<256x8xf32>
    %c0_21 = arith.constant 0 : index
    %c0_22 = arith.constant 0 : index
    %56 = vector.load %arg7[%c0_21, %c0_22] : memref<1x8xf32, #tpu.memory_space<vmem>>, vector<1x8xf32>
    %57 = vector.broadcast %56 : vector<1x8xf32> to vector<256x8xf32>
    %58 = arith.mulf %55, %57 : vector<256x8xf32>
    %c0_23 = arith.constant 0 : index
    %c0_24 = arith.constant 0 : index
    %59 = vector.load %arg8[%c0_23, %c0_24] : memref<1x8xf32, #tpu.memory_space<vmem>>, vector<1x8xf32>
    %60 = vector.broadcast %59 : vector<1x8xf32> to vector<256x8xf32>
    %61 = arith.addf %58, %60 : vector<256x8xf32>
    %cst_25 = arith.constant 0.000000e+00 : bf16
    %62 = vector.broadcast %cst_25 : bf16 to vector<18x18x8xbf16>
    %c0_26 = arith.constant 0 : index
    %c0_27 = arith.constant 0 : index
    %c0_28 = arith.constant 0 : index
    %63 = vector.load %arg10[%c0_26, %c0_27, %c0_28] : memref<18x18x8xbf16, #tpu.memory_space<vmem>>, vector<18x18x8xbf16>
    tpu.vector_store %arg10[%c0_26, %c0_27, %c0_28], %62 {strides = array<i32>} : memref<18x18x8xbf16, #tpu.memory_space<vmem>>, vector<18x18x8xbf16>,
    %c1 = arith.constant 1 : index
    %c1_29 = arith.constant 1 : index
    %c0_30 = arith.constant 0 : index
    %64 = vector.load %arg10[%c1, %c1_29, %c0_30] : memref<18x18x8xbf16, #tpu.memory_space<vmem>>, vector<16x16x8xbf16>
    tpu.vector_store %arg10[%c1, %c1_29, %c0_30], %4 {strides = array<i32>} : memref<18x18x8xbf16, #tpu.memory_space<vmem>>, vector<16x16x8xbf16>,
    %c0_31 = arith.constant 0 : index
    %c0_32 = arith.constant 0 : index
    %c0_33 = arith.constant 0 : index
    %65 = vector.load %arg10[%c0_31, %c0_32, %c0_33] : memref<18x18x8xbf16, #tpu.memory_space<vmem>>, vector<18x18x8xbf16>
    %66 = vector.extract_strided_slice %65 {offsets = [0, 0, 0], sizes = [16, 16, 8], strides = [1, 1, 1]} : vector<18x18x8xbf16> to vector<16x16x8xbf16>
    %67 = vector.extract_strided_slice %65 {offsets = [0, 1, 0], sizes = [16, 16, 8], strides = [1, 1, 1]} : vector<18x18x8xbf16> to vector<16x16x8xbf16>
    %68 = vector.extract_strided_slice %65 {offsets = [0, 2, 0], sizes = [16, 16, 8], strides = [1, 1, 1]} : vector<18x18x8xbf16> to vector<16x16x8xbf16>
    %69 = vector.extract_strided_slice %65 {offsets = [1, 0, 0], sizes = [16, 16, 8], strides = [1, 1, 1]} : vector<18x18x8xbf16> to vector<16x16x8xbf16>
    %70 = vector.extract_strided_slice %65 {offsets = [1, 1, 0], sizes = [16, 16, 8], strides = [1, 1, 1]} : vector<18x18x8xbf16> to vector<16x16x8xbf16>
    %71 = vector.extract_strided_slice %65 {offsets = [1, 2, 0], sizes = [16, 16, 8], strides = [1, 1, 1]} : vector<18x18x8xbf16> to vector<16x16x8xbf16>
    %72 = vector.extract_strided_slice %65 {offsets = [2, 0, 0], sizes = [16, 16, 8], strides = [1, 1, 1]} : vector<18x18x8xbf16> to vector<16x16x8xbf16>
    %73 = vector.extract_strided_slice %65 {offsets = [2, 1, 0], sizes = [16, 16, 8], strides = [1, 1, 1]} : vector<18x18x8xbf16> to vector<16x16x8xbf16>
    %74 = vector.extract_strided_slice %65 {offsets = [2, 2, 0], sizes = [16, 16, 8], strides = [1, 1, 1]} : vector<18x18x8xbf16> to vector<16x16x8xbf16>
    %75 = tpu.concatenate %66, %67, %68, %69, %70, %71, %72, %73, %74 in 2 : vector<16x16x8xbf16>, vector<16x16x8xbf16>, vector<16x16x8xbf16>, vector<16x16x8xbf16>, vector<16x16x8xbf16>, vector<16x16x8xbf16>, vector<16x16x8xbf16>, vector<16x16x8xbf16>, vector<16x16x8xbf16> -> vector<16x16x72xbf16>
    %76 = vector.shape_cast %75 : vector<16x16x72xbf16> to vector<256x72xbf16>
    %c0_34 = arith.constant 0 : index
    %c0_35 = arith.constant 0 : index
    %77 = vector.load %arg5[%c0_34, %c0_35] : memref<72x8xbf16, #tpu.memory_space<vmem>>, vector<72x8xbf16>
    %cst_36 = arith.constant dense<0.000000e+00> : vector<256x8xf32>
    %78 = tpu.matmul %76, %77, %cst_36 {dimension_numbers = #tpu.dot_dimension_numbers<[1], [0], [0], [1], [0, 0, 1, 1], [], []>} : vector<256x72xbf16>, vector<72x8xbf16>, vector<256x8xf32> -> vector<256x8xf32>
    %c0_37 = arith.constant 0 : index
    %c0_38 = arith.constant 0 : index
    %79 = vector.load %arg6[%c0_37, %c0_38] : memref<1x8xf32, #tpu.memory_space<vmem>>, vector<1x8xf32>
    %80 = vector.broadcast %79 : vector<1x8xf32> to vector<256x8xf32>
    %81 = arith.addf %78, %80 : vector<256x8xf32>
    %cst_39 = arith.constant dense<0.000000e+00> : vector<8xf32>
    %82 = vector.multi_reduction <add>, %61, %cst_39 [0] : vector<256x8xf32> to vector<8xf32>
    %83 = vector.shape_cast %82 : vector<8xf32> to vector<1x8xf32>
    %cst_40 = arith.constant 2.560000e+02 : f32
    %84 = vector.broadcast %cst_40 : f32 to vector<1x8xf32>
    %85 = arith.divf %83, %84 : vector<1x8xf32>
    %cst_41 = arith.constant dense<0.000000e+00> : vector<8xf32>
    %86 = vector.multi_reduction <add>, %81, %cst_41 [0] : vector<256x8xf32> to vector<8xf32>
    %87 = vector.shape_cast %86 : vector<8xf32> to vector<1x8xf32>
    %cst_42 = arith.constant 2.560000e+02 : f32
    %88 = vector.broadcast %cst_42 : f32 to vector<1x8xf32>
    %89 = arith.divf %87, %88 : vector<1x8xf32>
    %cst_43 = arith.constant dense<0xFF800000> : vector<1xf32>
    %90 = vector.multi_reduction <maximumf>, %85, %cst_43 [1] : vector<1x8xf32> to vector<1xf32>
    %91 = vector.shape_cast %90 : vector<1xf32> to vector<1x1xf32>
    %92 = vector.broadcast %91 : vector<1x1xf32> to vector<1x8xf32>
    %93 = arith.subf %85, %92 : vector<1x8xf32>
    %94 = math.exp %93 : vector<1x8xf32>
    %cst_44 = arith.constant dense<0xFF800000> : vector<1xf32>
    %95 = vector.multi_reduction <maximumf>, %89, %cst_44 [1] : vector<1x8xf32> to vector<1xf32>
    %96 = vector.shape_cast %95 : vector<1xf32> to vector<1x1xf32>
    %97 = vector.broadcast %96 : vector<1x1xf32> to vector<1x8xf32>
    %98 = arith.subf %89, %97 : vector<1x8xf32>
    %99 = math.exp %98 : vector<1x8xf32>
    %cst_45 = arith.constant dense<0.000000e+00> : vector<1xf32>
    %100 = vector.multi_reduction <add>, %94, %cst_45 [1] : vector<1x8xf32> to vector<1xf32>
    %101 = vector.shape_cast %100 : vector<1xf32> to vector<1x1xf32>
    %102 = vector.broadcast %101 : vector<1x1xf32> to vector<1x8xf32>
    %103 = arith.divf %94, %102 : vector<1x8xf32>
    %cst_46 = arith.constant dense<0.000000e+00> : vector<1xf32>
    %104 = vector.multi_reduction <add>, %99, %cst_46 [1] : vector<1x8xf32> to vector<1xf32>
    %105 = vector.shape_cast %104 : vector<1xf32> to vector<1x1xf32>
    %106 = vector.broadcast %105 : vector<1x1xf32> to vector<1x8xf32>
    %107 = arith.divf %99, %106 : vector<1x8xf32>
    %108 = vector.broadcast %103 : vector<1x8xf32> to vector<256x8xf32>
    %109 = arith.mulf %81, %108 : vector<256x8xf32>
    %cst_47 = arith.constant dense<0.000000e+00> : vector<256xf32>
    %110 = vector.multi_reduction <add>, %109, %cst_47 [1] : vector<256x8xf32> to vector<256xf32>
    %111 = vector.shape_cast %110 : vector<256xf32> to vector<256x1xf32>
    %112 = vector.broadcast %107 : vector<1x8xf32> to vector<256x8xf32>
    %113 = arith.mulf %61, %112 : vector<256x8xf32>
    %cst_48 = arith.constant dense<0.000000e+00> : vector<256xf32>
    %114 = vector.multi_reduction <add>, %113, %cst_48 [1] : vector<256x8xf32> to vector<256xf32>
    %115 = vector.shape_cast %114 : vector<256xf32> to vector<256x1xf32>
    %116 = arith.addf %111, %115 : vector<256x1xf32>
    %117 = arith.negf %116 : vector<256x1xf32>
    %118 = math.exp %117 : vector<256x1xf32>
    %cst_49 = arith.constant 1.000000e+00 : f32
    %119 = vector.broadcast %cst_49 : f32 to vector<256x1xf32>
    %120 = arith.addf %119, %118 : vector<256x1xf32>
    %121 = arith.divf %119, %120 : vector<256x1xf32>
    %122 = vector.shape_cast %5 : vector<16x16x8xf32> to vector<256x8xf32>
    %123 = vector.broadcast %121 : vector<256x1xf32> to vector<256x8xf32>
    %124 = arith.mulf %122, %123 : vector<256x8xf32>
    %125 = vector.extract_strided_slice %3 {offsets = [0, 0], sizes = [256, 8], strides = [1, 1]} : vector<256x16xbf16> to vector<256x8xbf16>
    %126 = arith.extf %125 : vector<256x8xbf16> to vector<256x8xf32>
    %127 = arith.addf %126, %124 : vector<256x8xf32>
    %128 = arith.truncf %127 : vector<256x8xf32> to vector<256x8xbf16>
    %c0_50 = arith.constant 0 : index
    %c0_51 = arith.constant 0 : index
    %c0_52 = arith.constant 0 : index
    %129 = vector.load %arg9[%c0_50, %c0_51, %c0_52] : memref<1x256x16xbf16, #tpu.memory_space<vmem>>, vector<1x256x8xbf16>
    %130 = vector.shape_cast %129 : vector<1x256x8xbf16> to vector<256x8xbf16>
    %131 = vector.shape_cast %128 : vector<256x8xbf16> to vector<1x256x8xbf16>
    tpu.vector_store %arg9[%c0_50, %c0_51, %c0_52], %131 {strides = array<i32>} : memref<1x256x16xbf16, #tpu.memory_space<vmem>>, vector<1x256x8xbf16>,
    %132 = vector.extract_strided_slice %1 {offsets = [0, 0, 8], sizes = [16, 16, 8], strides = [1, 1, 1]} : vector<16x16x16xbf16> to vector<16x16x8xbf16>
    %133 = arith.extf %132 : vector<16x16x8xbf16> to vector<16x16x8xf32>
    %cst_53 = arith.constant dense<0.000000e+00> : vector<16x8xf32>
    %134 = vector.multi_reduction <add>, %133, %cst_53 [1] : vector<16x16x8xf32> to vector<16x8xf32>
    %cst_54 = arith.constant 1.600000e+01 : f32
    %135 = vector.broadcast %cst_54 : f32 to vector<16x8xf32>
    %136 = arith.divf %134, %135 : vector<16x8xf32>
    %cst_55 = arith.constant dense<0.000000e+00> : vector<16x8xf32>
    %137 = vector.multi_reduction <add>, %133, %cst_55 [0] : vector<16x16x8xf32> to vector<16x8xf32>
    %cst_56 = arith.constant 1.600000e+01 : f32
    %138 = vector.broadcast %cst_56 : f32 to vector<16x8xf32>
    %139 = arith.divf %137, %138 : vector<16x8xf32>
    %140 = tpu.concatenate %136, %139 in 0 : vector<16x8xf32>, vector<16x8xf32> -> vector<32x8xf32>
    %141 = arith.truncf %140 : vector<32x8xf32> to vector<32x8xbf16>
    %c0_57 = arith.constant 0 : index
    %c0_58 = arith.constant 0 : index
    %142 = vector.load %arg3[%c0_57, %c0_58] : memref<8x8xbf16, #tpu.memory_space<vmem>>, vector<8x8xbf16>
    %cst_59 = arith.constant dense<0.000000e+00> : vector<32x8xf32>
    %143 = tpu.matmul %141, %142, %cst_59 {dimension_numbers = #tpu.dot_dimension_numbers<[1], [0], [0], [1], [0, 0, 1, 1], [], []>} : vector<32x8xbf16>, vector<8x8xbf16>, vector<32x8xf32> -> vector<32x8xf32>
    %c0_60 = arith.constant 0 : index
    %c0_61 = arith.constant 0 : index
    %144 = vector.load %arg4[%c0_60, %c0_61] : memref<1x8xf32, #tpu.memory_space<vmem>>, vector<1x8xf32>
    %145 = vector.broadcast %144 : vector<1x8xf32> to vector<32x8xf32>
    %146 = arith.addf %143, %145 : vector<32x8xf32>
    %147 = vector.extract_strided_slice %146 {offsets = [0, 0], sizes = [16, 8], strides = [1, 1]} : vector<32x8xf32> to vector<16x8xf32>
    %148 = arith.negf %147 : vector<16x8xf32>
    %149 = math.exp %148 : vector<16x8xf32>
    %cst_62 = arith.constant 1.000000e+00 : f32
    %150 = vector.broadcast %cst_62 : f32 to vector<16x8xf32>
    %151 = arith.addf %150, %149 : vector<16x8xf32>
    %152 = arith.divf %150, %151 : vector<16x8xf32>
    %153 = vector.extract_strided_slice %146 {offsets = [16, 0], sizes = [16, 8], strides = [1, 1]} : vector<32x8xf32> to vector<16x8xf32>
    %154 = arith.negf %153 : vector<16x8xf32>
    %155 = math.exp %154 : vector<16x8xf32>
    %cst_63 = arith.constant 1.000000e+00 : f32
    %156 = vector.broadcast %cst_63 : f32 to vector<16x8xf32>
    %157 = arith.addf %156, %155 : vector<16x8xf32>
    %158 = arith.divf %156, %157 : vector<16x8xf32>
    %159 = vector.shape_cast %152 : vector<16x8xf32> to vector<16x1x8xf32>
    %160 = vector.broadcast %159 : vector<16x1x8xf32> to vector<16x16x8xf32>
    %161 = arith.mulf %133, %160 : vector<16x16x8xf32>
    %162 = vector.shape_cast %158 : vector<16x8xf32> to vector<1x16x8xf32>
    %163 = vector.broadcast %162 : vector<1x16x8xf32> to vector<16x16x8xf32>
    %164 = arith.mulf %161, %163 : vector<16x16x8xf32>
    %165 = vector.shape_cast %164 : vector<16x16x8xf32> to vector<256x8xf32>
    %cst_64 = arith.constant dense<0.000000e+00> : vector<8xf32>
    %166 = vector.multi_reduction <add>, %165, %cst_64 [0] : vector<256x8xf32> to vector<8xf32>
    %167 = vector.shape_cast %166 : vector<8xf32> to vector<1x8xf32>
    %cst_65 = arith.constant 2.560000e+02 : f32
    %168 = vector.broadcast %cst_65 : f32 to vector<1x8xf32>
    %169 = arith.divf %167, %168 : vector<1x8xf32>
    %170 = vector.broadcast %169 : vector<1x8xf32> to vector<256x8xf32>
    %171 = arith.subf %165, %170 : vector<256x8xf32>
    %172 = arith.mulf %171, %171 : vector<256x8xf32>
    %cst_66 = arith.constant dense<0.000000e+00> : vector<8xf32>
    %173 = vector.multi_reduction <add>, %172, %cst_66 [0] : vector<256x8xf32> to vector<8xf32>
    %174 = vector.shape_cast %173 : vector<8xf32> to vector<1x8xf32>
    %cst_67 = arith.constant 2.560000e+02 : f32
    %175 = vector.broadcast %cst_67 : f32 to vector<1x8xf32>
    %176 = arith.divf %174, %175 : vector<1x8xf32>
    %177 = vector.broadcast %169 : vector<1x8xf32> to vector<256x8xf32>
    %178 = arith.subf %165, %177 : vector<256x8xf32>
    %cst_68 = arith.constant 9.99999974E-6 : f32
    %179 = vector.broadcast %cst_68 : f32 to vector<1x8xf32>
    %180 = arith.addf %176, %179 : vector<1x8xf32>
    %181 = math.rsqrt %180 : vector<1x8xf32>
    %182 = vector.broadcast %181 : vector<1x8xf32> to vector<256x8xf32>
    %183 = arith.mulf %178, %182 : vector<256x8xf32>
    %c0_69 = arith.constant 0 : index
    %c0_70 = arith.constant 0 : index
    %184 = vector.load %arg7[%c0_69, %c0_70] : memref<1x8xf32, #tpu.memory_space<vmem>>, vector<1x8xf32>
    %185 = vector.broadcast %184 : vector<1x8xf32> to vector<256x8xf32>
    %186 = arith.mulf %183, %185 : vector<256x8xf32>
    %c0_71 = arith.constant 0 : index
    %c0_72 = arith.constant 0 : index
    %187 = vector.load %arg8[%c0_71, %c0_72] : memref<1x8xf32, #tpu.memory_space<vmem>>, vector<1x8xf32>
    %188 = vector.broadcast %187 : vector<1x8xf32> to vector<256x8xf32>
    %189 = arith.addf %186, %188 : vector<256x8xf32>
    %cst_73 = arith.constant 0.000000e+00 : bf16
    %190 = vector.broadcast %cst_73 : bf16 to vector<18x18x8xbf16>
    %c0_74 = arith.constant 0 : index
    %c0_75 = arith.constant 0 : index
    %c0_76 = arith.constant 0 : index
    %191 = vector.load %arg10[%c0_74, %c0_75, %c0_76] : memref<18x18x8xbf16, #tpu.memory_space<vmem>>, vector<18x18x8xbf16>
    tpu.vector_store %arg10[%c0_74, %c0_75, %c0_76], %190 {strides = array<i32>} : memref<18x18x8xbf16, #tpu.memory_space<vmem>>, vector<18x18x8xbf16>,
    %c1_77 = arith.constant 1 : index
    %c1_78 = arith.constant 1 : index
    %c0_79 = arith.constant 0 : index
    %192 = vector.load %arg10[%c1_77, %c1_78, %c0_79] : memref<18x18x8xbf16, #tpu.memory_space<vmem>>, vector<16x16x8xbf16>
    tpu.vector_store %arg10[%c1_77, %c1_78, %c0_79], %132 {strides = array<i32>} : memref<18x18x8xbf16, #tpu.memory_space<vmem>>, vector<16x16x8xbf16>,
    %c0_80 = arith.constant 0 : index
    %c0_81 = arith.constant 0 : index
    %c0_82 = arith.constant 0 : index
    %193 = vector.load %arg10[%c0_80, %c0_81, %c0_82] : memref<18x18x8xbf16, #tpu.memory_space<vmem>>, vector<18x18x8xbf16>
    %194 = vector.extract_strided_slice %193 {offsets = [0, 0, 0], sizes = [16, 16, 8], strides = [1, 1, 1]} : vector<18x18x8xbf16> to vector<16x16x8xbf16>
    %195 = vector.extract_strided_slice %193 {offsets = [0, 1, 0], sizes = [16, 16, 8], strides = [1, 1, 1]} : vector<18x18x8xbf16> to vector<16x16x8xbf16>
    %196 = vector.extract_strided_slice %193 {offsets = [0, 2, 0], sizes = [16, 16, 8], strides = [1, 1, 1]} : vector<18x18x8xbf16> to vector<16x16x8xbf16>
    %197 = vector.extract_strided_slice %193 {offsets = [1, 0, 0], sizes = [16, 16, 8], strides = [1, 1, 1]} : vector<18x18x8xbf16> to vector<16x16x8xbf16>
    %198 = vector.extract_strided_slice %193 {offsets = [1, 1, 0], sizes = [16, 16, 8], strides = [1, 1, 1]} : vector<18x18x8xbf16> to vector<16x16x8xbf16>
    %199 = vector.extract_strided_slice %193 {offsets = [1, 2, 0], sizes = [16, 16, 8], strides = [1, 1, 1]} : vector<18x18x8xbf16> to vector<16x16x8xbf16>
    %200 = vector.extract_strided_slice %193 {offsets = [2, 0, 0], sizes = [16, 16, 8], strides = [1, 1, 1]} : vector<18x18x8xbf16> to vector<16x16x8xbf16>
    %201 = vector.extract_strided_slice %193 {offsets = [2, 1, 0], sizes = [16, 16, 8], strides = [1, 1, 1]} : vector<18x18x8xbf16> to vector<16x16x8xbf16>
    %202 = vector.extract_strided_slice %193 {offsets = [2, 2, 0], sizes = [16, 16, 8], strides = [1, 1, 1]} : vector<18x18x8xbf16> to vector<16x16x8xbf16>
    %203 = tpu.concatenate %194, %195, %196, %197, %198, %199, %200, %201, %202 in 2 : vector<16x16x8xbf16>, vector<16x16x8xbf16>, vector<16x16x8xbf16>, vector<16x16x8xbf16>, vector<16x16x8xbf16>, vector<16x16x8xbf16>, vector<16x16x8xbf16>, vector<16x16x8xbf16>, vector<16x16x8xbf16> -> vector<16x16x72xbf16>
    %204 = vector.shape_cast %203 : vector<16x16x72xbf16> to vector<256x72xbf16>
    %c0_83 = arith.constant 0 : index
    %c0_84 = arith.constant 0 : index
    %205 = vector.load %arg5[%c0_83, %c0_84] : memref<72x8xbf16, #tpu.memory_space<vmem>>, vector<72x8xbf16>
    %cst_85 = arith.constant dense<0.000000e+00> : vector<256x8xf32>
    %206 = tpu.matmul %204, %205, %cst_85 {dimension_numbers = #tpu.dot_dimension_numbers<[1], [0], [0], [1], [0, 0, 1, 1], [], []>} : vector<256x72xbf16>, vector<72x8xbf16>, vector<256x8xf32> -> vector<256x8xf32>
    %c0_86 = arith.constant 0 : index
    %c0_87 = arith.constant 0 : index
    %207 = vector.load %arg6[%c0_86, %c0_87] : memref<1x8xf32, #tpu.memory_space<vmem>>, vector<1x8xf32>
    %208 = vector.broadcast %207 : vector<1x8xf32> to vector<256x8xf32>
    %209 = arith.addf %206, %208 : vector<256x8xf32>
    %cst_88 = arith.constant dense<0.000000e+00> : vector<8xf32>
    %210 = vector.multi_reduction <add>, %189, %cst_88 [0] : vector<256x8xf32> to vector<8xf32>
    %211 = vector.shape_cast %210 : vector<8xf32> to vector<1x8xf32>
    %cst_89 = arith.constant 2.560000e+02 : f32
    %212 = vector.broadcast %cst_89 : f32 to vector<1x8xf32>
    %213 = arith.divf %211, %212 : vector<1x8xf32>
    %cst_90 = arith.constant dense<0.000000e+00> : vector<8xf32>
    %214 = vector.multi_reduction <add>, %209, %cst_90 [0] : vector<256x8xf32> to vector<8xf32>
    %215 = vector.shape_cast %214 : vector<8xf32> to vector<1x8xf32>
    %cst_91 = arith.constant 2.560000e+02 : f32
    %216 = vector.broadcast %cst_91 : f32 to vector<1x8xf32>
    %217 = arith.divf %215, %216 : vector<1x8xf32>
    %cst_92 = arith.constant dense<0xFF800000> : vector<1xf32>
    %218 = vector.multi_reduction <maximumf>, %213, %cst_92 [1] : vector<1x8xf32> to vector<1xf32>
    %219 = vector.shape_cast %218 : vector<1xf32> to vector<1x1xf32>
    %220 = vector.broadcast %219 : vector<1x1xf32> to vector<1x8xf32>
    %221 = arith.subf %213, %220 : vector<1x8xf32>
    %222 = math.exp %221 : vector<1x8xf32>
    %cst_93 = arith.constant dense<0xFF800000> : vector<1xf32>
    %223 = vector.multi_reduction <maximumf>, %217, %cst_93 [1] : vector<1x8xf32> to vector<1xf32>
    %224 = vector.shape_cast %223 : vector<1xf32> to vector<1x1xf32>
    %225 = vector.broadcast %224 : vector<1x1xf32> to vector<1x8xf32>
    %226 = arith.subf %217, %225 : vector<1x8xf32>
    %227 = math.exp %226 : vector<1x8xf32>
    %cst_94 = arith.constant dense<0.000000e+00> : vector<1xf32>
    %228 = vector.multi_reduction <add>, %222, %cst_94 [1] : vector<1x8xf32> to vector<1xf32>
    %229 = vector.shape_cast %228 : vector<1xf32> to vector<1x1xf32>
    %230 = vector.broadcast %229 : vector<1x1xf32> to vector<1x8xf32>
    %231 = arith.divf %222, %230 : vector<1x8xf32>
    %cst_95 = arith.constant dense<0.000000e+00> : vector<1xf32>
    %232 = vector.multi_reduction <add>, %227, %cst_95 [1] : vector<1x8xf32> to vector<1xf32>
    %233 = vector.shape_cast %232 : vector<1xf32> to vector<1x1xf32>
    %234 = vector.broadcast %233 : vector<1x1xf32> to vector<1x8xf32>
    %235 = arith.divf %227, %234 : vector<1x8xf32>
    %236 = vector.broadcast %231 : vector<1x8xf32> to vector<256x8xf32>
    %237 = arith.mulf %209, %236 : vector<256x8xf32>
    %cst_96 = arith.constant dense<0.000000e+00> : vector<256xf32>
    %238 = vector.multi_reduction <add>, %237, %cst_96 [1] : vector<256x8xf32> to vector<256xf32>
    %239 = vector.shape_cast %238 : vector<256xf32> to vector<256x1xf32>
    %240 = vector.broadcast %235 : vector<1x8xf32> to vector<256x8xf32>
    %241 = arith.mulf %189, %240 : vector<256x8xf32>
    %cst_97 = arith.constant dense<0.000000e+00> : vector<256xf32>
    %242 = vector.multi_reduction <add>, %241, %cst_97 [1] : vector<256x8xf32> to vector<256xf32>
    %243 = vector.shape_cast %242 : vector<256xf32> to vector<256x1xf32>
    %244 = arith.addf %239, %243 : vector<256x1xf32>
    %245 = arith.negf %244 : vector<256x1xf32>
    %246 = math.exp %245 : vector<256x1xf32>
    %cst_98 = arith.constant 1.000000e+00 : f32
    %247 = vector.broadcast %cst_98 : f32 to vector<256x1xf32>
    %248 = arith.addf %247, %246 : vector<256x1xf32>
    %249 = arith.divf %247, %248 : vector<256x1xf32>
    %250 = vector.shape_cast %133 : vector<16x16x8xf32> to vector<256x8xf32>
    %251 = vector.broadcast %249 : vector<256x1xf32> to vector<256x8xf32>
    %252 = arith.mulf %250, %251 : vector<256x8xf32>
    %253 = vector.extract_strided_slice %3 {offsets = [0, 8], sizes = [256, 8], strides = [1, 1]} : vector<256x16xbf16> to vector<256x8xbf16>
    %254 = arith.extf %253 : vector<256x8xbf16> to vector<256x8xf32>
    %255 = arith.addf %254, %252 : vector<256x8xf32>
    %256 = arith.truncf %255 : vector<256x8xf32> to vector<256x8xbf16>
    %c0_99 = arith.constant 0 : index
    %c0_100 = arith.constant 0 : index
    %c8 = arith.constant 8 : index
    %257 = vector.load %arg9[%c0_99, %c0_100, %c8] : memref<1x256x16xbf16, #tpu.memory_space<vmem>>, vector<1x256x8xbf16>
    %258 = vector.shape_cast %257 : vector<1x256x8xbf16> to vector<256x8xbf16>
    %259 = vector.shape_cast %256 : vector<256x8xbf16> to vector<1x256x8xbf16>
    tpu.vector_store %arg9[%c0_99, %c0_100, %c8], %259 {strides = array<i32>} : memref<1x256x16xbf16, #tpu.memory_space<vmem>>, vector<1x256x8xbf16>,
    return
  }
  func.func @transform_0(%arg0: i32) -> (i32, i32, i32, i32) {
    %c0_i32 = arith.constant 0 : i32
    %c0_i32_0 = arith.constant 0 : i32
    %c0_i32_1 = arith.constant 0 : i32
    %c0_i32_2 = arith.constant 0 : i32
    return %arg0, %c0_i32, %c0_i32_0, %c0_i32_1 : i32, i32, i32, i32
  }
  func.func @transform_1(%arg0: i32) -> (i32, i32, i32) {
    %c0_i32 = arith.constant 0 : i32
    %c0_i32_0 = arith.constant 0 : i32
    %c0_i32_1 = arith.constant 0 : i32
    return %arg0, %c0_i32, %c0_i32_0 : i32, i32, i32
  }
  func.func @transform_2(%arg0: i32) -> (i32, i32) {
    %c0_i32 = arith.constant 0 : i32
    %c0_i32_0 = arith.constant 0 : i32
    %c0_i32_1 = arith.constant 0 : i32
    return %c0_i32, %c0_i32_0 : i32, i32
  }
  func.func @transform_3(%arg0: i32) -> (i32, i32) {
    %c0_i32 = arith.constant 0 : i32
    %c0_i32_0 = arith.constant 0 : i32
    %c0_i32_1 = arith.constant 0 : i32
    return %c0_i32, %c0_i32_0 : i32, i32
  }
  func.func @transform_4(%arg0: i32) -> (i32, i32) {
    %c0_i32 = arith.constant 0 : i32
    %c0_i32_0 = arith.constant 0 : i32
    %c0_i32_1 = arith.constant 0 : i32
    return %c0_i32, %c0_i32_0 : i32, i32
  }
  func.func @transform_5(%arg0: i32) -> (i32, i32) {
    %c0_i32 = arith.constant 0 : i32
    %c0_i32_0 = arith.constant 0 : i32
    %c0_i32_1 = arith.constant 0 : i32
    return %c0_i32, %c0_i32_0 : i32, i32
  }
  func.func @transform_6(%arg0: i32) -> (i32, i32) {
    %c0_i32 = arith.constant 0 : i32
    %c0_i32_0 = arith.constant 0 : i32
    %c0_i32_1 = arith.constant 0 : i32
    return %c0_i32, %c0_i32_0 : i32, i32
  }
  func.func @transform_7(%arg0: i32) -> (i32, i32) {
    %c0_i32 = arith.constant 0 : i32
    %c0_i32_0 = arith.constant 0 : i32
    %c0_i32_1 = arith.constant 0 : i32
    return %c0_i32, %c0_i32_0 : i32, i32
  }
  func.func @transform_8(%arg0: i32) -> (i32, i32, i32) {
    %c0_i32 = arith.constant 0 : i32
    %c0_i32_0 = arith.constant 0 : i32
    %c0_i32_1 = arith.constant 0 : i32
    return %arg0, %c0_i32, %c0_i32_0 : i32, i32, i32
  }
}

module attributes {stable_mosaic.version = 11 : i64} {
  func.func @_mm_affine_res_kernel(%arg0: i32, %arg1: i32, %arg2: memref<512x32xbf16, #tpu.memory_space<vmem>>, %arg3: memref<32x32xbf16, #tpu.memory_space<vmem>>, %arg4: memref<1x32xf32, #tpu.memory_space<vmem>>, %arg5: memref<1x32xf32, #tpu.memory_space<vmem>>, %arg6: memref<512x32xbf16, #tpu.memory_space<vmem>>, %arg7: memref<512x32xf32, #tpu.memory_space<vmem>>) attributes {dimension_semantics = [#tpu.dimension_semantics<parallel>, #tpu.dimension_semantics<parallel>], iteration_bounds = array<i64: 1, 1>, scalar_prefetch = 0 : i64, scratch_operands = 0 : i64, tpu.core_type = #tpu.core_type<tc>, window_params = [{transform_indices = @transform_0, window_bounds = array<i64: 512, 32>}, {transform_indices = @transform_1, window_bounds = array<i64: 32, 32>}, {transform_indices = @transform_2, window_bounds = array<i64: 1, 32>}, {transform_indices = @transform_3, window_bounds = array<i64: 1, 32>}, {transform_indices = @transform_4, window_bounds = array<i64: 512, 32>}, {transform_indices = @transform_5, window_bounds = array<i64: 512, 32>}]} {
    %c0 = arith.constant 0 : index
    %c0_0 = arith.constant 0 : index
    %0 = vector.load %arg2[%c0, %c0_0] : memref<512x32xbf16, #tpu.memory_space<vmem>>, vector<512x32xbf16>
    %c0_1 = arith.constant 0 : index
    %c0_2 = arith.constant 0 : index
    %1 = vector.load %arg3[%c0_1, %c0_2] : memref<32x32xbf16, #tpu.memory_space<vmem>>, vector<32x32xbf16>
    %cst = arith.constant dense<0.000000e+00> : vector<512x32xf32>
    %2 = tpu.matmul %0, %1, %cst {dimension_numbers = #tpu.dot_dimension_numbers<[1], [0], [0], [1], [0, 0, 1, 1], [], []>} : vector<512x32xbf16>, vector<32x32xbf16>, vector<512x32xf32> -> vector<512x32xf32>
    %c0_3 = arith.constant 0 : index
    %c0_4 = arith.constant 0 : index
    %3 = vector.load %arg4[%c0_3, %c0_4] : memref<1x32xf32, #tpu.memory_space<vmem>>, vector<1x32xf32>
    %4 = vector.broadcast %3 : vector<1x32xf32> to vector<512x32xf32>
    %5 = arith.mulf %2, %4 : vector<512x32xf32>
    %c0_5 = arith.constant 0 : index
    %c0_6 = arith.constant 0 : index
    %6 = vector.load %arg5[%c0_5, %c0_6] : memref<1x32xf32, #tpu.memory_space<vmem>>, vector<1x32xf32>
    %7 = vector.broadcast %6 : vector<1x32xf32> to vector<512x32xf32>
    %8 = arith.addf %5, %7 : vector<512x32xf32>
    %cst_7 = arith.constant 0.000000e+00 : f32
    %9 = vector.broadcast %cst_7 : f32 to vector<512x32xf32>
    %10 = arith.maximumf %8, %9 : vector<512x32xf32>
    %c0_8 = arith.constant 0 : index
    %c0_9 = arith.constant 0 : index
    %11 = vector.load %arg6[%c0_8, %c0_9] : memref<512x32xbf16, #tpu.memory_space<vmem>>, vector<512x32xbf16>
    %12 = arith.extf %11 : vector<512x32xbf16> to vector<512x32xf32>
    %13 = arith.addf %10, %12 : vector<512x32xf32>
    %c0_10 = arith.constant 0 : index
    %c0_11 = arith.constant 0 : index
    %14 = vector.load %arg7[%c0_10, %c0_11] : memref<512x32xf32, #tpu.memory_space<vmem>>, vector<512x32xf32>
    tpu.vector_store %arg7[%c0_10, %c0_11], %13 {strides = array<i32>} : memref<512x32xf32, #tpu.memory_space<vmem>>, vector<512x32xf32>,
    return
  }
  func.func @transform_0(%arg0: i32, %arg1: i32) -> (i32, i32) {
    %c0_i32 = arith.constant 0 : i32
    %c0_i32_0 = arith.constant 0 : i32
    return %arg0, %c0_i32 : i32, i32
  }
  func.func @transform_1(%arg0: i32, %arg1: i32) -> (i32, i32) {
    %c0_i32 = arith.constant 0 : i32
    %c0_i32_0 = arith.constant 0 : i32
    return %c0_i32, %arg1 : i32, i32
  }
  func.func @transform_2(%arg0: i32, %arg1: i32) -> (i32, i32) {
    %c0_i32 = arith.constant 0 : i32
    %c0_i32_0 = arith.constant 0 : i32
    return %c0_i32, %arg1 : i32, i32
  }
  func.func @transform_3(%arg0: i32, %arg1: i32) -> (i32, i32) {
    %c0_i32 = arith.constant 0 : i32
    %c0_i32_0 = arith.constant 0 : i32
    return %c0_i32, %arg1 : i32, i32
  }
  func.func @transform_4(%arg0: i32, %arg1: i32) -> (i32, i32) {
    %c0_i32 = arith.constant 0 : i32
    return %arg0, %arg1 : i32, i32
  }
  func.func @transform_5(%arg0: i32, %arg1: i32) -> (i32, i32) {
    %c0_i32 = arith.constant 0 : i32
    return %arg0, %arg1 : i32, i32
  }
}

</mosaic_0001>

<llo_original>
// kernel: _lambda_.4
$region0: #{_lambda_.4}
  #allocation0 [shape = 'u32[]', space=smem, size = 0x4, offset = 0x4, fixed_abs, tag = 'smem constant byte address 0x4 - core index']
  #allocation1 [shape = 'u32[144,128]{1,0:T(1,128)}', space=vmem, size = 0x12000, scoped, tag = 'internal scratch']
  %s0 = inlined_call_operand.vmem [shape: bf16[512,32], index: 0, kind: input, shape index: {}]
  %s1 = inlined_call_operand.vmem [shape: bf16[32,32], index: 1, kind: input, shape index: {}]
  %s2 = inlined_call_operand.vmem [shape: f32[1,32], index: 2, kind: input, shape index: {}]
  %s3 = inlined_call_operand.vmem [shape: f32[1,32], index: 3, kind: input, shape index: {}]
  %s4 = inlined_call_operand.vmem [shape: bf16[512,32], index: 4, kind: output, shape index: {}]
  %s5 = sld [smem:[#allocation0]]
  $region26: #{_lambda_.4} parent=0
    _
  %s7 = ssub.s32 1, %s5
  %s8 = scalar_select 0, %s7, %s5
  // Predicated region
  $region2: #{_lambda_.4} parent=0 // pred_check
    _
  $region3: #{_lambda_.4} parent=0 // pred_check_branch
    %10 = sbr.rel (0) target = $region5
  $region4: #{_lambda_.4} parent=0 // pred_region
    _
  $region5: #{_lambda_.4} parent=0 // pred_fallthru
    _
  // Predicated region
  $region6: #{_lambda_.4} parent=0 // pred_check
    _
  $region7: #{_lambda_.4} parent=0 // pred_check_branch
    %12 = sbr.rel (0) target = $region9
  $region8: #{_lambda_.4} parent=0 // pred_region
    _
  $region9: #{_lambda_.4} parent=0 // pred_fallthru
    _
  // Predicated region
  $region10: #{_lambda_.4} parent=0 // pred_check
    _
  $region11: #{_lambda_.4} parent=0 // pred_check_branch
    %14 = sbr.rel (0) target = $region13
  $region12: #{_lambda_.4} parent=0 // pred_region
    _
  $region13: #{_lambda_.4} parent=0 // pred_fallthru
    _
  // Predicated region
  $region14: #{_lambda_.4} parent=0 // pred_check
    _
  $region15: #{_lambda_.4} parent=0 // pred_check_branch
    %16 = sbr.rel (0) target = $region17
  $region16: #{_lambda_.4} parent=0 // pred_region
    _
  $region17: #{_lambda_.4} parent=0 // pred_fallthru
    _
  %v18 = vld [vmem:[%s0] sm:$0xf]
  %v19 = vld [vmem:[%s0 + $0x4] sm:$0xf]
  %v20 = vld [vmem:[%s0 + $0x8] sm:$0xf]
  %v21 = vld [vmem:[%s0 + $0xc] sm:$0xf]
  %v22 = vld [vmem:[%s0 + $0x10] sm:$0xf]
  %v23 = vld [vmem:[%s0 + $0x14] sm:$0xf]
  %v24 = vld [vmem:[%s0 + $0x18] sm:$0xf]
  %v25 = vld [vmem:[%s0 + $0x1c] sm:$0xf]
  %v26 = vld [vmem:[%s0 + $0x20] sm:$0xf]
  %v27 = vld [vmem:[%s0 + $0x24] sm:$0xf]
  %v28 = vld [vmem:[%s0 + $0x28] sm:$0xf]
  %v29 = vld [vmem:[%s0 + $0x2c] sm:$0xf]
  %v30 = vld [vmem:[%s0 + $0x30] sm:$0xf]
  %v31 = vld [vmem:[%s0 + $0x34] sm:$0xf]
  %v32 = vld [vmem:[%s0 + $0x38] sm:$0xf]
  %v33 = vld [vmem:[%s0 + $0x3c] sm:$0xf]
  %v34 = vld [vmem:[%s0 + $0x40] sm:$0xf]
  %v35 = vld [vmem:[%s0 + $0x44] sm:$0xf]
  %v36 = vld [vmem:[%s0 + $0x48] sm:$0xf]
  %v37 = vld [vmem:[%s0 + $0x4c] sm:$0xf]
  %v38 = vld [vmem:[%s0 + $0x50] sm:$0xf]
  %v39 = vld [vmem:[%s0 + $0x54] sm:$0xf]
  %v40 = vld [vmem:[%s0 + $0x58] sm:$0xf]
  %v41 = vld [vmem:[%s0 + $0x5c] sm:$0xf]
  %v42 = vld [vmem:[%s0 + $0x60] sm:$0xf]
  %v43 = vld [vmem:[%s0 + $0x64] sm:$0xf]
  %v44 = vld [vmem:[%s0 + $0x68] sm:$0xf]
  %v45 = vld [vmem:[%s0 + $0x6c] sm:$0xf]
  %v46 = vld [vmem:[%s0 + $0x70] sm:$0xf]
  %v47 = vld [vmem:[%s0 + $0x74] sm:$0xf]
  %v48 = vld [vmem:[%s0 + $0x78] sm:$0xf]
  %v49 = vld [vmem:[%s0 + $0x7c] sm:$0xf]
  %v50 = vld [vmem:[%s0 + $0x80] sm:$0xf]
  %v51 = vld [vmem:[%s0 + $0x84] sm:$0xf]
  %v52 = vld [vmem:[%s0 + $0x88] sm:$0xf]
  %v53 = vld [vmem:[%s0 + $0x8c] sm:$0xf]
  %v54 = vld [vmem:[%s0 + $0x90] sm:$0xf]
  %v55 = vld [vmem:[%s0 + $0x94] sm:$0xf]
  %v56 = vld [vmem:[%s0 + $0x98] sm:$0xf]
  %v57 = vld [vmem:[%s0 + $0x9c] sm:$0xf]
  %v58 = vld [vmem:[%s0 + $0xa0] sm:$0xf]
  %v59 = vld [vmem:[%s0 + $0xa4] sm:$0xf]
  %v60 = vld [vmem:[%s0 + $0xa8] sm:$0xf]
  %v61 = vld [vmem:[%s0 + $0xac] sm:$0xf]
  %v62 = vld [vmem:[%s0 + $0xb0] sm:$0xf]
  %v63 = vld [vmem:[%s0 + $0xb4] sm:$0xf]
  %v64 = vld [vmem:[%s0 + $0xb8] sm:$0xf]
  %v65 = vld [vmem:[%s0 + $0xbc] sm:$0xf]
  %v66 = vld [vmem:[%s0 + $0xc0] sm:$0xf]
  %v67 = vld [vmem:[%s0 + $0xc4] sm:$0xf]
  %v68 = vld [vmem:[%s0 + $0xc8] sm:$0xf]
  %v69 = vld [vmem:[%s0 + $0xcc] sm:$0xf]
  %v70 = vld [vmem:[%s0 + $0xd0] sm:$0xf]
  %v71 = vld [vmem:[%s0 + $0xd4] sm:$0xf]
  %v72 = vld [vmem:[%s0 + $0xd8] sm:$0xf]
  %v73 = vld [vmem:[%s0 + $0xdc] sm:$0xf]
  %v74 = vld [vmem:[%s0 + $0xe0] sm:$0xf]
  %v75 = vld [vmem:[%s0 + $0xe4] sm:$0xf]
  %v76 = vld [vmem:[%s0 + $0xe8] sm:$0xf]
  %v77 = vld [vmem:[%s0 + $0xec] sm:$0xf]
  %v78 = vld [vmem:[%s0 + $0xf0] sm:$0xf]
  %v79 = vld [vmem:[%s0 + $0xf4] sm:$0xf]
  %v80 = vld [vmem:[%s0 + $0xf8] sm:$0xf]
  %v81 = vld [vmem:[%s0 + $0xfc] sm:$0xf]
  %v82 = vld [vmem:[%s1] sm:$0xf]
  %v83 = vld [vmem:[%s1 + $0x4] sm:$0xf]
  %v84 = vld [vmem:[%s1 + $0x8] sm:$0xf]
  %v85 = vld [vmem:[%s1 + $0xc] sm:$0xf]
  %v150 = vunpack.c.l.b16 %v18
  %v151 = vunpack.c.l.b16 %v19
  %v152 = vunpack.c.l.b16 %v20
  %v153 = vunpack.c.l.b16 %v21
  %v154 = vunpack.c.l.b16 %v22
  %v155 = vunpack.c.l.b16 %v23
  %v156 = vunpack.c.l.b16 %v24
  %v157 = vunpack.c.l.b16 %v25
  %v158 = vunpack.c.l.b16 %v26
  %v159 = vunpack.c.l.b16 %v27
  %v160 = vunpack.c.l.b16 %v28
  %v161 = vunpack.c.l.b16 %v29
  %v162 = vunpack.c.l.b16 %v30
  %v163 = vunpack.c.l.b16 %v31
  %v164 = vunpack.c.l.b16 %v32
  %v165 = vunpack.c.l.b16 %v33
  %v166 = vunpack.c.l.b16 %v34
  %v167 = vunpack.c.l.b16 %v35
  %v168 = vunpack.c.l.b16 %v36
  %v169 = vunpack.c.l.b16 %v37
  %v170 = vunpack.c.l.b16 %v38
  %v171 = vunpack.c.l.b16 %v39
  %v172 = vunpack.c.l.b16 %v40
  %v173 = vunpack.c.l.b16 %v41
  %v174 = vunpack.c.l.b16 %v42
  %v175 = vunpack.c.l.b16 %v43
  %v176 = vunpack.c.l.b16 %v44
  %v177 = vunpack.c.l.b16 %v45
  %v178 = vunpack.c.l.b16 %v46
  %v179 = vunpack.c.l.b16 %v47
  %v180 = vunpack.c.l.b16 %v48
  %v181 = vunpack.c.l.b16 %v49
  %v182 = vunpack.c.l.b16 %v50
  %v183 = vunpack.c.l.b16 %v51
  %v184 = vunpack.c.l.b16 %v52
  %v185 = vunpack.c.l.b16 %v53
  %v186 = vunpack.c.l.b16 %v54
  %v187 = vunpack.c.l.b16 %v55
  %v188 = vunpack.c.l.b16 %v56
  %v189 = vunpack.c.l.b16 %v57
  %v190 = vunpack.c.l.b16 %v58
  %v191 = vunpack.c.l.b16 %v59
  %v192 = vunpack.c.l.b16 %v60
  %v193 = vunpack.c.l.b16 %v61
  %v194 = vunpack.c.l.b16 %v62
  %v195 = vunpack.c.l.b16 %v63
  %v196 = vunpack.c.l.b16 %v64
  %v197 = vunpack.c.l.b16 %v65
  %v198 = vunpack.c.l.b16 %v66
  %v199 = vunpack.c.l.b16 %v67
  %v200 = vunpack.c.l.b16 %v68
  %v201 = vunpack.c.l.b16 %v69
  %v202 = vunpack.c.l.b16 %v70
  %v203 = vunpack.c.l.b16 %v71
  %v204 = vunpack.c.l.b16 %v72
  %v205 = vunpack.c.l.b16 %v73
  %v206 = vunpack.c.l.b16 %v74
  %v207 = vunpack.c.l.b16 %v75
  %v208 = vunpack.c.l.b16 %v76
  %v209 = vunpack.c.l.b16 %v77
  %v210 = vunpack.c.l.b16 %v78
  %v211 = vunpack.c.l.b16 %v79
  %v212 = vunpack.c.l.b16 %v80
  %v213 = vunpack.c.l.b16 %v81
  %v214 = vpack.c.b16 %v151, %v150
  %v215 = vpack.c.b16 %v153, %v152
  %v216 = vpack.c.b16 %v155, %v154
  %v217 = vpack.c.b16 %v157, %v156
  %v218 = vpack.c.b16 %v159, %v158
  %v219 = vpack.c.b16 %v161, %v160
  %v220 = vpack.c.b16 %v163, %v162
  %v221 = vpack.c.b16 %v165, %v164
  %v222 = vpack.c.b16 %v167, %v166
  %v223 = vpack.c.b16 %v169, %v168
  %v224 = vpack.c.b16 %v171, %v170
  %v225 = vpack.c.b16 %v173, %v172
  %v226 = vpack.c.b16 %v175, %v174
  %v227 = vpack.c.b16 %v177, %v176
  %v228 = vpack.c.b16 %v179, %v178
  %v229 = vpack.c.b16 %v181, %v180
  %v230 = vpack.c.b16 %v183, %v182
  %v231 = vpack.c.b16 %v185, %v184
  %v232 = vpack.c.b16 %v187, %v186
  %v233 = vpack.c.b16 %v189, %v188
  %v234 = vpack.c.b16 %v191, %v190
  %v235 = vpack.c.b16 %v193, %v192
  %v236 = vpack.c.b16 %v195, %v194
  %v237 = vpack.c.b16 %v197, %v196
  %v238 = vpack.c.b16 %v199, %v198
  %v239 = vpack.c.b16 %v201, %v200
  %v240 = vpack.c.b16 %v203, %v202
  %v241 = vpack.c.b16 %v205, %v204
  %v242 = vpack.c.b16 %v207, %v206
  %v243 = vpack.c.b16 %v209, %v208
  %v244 = vpack.c.b16 %v211, %v210
  %v245 = vpack.c.b16 %v213, %v212
  %v250 = vunpack.c.l.b16 %v82
  %v251 = vunpack.c.l.b16 %v83
  %v252 = vunpack.c.l.b16 %v84
  %v253 = vunpack.c.l.b16 %v85
  %v254 = vpack.c.b16 %v251, %v250
  %v255 = vpack.c.b16 %v253, %v252
  %vm258 = vcmask 261120
  %v260 = vsel %vm258, %v214, 0
  %v263 = vsel %vm258, %v215, 0
  %v266 = vsel %vm258, %v216, 0
  %v269 = vsel %vm258, %v217, 0
  %v272 = vsel %vm258, %v218, 0
  %v275 = vsel %vm258, %v219, 0
  %v278 = vsel %vm258, %v220, 0
  %v281 = vsel %vm258, %v221, 0
  %v284 = vsel %vm258, %v222, 0
  %v287 = vsel %vm258, %v223, 0
  %v290 = vsel %vm258, %v224, 0
  %v293 = vsel %vm258, %v225, 0
  %v296 = vsel %vm258, %v226, 0
  %v299 = vsel %vm258, %v227, 0
  %v302 = vsel %vm258, %v228, 0
  %v305 = vsel %vm258, %v229, 0
  %v308 = vsel %vm258, %v230, 0
  %v311 = vsel %vm258, %v231, 0
  %v314 = vsel %vm258, %v232, 0
  %v317 = vsel %vm258, %v233, 0
  %v320 = vsel %vm258, %v234, 0
  %v323 = vsel %vm258, %v235, 0
  %v326 = vsel %vm258, %v236, 0
  %v329 = vsel %vm258, %v237, 0
  %v332 = vsel %vm258, %v238, 0
  %v335 = vsel %vm258, %v239, 0
  %v338 = vsel %vm258, %v240, 0
  %v341 = vsel %vm258, %v241, 0
  %v344 = vsel %vm258, %v242, 0
  %v347 = vsel %vm258, %v243, 0
  %v350 = vsel %vm258, %v244, 0
  %v353 = vsel %vm258, %v245, 0
  %355 = vmatprep.subr.bf16.mxu0 0
  %356 = vmatpush1.bf16.msra.mxu0 0
  %357 = vmatprep.subr.bf16.mxu0 0
  %358 = vmatpush1.bf16.msra.mxu0 0
  %359 = vmatprep.subr.bf16.mxu0 0
  %360 = vmatpush1.bf16.msra.mxu0 0
  %361 = vmatprep.subr.bf16.mxu0 0
  %362 = vmatpush1.bf16.msra.mxu0 0
  %363 = vmatprep.subr.bf16.mxu0 0
  %364 = vmatpush1.bf16.msra.mxu0 0
  %365 = vmatprep.subr.bf16.mxu0 0
  %366 = vmatpush1.bf16.msra.mxu0 0
  %367 = vmatprep.subr.bf16.mxu0 0
  %368 = vmatpush1.bf16.msra.mxu0 %v255
  %369 = vmatprep.subr.bf16.mxu0 0
  %370 = vmatpush1.bf16.msra.mxu0 %v254
  %371 = vmatprep.subr.bf16.mxu0 0
  %372 = vmatpush2.bf16.msra.mxu0 0
  %373 = vmatprep.subr.bf16.mxu0 0
  %374 = vmatpush2.bf16.msra.mxu0 0
  %375 = vmatprep.subr.bf16.mxu0 0
  %376 = vmatpush2.bf16.msra.mxu0 0
  %377 = vmatprep.subr.bf16.mxu0 0
  %378 = vmatpush2.bf16.msra.mxu0 0
  %379 = vmatprep.subr.bf16.mxu0 0
  %380 = vmatpush2.bf16.msra.mxu0 0
  %381 = vmatprep.subr.bf16.mxu0 0
  %382 = vmatpush2.bf16.msra.mxu0 0
  %383 = vmatprep.subr.bf16.mxu0 0
  %384 = vmatpush2.bf16.msra.mxu0 0
  %385 = vmatprep.subr.bf16.mxu0 0
  %386 = vmatpush2.bf16.msra.mxu0 0
  %387 = vmatprep.mubr.bf16.mxu0 0
  %388 = vmatmul.mubr.bf16.gmra.mxu0 %v260
  %v389 = vpop.f32.mrf.mxu0
  %v390 = vadd.f32 0.0, %v389
  %v391 = vpop.f32.mrf.mxu0
  %v392 = vpop.f32.mrf.mxu0
  %v393 = vadd.f32 0.0, %v392
  %v394 = vpop.f32.mrf.mxu0
  %395 = vmatprep.mubr.bf16.mxu0 0
  %396 = vmatmul.mubr.bf16.gmra.mxu0 %v263
  %v397 = vpop.f32.mrf.mxu0
  %v398 = vadd.f32 0.0, %v397
  %v399 = vpop.f32.mrf.mxu0
  %v400 = vpop.f32.mrf.mxu0
  %v401 = vadd.f32 0.0, %v400
  %v402 = vpop.f32.mrf.mxu0
  %403 = vmatprep.mubr.bf16.mxu0 0
  %404 = vmatmul.mubr.bf16.gmra.mxu0 %v266
  %v405 = vpop.f32.mrf.mxu0
  %v406 = vadd.f32 0.0, %v405
  %v407 = vpop.f32.mrf.mxu0
  %v408 = vpop.f32.mrf.mxu0
  %v409 = vadd.f32 0.0, %v408
  %v410 = vpop.f32.mrf.mxu0
  %411 = vmatprep.mubr.bf16.mxu0 0
  %412 = vmatmul.mubr.bf16.gmra.mxu0 %v269
  %v413 = vpop.f32.mrf.mxu0
  %v414 = vadd.f32 0.0, %v413
  %v415 = vpop.f32.mrf.mxu0
  %v416 = vpop.f32.mrf.mxu0
  %v417 = vadd.f32 0.0, %v416
  %v418 = vpop.f32.mrf.mxu0
  %419 = vmatprep.mubr.bf16.mxu0 0
  %420 = vmatmul.mubr.bf16.gmra.mxu0 %v272
  %v421 = vpop.f32.mrf.mxu0
  %v422 = vadd.f32 0.0, %v421
  %v423 = vpop.f32.mrf.mxu0
  %v424 = vpop.f32.mrf.mxu0
  %v425 = vadd.f32 0.0, %v424
  %v426 = vpop.f32.mrf.mxu0
  %427 = vmatprep.mubr.bf16.mxu0 0
  %428 = vmatmul.mubr.bf16.gmra.mxu0 %v275
  %v429 = vpop.f32.mrf.mxu0
  %v430 = vadd.f32 0.0, %v429
  %v431 = vpop.f32.mrf.mxu0
  %v432 = vpop.f32.mrf.mxu0
  %v433 = vadd.f32 0.0, %v432
  %v434 = vpop.f32.mrf.mxu0
  %435 = vmatprep.mubr.bf16.mxu0 0
  %436 = vmatmul.mubr.bf16.gmra.mxu0 %v278
  %v437 = vpop.f32.mrf.mxu0
  %v438 = vadd.f32 0.0, %v437
  %v439 = vpop.f32.mrf.mxu0
  %v440 = vpop.f32.mrf.mxu0
  %v441 = vadd.f32 0.0, %v440
  %v442 = vpop.f32.mrf.mxu0
  %443 = vmatprep.mubr.bf16.mxu0 0
  %444 = vmatmul.mubr.bf16.gmra.mxu0 %v281
  %v445 = vpop.f32.mrf.mxu0
  %v446 = vadd.f32 0.0, %v445
  %v447 = vpop.f32.mrf.mxu0
  %v448 = vpop.f32.mrf.mxu0
  %v449 = vadd.f32 0.0, %v448
  %v450 = vpop.f32.mrf.mxu0
  %451 = vmatprep.mubr.bf16.mxu0 0
  %452 = vmatmul.mubr.bf16.gmra.mxu0 %v284
  %v453 = vpop.f32.mrf.mxu0
  %v454 = vadd.f32 0.0, %v453
  %v455 = vpop.f32.mrf.mxu0
  %v456 = vpop.f32.mrf.mxu0
  %v457 = vadd.f32 0.0, %v456
  %v458 = vpop.f32.mrf.mxu0
  %459 = vmatprep.mubr.bf16.mxu0 0
  %460 = vmatmul.mubr.bf16.gmra.mxu0 %v287
  %v461 = vpop.f32.mrf.mxu0
  %v462 = vadd.f32 0.0, %v461
  %v463 = vpop.f32.mrf.mxu0
  %v464 = vpop.f32.mrf.mxu0
  %v465 = vadd.f32 0.0, %v464
  %v466 = vpop.f32.mrf.mxu0
  %467 = vmatprep.mubr.bf16.mxu0 0
  %468 = vmatmul.mubr.bf16.gmra.mxu0 %v290
  %v469 = vpop.f32.mrf.mxu0
  %v470 = vadd.f32 0.0, %v469
  %v471 = vpop.f32.mrf.mxu0
  %v472 = vpop.f32.mrf.mxu0
  %v473 = vadd.f32 0.0, %v472
  %v474 = vpop.f32.mrf.mxu0
  %475 = vmatprep.mubr.bf16.mxu0 0
  %476 = vmatmul.mubr.bf16.gmra.mxu0 %v293
  %v477 = vpop.f32.mrf.mxu0
  %v478 = vadd.f32 0.0, %v477
  %v479 = vpop.f32.mrf.mxu0
  %v480 = vpop.f32.mrf.mxu0
  %v481 = vadd.f32 0.0, %v480
  %v482 = vpop.f32.mrf.mxu0
  %483 = vmatprep.mubr.bf16.mxu0 0
  %484 = vmatmul.mubr.bf16.gmra.mxu0 %v296
  %v485 = vpop.f32.mrf.mxu0
  %v486 = vadd.f32 0.0, %v485
  %v487 = vpop.f32.mrf.mxu0
  %v488 = vpop.f32.mrf.mxu0
  %v489 = vadd.f32 0.0, %v488
  %v490 = vpop.f32.mrf.mxu0
  %491 = vmatprep.mubr.bf16.mxu0 0
  %492 = vmatmul.mubr.bf16.gmra.mxu0 %v299
  %v493 = vpop.f32.mrf.mxu0
  %v494 = vadd.f32 0.0, %v493
  %v495 = vpop.f32.mrf.mxu0
  %v496 = vpop.f32.mrf.mxu0
  %v497 = vadd.f32 0.0, %v496
  %v498 = vpop.f32.mrf.mxu0
  %499 = vmatprep.mubr.bf16.mxu0 0
  %500 = vmatmul.mubr.bf16.gmra.mxu0 %v302
  %v501 = vpop.f32.mrf.mxu0
  %v502 = vadd.f32 0.0, %v501
  %v503 = vpop.f32.mrf.mxu0
  %v504 = vpop.f32.mrf.mxu0
  %v505 = vadd.f32 0.0, %v504
  %v506 = vpop.f32.mrf.mxu0
  %507 = vmatprep.mubr.bf16.mxu0 0
  %508 = vmatmul.mubr.bf16.gmra.mxu0 %v305
  %v509 = vpop.f32.mrf.mxu0
  %v510 = vadd.f32 0.0, %v509
  %v511 = vpop.f32.mrf.mxu0
  %v512 = vpop.f32.mrf.mxu0
  %v513 = vadd.f32 0.0, %v512
  %v514 = vpop.f32.mrf.mxu0
  %515 = vmatprep.mubr.bf16.mxu0 0
  %516 = vmatmul.mubr.bf16.gmra.mxu0 %v308
  %v517 = vpop.f32.mrf.mxu0
  %v518 = vadd.f32 0.0, %v517
  %v519 = vpop.f32.mrf.mxu0
  %v520 = vpop.f32.mrf.mxu0
  %v521 = vadd.f32 0.0, %v520
  %v522 = vpop.f32.mrf.mxu0
  %523 = vmatprep.mubr.bf16.mxu0 0
  %524 = vmatmul.mubr.bf16.gmra.mxu0 %v311
  %v525 = vpop.f32.mrf.mxu0
  %v526 = vadd.f32 0.0, %v525
  %v527 = vpop.f32.mrf.mxu0
  %v528 = vpop.f32.mrf.mxu0
  %v529 = vadd.f32 0.0, %v528
  %v530 = vpop.f32.mrf.mxu0
  %531 = vmatprep.mubr.bf16.mxu0 0
  %532 = vmatmul.mubr.bf16.gmra.mxu0 %v314
  %v533 = vpop.f32.mrf.mxu0
  %v534 = vadd.f32 0.0, %v533
  %v535 = vpop.f32.mrf.mxu0
  %v536 = vpop.f32.mrf.mxu0
  %v537 = vadd.f32 0.0, %v536
  %v538 = vpop.f32.mrf.mxu0
  %539 = vmatprep.mubr.bf16.mxu0 0
  %540 = vmatmul.mubr.bf16.gmra.mxu0 %v317
  %v541 = vpop.f32.mrf.mxu0
  %v542 = vadd.f32 0.0, %v541
  %v543 = vpop.f32.mrf.mxu0
  %v544 = vpop.f32.mrf.mxu0
  %v545 = vadd.f32 0.0, %v544
  %v546 = vpop.f32.mrf.mxu0
  %547 = vmatprep.mubr.bf16.mxu0 0
  %548 = vmatmul.mubr.bf16.gmra.mxu0 %v320
  %v549 = vpop.f32.mrf.mxu0
  %v550 = vadd.f32 0.0, %v549
  %v551 = vpop.f32.mrf.mxu0
  %v552 = vpop.f32.mrf.mxu0
  %v553 = vadd.f32 0.0, %v552
  %v554 = vpop.f32.mrf.mxu0
  %555 = vmatprep.mubr.bf16.mxu0 0
  %556 = vmatmul.mubr.bf16.gmra.mxu0 %v323
  %v557 = vpop.f32.mrf.mxu0
  %v558 = vadd.f32 0.0, %v557
  %v559 = vpop.f32.mrf.mxu0
  %v560 = vpop.f32.mrf.mxu0
  %v561 = vadd.f32 0.0, %v560
  %v562 = vpop.f32.mrf.mxu0
  %563 = vmatprep.mubr.bf16.mxu0 0
  %564 = vmatmul.mubr.bf16.gmra.mxu0 %v326
  %v565 = vpop.f32.mrf.mxu0
  %v566 = vadd.f32 0.0, %v565
  %v567 = vpop.f32.mrf.mxu0
  %v568 = vpop.f32.mrf.mxu0
  %v569 = vadd.f32 0.0, %v568
  %v570 = vpop.f32.mrf.mxu0
  %571 = vmatprep.mubr.bf16.mxu0 0
  %572 = vmatmul.mubr.bf16.gmra.mxu0 %v329
  %v573 = vpop.f32.mrf.mxu0
  %v574 = vadd.f32 0.0, %v573
  %v575 = vpop.f32.mrf.mxu0
  %v576 = vpop.f32.mrf.mxu0
  %v577 = vadd.f32 0.0, %v576
  %v578 = vpop.f32.mrf.mxu0
  %579 = vmatprep.mubr.bf16.mxu0 0
  %580 = vmatmul.mubr.bf16.gmra.mxu0 %v332
  %v581 = vpop.f32.mrf.mxu0
  %v582 = vadd.f32 0.0, %v581
  %v583 = vpop.f32.mrf.mxu0
  %v584 = vpop.f32.mrf.mxu0
  %v585 = vadd.f32 0.0, %v584
  %v586 = vpop.f32.mrf.mxu0
  %587 = vmatprep.mubr.bf16.mxu0 0
  %588 = vmatmul.mubr.bf16.gmra.mxu0 %v335
  %v589 = vpop.f32.mrf.mxu0
  %v590 = vadd.f32 0.0, %v589
  %v591 = vpop.f32.mrf.mxu0
  %v592 = vpop.f32.mrf.mxu0
  %v593 = vadd.f32 0.0, %v592
  %v594 = vpop.f32.mrf.mxu0
  %595 = vmatprep.mubr.bf16.mxu0 0
  %596 = vmatmul.mubr.bf16.gmra.mxu0 %v338
  %v597 = vpop.f32.mrf.mxu0
  %v598 = vadd.f32 0.0, %v597
  %v599 = vpop.f32.mrf.mxu0
  %v600 = vpop.f32.mrf.mxu0
  %v601 = vadd.f32 0.0, %v600
  %v602 = vpop.f32.mrf.mxu0
  %603 = vmatprep.mubr.bf16.mxu0 0
  %604 = vmatmul.mubr.bf16.gmra.mxu0 %v341
  %v605 = vpop.f32.mrf.mxu0
  %v606 = vadd.f32 0.0, %v605
  %v607 = vpop.f32.mrf.mxu0
  %v608 = vpop.f32.mrf.mxu0
  %v609 = vadd.f32 0.0, %v608
  %v610 = vpop.f32.mrf.mxu0
  %611 = vmatprep.mubr.bf16.mxu0 0
  %612 = vmatmul.mubr.bf16.gmra.mxu0 %v344
  %v613 = vpop.f32.mrf.mxu0
  %v614 = vadd.f32 0.0, %v613
  %v615 = vpop.f32.mrf.mxu0
  %v616 = vpop.f32.mrf.mxu0
  %v617 = vadd.f32 0.0, %v616
  %v618 = vpop.f32.mrf.mxu0
  %619 = vmatprep.mubr.bf16.mxu0 0
  %620 = vmatmul.mubr.bf16.gmra.mxu0 %v347
  %v621 = vpop.f32.mrf.mxu0
  %v622 = vadd.f32 0.0, %v621
  %v623 = vpop.f32.mrf.mxu0
  %v624 = vpop.f32.mrf.mxu0
  %v625 = vadd.f32 0.0, %v624
  %v626 = vpop.f32.mrf.mxu0
  %627 = vmatprep.mubr.bf16.mxu0 0
  %628 = vmatmul.mubr.bf16.gmra.mxu0 %v350
  %v629 = vpop.f32.mrf.mxu0
  %v630 = vadd.f32 0.0, %v629
  %v631 = vpop.f32.mrf.mxu0
  %v632 = vpop.f32.mrf.mxu0
  %v633 = vadd.f32 0.0, %v632
  %v634 = vpop.f32.mrf.mxu0
  %635 = vmatprep.mubr.bf16.mxu0 0
  %636 = vmatmul.mubr.bf16.gmra.mxu0 %v353
  %v637 = vpop.f32.mrf.mxu0
  %v638 = vadd.f32 0.0, %v637
  %v639 = vpop.f32.mrf.mxu0
  %v640 = vpop.f32.mrf.mxu0
  %v641 = vadd.f32 0.0, %v640
  %v642 = vpop.f32.mrf.mxu0
  %643 = vdwg.mxu0
  %v644 = vld [vmem:[%s2] sm:$0x1]
  %v646 = vlaneseq
  %v647 = vshrl.u32 %v646, 7
  %v648 = vsub.s32 0, %v647
  %v649 = vrot.slane %v644, %v648
  %v651 = vmul.f32 %v390, %v649
  %v652 = vmul.f32 %v393, %v649
  %v653 = vmul.f32 %v398, %v649
  %v654 = vmul.f32 %v401, %v649
  %v655 = vmul.f32 %v406, %v649
  %v656 = vmul.f32 %v409, %v649
  %v657 = vmul.f32 %v414, %v649
  %v658 = vmul.f32 %v417, %v649
  %v659 = vmul.f32 %v422, %v649
  %v660 = vmul.f32 %v425, %v649
  %v661 = vmul.f32 %v430, %v649
  %v662 = vmul.f32 %v433, %v649
  %v663 = vmul.f32 %v438, %v649
  %v664 = vmul.f32 %v441, %v649
  %v665 = vmul.f32 %v446, %v649
  %v666 = vmul.f32 %v449, %v649
  %v667 = vmul.f32 %v454, %v649
  %v668 = vmul.f32 %v457, %v649
  %v669 = vmul.f32 %v462, %v649
  %v670 = vmul.f32 %v465, %v649
  %v671 = vmul.f32 %v470, %v649
  %v672 = vmul.f32 %v473, %v649
  %v673 = vmul.f32 %v478, %v649
  %v674 = vmul.f32 %v481, %v649
  %v675 = vmul.f32 %v486, %v649
  %v676 = vmul.f32 %v489, %v649
  %v677 = vmul.f32 %v494, %v649
  %v678 = vmul.f32 %v497, %v649
  %v679 = vmul.f32 %v502, %v649
  %v680 = vmul.f32 %v505, %v649
  %v681 = vmul.f32 %v510, %v649
  %v682 = vmul.f32 %v513, %v649
  %v683 = vmul.f32 %v518, %v649
  %v684 = vmul.f32 %v521, %v649
  %v685 = vmul.f32 %v526, %v649
  %v686 = vmul.f32 %v529, %v649
  %v687 = vmul.f32 %v534, %v649
  %v688 = vmul.f32 %v537, %v649
  %v689 = vmul.f32 %v542, %v649
  %v690 = vmul.f32 %v545, %v649
  %v691 = vmul.f32 %v550, %v649
  %v692 = vmul.f32 %v553, %v649
  %v693 = vmul.f32 %v558, %v649
  %v694 = vmul.f32 %v561, %v649
  %v695 = vmul.f32 %v566, %v649
  %v696 = vmul.f32 %v569, %v649
  %v697 = vmul.f32 %v574, %v649
  %v698 = vmul.f32 %v577, %v649
  %v699 = vmul.f32 %v582, %v649
  %v700 = vmul.f32 %v585, %v649
  %v701 = vmul.f32 %v590, %v649
  %v702 = vmul.f32 %v593, %v649
  %v703 = vmul.f32 %v598, %v649
  %v704 = vmul.f32 %v601, %v649
  %v705 = vmul.f32 %v606, %v649
  %v706 = vmul.f32 %v609, %v649
  %v707 = vmul.f32 %v614, %v649
  %v708 = vmul.f32 %v617, %v649
  %v709 = vmul.f32 %v622, %v649
  %v710 = vmul.f32 %v625, %v649
  %v711 = vmul.f32 %v630, %v649
  %v712 = vmul.f32 %v633, %v649
  %v713 = vmul.f32 %v638, %v649
  %v714 = vmul.f32 %v641, %v649
  %v715 = vld [vmem:[%s3] sm:$0x1]
  %v717 = vlaneseq
  %v718 = vshrl.u32 %v717, 7
  %v719 = vsub.s32 0, %v718
  %v720 = vrot.slane %v715, %v719
  %v722 = vadd.f32 %v651, %v720
  %v723 = vadd.f32 %v652, %v720
  %v724 = vadd.f32 %v653, %v720
  %v725 = vadd.f32 %v654, %v720
  %v726 = vadd.f32 %v655, %v720
  %v727 = vadd.f32 %v656, %v720
  %v728 = vadd.f32 %v657, %v720
  %v729 = vadd.f32 %v658, %v720
  %v730 = vadd.f32 %v659, %v720
  %v731 = vadd.f32 %v660, %v720
  %v732 = vadd.f32 %v661, %v720
  %v733 = vadd.f32 %v662, %v720
  %v734 = vadd.f32 %v663, %v720
  %v735 = vadd.f32 %v664, %v720
  %v736 = vadd.f32 %v665, %v720
  %v737 = vadd.f32 %v666, %v720
  %v738 = vadd.f32 %v667, %v720
  %v739 = vadd.f32 %v668, %v720
  %v740 = vadd.f32 %v669, %v720
  %v741 = vadd.f32 %v670, %v720
  %v742 = vadd.f32 %v671, %v720
  %v743 = vadd.f32 %v672, %v720
  %v744 = vadd.f32 %v673, %v720
  %v745 = vadd.f32 %v674, %v720
  %v746 = vadd.f32 %v675, %v720
  %v747 = vadd.f32 %v676, %v720
  %v748 = vadd.f32 %v677, %v720
  %v749 = vadd.f32 %v678, %v720
  %v750 = vadd.f32 %v679, %v720
  %v751 = vadd.f32 %v680, %v720
  %v752 = vadd.f32 %v681, %v720
  %v753 = vadd.f32 %v682, %v720
  %v754 = vadd.f32 %v683, %v720
  %v755 = vadd.f32 %v684, %v720
  %v756 = vadd.f32 %v685, %v720
  %v757 = vadd.f32 %v686, %v720
  %v758 = vadd.f32 %v687, %v720
  %v759 = vadd.f32 %v688, %v720
  %v760 = vadd.f32 %v689, %v720
  %v761 = vadd.f32 %v690, %v720
  %v762 = vadd.f32 %v691, %v720
  %v763 = vadd.f32 %v692, %v720
  %v764 = vadd.f32 %v693, %v720
  %v765 = vadd.f32 %v694, %v720
  %v766 = vadd.f32 %v695, %v720
  %v767 = vadd.f32 %v696, %v720
  %v768 = vadd.f32 %v697, %v720
  %v769 = vadd.f32 %v698, %v720
  %v770 = vadd.f32 %v699, %v720
  %v771 = vadd.f32 %v700, %v720
  %v772 = vadd.f32 %v701, %v720
  %v773 = vadd.f32 %v702, %v720
  %v774 = vadd.f32 %v703, %v720
  %v775 = vadd.f32 %v704, %v720
  %v776 = vadd.f32 %v705, %v720
  %v777 = vadd.f32 %v706, %v720
  %v778 = vadd.f32 %v707, %v720
  %v779 = vadd.f32 %v708, %v720
  %v780 = vadd.f32 %v709, %v720
  %v781 = vadd.f32 %v710, %v720
  %v782 = vadd.f32 %v711, %v720
  %v783 = vadd.f32 %v712, %v720
  %v784 = vadd.f32 %v713, %v720
  %v785 = vadd.f32 %v714, %v720
  %v786 = vpack.c.bf16 %v723, %v722
  %v787 = vpack.c.bf16 %v725, %v724
  %v788 = vpack.c.bf16 %v727, %v726
  %v789 = vpack.c.bf16 %v729, %v728
  %v790 = vpack.c.bf16 %v731, %v730
  %v791 = vpack.c.bf16 %v733, %v732
  %v792 = vpack.c.bf16 %v735, %v734
  %v793 = vpack.c.bf16 %v737, %v736
  %v794 = vpack.c.bf16 %v739, %v738
  %v795 = vpack.c.bf16 %v741, %v740
  %v796 = vpack.c.bf16 %v743, %v742
  %v797 = vpack.c.bf16 %v745, %v744
  %v798 = vpack.c.bf16 %v747, %v746
  %v799 = vpack.c.bf16 %v749, %v748
  %v800 = vpack.c.bf16 %v751, %v750
  %v801 = vpack.c.bf16 %v753, %v752
  %v802 = vpack.c.bf16 %v755, %v754
  %v803 = vpack.c.bf16 %v757, %v756
  %v804 = vpack.c.bf16 %v759, %v758
  %v805 = vpack.c.bf16 %v761, %v760
  %v806 = vpack.c.bf16 %v763, %v762
  %v807 = vpack.c.bf16 %v765, %v764
  %v808 = vpack.c.bf16 %v767, %v766
  %v809 = vpack.c.bf16 %v769, %v768
  %v810 = vpack.c.bf16 %v771, %v770
  %v811 = vpack.c.bf16 %v773, %v772
  %v812 = vpack.c.bf16 %v775, %v774
  %v813 = vpack.c.bf16 %v777, %v776
  %v814 = vpack.c.bf16 %v779, %v778
  %v815 = vpack.c.bf16 %v781, %v780
  %v816 = vpack.c.bf16 %v783, %v782
  %v817 = vpack.c.bf16 %v785, %v784
  %v850 = vunpack.c.l.b16 %v786
  %v851 = vunpack.c.h.b16 %v786
  %v852 = vunpack.c.l.b16 %v787
  %v853 = vunpack.c.h.b16 %v787
  %v854 = vunpack.c.l.b16 %v788
  %v855 = vunpack.c.h.b16 %v788
  %v856 = vunpack.c.l.b16 %v789
  %v857 = vunpack.c.h.b16 %v789
  %v858 = vunpack.c.l.b16 %v790
  %v859 = vunpack.c.h.b16 %v790
  %v860 = vunpack.c.l.b16 %v791
  %v861 = vunpack.c.h.b16 %v791
  %v862 = vunpack.c.l.b16 %v792
  %v863 = vunpack.c.h.b16 %v792
  %v864 = vunpack.c.l.b16 %v793
  %v865 = vunpack.c.h.b16 %v793
  %v866 = vunpack.c.l.b16 %v794
  %v867 = vunpack.c.h.b16 %v794
  %v868 = vunpack.c.l.b16 %v795
  %v869 = vunpack.c.h.b16 %v795
  %v870 = vunpack.c.l.b16 %v796
  %v871 = vunpack.c.h.b16 %v796
  %v872 = vunpack.c.l.b16 %v797
  %v873 = vunpack.c.h.b16 %v797
  %v874 = vunpack.c.l.b16 %v798
  %v875 = vunpack.c.h.b16 %v798
  %v876 = vunpack.c.l.b16 %v799
  %v877 = vunpack.c.h.b16 %v799
  %v878 = vunpack.c.l.b16 %v800
  %v879 = vunpack.c.h.b16 %v800
  %v880 = vunpack.c.l.b16 %v801
  %v881 = vunpack.c.h.b16 %v801
  %v882 = vunpack.c.l.b16 %v802
  %v883 = vunpack.c.h.b16 %v802
  %v884 = vunpack.c.l.b16 %v803
  %v885 = vunpack.c.h.b16 %v803
  %v886 = vunpack.c.l.b16 %v804
  %v887 = vunpack.c.h.b16 %v804
  %v888 = vunpack.c.l.b16 %v805
  %v889 = vunpack.c.h.b16 %v805
  %v890 = vunpack.c.l.b16 %v806
  %v891 = vunpack.c.h.b16 %v806
  %v892 = vunpack.c.l.b16 %v807
  %v893 = vunpack.c.h.b16 %v807
  %v894 = vunpack.c.l.b16 %v808
  %v895 = vunpack.c.h.b16 %v808
  %v896 = vunpack.c.l.b16 %v809
  %v897 = vunpack.c.h.b16 %v809
  %v898 = vunpack.c.l.b16 %v810
  %v899 = vunpack.c.h.b16 %v810
  %v900 = vunpack.c.l.b16 %v811
  %v901 = vunpack.c.h.b16 %v811
  %v902 = vunpack.c.l.b16 %v812
  %v903 = vunpack.c.h.b16 %v812
  %v904 = vunpack.c.l.b16 %v813
  %v905 = vunpack.c.h.b16 %v813
  %v906 = vunpack.c.l.b16 %v814
  %v907 = vunpack.c.h.b16 %v814
  %v908 = vunpack.c.l.b16 %v815
  %v909 = vunpack.c.h.b16 %v815
  %v910 = vunpack.c.l.b16 %v816
  %v911 = vunpack.c.h.b16 %v816
  %v912 = vunpack.c.l.b16 %v817
  %v913 = vunpack.c.h.b16 %v817
  %v914 = vpack.c.b16 %v850, %v850
  %v915 = vpack.c.b16 %v851, %v851
  %v916 = vpack.c.b16 %v852, %v852
  %v917 = vpack.c.b16 %v853, %v853
  %v918 = vpack.c.b16 %v854, %v854
  %v919 = vpack.c.b16 %v855, %v855
  %v920 = vpack.c.b16 %v856, %v856
  %v921 = vpack.c.b16 %v857, %v857
  %v922 = vpack.c.b16 %v858, %v858
  %v923 = vpack.c.b16 %v859, %v859
  %v924 = vpack.c.b16 %v860, %v860
  %v925 = vpack.c.b16 %v861, %v861
  %v926 = vpack.c.b16 %v862, %v862
  %v927 = vpack.c.b16 %v863, %v863
  %v928 = vpack.c.b16 %v864, %v864
  %v929 = vpack.c.b16 %v865, %v865
  %v930 = vpack.c.b16 %v866, %v866
  %v931 = vpack.c.b16 %v867, %v867
  %v932 = vpack.c.b16 %v868, %v868
  %v933 = vpack.c.b16 %v869, %v869
  %v934 = vpack.c.b16 %v870, %v870
  %v935 = vpack.c.b16 %v871, %v871
  %v936 = vpack.c.b16 %v872, %v872
  %v937 = vpack.c.b16 %v873, %v873
  %v938 = vpack.c.b16 %v874, %v874
  %v939 = vpack.c.b16 %v875, %v875
  %v940 = vpack.c.b16 %v876, %v876
  %v941 = vpack.c.b16 %v877, %v877
  %v942 = vpack.c.b16 %v878, %v878
  %v943 = vpack.c.b16 %v879, %v879
  %v944 = vpack.c.b16 %v880, %v880
  %v945 = vpack.c.b16 %v881, %v881
  %v946 = vpack.c.b16 %v882, %v882
  %v947 = vpack.c.b16 %v883, %v883
  %v948 = vpack.c.b16 %v884, %v884
  %v949 = vpack.c.b16 %v885, %v885
  %v950 = vpack.c.b16 %v886, %v886
  %v951 = vpack.c.b16 %v887, %v887
  %v952 = vpack.c.b16 %v888, %v888
  %v953 = vpack.c.b16 %v889, %v889
  %v954 = vpack.c.b16 %v890, %v890
  %v955 = vpack.c.b16 %v891, %v891
  %v956 = vpack.c.b16 %v892, %v892
  %v957 = vpack.c.b16 %v893, %v893
  %v958 = vpack.c.b16 %v894, %v894
  %v959 = vpack.c.b16 %v895, %v895
  %v960 = vpack.c.b16 %v896, %v896
  %v961 = vpack.c.b16 %v897, %v897
  %v962 = vpack.c.b16 %v898, %v898
  %v963 = vpack.c.b16 %v899, %v899
  %v964 = vpack.c.b16 %v900, %v900
  %v965 = vpack.c.b16 %v901, %v901
  %v966 = vpack.c.b16 %v902, %v902
  %v967 = vpack.c.b16 %v903, %v903
  %v968 = vpack.c.b16 %v904, %v904
  %v969 = vpack.c.b16 %v905, %v905
  %v970 = vpack.c.b16 %v906, %v906
  %v971 = vpack.c.b16 %v907, %v907
  %v972 = vpack.c.b16 %v908, %v908
  %v973 = vpack.c.b16 %v909, %v909
  %v974 = vpack.c.b16 %v910, %v910
  %v975 = vpack.c.b16 %v911, %v911
  %v976 = vpack.c.b16 %v912, %v912
  %v977 = vpack.c.b16 %v913, %v913
  %vm1042 = vcmask 257024
  %1043 = vst.msk [vmem:[%s4] sm:$0xf] %vm1042, %v914
  %1044 = vst.msk [vmem:[%s4 + $0x4] sm:$0xf] %vm1042, %v915
  %1045 = vst.msk [vmem:[%s4 + $0x8] sm:$0xf] %vm1042, %v916
  %1046 = vst.msk [vmem:[%s4 + $0xc] sm:$0xf] %vm1042, %v917
  %1047 = vst.msk [vmem:[%s4 + $0x10] sm:$0xf] %vm1042, %v918
  %1048 = vst.msk [vmem:[%s4 + $0x14] sm:$0xf] %vm1042, %v919
  %1049 = vst.msk [vmem:[%s4 + $0x18] sm:$0xf] %vm1042, %v920
  %1050 = vst.msk [vmem:[%s4 + $0x1c] sm:$0xf] %vm1042, %v921
  %1051 = vst.msk [vmem:[%s4 + $0x20] sm:$0xf] %vm1042, %v922
  %1052 = vst.msk [vmem:[%s4 + $0x24] sm:$0xf] %vm1042, %v923
  %1053 = vst.msk [vmem:[%s4 + $0x28] sm:$0xf] %vm1042, %v924
  %1054 = vst.msk [vmem:[%s4 + $0x2c] sm:$0xf] %vm1042, %v925
  %1055 = vst.msk [vmem:[%s4 + $0x30] sm:$0xf] %vm1042, %v926
  %1056 = vst.msk [vmem:[%s4 + $0x34] sm:$0xf] %vm1042, %v927
  %1057 = vst.msk [vmem:[%s4 + $0x38] sm:$0xf] %vm1042, %v928
  %1058 = vst.msk [vmem:[%s4 + $0x3c] sm:$0xf] %vm1042, %v929
  %1059 = vst.msk [vmem:[%s4 + $0x40] sm:$0xf] %vm1042, %v930
  %1060 = vst.msk [vmem:[%s4 + $0x44] sm:$0xf] %vm1042, %v931
  %1061 = vst.msk [vmem:[%s4 + $0x48] sm:$0xf] %vm1042, %v932
  %1062 = vst.msk [vmem:[%s4 + $0x4c] sm:$0xf] %vm1042, %v933
  %1063 = vst.msk [vmem:[%s4 + $0x50] sm:$0xf] %vm1042, %v934
  %1064 = vst.msk [vmem:[%s4 + $0x54] sm:$0xf] %vm1042, %v935
  %1065 = vst.msk [vmem:[%s4 + $0x58] sm:$0xf] %vm1042, %v936
  %1066 = vst.msk [vmem:[%s4 + $0x5c] sm:$0xf] %vm1042, %v937
  %1067 = vst.msk [vmem:[%s4 + $0x60] sm:$0xf] %vm1042, %v938
  %1068 = vst.msk [vmem:[%s4 + $0x64] sm:$0xf] %vm1042, %v939
  %1069 = vst.msk [vmem:[%s4 + $0x68] sm:$0xf] %vm1042, %v940
  %1070 = vst.msk [vmem:[%s4 + $0x6c] sm:$0xf] %vm1042, %v941
  %1071 = vst.msk [vmem:[%s4 + $0x70] sm:$0xf] %vm1042, %v942
  %1072 = vst.msk [vmem:[%s4 + $0x74] sm:$0xf] %vm1042, %v943
  %1073 = vst.msk [vmem:[%s4 + $0x78] sm:$0xf] %vm1042, %v944
  %1074 = vst.msk [vmem:[%s4 + $0x7c] sm:$0xf] %vm1042, %v945
  %1075 = vst.msk [vmem:[%s4 + $0x80] sm:$0xf] %vm1042, %v946
  %1076 = vst.msk [vmem:[%s4 + $0x84] sm:$0xf] %vm1042, %v947
  %1077 = vst.msk [vmem:[%s4 + $0x88] sm:$0xf] %vm1042, %v948
  %1078 = vst.msk [vmem:[%s4 + $0x8c] sm:$0xf] %vm1042, %v949
  %1079 = vst.msk [vmem:[%s4 + $0x90] sm:$0xf] %vm1042, %v950
  %1080 = vst.msk [vmem:[%s4 + $0x94] sm:$0xf] %vm1042, %v951
  %1081 = vst.msk [vmem:[%s4 + $0x98] sm:$0xf] %vm1042, %v952
  %1082 = vst.msk [vmem:[%s4 + $0x9c] sm:$0xf] %vm1042, %v953
  %1083 = vst.msk [vmem:[%s4 + $0xa0] sm:$0xf] %vm1042, %v954
  %1084 = vst.msk [vmem:[%s4 + $0xa4] sm:$0xf] %vm1042, %v955
  %1085 = vst.msk [vmem:[%s4 + $0xa8] sm:$0xf] %vm1042, %v956
  %1086 = vst.msk [vmem:[%s4 + $0xac] sm:$0xf] %vm1042, %v957
  %1087 = vst.msk [vmem:[%s4 + $0xb0] sm:$0xf] %vm1042, %v958
  %1088 = vst.msk [vmem:[%s4 + $0xb4] sm:$0xf] %vm1042, %v959
  %1089 = vst.msk [vmem:[%s4 + $0xb8] sm:$0xf] %vm1042, %v960
  %1090 = vst.msk [vmem:[%s4 + $0xbc] sm:$0xf] %vm1042, %v961
  %1091 = vst.msk [vmem:[%s4 + $0xc0] sm:$0xf] %vm1042, %v962
  %1092 = vst.msk [vmem:[%s4 + $0xc4] sm:$0xf] %vm1042, %v963
  %1093 = vst.msk [vmem:[%s4 + $0xc8] sm:$0xf] %vm1042, %v964
  %1094 = vst.msk [vmem:[%s4 + $0xcc] sm:$0xf] %vm1042, %v965
  %1095 = vst.msk [vmem:[%s4 + $0xd0] sm:$0xf] %vm1042, %v966
  %1096 = vst.msk [vmem:[%s4 + $0xd4] sm:$0xf] %vm1042, %v967
  %1097 = vst.msk [vmem:[%s4 + $0xd8] sm:$0xf] %vm1042, %v968
  %1098 = vst.msk [vmem:[%s4 + $0xdc] sm:$0xf] %vm1042, %v969
  %1099 = vst.msk [vmem:[%s4 + $0xe0] sm:$0xf] %vm1042, %v970
  %1100 = vst.msk [vmem:[%s4 + $0xe4] sm:$0xf] %vm1042, %v971
  %1101 = vst.msk [vmem:[%s4 + $0xe8] sm:$0xf] %vm1042, %v972
  %1102 = vst.msk [vmem:[%s4 + $0xec] sm:$0xf] %vm1042, %v973
  %1103 = vst.msk [vmem:[%s4 + $0xf0] sm:$0xf] %vm1042, %v974
  %1104 = vst.msk [vmem:[%s4 + $0xf4] sm:$0xf] %vm1042, %v975
  %1105 = vst.msk [vmem:[%s4 + $0xf8] sm:$0xf] %vm1042, %v976
  %1106 = vst.msk [vmem:[%s4 + $0xfc] sm:$0xf] %vm1042, %v977
  // Predicated region
  $region18: #{_lambda_.4} parent=0 // pred_check
    _
  $region19: #{_lambda_.4} parent=0 // pred_check_branch
    %1108 = sbr.rel (0) target = $region21
  $region20: #{_lambda_.4} parent=0 // pred_region
    _
  $region21: #{_lambda_.4} parent=0 // pred_fallthru
    _
  // Predicated region
  $region22: #{_lambda_.4} parent=0 // pred_check
    _
  $region23: #{_lambda_.4} parent=0 // pred_check_branch
    %1110 = sbr.rel (0) target = $region25
  $region24: #{_lambda_.4} parent=0 // pred_region
    _
  $region25: #{_lambda_.4} parent=0 // pred_fallthru
    _

// kernel: _lambda_.7
$region0: #{_lambda_.7}
  #allocation0 [shape = 'u32[]', space=smem, size = 0x4, offset = 0x4, fixed_abs, tag = 'smem constant byte address 0x4 - core index']
  #allocation1 [shape = 'u32[144,128]{1,0:T(1,128)}', space=vmem, size = 0x12000, scoped, tag = 'internal scratch']
  %s0 = inlined_call_operand.vmem [shape: bf16[512,32], index: 0, kind: input, shape index: {}]
  %s1 = inlined_call_operand.vmem [shape: bf16[32,32], index: 1, kind: input, shape index: {}]
  %s2 = inlined_call_operand.vmem [shape: f32[1,32], index: 2, kind: input, shape index: {}]
  %s3 = inlined_call_operand.vmem [shape: f32[1,32], index: 3, kind: input, shape index: {}]
  %s4 = inlined_call_operand.vmem [shape: bf16[512,32], index: 4, kind: input, shape index: {}]
  %s5 = inlined_call_operand.hbm [shape: f32[512,32], index: 5, kind: output, shape index: {}]
  %s6 = sld [smem:[#allocation0]]
  $region30: #{_lambda_.7} parent=0
    _
  %s8 = ssub.s32 1, %s6
  %s9 = scalar_select 0, %s8, %s6
  $region1: #{_lambda_.7} parent=0
    #allocation2 [shape = 'u8[262144]{0}', space=vmem, size = 0x40000, scoped, tag = 'output window, operand 0, single buffered']
    #allocation3 [shape = 's32[1]{0}', space=sflag, size = 0x4, scoped, tag = 'scoped memory for _lambda_.7']
    %10 = vsyncpa [#allocation3], 0
    // Predicated region
    $region2: #{_lambda_.7} parent=1 // pred_check
      _
    $region3: #{_lambda_.7} parent=1 // pred_check_branch
      %12 = sbr.rel (0) target = $region5
    $region4: #{_lambda_.7} parent=1 // pred_region
      _
    $region5: #{_lambda_.7} parent=1 // pred_fallthru
      _
    // Predicated region
    $region6: #{_lambda_.7} parent=1 // pred_check
      _
    $region7: #{_lambda_.7} parent=1 // pred_check_branch
      %14 = sbr.rel (0) target = $region9
    $region8: #{_lambda_.7} parent=1 // pred_region
      _
    $region9: #{_lambda_.7} parent=1 // pred_fallthru
      _
    // Predicated region
    $region10: #{_lambda_.7} parent=1 // pred_check
      _
    $region11: #{_lambda_.7} parent=1 // pred_check_branch
      %16 = sbr.rel (0) target = $region13
    $region12: #{_lambda_.7} parent=1 // pred_region
      _
    $region13: #{_lambda_.7} parent=1 // pred_fallthru
      _
    // Predicated region
    $region14: #{_lambda_.7} parent=1 // pred_check
      _
    $region15: #{_lambda_.7} parent=1 // pred_check_branch
      %18 = sbr.rel (0) target = $region17
    $region16: #{_lambda_.7} parent=1 // pred_region
      _
    $region17: #{_lambda_.7} parent=1 // pred_fallthru
      _
    // Predicated region
    $region18: #{_lambda_.7} parent=1 // pred_check
      _
    $region19: #{_lambda_.7} parent=1 // pred_check_branch
      %20 = sbr.rel (0) target = $region21
    $region20: #{_lambda_.7} parent=1 // pred_region
      _
    $region21: #{_lambda_.7} parent=1 // pred_fallthru
      _
    %v22 = vld [vmem:[%s0] sm:$0xf]
    %v23 = vld [vmem:[%s0 + $0x4] sm:$0xf]
    %v24 = vld [vmem:[%s0 + $0x8] sm:$0xf]
    %v25 = vld [vmem:[%s0 + $0xc] sm:$0xf]
    %v26 = vld [vmem:[%s0 + $0x10] sm:$0xf]
    %v27 = vld [vmem:[%s0 + $0x14] sm:$0xf]
    %v28 = vld [vmem:[%s0 + $0x18] sm:$0xf]
    %v29 = vld [vmem:[%s0 + $0x1c] sm:$0xf]
    %v30 = vld [vmem:[%s0 + $0x20] sm:$0xf]
    %v31 = vld [vmem:[%s0 + $0x24] sm:$0xf]
    %v32 = vld [vmem:[%s0 + $0x28] sm:$0xf]
    %v33 = vld [vmem:[%s0 + $0x2c] sm:$0xf]
    %v34 = vld [vmem:[%s0 + $0x30] sm:$0xf]
    %v35 = vld [vmem:[%s0 + $0x34] sm:$0xf]
    %v36 = vld [vmem:[%s0 + $0x38] sm:$0xf]
    %v37 = vld [vmem:[%s0 + $0x3c] sm:$0xf]
    %v38 = vld [vmem:[%s0 + $0x40] sm:$0xf]
    %v39 = vld [vmem:[%s0 + $0x44] sm:$0xf]
    %v40 = vld [vmem:[%s0 + $0x48] sm:$0xf]
    %v41 = vld [vmem:[%s0 + $0x4c] sm:$0xf]
    %v42 = vld [vmem:[%s0 + $0x50] sm:$0xf]
    %v43 = vld [vmem:[%s0 + $0x54] sm:$0xf]
    %v44 = vld [vmem:[%s0 + $0x58] sm:$0xf]
    %v45 = vld [vmem:[%s0 + $0x5c] sm:$0xf]
    %v46 = vld [vmem:[%s0 + $0x60] sm:$0xf]
    %v47 = vld [vmem:[%s0 + $0x64] sm:$0xf]
    %v48 = vld [vmem:[%s0 + $0x68] sm:$0xf]
    %v49 = vld [vmem:[%s0 + $0x6c] sm:$0xf]
    %v50 = vld [vmem:[%s0 + $0x70] sm:$0xf]
    %v51 = vld [vmem:[%s0 + $0x74] sm:$0xf]
    %v52 = vld [vmem:[%s0 + $0x78] sm:$0xf]
    %v53 = vld [vmem:[%s0 + $0x7c] sm:$0xf]
    %v54 = vld [vmem:[%s0 + $0x80] sm:$0xf]
    %v55 = vld [vmem:[%s0 + $0x84] sm:$0xf]
    %v56 = vld [vmem:[%s0 + $0x88] sm:$0xf]
    %v57 = vld [vmem:[%s0 + $0x8c] sm:$0xf]
    %v58 = vld [vmem:[%s0 + $0x90] sm:$0xf]
    %v59 = vld [vmem:[%s0 + $0x94] sm:$0xf]
    %v60 = vld [vmem:[%s0 + $0x98] sm:$0xf]
    %v61 = vld [vmem:[%s0 + $0x9c] sm:$0xf]
    %v62 = vld [vmem:[%s0 + $0xa0] sm:$0xf]
    %v63 = vld [vmem:[%s0 + $0xa4] sm:$0xf]
    %v64 = vld [vmem:[%s0 + $0xa8] sm:$0xf]
    %v65 = vld [vmem:[%s0 + $0xac] sm:$0xf]
    %v66 = vld [vmem:[%s0 + $0xb0] sm:$0xf]
    %v67 = vld [vmem:[%s0 + $0xb4] sm:$0xf]
    %v68 = vld [vmem:[%s0 + $0xb8] sm:$0xf]
    %v69 = vld [vmem:[%s0 + $0xbc] sm:$0xf]
    %v70 = vld [vmem:[%s0 + $0xc0] sm:$0xf]
    %v71 = vld [vmem:[%s0 + $0xc4] sm:$0xf]
    %v72 = vld [vmem:[%s0 + $0xc8] sm:$0xf]
    %v73 = vld [vmem:[%s0 + $0xcc] sm:$0xf]
    %v74 = vld [vmem:[%s0 + $0xd0] sm:$0xf]
    %v75 = vld [vmem:[%s0 + $0xd4] sm:$0xf]
    %v76 = vld [vmem:[%s0 + $0xd8] sm:$0xf]
    %v77 = vld [vmem:[%s0 + $0xdc] sm:$0xf]
    %v78 = vld [vmem:[%s0 + $0xe0] sm:$0xf]
    %v79 = vld [vmem:[%s0 + $0xe4] sm:$0xf]
    %v80 = vld [vmem:[%s0 + $0xe8] sm:$0xf]
    %v81 = vld [vmem:[%s0 + $0xec] sm:$0xf]
    %v82 = vld [vmem:[%s0 + $0xf0] sm:$0xf]
    %v83 = vld [vmem:[%s0 + $0xf4] sm:$0xf]
    %v84 = vld [vmem:[%s0 + $0xf8] sm:$0xf]
    %v85 = vld [vmem:[%s0 + $0xfc] sm:$0xf]
    %v86 = vld [vmem:[%s1] sm:$0xf]
    %v87 = vld [vmem:[%s1 + $0x4] sm:$0xf]
    %v88 = vld [vmem:[%s1 + $0x8] sm:$0xf]
    %v89 = vld [vmem:[%s1 + $0xc] sm:$0xf]
    %v154 = vunpack.c.l.b16 %v22
    %v155 = vunpack.c.l.b16 %v23
    %v156 = vunpack.c.l.b16 %v24
    %v157 = vunpack.c.l.b16 %v25
    %v158 = vunpack.c.l.b16 %v26
    %v159 = vunpack.c.l.b16 %v27
    %v160 = vunpack.c.l.b16 %v28
    %v161 = vunpack.c.l.b16 %v29
    %v162 = vunpack.c.l.b16 %v30
    %v163 = vunpack.c.l.b16 %v31
    %v164 = vunpack.c.l.b16 %v32
    %v165 = vunpack.c.l.b16 %v33
    %v166 = vunpack.c.l.b16 %v34
    %v167 = vunpack.c.l.b16 %v35
    %v168 = vunpack.c.l.b16 %v36
    %v169 = vunpack.c.l.b16 %v37
    %v170 = vunpack.c.l.b16 %v38
    %v171 = vunpack.c.l.b16 %v39
    %v172 = vunpack.c.l.b16 %v40
    %v173 = vunpack.c.l.b16 %v41
    %v174 = vunpack.c.l.b16 %v42
    %v175 = vunpack.c.l.b16 %v43
    %v176 = vunpack.c.l.b16 %v44
    %v177 = vunpack.c.l.b16 %v45
    %v178 = vunpack.c.l.b16 %v46
    %v179 = vunpack.c.l.b16 %v47
    %v180 = vunpack.c.l.b16 %v48
    %v181 = vunpack.c.l.b16 %v49
    %v182 = vunpack.c.l.b16 %v50
    %v183 = vunpack.c.l.b16 %v51
    %v184 = vunpack.c.l.b16 %v52
    %v185 = vunpack.c.l.b16 %v53
    %v186 = vunpack.c.l.b16 %v54
    %v187 = vunpack.c.l.b16 %v55
    %v188 = vunpack.c.l.b16 %v56
    %v189 = vunpack.c.l.b16 %v57
    %v190 = vunpack.c.l.b16 %v58
    %v191 = vunpack.c.l.b16 %v59
    %v192 = vunpack.c.l.b16 %v60
    %v193 = vunpack.c.l.b16 %v61
    %v194 = vunpack.c.l.b16 %v62
    %v195 = vunpack.c.l.b16 %v63
    %v196 = vunpack.c.l.b16 %v64
    %v197 = vunpack.c.l.b16 %v65
    %v198 = vunpack.c.l.b16 %v66
    %v199 = vunpack.c.l.b16 %v67
    %v200 = vunpack.c.l.b16 %v68
    %v201 = vunpack.c.l.b16 %v69
    %v202 = vunpack.c.l.b16 %v70
    %v203 = vunpack.c.l.b16 %v71
    %v204 = vunpack.c.l.b16 %v72
    %v205 = vunpack.c.l.b16 %v73
    %v206 = vunpack.c.l.b16 %v74
    %v207 = vunpack.c.l.b16 %v75
    %v208 = vunpack.c.l.b16 %v76
    %v209 = vunpack.c.l.b16 %v77
    %v210 = vunpack.c.l.b16 %v78
    %v211 = vunpack.c.l.b16 %v79
    %v212 = vunpack.c.l.b16 %v80
    %v213 = vunpack.c.l.b16 %v81
    %v214 = vunpack.c.l.b16 %v82
    %v215 = vunpack.c.l.b16 %v83
    %v216 = vunpack.c.l.b16 %v84
    %v217 = vunpack.c.l.b16 %v85
    %v218 = vpack.c.b16 %v155, %v154
    %v219 = vpack.c.b16 %v157, %v156
    %v220 = vpack.c.b16 %v159, %v158
    %v221 = vpack.c.b16 %v161, %v160
    %v222 = vpack.c.b16 %v163, %v162
    %v223 = vpack.c.b16 %v165, %v164
    %v224 = vpack.c.b16 %v167, %v166
    %v225 = vpack.c.b16 %v169, %v168
    %v226 = vpack.c.b16 %v171, %v170
    %v227 = vpack.c.b16 %v173, %v172
    %v228 = vpack.c.b16 %v175, %v174
    %v229 = vpack.c.b16 %v177, %v176
    %v230 = vpack.c.b16 %v179, %v178
    %v231 = vpack.c.b16 %v181, %v180
    %v232 = vpack.c.b16 %v183, %v182
    %v233 = vpack.c.b16 %v185, %v184
    %v234 = vpack.c.b16 %v187, %v186
    %v235 = vpack.c.b16 %v189, %v188
    %v236 = vpack.c.b16 %v191, %v190
    %v237 = vpack.c.b16 %v193, %v192
    %v238 = vpack.c.b16 %v195, %v194
    %v239 = vpack.c.b16 %v197, %v196
    %v240 = vpack.c.b16 %v199, %v198
    %v241 = vpack.c.b16 %v201, %v200
    %v242 = vpack.c.b16 %v203, %v202
    %v243 = vpack.c.b16 %v205, %v204
    %v244 = vpack.c.b16 %v207, %v206
    %v245 = vpack.c.b16 %v209, %v208
    %v246 = vpack.c.b16 %v211, %v210
    %v247 = vpack.c.b16 %v213, %v212
    %v248 = vpack.c.b16 %v215, %v214
    %v249 = vpack.c.b16 %v217, %v216
    %v254 = vunpack.c.l.b16 %v86
    %v255 = vunpack.c.l.b16 %v87
    %v256 = vunpack.c.l.b16 %v88
    %v257 = vunpack.c.l.b16 %v89
    %v258 = vpack.c.b16 %v255, %v254
    %v259 = vpack.c.b16 %v257, %v256
    %vm262 = vcmask 261120
    %v264 = vsel %vm262, %v218, 0
    %v267 = vsel %vm262, %v219, 0
    %v270 = vsel %vm262, %v220, 0
    %v273 = vsel %vm262, %v221, 0
    %v276 = vsel %vm262, %v222, 0
    %v279 = vsel %vm262, %v223, 0
    %v282 = vsel %vm262, %v224, 0
    %v285 = vsel %vm262, %v225, 0
    %v288 = vsel %vm262, %v226, 0
    %v291 = vsel %vm262, %v227, 0
    %v294 = vsel %vm262, %v228, 0
    %v297 = vsel %vm262, %v229, 0
    %v300 = vsel %vm262, %v230, 0
    %v303 = vsel %vm262, %v231, 0
    %v306 = vsel %vm262, %v232, 0
    %v309 = vsel %vm262, %v233, 0
    %v312 = vsel %vm262, %v234, 0
    %v315 = vsel %vm262, %v235, 0
    %v318 = vsel %vm262, %v236, 0
    %v321 = vsel %vm262, %v237, 0
    %v324 = vsel %vm262, %v238, 0
    %v327 = vsel %vm262, %v239, 0
    %v330 = vsel %vm262, %v240, 0
    %v333 = vsel %vm262, %v241, 0
    %v336 = vsel %vm262, %v242, 0
    %v339 = vsel %vm262, %v243, 0
    %v342 = vsel %vm262, %v244, 0
    %v345 = vsel %vm262, %v245, 0
    %v348 = vsel %vm262, %v246, 0
    %v351 = vsel %vm262, %v247, 0
    %v354 = vsel %vm262, %v248, 0
    %v357 = vsel %vm262, %v249, 0
    %359 = vmatprep.subr.bf16.mxu0 0
    %360 = vmatpush1.bf16.msra.mxu0 0
    %361 = vmatprep.subr.bf16.mxu0 0
    %362 = vmatpush1.bf16.msra.mxu0 0
    %363 = vmatprep.subr.bf16.mxu0 0
    %364 = vmatpush1.bf16.msra.mxu0 0
    %365 = vmatprep.subr.bf16.mxu0 0
    %366 = vmatpush1.bf16.msra.mxu0 0
    %367 = vmatprep.subr.bf16.mxu0 0
    %368 = vmatpush1.bf16.msra.mxu0 0
    %369 = vmatprep.subr.bf16.mxu0 0
    %370 = vmatpush1.bf16.msra.mxu0 0
    %371 = vmatprep.subr.bf16.mxu0 0
    %372 = vmatpush1.bf16.msra.mxu0 %v259
    %373 = vmatprep.subr.bf16.mxu0 0
    %374 = vmatpush1.bf16.msra.mxu0 %v258
    %375 = vmatprep.subr.bf16.mxu0 0
    %376 = vmatpush2.bf16.msra.mxu0 0
    %377 = vmatprep.subr.bf16.mxu0 0
    %378 = vmatpush2.bf16.msra.mxu0 0
    %379 = vmatprep.subr.bf16.mxu0 0
    %380 = vmatpush2.bf16.msra.mxu0 0
    %381 = vmatprep.subr.bf16.mxu0 0
    %382 = vmatpush2.bf16.msra.mxu0 0
    %383 = vmatprep.subr.bf16.mxu0 0
    %384 = vmatpush2.bf16.msra.mxu0 0
    %385 = vmatprep.subr.bf16.mxu0 0
    %386 = vmatpush2.bf16.msra.mxu0 0
    %387 = vmatprep.subr.bf16.mxu0 0
    %388 = vmatpush2.bf16.msra.mxu0 0
    %389 = vmatprep.subr.bf16.mxu0 0
    %390 = vmatpush2.bf16.msra.mxu0 0
    %391 = vmatprep.mubr.bf16.mxu0 0
    %392 = vmatmul.mubr.bf16.gmra.mxu0 %v264
    %v393 = vpop.f32.mrf.mxu0
    %v394 = vadd.f32 0.0, %v393
    %v395 = vpop.f32.mrf.mxu0
    %v396 = vpop.f32.mrf.mxu0
    %v397 = vadd.f32 0.0, %v396
    %v398 = vpop.f32.mrf.mxu0
    %399 = vmatprep.mubr.bf16.mxu0 0
    %400 = vmatmul.mubr.bf16.gmra.mxu0 %v267
    %v401 = vpop.f32.mrf.mxu0
    %v402 = vadd.f32 0.0, %v401
    %v403 = vpop.f32.mrf.mxu0
    %v404 = vpop.f32.mrf.mxu0
    %v405 = vadd.f32 0.0, %v404
    %v406 = vpop.f32.mrf.mxu0
    %407 = vmatprep.mubr.bf16.mxu0 0
    %408 = vmatmul.mubr.bf16.gmra.mxu0 %v270
    %v409 = vpop.f32.mrf.mxu0
    %v410 = vadd.f32 0.0, %v409
    %v411 = vpop.f32.mrf.mxu0
    %v412 = vpop.f32.mrf.mxu0
    %v413 = vadd.f32 0.0, %v412
    %v414 = vpop.f32.mrf.mxu0
    %415 = vmatprep.mubr.bf16.mxu0 0
    %416 = vmatmul.mubr.bf16.gmra.mxu0 %v273
    %v417 = vpop.f32.mrf.mxu0
    %v418 = vadd.f32 0.0, %v417
    %v419 = vpop.f32.mrf.mxu0
    %v420 = vpop.f32.mrf.mxu0
    %v421 = vadd.f32 0.0, %v420
    %v422 = vpop.f32.mrf.mxu0
    %423 = vmatprep.mubr.bf16.mxu0 0
    %424 = vmatmul.mubr.bf16.gmra.mxu0 %v276
    %v425 = vpop.f32.mrf.mxu0
    %v426 = vadd.f32 0.0, %v425
    %v427 = vpop.f32.mrf.mxu0
    %v428 = vpop.f32.mrf.mxu0
    %v429 = vadd.f32 0.0, %v428
    %v430 = vpop.f32.mrf.mxu0
    %431 = vmatprep.mubr.bf16.mxu0 0
    %432 = vmatmul.mubr.bf16.gmra.mxu0 %v279
    %v433 = vpop.f32.mrf.mxu0
    %v434 = vadd.f32 0.0, %v433
    %v435 = vpop.f32.mrf.mxu0
    %v436 = vpop.f32.mrf.mxu0
    %v437 = vadd.f32 0.0, %v436
    %v438 = vpop.f32.mrf.mxu0
    %439 = vmatprep.mubr.bf16.mxu0 0
    %440 = vmatmul.mubr.bf16.gmra.mxu0 %v282
    %v441 = vpop.f32.mrf.mxu0
    %v442 = vadd.f32 0.0, %v441
    %v443 = vpop.f32.mrf.mxu0
    %v444 = vpop.f32.mrf.mxu0
    %v445 = vadd.f32 0.0, %v444
    %v446 = vpop.f32.mrf.mxu0
    %447 = vmatprep.mubr.bf16.mxu0 0
    %448 = vmatmul.mubr.bf16.gmra.mxu0 %v285
    %v449 = vpop.f32.mrf.mxu0
    %v450 = vadd.f32 0.0, %v449
    %v451 = vpop.f32.mrf.mxu0
    %v452 = vpop.f32.mrf.mxu0
    %v453 = vadd.f32 0.0, %v452
    %v454 = vpop.f32.mrf.mxu0
    %455 = vmatprep.mubr.bf16.mxu0 0
    %456 = vmatmul.mubr.bf16.gmra.mxu0 %v288
    %v457 = vpop.f32.mrf.mxu0
    %v458 = vadd.f32 0.0, %v457
    %v459 = vpop.f32.mrf.mxu0
    %v460 = vpop.f32.mrf.mxu0
    %v461 = vadd.f32 0.0, %v460
    %v462 = vpop.f32.mrf.mxu0
    %463 = vmatprep.mubr.bf16.mxu0 0
    %464 = vmatmul.mubr.bf16.gmra.mxu0 %v291
    %v465 = vpop.f32.mrf.mxu0
    %v466 = vadd.f32 0.0, %v465
    %v467 = vpop.f32.mrf.mxu0
    %v468 = vpop.f32.mrf.mxu0
    %v469 = vadd.f32 0.0, %v468
    %v470 = vpop.f32.mrf.mxu0
    %471 = vmatprep.mubr.bf16.mxu0 0
    %472 = vmatmul.mubr.bf16.gmra.mxu0 %v294
    %v473 = vpop.f32.mrf.mxu0
    %v474 = vadd.f32 0.0, %v473
    %v475 = vpop.f32.mrf.mxu0
    %v476 = vpop.f32.mrf.mxu0
    %v477 = vadd.f32 0.0, %v476
    %v478 = vpop.f32.mrf.mxu0
    %479 = vmatprep.mubr.bf16.mxu0 0
    %480 = vmatmul.mubr.bf16.gmra.mxu0 %v297
    %v481 = vpop.f32.mrf.mxu0
    %v482 = vadd.f32 0.0, %v481
    %v483 = vpop.f32.mrf.mxu0
    %v484 = vpop.f32.mrf.mxu0
    %v485 = vadd.f32 0.0, %v484
    %v486 = vpop.f32.mrf.mxu0
    %487 = vmatprep.mubr.bf16.mxu0 0
    %488 = vmatmul.mubr.bf16.gmra.mxu0 %v300
    %v489 = vpop.f32.mrf.mxu0
    %v490 = vadd.f32 0.0, %v489
    %v491 = vpop.f32.mrf.mxu0
    %v492 = vpop.f32.mrf.mxu0
    %v493 = vadd.f32 0.0, %v492
    %v494 = vpop.f32.mrf.mxu0
    %495 = vmatprep.mubr.bf16.mxu0 0
    %496 = vmatmul.mubr.bf16.gmra.mxu0 %v303
    %v497 = vpop.f32.mrf.mxu0
    %v498 = vadd.f32 0.0, %v497
    %v499 = vpop.f32.mrf.mxu0
    %v500 = vpop.f32.mrf.mxu0
    %v501 = vadd.f32 0.0, %v500
    %v502 = vpop.f32.mrf.mxu0
    %503 = vmatprep.mubr.bf16.mxu0 0
    %504 = vmatmul.mubr.bf16.gmra.mxu0 %v306
    %v505 = vpop.f32.mrf.mxu0
    %v506 = vadd.f32 0.0, %v505
    %v507 = vpop.f32.mrf.mxu0
    %v508 = vpop.f32.mrf.mxu0
    %v509 = vadd.f32 0.0, %v508
    %v510 = vpop.f32.mrf.mxu0
    %511 = vmatprep.mubr.bf16.mxu0 0
    %512 = vmatmul.mubr.bf16.gmra.mxu0 %v309
    %v513 = vpop.f32.mrf.mxu0
    %v514 = vadd.f32 0.0, %v513
    %v515 = vpop.f32.mrf.mxu0
    %v516 = vpop.f32.mrf.mxu0
    %v517 = vadd.f32 0.0, %v516
    %v518 = vpop.f32.mrf.mxu0
    %519 = vmatprep.mubr.bf16.mxu0 0
    %520 = vmatmul.mubr.bf16.gmra.mxu0 %v312
    %v521 = vpop.f32.mrf.mxu0
    %v522 = vadd.f32 0.0, %v521
    %v523 = vpop.f32.mrf.mxu0
    %v524 = vpop.f32.mrf.mxu0
    %v525 = vadd.f32 0.0, %v524
    %v526 = vpop.f32.mrf.mxu0
    %527 = vmatprep.mubr.bf16.mxu0 0
    %528 = vmatmul.mubr.bf16.gmra.mxu0 %v315
    %v529 = vpop.f32.mrf.mxu0
    %v530 = vadd.f32 0.0, %v529
    %v531 = vpop.f32.mrf.mxu0
    %v532 = vpop.f32.mrf.mxu0
    %v533 = vadd.f32 0.0, %v532
    %v534 = vpop.f32.mrf.mxu0
    %535 = vmatprep.mubr.bf16.mxu0 0
    %536 = vmatmul.mubr.bf16.gmra.mxu0 %v318
    %v537 = vpop.f32.mrf.mxu0
    %v538 = vadd.f32 0.0, %v537
    %v539 = vpop.f32.mrf.mxu0
    %v540 = vpop.f32.mrf.mxu0
    %v541 = vadd.f32 0.0, %v540
    %v542 = vpop.f32.mrf.mxu0
    %543 = vmatprep.mubr.bf16.mxu0 0
    %544 = vmatmul.mubr.bf16.gmra.mxu0 %v321
    %v545 = vpop.f32.mrf.mxu0
    %v546 = vadd.f32 0.0, %v545
    %v547 = vpop.f32.mrf.mxu0
    %v548 = vpop.f32.mrf.mxu0
    %v549 = vadd.f32 0.0, %v548
    %v550 = vpop.f32.mrf.mxu0
    %551 = vmatprep.mubr.bf16.mxu0 0
    %552 = vmatmul.mubr.bf16.gmra.mxu0 %v324
    %v553 = vpop.f32.mrf.mxu0
    %v554 = vadd.f32 0.0, %v553
    %v555 = vpop.f32.mrf.mxu0
    %v556 = vpop.f32.mrf.mxu0
    %v557 = vadd.f32 0.0, %v556
    %v558 = vpop.f32.mrf.mxu0
    %559 = vmatprep.mubr.bf16.mxu0 0
    %560 = vmatmul.mubr.bf16.gmra.mxu0 %v327
    %v561 = vpop.f32.mrf.mxu0
    %v562 = vadd.f32 0.0, %v561
    %v563 = vpop.f32.mrf.mxu0
    %v564 = vpop.f32.mrf.mxu0
    %v565 = vadd.f32 0.0, %v564
    %v566 = vpop.f32.mrf.mxu0
    %567 = vmatprep.mubr.bf16.mxu0 0
    %568 = vmatmul.mubr.bf16.gmra.mxu0 %v330
    %v569 = vpop.f32.mrf.mxu0
    %v570 = vadd.f32 0.0, %v569
    %v571 = vpop.f32.mrf.mxu0
    %v572 = vpop.f32.mrf.mxu0
    %v573 = vadd.f32 0.0, %v572
    %v574 = vpop.f32.mrf.mxu0
    %575 = vmatprep.mubr.bf16.mxu0 0
    %576 = vmatmul.mubr.bf16.gmra.mxu0 %v333
    %v577 = vpop.f32.mrf.mxu0
    %v578 = vadd.f32 0.0, %v577
    %v579 = vpop.f32.mrf.mxu0
    %v580 = vpop.f32.mrf.mxu0
    %v581 = vadd.f32 0.0, %v580
    %v582 = vpop.f32.mrf.mxu0
    %583 = vmatprep.mubr.bf16.mxu0 0
    %584 = vmatmul.mubr.bf16.gmra.mxu0 %v336
    %v585 = vpop.f32.mrf.mxu0
    %v586 = vadd.f32 0.0, %v585
    %v587 = vpop.f32.mrf.mxu0
    %v588 = vpop.f32.mrf.mxu0
    %v589 = vadd.f32 0.0, %v588
    %v590 = vpop.f32.mrf.mxu0
    %591 = vmatprep.mubr.bf16.mxu0 0
    %592 = vmatmul.mubr.bf16.gmra.mxu0 %v339
    %v593 = vpop.f32.mrf.mxu0
    %v594 = vadd.f32 0.0, %v593
    %v595 = vpop.f32.mrf.mxu0
    %v596 = vpop.f32.mrf.mxu0
    %v597 = vadd.f32 0.0, %v596
    %v598 = vpop.f32.mrf.mxu0
    %599 = vmatprep.mubr.bf16.mxu0 0
    %600 = vmatmul.mubr.bf16.gmra.mxu0 %v342
    %v601 = vpop.f32.mrf.mxu0
    %v602 = vadd.f32 0.0, %v601
    %v603 = vpop.f32.mrf.mxu0
    %v604 = vpop.f32.mrf.mxu0
    %v605 = vadd.f32 0.0, %v604
    %v606 = vpop.f32.mrf.mxu0
    %607 = vmatprep.mubr.bf16.mxu0 0
    %608 = vmatmul.mubr.bf16.gmra.mxu0 %v345
    %v609 = vpop.f32.mrf.mxu0
    %v610 = vadd.f32 0.0, %v609
    %v611 = vpop.f32.mrf.mxu0
    %v612 = vpop.f32.mrf.mxu0
    %v613 = vadd.f32 0.0, %v612
    %v614 = vpop.f32.mrf.mxu0
    %615 = vmatprep.mubr.bf16.mxu0 0
    %616 = vmatmul.mubr.bf16.gmra.mxu0 %v348
    %v617 = vpop.f32.mrf.mxu0
    %v618 = vadd.f32 0.0, %v617
    %v619 = vpop.f32.mrf.mxu0
    %v620 = vpop.f32.mrf.mxu0
    %v621 = vadd.f32 0.0, %v620
    %v622 = vpop.f32.mrf.mxu0
    %623 = vmatprep.mubr.bf16.mxu0 0
    %624 = vmatmul.mubr.bf16.gmra.mxu0 %v351
    %v625 = vpop.f32.mrf.mxu0
    %v626 = vadd.f32 0.0, %v625
    %v627 = vpop.f32.mrf.mxu0
    %v628 = vpop.f32.mrf.mxu0
    %v629 = vadd.f32 0.0, %v628
    %v630 = vpop.f32.mrf.mxu0
    %631 = vmatprep.mubr.bf16.mxu0 0
    %632 = vmatmul.mubr.bf16.gmra.mxu0 %v354
    %v633 = vpop.f32.mrf.mxu0
    %v634 = vadd.f32 0.0, %v633
    %v635 = vpop.f32.mrf.mxu0
    %v636 = vpop.f32.mrf.mxu0
    %v637 = vadd.f32 0.0, %v636
    %v638 = vpop.f32.mrf.mxu0
    %639 = vmatprep.mubr.bf16.mxu0 0
    %640 = vmatmul.mubr.bf16.gmra.mxu0 %v357
    %v641 = vpop.f32.mrf.mxu0
    %v642 = vadd.f32 0.0, %v641
    %v643 = vpop.f32.mrf.mxu0
    %v644 = vpop.f32.mrf.mxu0
    %v645 = vadd.f32 0.0, %v644
    %v646 = vpop.f32.mrf.mxu0
    %647 = vdwg.mxu0
    %v648 = vld [vmem:[%s2] sm:$0x1]
    %v650 = vlaneseq
    %v651 = vshrl.u32 %v650, 7
    %v652 = vsub.s32 0, %v651
    %v653 = vrot.slane %v648, %v652
    %v655 = vmul.f32 %v394, %v653
    %v656 = vmul.f32 %v397, %v653
    %v657 = vmul.f32 %v402, %v653
    %v658 = vmul.f32 %v405, %v653
    %v659 = vmul.f32 %v410, %v653
    %v660 = vmul.f32 %v413, %v653
    %v661 = vmul.f32 %v418, %v653
    %v662 = vmul.f32 %v421, %v653
    %v663 = vmul.f32 %v426, %v653
    %v664 = vmul.f32 %v429, %v653
    %v665 = vmul.f32 %v434, %v653
    %v666 = vmul.f32 %v437, %v653
    %v667 = vmul.f32 %v442, %v653
    %v668 = vmul.f32 %v445, %v653
    %v669 = vmul.f32 %v450, %v653
    %v670 = vmul.f32 %v453, %v653
    %v671 = vmul.f32 %v458, %v653
    %v672 = vmul.f32 %v461, %v653
    %v673 = vmul.f32 %v466, %v653
    %v674 = vmul.f32 %v469, %v653
    %v675 = vmul.f32 %v474, %v653
    %v676 = vmul.f32 %v477, %v653
    %v677 = vmul.f32 %v482, %v653
    %v678 = vmul.f32 %v485, %v653
    %v679 = vmul.f32 %v490, %v653
    %v680 = vmul.f32 %v493, %v653
    %v681 = vmul.f32 %v498, %v653
    %v682 = vmul.f32 %v501, %v653
    %v683 = vmul.f32 %v506, %v653
    %v684 = vmul.f32 %v509, %v653
    %v685 = vmul.f32 %v514, %v653
    %v686 = vmul.f32 %v517, %v653
    %v687 = vmul.f32 %v522, %v653
    %v688 = vmul.f32 %v525, %v653
    %v689 = vmul.f32 %v530, %v653
    %v690 = vmul.f32 %v533, %v653
    %v691 = vmul.f32 %v538, %v653
    %v692 = vmul.f32 %v541, %v653
    %v693 = vmul.f32 %v546, %v653
    %v694 = vmul.f32 %v549, %v653
    %v695 = vmul.f32 %v554, %v653
    %v696 = vmul.f32 %v557, %v653
    %v697 = vmul.f32 %v562, %v653
    %v698 = vmul.f32 %v565, %v653
    %v699 = vmul.f32 %v570, %v653
    %v700 = vmul.f32 %v573, %v653
    %v701 = vmul.f32 %v578, %v653
    %v702 = vmul.f32 %v581, %v653
    %v703 = vmul.f32 %v586, %v653
    %v704 = vmul.f32 %v589, %v653
    %v705 = vmul.f32 %v594, %v653
    %v706 = vmul.f32 %v597, %v653
    %v707 = vmul.f32 %v602, %v653
    %v708 = vmul.f32 %v605, %v653
    %v709 = vmul.f32 %v610, %v653
    %v710 = vmul.f32 %v613, %v653
    %v711 = vmul.f32 %v618, %v653
    %v712 = vmul.f32 %v621, %v653
    %v713 = vmul.f32 %v626, %v653
    %v714 = vmul.f32 %v629, %v653
    %v715 = vmul.f32 %v634, %v653
    %v716 = vmul.f32 %v637, %v653
    %v717 = vmul.f32 %v642, %v653
    %v718 = vmul.f32 %v645, %v653
    %v719 = vld [vmem:[%s3] sm:$0x1]
    %v721 = vlaneseq
    %v722 = vshrl.u32 %v721, 7
    %v723 = vsub.s32 0, %v722
    %v724 = vrot.slane %v719, %v723
    %v726 = vadd.f32 %v655, %v724
    %v727 = vadd.f32 %v656, %v724
    %v728 = vadd.f32 %v657, %v724
    %v729 = vadd.f32 %v658, %v724
    %v730 = vadd.f32 %v659, %v724
    %v731 = vadd.f32 %v660, %v724
    %v732 = vadd.f32 %v661, %v724
    %v733 = vadd.f32 %v662, %v724
    %v734 = vadd.f32 %v663, %v724
    %v735 = vadd.f32 %v664, %v724
    %v736 = vadd.f32 %v665, %v724
    %v737 = vadd.f32 %v666, %v724
    %v738 = vadd.f32 %v667, %v724
    %v739 = vadd.f32 %v668, %v724
    %v740 = vadd.f32 %v669, %v724
    %v741 = vadd.f32 %v670, %v724
    %v742 = vadd.f32 %v671, %v724
    %v743 = vadd.f32 %v672, %v724
    %v744 = vadd.f32 %v673, %v724
    %v745 = vadd.f32 %v674, %v724
    %v746 = vadd.f32 %v675, %v724
    %v747 = vadd.f32 %v676, %v724
    %v748 = vadd.f32 %v677, %v724
    %v749 = vadd.f32 %v678, %v724
    %v750 = vadd.f32 %v679, %v724
    %v751 = vadd.f32 %v680, %v724
    %v752 = vadd.f32 %v681, %v724
    %v753 = vadd.f32 %v682, %v724
    %v754 = vadd.f32 %v683, %v724
    %v755 = vadd.f32 %v684, %v724
    %v756 = vadd.f32 %v685, %v724
    %v757 = vadd.f32 %v686, %v724
    %v758 = vadd.f32 %v687, %v724
    %v759 = vadd.f32 %v688, %v724
    %v760 = vadd.f32 %v689, %v724
    %v761 = vadd.f32 %v690, %v724
    %v762 = vadd.f32 %v691, %v724
    %v763 = vadd.f32 %v692, %v724
    %v764 = vadd.f32 %v693, %v724
    %v765 = vadd.f32 %v694, %v724
    %v766 = vadd.f32 %v695, %v724
    %v767 = vadd.f32 %v696, %v724
    %v768 = vadd.f32 %v697, %v724
    %v769 = vadd.f32 %v698, %v724
    %v770 = vadd.f32 %v699, %v724
    %v771 = vadd.f32 %v700, %v724
    %v772 = vadd.f32 %v701, %v724
    %v773 = vadd.f32 %v702, %v724
    %v774 = vadd.f32 %v703, %v724
    %v775 = vadd.f32 %v704, %v724
    %v776 = vadd.f32 %v705, %v724
    %v777 = vadd.f32 %v706, %v724
    %v778 = vadd.f32 %v707, %v724
    %v779 = vadd.f32 %v708, %v724
    %v780 = vadd.f32 %v709, %v724
    %v781 = vadd.f32 %v710, %v724
    %v782 = vadd.f32 %v711, %v724
    %v783 = vadd.f32 %v712, %v724
    %v784 = vadd.f32 %v713, %v724
    %v785 = vadd.f32 %v714, %v724
    %v786 = vadd.f32 %v715, %v724
    %v787 = vadd.f32 %v716, %v724
    %v788 = vadd.f32 %v717, %v724
    %v789 = vadd.f32 %v718, %v724
    %v790 = vmax.f32 %v726, 0.0
    %v791 = vmax.f32 %v727, 0.0
    %v792 = vmax.f32 %v728, 0.0
    %v793 = vmax.f32 %v729, 0.0
    %v794 = vmax.f32 %v730, 0.0
    %v795 = vmax.f32 %v731, 0.0
    %v796 = vmax.f32 %v732, 0.0
    %v797 = vmax.f32 %v733, 0.0
    %v798 = vmax.f32 %v734, 0.0
    %v799 = vmax.f32 %v735, 0.0
    %v800 = vmax.f32 %v736, 0.0
    %v801 = vmax.f32 %v737, 0.0
    %v802 = vmax.f32 %v738, 0.0
    %v803 = vmax.f32 %v739, 0.0
    %v804 = vmax.f32 %v740, 0.0
    %v805 = vmax.f32 %v741, 0.0
    %v806 = vmax.f32 %v742, 0.0
    %v807 = vmax.f32 %v743, 0.0
    %v808 = vmax.f32 %v744, 0.0
    %v809 = vmax.f32 %v745, 0.0
    %v810 = vmax.f32 %v746, 0.0
    %v811 = vmax.f32 %v747, 0.0
    %v812 = vmax.f32 %v748, 0.0
    %v813 = vmax.f32 %v749, 0.0
    %v814 = vmax.f32 %v750, 0.0
    %v815 = vmax.f32 %v751, 0.0
    %v816 = vmax.f32 %v752, 0.0
    %v817 = vmax.f32 %v753, 0.0
    %v818 = vmax.f32 %v754, 0.0
    %v819 = vmax.f32 %v755, 0.0
    %v820 = vmax.f32 %v756, 0.0
    %v821 = vmax.f32 %v757, 0.0
    %v822 = vmax.f32 %v758, 0.0
    %v823 = vmax.f32 %v759, 0.0
    %v824 = vmax.f32 %v760, 0.0
    %v825 = vmax.f32 %v761, 0.0
    %v826 = vmax.f32 %v762, 0.0
    %v827 = vmax.f32 %v763, 0.0
    %v828 = vmax.f32 %v764, 0.0
    %v829 = vmax.f32 %v765, 0.0
    %v830 = vmax.f32 %v766, 0.0
    %v831 = vmax.f32 %v767, 0.0
    %v832 = vmax.f32 %v768, 0.0
    %v833 = vmax.f32 %v769, 0.0
    %v834 = vmax.f32 %v770, 0.0
    %v835 = vmax.f32 %v771, 0.0
    %v836 = vmax.f32 %v772, 0.0
    %v837 = vmax.f32 %v773, 0.0
    %v838 = vmax.f32 %v774, 0.0
    %v839 = vmax.f32 %v775, 0.0
    %v840 = vmax.f32 %v776, 0.0
    %v841 = vmax.f32 %v777, 0.0
    %v842 = vmax.f32 %v778, 0.0
    %v843 = vmax.f32 %v779, 0.0
    %v844 = vmax.f32 %v780, 0.0
    %v845 = vmax.f32 %v781, 0.0
    %v846 = vmax.f32 %v782, 0.0
    %v847 = vmax.f32 %v783, 0.0
    %v848 = vmax.f32 %v784, 0.0
    %v849 = vmax.f32 %v785, 0.0
    %v850 = vmax.f32 %v786, 0.0
    %v851 = vmax.f32 %v787, 0.0
    %v852 = vmax.f32 %v788, 0.0
    %v853 = vmax.f32 %v789, 0.0
    %v854 = vld [vmem:[%s4] sm:$0xf]
    %v855 = vld [vmem:[%s4 + $0x4] sm:$0xf]
    %v856 = vld [vmem:[%s4 + $0x8] sm:$0xf]
    %v857 = vld [vmem:[%s4 + $0xc] sm:$0xf]
    %v858 = vld [vmem:[%s4 + $0x10] sm:$0xf]
    %v859 = vld [vmem:[%s4 + $0x14] sm:$0xf]
    %v860 = vld [vmem:[%s4 + $0x18] sm:$0xf]
    %v861 = vld [vmem:[%s4 + $0x1c] sm:$0xf]
    %v862 = vld [vmem:[%s4 + $0x20] sm:$0xf]
    %v863 = vld [vmem:[%s4 + $0x24] sm:$0xf]
    %v864 = vld [vmem:[%s4 + $0x28] sm:$0xf]
    %v865 = vld [vmem:[%s4 + $0x2c] sm:$0xf]
    %v866 = vld [vmem:[%s4 + $0x30] sm:$0xf]
    %v867 = vld [vmem:[%s4 + $0x34] sm:$0xf]
    %v868 = vld [vmem:[%s4 + $0x38] sm:$0xf]
    %v869 = vld [vmem:[%s4 + $0x3c] sm:$0xf]
    %v870 = vld [vmem:[%s4 + $0x40] sm:$0xf]
    %v871 = vld [vmem:[%s4 + $0x44] sm:$0xf]
    %v872 = vld [vmem:[%s4 + $0x48] sm:$0xf]
    %v873 = vld [vmem:[%s4 + $0x4c] sm:$0xf]
    %v874 = vld [vmem:[%s4 + $0x50] sm:$0xf]
    %v875 = vld [vmem:[%s4 + $0x54] sm:$0xf]
    %v876 = vld [vmem:[%s4 + $0x58] sm:$0xf]
    %v877 = vld [vmem:[%s4 + $0x5c] sm:$0xf]
    %v878 = vld [vmem:[%s4 + $0x60] sm:$0xf]
    %v879 = vld [vmem:[%s4 + $0x64] sm:$0xf]
    %v880 = vld [vmem:[%s4 + $0x68] sm:$0xf]
    %v881 = vld [vmem:[%s4 + $0x6c] sm:$0xf]
    %v882 = vld [vmem:[%s4 + $0x70] sm:$0xf]
    %v883 = vld [vmem:[%s4 + $0x74] sm:$0xf]
    %v884 = vld [vmem:[%s4 + $0x78] sm:$0xf]
    %v885 = vld [vmem:[%s4 + $0x7c] sm:$0xf]
    %v886 = vld [vmem:[%s4 + $0x80] sm:$0xf]
    %v887 = vld [vmem:[%s4 + $0x84] sm:$0xf]
    %v888 = vld [vmem:[%s4 + $0x88] sm:$0xf]
    %v889 = vld [vmem:[%s4 + $0x8c] sm:$0xf]
    %v890 = vld [vmem:[%s4 + $0x90] sm:$0xf]
    %v891 = vld [vmem:[%s4 + $0x94] sm:$0xf]
    %v892 = vld [vmem:[%s4 + $0x98] sm:$0xf]
    %v893 = vld [vmem:[%s4 + $0x9c] sm:$0xf]
    %v894 = vld [vmem:[%s4 + $0xa0] sm:$0xf]
    %v895 = vld [vmem:[%s4 + $0xa4] sm:$0xf]
    %v896 = vld [vmem:[%s4 + $0xa8] sm:$0xf]
    %v897 = vld [vmem:[%s4 + $0xac] sm:$0xf]
    %v898 = vld [vmem:[%s4 + $0xb0] sm:$0xf]
    %v899 = vld [vmem:[%s4 + $0xb4] sm:$0xf]
    %v900 = vld [vmem:[%s4 + $0xb8] sm:$0xf]
    %v901 = vld [vmem:[%s4 + $0xbc] sm:$0xf]
    %v902 = vld [vmem:[%s4 + $0xc0] sm:$0xf]
    %v903 = vld [vmem:[%s4 + $0xc4] sm:$0xf]
    %v904 = vld [vmem:[%s4 + $0xc8] sm:$0xf]
    %v905 = vld [vmem:[%s4 + $0xcc] sm:$0xf]
    %v906 = vld [vmem:[%s4 + $0xd0] sm:$0xf]
    %v907 = vld [vmem:[%s4 + $0xd4] sm:$0xf]
    %v908 = vld [vmem:[%s4 + $0xd8] sm:$0xf]
    %v909 = vld [vmem:[%s4 + $0xdc] sm:$0xf]
    %v910 = vld [vmem:[%s4 + $0xe0] sm:$0xf]
    %v911 = vld [vmem:[%s4 + $0xe4] sm:$0xf]
    %v912 = vld [vmem:[%s4 + $0xe8] sm:$0xf]
    %v913 = vld [vmem:[%s4 + $0xec] sm:$0xf]
    %v914 = vld [vmem:[%s4 + $0xf0] sm:$0xf]
    %v915 = vld [vmem:[%s4 + $0xf4] sm:$0xf]
    %v916 = vld [vmem:[%s4 + $0xf8] sm:$0xf]
    %v917 = vld [vmem:[%s4 + $0xfc] sm:$0xf]
    %v918 = vunpack.c.l.bf16 %v854
    %v919 = vunpack.c.l.bf16 %v855
    %v920 = vunpack.c.l.bf16 %v856
    %v921 = vunpack.c.l.bf16 %v857
    %v922 = vunpack.c.l.bf16 %v858
    %v923 = vunpack.c.l.bf16 %v859
    %v924 = vunpack.c.l.bf16 %v860
    %v925 = vunpack.c.l.bf16 %v861
    %v926 = vunpack.c.l.bf16 %v862
    %v927 = vunpack.c.l.bf16 %v863
    %v928 = vunpack.c.l.bf16 %v864
    %v929 = vunpack.c.l.bf16 %v865
    %v930 = vunpack.c.l.bf16 %v866
    %v931 = vunpack.c.l.bf16 %v867
    %v932 = vunpack.c.l.bf16 %v868
    %v933 = vunpack.c.l.bf16 %v869
    %v934 = vunpack.c.l.bf16 %v870
    %v935 = vunpack.c.l.bf16 %v871
    %v936 = vunpack.c.l.bf16 %v872
    %v937 = vunpack.c.l.bf16 %v873
    %v938 = vunpack.c.l.bf16 %v874
    %v939 = vunpack.c.l.bf16 %v875
    %v940 = vunpack.c.l.bf16 %v876
    %v941 = vunpack.c.l.bf16 %v877
    %v942 = vunpack.c.l.bf16 %v878
    %v943 = vunpack.c.l.bf16 %v879
    %v944 = vunpack.c.l.bf16 %v880
    %v945 = vunpack.c.l.bf16 %v881
    %v946 = vunpack.c.l.bf16 %v882
    %v947 = vunpack.c.l.bf16 %v883
    %v948 = vunpack.c.l.bf16 %v884
    %v949 = vunpack.c.l.bf16 %v885
    %v950 = vunpack.c.l.bf16 %v886
    %v951 = vunpack.c.l.bf16 %v887
    %v952 = vunpack.c.l.bf16 %v888
    %v953 = vunpack.c.l.bf16 %v889
    %v954 = vunpack.c.l.bf16 %v890
    %v955 = vunpack.c.l.bf16 %v891
    %v956 = vunpack.c.l.bf16 %v892
    %v957 = vunpack.c.l.bf16 %v893
    %v958 = vunpack.c.l.bf16 %v894
    %v959 = vunpack.c.l.bf16 %v895
    %v960 = vunpack.c.l.bf16 %v896
    %v961 = vunpack.c.l.bf16 %v897
    %v962 = vunpack.c.l.bf16 %v898
    %v963 = vunpack.c.l.bf16 %v899
    %v964 = vunpack.c.l.bf16 %v900
    %v965 = vunpack.c.l.bf16 %v901
    %v966 = vunpack.c.l.bf16 %v902
    %v967 = vunpack.c.l.bf16 %v903
    %v968 = vunpack.c.l.bf16 %v904
    %v969 = vunpack.c.l.bf16 %v905
    %v970 = vunpack.c.l.bf16 %v906
    %v971 = vunpack.c.l.bf16 %v907
    %v972 = vunpack.c.l.bf16 %v908
    %v973 = vunpack.c.l.bf16 %v909
    %v974 = vunpack.c.l.bf16 %v910
    %v975 = vunpack.c.l.bf16 %v911
    %v976 = vunpack.c.l.bf16 %v912
    %v977 = vunpack.c.l.bf16 %v913
    %v978 = vunpack.c.l.bf16 %v914
    %v979 = vunpack.c.l.bf16 %v915
    %v980 = vunpack.c.l.bf16 %v916
    %v981 = vunpack.c.l.bf16 %v917
    %v982 = vadd.f32 %v790, %v918
    %v983 = vadd.f32 %v791, %v919
    %v984 = vadd.f32 %v792, %v920
    %v985 = vadd.f32 %v793, %v921
    %v986 = vadd.f32 %v794, %v922
    %v987 = vadd.f32 %v795, %v923
    %v988 = vadd.f32 %v796, %v924
    %v989 = vadd.f32 %v797, %v925
    %v990 = vadd.f32 %v798, %v926
    %v991 = vadd.f32 %v799, %v927
    %v992 = vadd.f32 %v800, %v928
    %v993 = vadd.f32 %v801, %v929
    %v994 = vadd.f32 %v802, %v930
    %v995 = vadd.f32 %v803, %v931
    %v996 = vadd.f32 %v804, %v932
    %v997 = vadd.f32 %v805, %v933
    %v998 = vadd.f32 %v806, %v934
    %v999 = vadd.f32 %v807, %v935
    %v1000 = vadd.f32 %v808, %v936
    %v1001 = vadd.f32 %v809, %v937
    %v1002 = vadd.f32 %v810, %v938
    %v1003 = vadd.f32 %v811, %v939
    %v1004 = vadd.f32 %v812, %v940
    %v1005 = vadd.f32 %v813, %v941
    %v1006 = vadd.f32 %v814, %v942
    %v1007 = vadd.f32 %v815, %v943
    %v1008 = vadd.f32 %v816, %v944
    %v1009 = vadd.f32 %v817, %v945
    %v1010 = vadd.f32 %v818, %v946
    %v1011 = vadd.f32 %v819, %v947
    %v1012 = vadd.f32 %v820, %v948
    %v1013 = vadd.f32 %v821, %v949
    %v1014 = vadd.f32 %v822, %v950
    %v1015 = vadd.f32 %v823, %v951
    %v1016 = vadd.f32 %v824, %v952
    %v1017 = vadd.f32 %v825, %v953
    %v1018 = vadd.f32 %v826, %v954
    %v1019 = vadd.f32 %v827, %v955
    %v1020 = vadd.f32 %v828, %v956
    %v1021 = vadd.f32 %v829, %v957
    %v1022 = vadd.f32 %v830, %v958
    %v1023 = vadd.f32 %v831, %v959
    %v1024 = vadd.f32 %v832, %v960
    %v1025 = vadd.f32 %v833, %v961
    %v1026 = vadd.f32 %v834, %v962
    %v1027 = vadd.f32 %v835, %v963
    %v1028 = vadd.f32 %v836, %v964
    %v1029 = vadd.f32 %v837, %v965
    %v1030 = vadd.f32 %v838, %v966
    %v1031 = vadd.f32 %v839, %v967
    %v1032 = vadd.f32 %v840, %v968
    %v1033 = vadd.f32 %v841, %v969
    %v1034 = vadd.f32 %v842, %v970
    %v1035 = vadd.f32 %v843, %v971
    %v1036 = vadd.f32 %v844, %v972
    %v1037 = vadd.f32 %v845, %v973
    %v1038 = vadd.f32 %v846, %v974
    %v1039 = vadd.f32 %v847, %v975
    %v1040 = vadd.f32 %v848, %v976
    %v1041 = vadd.f32 %v849, %v977
    %v1042 = vadd.f32 %v850, %v978
    %v1043 = vadd.f32 %v851, %v979
    %v1044 = vadd.f32 %v852, %v980
    %v1045 = vadd.f32 %v853, %v981
    %1046 = vst.msk [vmem:[#allocation2] sm:$0xff] %vm262, %v982
    %1047 = vst.msk [vmem:[#allocation2 + $0x8] sm:$0xff] %vm262, %v983
    %1048 = vst.msk [vmem:[#allocation2 + $0x10] sm:$0xff] %vm262, %v984
    %1049 = vst.msk [vmem:[#allocation2 + $0x18] sm:$0xff] %vm262, %v985
    %1050 = vst.msk [vmem:[#allocation2 + $0x20] sm:$0xff] %vm262, %v986
    %1051 = vst.msk [vmem:[#allocation2 + $0x28] sm:$0xff] %vm262, %v987
    %1052 = vst.msk [vmem:[#allocation2 + $0x30] sm:$0xff] %vm262, %v988
    %1053 = vst.msk [vmem:[#allocation2 + $0x38] sm:$0xff] %vm262, %v989
    %1054 = vst.msk [vmem:[#allocation2 + $0x40] sm:$0xff] %vm262, %v990
    %1055 = vst.msk [vmem:[#allocation2 + $0x48] sm:$0xff] %vm262, %v991
    %1056 = vst.msk [vmem:[#allocation2 + $0x50] sm:$0xff] %vm262, %v992
    %1057 = vst.msk [vmem:[#allocation2 + $0x58] sm:$0xff] %vm262, %v993
    %1058 = vst.msk [vmem:[#allocation2 + $0x60] sm:$0xff] %vm262, %v994
    %1059 = vst.msk [vmem:[#allocation2 + $0x68] sm:$0xff] %vm262, %v995
    %1060 = vst.msk [vmem:[#allocation2 + $0x70] sm:$0xff] %vm262, %v996
    %1061 = vst.msk [vmem:[#allocation2 + $0x78] sm:$0xff] %vm262, %v997
    %1062 = vst.msk [vmem:[#allocation2 + $0x80] sm:$0xff] %vm262, %v998
    %1063 = vst.msk [vmem:[#allocation2 + $0x88] sm:$0xff] %vm262, %v999
    %1064 = vst.msk [vmem:[#allocation2 + $0x90] sm:$0xff] %vm262, %v1000
    %1065 = vst.msk [vmem:[#allocation2 + $0x98] sm:$0xff] %vm262, %v1001
    %1066 = vst.msk [vmem:[#allocation2 + $0xa0] sm:$0xff] %vm262, %v1002
    %1067 = vst.msk [vmem:[#allocation2 + $0xa8] sm:$0xff] %vm262, %v1003
    %1068 = vst.msk [vmem:[#allocation2 + $0xb0] sm:$0xff] %vm262, %v1004
    %1069 = vst.msk [vmem:[#allocation2 + $0xb8] sm:$0xff] %vm262, %v1005
    %1070 = vst.msk [vmem:[#allocation2 + $0xc0] sm:$0xff] %vm262, %v1006
    %1071 = vst.msk [vmem:[#allocation2 + $0xc8] sm:$0xff] %vm262, %v1007
    %1072 = vst.msk [vmem:[#allocation2 + $0xd0] sm:$0xff] %vm262, %v1008
    %1073 = vst.msk [vmem:[#allocation2 + $0xd8] sm:$0xff] %vm262, %v1009
    %1074 = vst.msk [vmem:[#allocation2 + $0xe0] sm:$0xff] %vm262, %v1010
    %1075 = vst.msk [vmem:[#allocation2 + $0xe8] sm:$0xff] %vm262, %v1011
    %1076 = vst.msk [vmem:[#allocation2 + $0xf0] sm:$0xff] %vm262, %v1012
    %1077 = vst.msk [vmem:[#allocation2 + $0xf8] sm:$0xff] %vm262, %v1013
    %1078 = vst.msk [vmem:[#allocation2 + $0x100] sm:$0xff] %vm262, %v1014
    %1079 = vst.msk [vmem:[#allocation2 + $0x108] sm:$0xff] %vm262, %v1015
    %1080 = vst.msk [vmem:[#allocation2 + $0x110] sm:$0xff] %vm262, %v1016
    %1081 = vst.msk [vmem:[#allocation2 + $0x118] sm:$0xff] %vm262, %v1017
    %1082 = vst.msk [vmem:[#allocation2 + $0x120] sm:$0xff] %vm262, %v1018
    %1083 = vst.msk [vmem:[#allocation2 + $0x128] sm:$0xff] %vm262, %v1019
    %1084 = vst.msk [vmem:[#allocation2 + $0x130] sm:$0xff] %vm262, %v1020
    %1085 = vst.msk [vmem:[#allocation2 + $0x138] sm:$0xff] %vm262, %v1021
    %1086 = vst.msk [vmem:[#allocation2 + $0x140] sm:$0xff] %vm262, %v1022
    %1087 = vst.msk [vmem:[#allocation2 + $0x148] sm:$0xff] %vm262, %v1023
    %1088 = vst.msk [vmem:[#allocation2 + $0x150] sm:$0xff] %vm262, %v1024
    %1089 = vst.msk [vmem:[#allocation2 + $0x158] sm:$0xff] %vm262, %v1025
    %1090 = vst.msk [vmem:[#allocation2 + $0x160] sm:$0xff] %vm262, %v1026
    %1091 = vst.msk [vmem:[#allocation2 + $0x168] sm:$0xff] %vm262, %v1027
    %1092 = vst.msk [vmem:[#allocation2 + $0x170] sm:$0xff] %vm262, %v1028
    %1093 = vst.msk [vmem:[#allocation2 + $0x178] sm:$0xff] %vm262, %v1029
    %1094 = vst.msk [vmem:[#allocation2 + $0x180] sm:$0xff] %vm262, %v1030
    %1095 = vst.msk [vmem:[#allocation2 + $0x188] sm:$0xff] %vm262, %v1031
    %1096 = vst.msk [vmem:[#allocation2 + $0x190] sm:$0xff] %vm262, %v1032
    %1097 = vst.msk [vmem:[#allocation2 + $0x198] sm:$0xff] %vm262, %v1033
    %1098 = vst.msk [vmem:[#allocation2 + $0x1a0] sm:$0xff] %vm262, %v1034
    %1099 = vst.msk [vmem:[#allocation2 + $0x1a8] sm:$0xff] %vm262, %v1035
    %1100 = vst.msk [vmem:[#allocation2 + $0x1b0] sm:$0xff] %vm262, %v1036
    %1101 = vst.msk [vmem:[#allocation2 + $0x1b8] sm:$0xff] %vm262, %v1037
    %1102 = vst.msk [vmem:[#allocation2 + $0x1c0] sm:$0xff] %vm262, %v1038
    %1103 = vst.msk [vmem:[#allocation2 + $0x1c8] sm:$0xff] %vm262, %v1039
    %1104 = vst.msk [vmem:[#allocation2 + $0x1d0] sm:$0xff] %vm262, %v1040
    %1105 = vst.msk [vmem:[#allocation2 + $0x1d8] sm:$0xff] %vm262, %v1041
    %1106 = vst.msk [vmem:[#allocation2 + $0x1e0] sm:$0xff] %vm262, %v1042
    %1107 = vst.msk [vmem:[#allocation2 + $0x1e8] sm:$0xff] %vm262, %v1043
    %1108 = vst.msk [vmem:[#allocation2 + $0x1f0] sm:$0xff] %vm262, %v1044
    %1109 = vst.msk [vmem:[#allocation2 + $0x1f8] sm:$0xff] %vm262, %v1045
    // Predicated region
    $region22: #{_lambda_.7} parent=1 // pred_check
      _
    $region23: #{_lambda_.7} parent=1 // pred_check_branch
      %1111 = sbr.rel (0) target = $region25
    $region24: #{_lambda_.7} parent=1 // pred_region
      %s1113 = ssub.s32 8192, 8192
      %1114 = vsyncadd [#allocation3], %s1113
      %s1115 = sshll.u32 [#allocation2], 4
      %s1116 = int_to_ptr.vmem [resolvable:$true] %s1115
      %1121 = dma.vmem_to_hbm [thread:$0]  %s1116, 8192, %s5, [#allocation3], 128, 128, 8
    $region25: #{_lambda_.7} parent=1 // pred_fallthru
      _
    // Predicated region
    $region26: #{_lambda_.7} parent=1 // pred_check
      _
    $region27: #{_lambda_.7} parent=1 // pred_check_branch
      %1123 = sbr.rel (0) target = $region29
    $region28: #{_lambda_.7} parent=1 // pred_region
      %1124 = dma.done [#allocation3], 8192
    $region29: #{_lambda_.7} parent=1 // pred_fallthru
      _
    %1125 = vsyncpa [#allocation3], 1

// kernel: _lambda_.5
$region0: #{_lambda_.5}
  #allocation0 [shape = 'u32[]', space=smem, size = 0x4, offset = 0x4, fixed_abs, tag = 'smem constant byte address 0x4 - core index']
  #allocation1 [shape = 'u32[144,128]{1,0:T(1,128)}', space=vmem, size = 0x12000, scoped, tag = 'internal scratch']
  #allocation2 [shape = 'bf16[18,18,8]{2,1,0:T(8,128)(2,1)}', space=vmem, size = 0x1b000, scoped, tag = 'scratch operand']
  %s0 = inlined_call_operand.vmem [shape: bf16[2,16,16,16], index: 0, kind: input, shape index: {}]
  %s1 = inlined_call_operand.vmem [shape: bf16[72,8], index: 1, kind: input, shape index: {}]
  %s2 = inlined_call_operand.vmem [shape: bf16[16,32], index: 2, kind: input, shape index: {}]
  %s3 = inlined_call_operand.vmem [shape: f32[1,32], index: 3, kind: input, shape index: {}]
  %s4 = inlined_call_operand.vmem [shape: f32[1,32], index: 4, kind: input, shape index: {}]
  %s5 = inlined_call_operand.vmem [shape: bf16[32,16], index: 5, kind: input, shape index: {}]
  %s6 = inlined_call_operand.vmem [shape: bf16[2,256,16], index: 6, kind: output, shape index: {}]
  %s7 = sld [smem:[#allocation0]]
  $region57: #{_lambda_.5} parent=0
    _
  %s9 = ssub.s32 1, %s7
  %s10 = scalar_select 0, %s9, %s7
  loop: start=0, step=1, limit=4
  $region2: #{_lambda_.5} parent=0 // loop_pre_header
    _
  $region3: #{_lambda_.5} parent=0 // loop_header
    %s12 = sphi 0, %s16
    %p13 = scmp.ge.s32.totalorder %s12, 4
    %s22 = sphi 0, %s24
    %s25 = sphi 0, %s22
    %s26 = sphi 0, %s25
    %s42 = sphi 0, %s26
    %s46 = sphi 0, %s46
    %s48 = sphi 0, %s46
    %s49 = sphi 0, %s48
    %s63 = sphi 0, %s49
    %s67 = sphi 0, %s67
    %s69 = sphi 0, %s67
    %s70 = sphi 0, %s69
    %s84 = sphi 0, %s70
    %s88 = sphi 0, %s88
    %s90 = sphi 0, %s88
    %s91 = sphi 0, %s90
    %s105 = sphi 0, %s91
    %s109 = sphi 0, %s109
    %s111 = sphi 0, %s109
    %s112 = sphi 0, %s111
    %s126 = sphi 0, %s112
    %s130 = sphi 0, %s130
    %s132 = sphi 0, %s130
    %s133 = sphi 0, %s132
    %s147 = sphi 0, %s133
    %s153 = sphi 0, %s155
    %s156 = sphi 0, %s153
    %s157 = sphi 0, %s156
    %s173 = sphi 0, %s157
  $region4: #{_lambda_.5} parent=0 // loop_header_branch
    %15 = sbr.rel (%p13) target = $region8
  $region5: #{_lambda_.5} parent=0 // loop_body
    %s17 = ssub.s32 %s12, 1
    %s18 = ssub.s32 %s12, 2
    %s19 = sadd.s32 %s12, 1
    %s20 = ssub.s32 %s12, %s19
    %p21 = scmp.eq.s32.totalorder %s20, 0
    %s23 = sadd.s32 %s22, 1
    %s24 = scalar_select %p21, %s22, %s23
    %p27 = pneg %p21
    %p28 = scmp.eq.s32.totalorder %s12, 1
    %p29 = por %p27, %p28
    %p30 = scmp.ne.s32.totalorder %s22, %s25
    %p31 = scmp.eq.s32.totalorder %s12, 0
    %p32 = por %p30, %p31
    %p33 = scmp.ne.s32.totalorder %s22, %s25
    %p34 = scmp.eq.s32.totalorder %s17, 1
    %p35 = por %p33, %p34
    %p36 = scmp.ne.s32.totalorder %s25, %s26
    %p37 = scmp.eq.s32.totalorder %s17, 0
    %p38 = por %p36, %p37
    %p39 = scmp.ne.s32.totalorder %s25, %s26
    %p40 = scmp.eq.s32.totalorder %s18, 1
    %p41 = por %p39, %p40
    %p43 = scmp.ne.s32.totalorder %s26, %s42
    %p44 = scmp.eq.s32.totalorder %s18, 0
    %p45 = por %p43, %p44
    %s47 = sadd.s32 %s46, 1
    %p50 = scmp.eq.s32.totalorder %s12, 1
    %p51 = scmp.ne.s32.totalorder %s46, %s48
    %p52 = scmp.eq.s32.totalorder %s12, 0
    %p53 = por %p51, %p52
    %p54 = scmp.ne.s32.totalorder %s46, %s48
    %p55 = scmp.eq.s32.totalorder %s17, 1
    %p56 = por %p54, %p55
    %p57 = scmp.ne.s32.totalorder %s48, %s49
    %p58 = scmp.eq.s32.totalorder %s17, 0
    %p59 = por %p57, %p58
    %p60 = scmp.ne.s32.totalorder %s48, %s49
    %p61 = scmp.eq.s32.totalorder %s18, 1
    %p62 = por %p60, %p61
    %p64 = scmp.ne.s32.totalorder %s49, %s63
    %p65 = scmp.eq.s32.totalorder %s18, 0
    %p66 = por %p64, %p65
    %s68 = sadd.s32 %s67, 1
    %p71 = scmp.eq.s32.totalorder %s12, 1
    %p72 = scmp.ne.s32.totalorder %s67, %s69
    %p73 = scmp.eq.s32.totalorder %s12, 0
    %p74 = por %p72, %p73
    %p75 = scmp.ne.s32.totalorder %s67, %s69
    %p76 = scmp.eq.s32.totalorder %s17, 1
    %p77 = por %p75, %p76
    %p78 = scmp.ne.s32.totalorder %s69, %s70
    %p79 = scmp.eq.s32.totalorder %s17, 0
    %p80 = por %p78, %p79
    %p81 = scmp.ne.s32.totalorder %s69, %s70
    %p82 = scmp.eq.s32.totalorder %s18, 1
    %p83 = por %p81, %p82
    %p85 = scmp.ne.s32.totalorder %s70, %s84
    %p86 = scmp.eq.s32.totalorder %s18, 0
    %p87 = por %p85, %p86
    %s89 = sadd.s32 %s88, 1
    %p92 = scmp.eq.s32.totalorder %s12, 1
    %p93 = scmp.ne.s32.totalorder %s88, %s90
    %p94 = scmp.eq.s32.totalorder %s12, 0
    %p95 = por %p93, %p94
    %p96 = scmp.ne.s32.totalorder %s88, %s90
    %p97 = scmp.eq.s32.totalorder %s17, 1
    %p98 = por %p96, %p97
    %p99 = scmp.ne.s32.totalorder %s90, %s91
    %p100 = scmp.eq.s32.totalorder %s17, 0
    %p101 = por %p99, %p100
    %p102 = scmp.ne.s32.totalorder %s90, %s91
    %p103 = scmp.eq.s32.totalorder %s18, 1
    %p104 = por %p102, %p103
    %p106 = scmp.ne.s32.totalorder %s91, %s105
    %p107 = scmp.eq.s32.totalorder %s18, 0
    %p108 = por %p106, %p107
    %s110 = sadd.s32 %s109, 1
    %p113 = scmp.eq.s32.totalorder %s12, 1
    %p114 = scmp.ne.s32.totalorder %s109, %s111
    %p115 = scmp.eq.s32.totalorder %s12, 0
    %p116 = por %p114, %p115
    %p117 = scmp.ne.s32.totalorder %s109, %s111
    %p118 = scmp.eq.s32.totalorder %s17, 1
    %p119 = por %p117, %p118
    %p120 = scmp.ne.s32.totalorder %s111, %s112
    %p121 = scmp.eq.s32.totalorder %s17, 0
    %p122 = por %p120, %p121
    %p123 = scmp.ne.s32.totalorder %s111, %s112
    %p124 = scmp.eq.s32.totalorder %s18, 1
    %p125 = por %p123, %p124
    %p127 = scmp.ne.s32.totalorder %s112, %s126
    %p128 = scmp.eq.s32.totalorder %s18, 0
    %p129 = por %p127, %p128
    %s131 = sadd.s32 %s130, 1
    %p134 = scmp.eq.s32.totalorder %s12, 1
    %p135 = scmp.ne.s32.totalorder %s130, %s132
    %p136 = scmp.eq.s32.totalorder %s12, 0
    %p137 = por %p135, %p136
    %p138 = scmp.ne.s32.totalorder %s130, %s132
    %p139 = scmp.eq.s32.totalorder %s17, 1
    %p140 = por %p138, %p139
    %p141 = scmp.ne.s32.totalorder %s132, %s133
    %p142 = scmp.eq.s32.totalorder %s17, 0
    %p143 = por %p141, %p142
    %p144 = scmp.ne.s32.totalorder %s132, %s133
    %p145 = scmp.eq.s32.totalorder %s18, 1
    %p146 = por %p144, %p145
    %p148 = scmp.ne.s32.totalorder %s133, %s147
    %p149 = scmp.eq.s32.totalorder %s18, 0
    %p150 = por %p148, %p149
    %s151 = ssub.s32 %s12, %s19
    %p152 = scmp.eq.s32.totalorder %s151, 0
    %s154 = sadd.s32 %s153, 1
    %s155 = scalar_select %p152, %s153, %s154
    %p158 = pneg %p152
    %p159 = scmp.eq.s32.totalorder %s12, 1
    %p160 = por %p158, %p159
    %p161 = scmp.ne.s32.totalorder %s153, %s156
    %p162 = scmp.eq.s32.totalorder %s12, 0
    %p163 = por %p161, %p162
    %p164 = scmp.ne.s32.totalorder %s153, %s156
    %p165 = scmp.eq.s32.totalorder %s17, 1
    %p166 = por %p164, %p165
    %p167 = scmp.ne.s32.totalorder %s156, %s157
    %p168 = scmp.eq.s32.totalorder %s17, 0
    %p169 = por %p167, %p168
    %p170 = scmp.ne.s32.totalorder %s156, %s157
    %p171 = scmp.eq.s32.totalorder %s18, 1
    %p172 = por %p170, %p171
    %p174 = scmp.ne.s32.totalorder %s157, %s173
    %p175 = scmp.eq.s32.totalorder %s18, 0
    %p176 = por %p174, %p175
    %p177 = scmp.le.s32.totalorder 1, %s12
    %p178 = scmp.lt.s32.totalorder %s12, 3
    %p179 = pnand %p177, %p178
    %p180 = pneg %p179
    // Predicated region
    $region9: #{_lambda_.5} parent=5 // pred_check
      _
    $region10: #{_lambda_.5} parent=5 // pred_check_branch
      %182 = sbr.rel (%p179) target = $region12
    $region11: #{_lambda_.5} parent=5 // pred_region
      %s183 = ssub.s32 %s12, 1
      // Predicated region
      $region13: #{_lambda_.5} parent=11 // pred_check
        %p184 = pneg %p59
      $region14: #{_lambda_.5} parent=11 // pred_check_branch
        %186 = sbr.rel (%p184) target = $region16
      $region15: #{_lambda_.5} parent=11 // pred_region
        _
      $region16: #{_lambda_.5} parent=11 // pred_fallthru
        _
      // Predicated region
      $region17: #{_lambda_.5} parent=11 // pred_check
        %p187 = pneg %p80
      $region18: #{_lambda_.5} parent=11 // pred_check_branch
        %189 = sbr.rel (%p187) target = $region20
      $region19: #{_lambda_.5} parent=11 // pred_region
        _
      $region20: #{_lambda_.5} parent=11 // pred_fallthru
        _
      // Predicated region
      $region21: #{_lambda_.5} parent=11 // pred_check
        %p190 = pneg %p101
      $region22: #{_lambda_.5} parent=11 // pred_check_branch
        %192 = sbr.rel (%p190) target = $region24
      $region23: #{_lambda_.5} parent=11 // pred_region
        _
      $region24: #{_lambda_.5} parent=11 // pred_fallthru
        _
      // Predicated region
      $region25: #{_lambda_.5} parent=11 // pred_check
        %p193 = pneg %p122
      $region26: #{_lambda_.5} parent=11 // pred_check_branch
        %195 = sbr.rel (%p193) target = $region28
      $region27: #{_lambda_.5} parent=11 // pred_region
        _
      $region28: #{_lambda_.5} parent=11 // pred_fallthru
        _
      // Predicated region
      $region29: #{_lambda_.5} parent=11 // pred_check
        %p196 = pneg %p143
      $region30: #{_lambda_.5} parent=11 // pred_check_branch
        %198 = sbr.rel (%p196) target = $region32
      $region31: #{_lambda_.5} parent=11 // pred_region
        _
      $region32: #{_lambda_.5} parent=11 // pred_fallthru
        _
    $region12: #{_lambda_.5} parent=5 // pred_fallthru
      _
    %p199 = scmp.lt.s32.totalorder %s12, 2
    // Predicated region
    $region33: #{_lambda_.5} parent=5 // pred_check
      %p200 = pneg %p199
    $region34: #{_lambda_.5} parent=5 // pred_check_branch
      %202 = sbr.rel (%p200) target = $region36
    $region35: #{_lambda_.5} parent=5 // pred_region
      // Predicated region
      $region37: #{_lambda_.5} parent=35 // pred_check
        %p203 = pneg %p32
      $region38: #{_lambda_.5} parent=35 // pred_check_branch
        %205 = sbr.rel (%p203) target = $region40
      $region39: #{_lambda_.5} parent=35 // pred_region
        %p206 = scmp.lt.s32.totalorder %s12, 1
        %s207 = scalar_select %p206, %s12, 1
        %s208 = smul.addr %s207, 32
        %s209 = smul.addr %s208, 4
        %s210 = scalar_lea.vmem %s0, %s209
      $region40: #{_lambda_.5} parent=35 // pred_fallthru
        _
    $region36: #{_lambda_.5} parent=5 // pred_fallthru
      _
    %p211 = scmp.le.s32.totalorder 1, %s12
    %p212 = scmp.lt.s32.totalorder %s12, 3
    %p213 = pnand %p211, %p212
    %p214 = pneg %p213
    // Predicated region
    $region41: #{_lambda_.5} parent=5 // pred_check
      _
    $region42: #{_lambda_.5} parent=5 // pred_check_branch
      %216 = sbr.rel (%p213) target = $region44
    $region43: #{_lambda_.5} parent=5 // pred_region
      %s217 = ssub.s32 %s12, 1
      %p218 = scmp.lt.s32.totalorder %s17, 1
      %s219 = scalar_select %p218, %s17, 1
      %s220 = smul.addr %s219, 32
      %s221 = smul.addr %s220, 4
      %s222 = scalar_lea.vmem %s0, %s221
      %p223 = pneg %p38
      %p224 = pneg %p35
      %p225 = pneg %p59
      %p226 = pneg %p56
      %p227 = pneg %p80
      %p228 = pneg %p77
      %p229 = pneg %p101
      %p230 = pneg %p98
      %p231 = pneg %p122
      %p232 = pneg %p119
      %p233 = pneg %p143
      %p234 = pneg %p140
      %p235 = pneg %p169
      %p236 = pneg %p166
      %p237 = scmp.lt.s32.totalorder %s17, 1
      %s238 = scalar_select %p237, %s17, 1
      %s239 = smul.addr %s238, 32
      %s240 = smul.addr %s239, 4
      %s241 = scalar_lea.vmem %s6, %s240
      %p242 = scmp.lt.s32.totalorder %s17, 1
      %s243 = scalar_select %p242, %s17, 1
      %s244 = smul.addr %s243, 32
      %s245 = smul.addr %s244, 4
      %s246 = scalar_lea.vmem %s0, %s245
      %p247 = scmp.lt.s32.totalorder %s17, 1
      %s248 = scalar_select %p247, %s17, 1
      %s249 = smul.addr %s248, 32
      %s250 = smul.addr %s249, 4
      %s251 = scalar_lea.vmem %s6, %s250
      %v253 = vld [vmem:[%s246] sm:$0xf]
      %v254 = vld [vmem:[%s246 + $0x4] sm:$0xf]
      %v255 = vld [vmem:[%s246 + $0x8] sm:$0xf]
      %v256 = vld [vmem:[%s246 + $0xc] sm:$0xf]
      %v257 = vld [vmem:[%s246 + $0x10] sm:$0xf]
      %v258 = vld [vmem:[%s246 + $0x14] sm:$0xf]
      %v259 = vld [vmem:[%s246 + $0x18] sm:$0xf]
      %v260 = vld [vmem:[%s246 + $0x1c] sm:$0xf]
      %v261 = vld [vmem:[%s246 + $0x20] sm:$0xf]
      %v262 = vld [vmem:[%s246 + $0x24] sm:$0xf]
      %v263 = vld [vmem:[%s246 + $0x28] sm:$0xf]
      %v264 = vld [vmem:[%s246 + $0x2c] sm:$0xf]
      %v265 = vld [vmem:[%s246 + $0x30] sm:$0xf]
      %v266 = vld [vmem:[%s246 + $0x34] sm:$0xf]
      %v267 = vld [vmem:[%s246 + $0x38] sm:$0xf]
      %v268 = vld [vmem:[%s246 + $0x3c] sm:$0xf]
      %v269 = vld [vmem:[%s246 + $0x40] sm:$0xf]
      %v270 = vld [vmem:[%s246 + $0x44] sm:$0xf]
      %v271 = vld [vmem:[%s246 + $0x48] sm:$0xf]
      %v272 = vld [vmem:[%s246 + $0x4c] sm:$0xf]
      %v273 = vld [vmem:[%s246 + $0x50] sm:$0xf]
      %v274 = vld [vmem:[%s246 + $0x54] sm:$0xf]
      %v275 = vld [vmem:[%s246 + $0x58] sm:$0xf]
      %v276 = vld [vmem:[%s246 + $0x5c] sm:$0xf]
      %v277 = vld [vmem:[%s246 + $0x60] sm:$0xf]
      %v278 = vld [vmem:[%s246 + $0x64] sm:$0xf]
      %v279 = vld [vmem:[%s246 + $0x68] sm:$0xf]
      %v280 = vld [vmem:[%s246 + $0x6c] sm:$0xf]
      %v281 = vld [vmem:[%s246 + $0x70] sm:$0xf]
      %v282 = vld [vmem:[%s246 + $0x74] sm:$0xf]
      %v283 = vld [vmem:[%s246 + $0x78] sm:$0xf]
      %v284 = vld [vmem:[%s246 + $0x7c] sm:$0xf]
      %vm285 = vcmask 60416
      %286 = vst.msk [vmem:[#allocation2] sm:$0xf] %vm285, 0
      %287 = vst.msk [vmem:[#allocation2 + $0x4] sm:$0xf] %vm285, 0
      %vm288 = vcmask 57344
      %289 = vst.msk [vmem:[#allocation2 + $0x8] sm:$0x1] %vm288, 0
      %290 = vst.msk [vmem:[#allocation2 + $0xc] sm:$0xf] %vm285, 0
      %291 = vst.msk [vmem:[#allocation2 + $0x10] sm:$0xf] %vm285, 0
      %292 = vst.msk [vmem:[#allocation2 + $0x14] sm:$0x1] %vm288, 0
      %293 = vst.msk [vmem:[#allocation2 + $0x18] sm:$0xf] %vm285, 0
      %294 = vst.msk [vmem:[#allocation2 + $0x1c] sm:$0xf] %vm285, 0
      %295 = vst.msk [vmem:[#allocation2 + $0x20] sm:$0x1] %vm288, 0
      %296 = vst.msk [vmem:[#allocation2 + $0x24] sm:$0xf] %vm285, 0
      %297 = vst.msk [vmem:[#allocation2 + $0x28] sm:$0xf] %vm285, 0
      %298 = vst.msk [vmem:[#allocation2 + $0x2c] sm:$0x1] %vm288, 0
      %299 = vst.msk [vmem:[#allocation2 + $0x30] sm:$0xf] %vm285, 0
      %300 = vst.msk [vmem:[#allocation2 + $0x34] sm:$0xf] %vm285, 0
      %301 = vst.msk [vmem:[#allocation2 + $0x38] sm:$0x1] %vm288, 0
      %302 = vst.msk [vmem:[#allocation2 + $0x3c] sm:$0xf] %vm285, 0
      %303 = vst.msk [vmem:[#allocation2 + $0x40] sm:$0xf] %vm285, 0
      %304 = vst.msk [vmem:[#allocation2 + $0x44] sm:$0x1] %vm288, 0
      %305 = vst.msk [vmem:[#allocation2 + $0x48] sm:$0xf] %vm285, 0
      %306 = vst.msk [vmem:[#allocation2 + $0x4c] sm:$0xf] %vm285, 0
      %307 = vst.msk [vmem:[#allocation2 + $0x50] sm:$0x1] %vm288, 0
      %308 = vst.msk [vmem:[#allocation2 + $0x54] sm:$0xf] %vm285, 0
      %309 = vst.msk [vmem:[#allocation2 + $0x58] sm:$0xf] %vm285, 0
      %310 = vst.msk [vmem:[#allocation2 + $0x5c] sm:$0x1] %vm288, 0
      %311 = vst.msk [vmem:[#allocation2 + $0x60] sm:$0xf] %vm285, 0
      %312 = vst.msk [vmem:[#allocation2 + $0x64] sm:$0xf] %vm285, 0
      %313 = vst.msk [vmem:[#allocation2 + $0x68] sm:$0x1] %vm288, 0
      %314 = vst.msk [vmem:[#allocation2 + $0x6c] sm:$0xf] %vm285, 0
      %315 = vst.msk [vmem:[#allocation2 + $0x70] sm:$0xf] %vm285, 0
      %316 = vst.msk [vmem:[#allocation2 + $0x74] sm:$0x1] %vm288, 0
      %317 = vst.msk [vmem:[#allocation2 + $0x78] sm:$0xf] %vm285, 0
      %318 = vst.msk [vmem:[#allocation2 + $0x7c] sm:$0xf] %vm285, 0
      %319 = vst.msk [vmem:[#allocation2 + $0x80] sm:$0x1] %vm288, 0
      %320 = vst.msk [vmem:[#allocation2 + $0x84] sm:$0xf] %vm285, 0
      %321 = vst.msk [vmem:[#allocation2 + $0x88] sm:$0xf] %vm285, 0
      %322 = vst.msk [vmem:[#allocation2 + $0x8c] sm:$0x1] %vm288, 0
      %323 = vst.msk [vmem:[#allocation2 + $0x90] sm:$0xf] %vm285, 0
      %324 = vst.msk [vmem:[#allocation2 + $0x94] sm:$0xf] %vm285, 0
      %325 = vst.msk [vmem:[#allocation2 + $0x98] sm:$0x1] %vm288, 0
      %326 = vst.msk [vmem:[#allocation2 + $0x9c] sm:$0xf] %vm285, 0
      %327 = vst.msk [vmem:[#allocation2 + $0xa0] sm:$0xf] %vm285, 0
      %328 = vst.msk [vmem:[#allocation2 + $0xa4] sm:$0x1] %vm288, 0
      %329 = vst.msk [vmem:[#allocation2 + $0xa8] sm:$0xf] %vm285, 0
      %330 = vst.msk [vmem:[#allocation2 + $0xac] sm:$0xf] %vm285, 0
      %331 = vst.msk [vmem:[#allocation2 + $0xb0] sm:$0x1] %vm288, 0
      %332 = vst.msk [vmem:[#allocation2 + $0xb4] sm:$0xf] %vm285, 0
      %333 = vst.msk [vmem:[#allocation2 + $0xb8] sm:$0xf] %vm285, 0
      %334 = vst.msk [vmem:[#allocation2 + $0xbc] sm:$0x1] %vm288, 0
      %335 = vst.msk [vmem:[#allocation2 + $0xc0] sm:$0xf] %vm285, 0
      %336 = vst.msk [vmem:[#allocation2 + $0xc4] sm:$0xf] %vm285, 0
      %337 = vst.msk [vmem:[#allocation2 + $0xc8] sm:$0x1] %vm288, 0
      %338 = vst.msk [vmem:[#allocation2 + $0xcc] sm:$0xf] %vm285, 0
      %339 = vst.msk [vmem:[#allocation2 + $0xd0] sm:$0xf] %vm285, 0
      %340 = vst.msk [vmem:[#allocation2 + $0xd4] sm:$0x1] %vm288, 0
      %vm341 = vsmask.f32 256
      %vm342 = vsmask.f32 4368
      %vm343 = vmor %vm341, %vm342
      %v345 = vshrl.u32 %v253, 16
      %v347 = vrot.slane %v345, 7
      %v348 = vshll.u32 %v253, 16
      %v350 = vor.u32 %v347, %v348
      %v351 = vrot.slane %v347, 4
      %v353 = vshrl.u32 %v254, 16
      %v355 = vrot.slane %v353, 7
      %v356 = vshll.u32 %v254, 16
      %v358 = vor.u32 %v355, %v356
      %v359 = vsel %vm343, %v351, %v358
      %v360 = vrot.slane %v355, 4
      %v362 = vshrl.u32 %v255, 16
      %v364 = vrot.slane %v362, 7
      %v365 = vshll.u32 %v255, 16
      %v367 = vor.u32 %v364, %v365
      %v368 = vrot.slane %v364, 4
      %v370 = vshrl.u32 %v256, 16
      %v372 = vrot.slane %v370, 7
      %v373 = vshll.u32 %v256, 16
      %v375 = vor.u32 %v372, %v373
      %v376 = vsel %vm343, %v368, %v375
      %v377 = vrot.slane %v372, 4
      %v379 = vshrl.u32 %v257, 16
      %v381 = vrot.slane %v379, 7
      %v382 = vshll.u32 %v257, 16
      %v384 = vor.u32 %v381, %v382
      %v385 = vrot.slane %v381, 4
      %v387 = vshrl.u32 %v258, 16
      %v389 = vrot.slane %v387, 7
      %v390 = vshll.u32 %v258, 16
      %v392 = vor.u32 %v389, %v390
      %v393 = vsel %vm343, %v385, %v392
      %v394 = vrot.slane %v389, 4
      %v396 = vshrl.u32 %v259, 16
      %v398 = vrot.slane %v396, 7
      %v399 = vshll.u32 %v259, 16
      %v401 = vor.u32 %v398, %v399
      %v402 = vrot.slane %v398, 4
      %v404 = vshrl.u32 %v260, 16
      %v406 = vrot.slane %v404, 7
      %v407 = vshll.u32 %v260, 16
      %v409 = vor.u32 %v406, %v407
      %v410 = vsel %vm343, %v402, %v409
      %v411 = vrot.slane %v406, 4
      %v413 = vshrl.u32 %v261, 16
      %v415 = vrot.slane %v413, 7
      %v416 = vshll.u32 %v261, 16
      %v418 = vor.u32 %v415, %v416
      %v419 = vrot.slane %v415, 4
      %v421 = vshrl.u32 %v262, 16
      %v423 = vrot.slane %v421, 7
      %v424 = vshll.u32 %v262, 16
      %v426 = vor.u32 %v423, %v424
      %v427 = vsel %vm343, %v419, %v426
      %v428 = vrot.slane %v423, 4
      %v430 = vshrl.u32 %v263, 16
      %v432 = vrot.slane %v430, 7
      %v433 = vshll.u32 %v263, 16
      %v435 = vor.u32 %v432, %v433
      %v436 = vrot.slane %v432, 4
      %v438 = vshrl.u32 %v264, 16
      %v440 = vrot.slane %v438, 7
      %v441 = vshll.u32 %v264, 16
      %v443 = vor.u32 %v440, %v441
      %v444 = vsel %vm343, %v436, %v443
      %v445 = vrot.slane %v440, 4
      %v447 = vshrl.u32 %v265, 16
      %v449 = vrot.slane %v447, 7
      %v450 = vshll.u32 %v265, 16
      %v452 = vor.u32 %v449, %v450
      %v453 = vrot.slane %v449, 4
      %v455 = vshrl.u32 %v266, 16
      %v457 = vrot.slane %v455, 7
      %v458 = vshll.u32 %v266, 16
      %v460 = vor.u32 %v457, %v458
      %v461 = vsel %vm343, %v453, %v460
      %v462 = vrot.slane %v457, 4
      %v464 = vshrl.u32 %v267, 16
      %v466 = vrot.slane %v464, 7
      %v467 = vshll.u32 %v267, 16
      %v469 = vor.u32 %v466, %v467
      %v470 = vrot.slane %v466, 4
      %v472 = vshrl.u32 %v268, 16
      %v474 = vrot.slane %v472, 7
      %v475 = vshll.u32 %v268, 16
      %v477 = vor.u32 %v474, %v475
      %v478 = vsel %vm343, %v470, %v477
      %v479 = vrot.slane %v474, 4
      %v481 = vshrl.u32 %v269, 16
      %v483 = vrot.slane %v481, 7
      %v484 = vshll.u32 %v269, 16
      %v486 = vor.u32 %v483, %v484
      %v487 = vrot.slane %v483, 4
      %v489 = vshrl.u32 %v270, 16
      %v491 = vrot.slane %v489, 7
      %v492 = vshll.u32 %v270, 16
      %v494 = vor.u32 %v491, %v492
      %v495 = vsel %vm343, %v487, %v494
      %v496 = vrot.slane %v491, 4
      %v498 = vshrl.u32 %v271, 16
      %v500 = vrot.slane %v498, 7
      %v501 = vshll.u32 %v271, 16
      %v503 = vor.u32 %v500, %v501
      %v504 = vrot.slane %v500, 4
      %v506 = vshrl.u32 %v272, 16
      %v508 = vrot.slane %v506, 7
      %v509 = vshll.u32 %v272, 16
      %v511 = vor.u32 %v508, %v509
      %v512 = vsel %vm343, %v504, %v511
      %v513 = vrot.slane %v508, 4
      %v515 = vshrl.u32 %v273, 16
      %v517 = vrot.slane %v515, 7
      %v518 = vshll.u32 %v273, 16
      %v520 = vor.u32 %v517, %v518
      %v521 = vrot.slane %v517, 4
      %v523 = vshrl.u32 %v274, 16
      %v525 = vrot.slane %v523, 7
      %v526 = vshll.u32 %v274, 16
      %v528 = vor.u32 %v525, %v526
      %v529 = vsel %vm343, %v521, %v528
      %v530 = vrot.slane %v525, 4
      %v532 = vshrl.u32 %v275, 16
      %v534 = vrot.slane %v532, 7
      %v535 = vshll.u32 %v275, 16
      %v537 = vor.u32 %v534, %v535
      %v538 = vrot.slane %v534, 4
      %v540 = vshrl.u32 %v276, 16
      %v542 = vrot.slane %v540, 7
      %v543 = vshll.u32 %v276, 16
      %v545 = vor.u32 %v542, %v543
      %v546 = vsel %vm343, %v538, %v545
      %v547 = vrot.slane %v542, 4
      %v549 = vshrl.u32 %v277, 16
      %v551 = vrot.slane %v549, 7
      %v552 = vshll.u32 %v277, 16
      %v554 = vor.u32 %v551, %v552
      %v555 = vrot.slane %v551, 4
      %v557 = vshrl.u32 %v278, 16
      %v559 = vrot.slane %v557, 7
      %v560 = vshll.u32 %v278, 16
      %v562 = vor.u32 %v559, %v560
      %v563 = vsel %vm343, %v555, %v562
      %v564 = vrot.slane %v559, 4
      %v566 = vshrl.u32 %v279, 16
      %v568 = vrot.slane %v566, 7
      %v569 = vshll.u32 %v279, 16
      %v571 = vor.u32 %v568, %v569
      %v572 = vrot.slane %v568, 4
      %v574 = vshrl.u32 %v280, 16
      %v576 = vrot.slane %v574, 7
      %v577 = vshll.u32 %v280, 16
      %v579 = vor.u32 %v576, %v577
      %v580 = vsel %vm343, %v572, %v579
      %v581 = vrot.slane %v576, 4
      %v583 = vshrl.u32 %v281, 16
      %v585 = vrot.slane %v583, 7
      %v586 = vshll.u32 %v281, 16
      %v588 = vor.u32 %v585, %v586
      %v589 = vrot.slane %v585, 4
      %v591 = vshrl.u32 %v282, 16
      %v593 = vrot.slane %v591, 7
      %v594 = vshll.u32 %v282, 16
      %v596 = vor.u32 %v593, %v594
      %v597 = vsel %vm343, %v589, %v596
      %v598 = vrot.slane %v593, 4
      %v600 = vshrl.u32 %v283, 16
      %v602 = vrot.slane %v600, 7
      %v603 = vshll.u32 %v283, 16
      %v605 = vor.u32 %v602, %v603
      %v606 = vrot.slane %v602, 4
      %v608 = vshrl.u32 %v284, 16
      %v610 = vrot.slane %v608, 7
      %v611 = vshll.u32 %v284, 16
      %v613 = vor.u32 %v610, %v611
      %v614 = vsel %vm343, %v606, %v613
      %v615 = vrot.slane %v610, 4
      %s664 = scalar_lea.vmem [#allocation2], 12
      %vm665 = vcmask 60416
      %vm666 = vsmask.f32 7938
      %vm667 = vmand %vm665, %vm666
      %v668 = vld [vmem:[%s664] sm:$0xf]
      %v669 = vsel %vm667, %v350, %v668
      %670 = vst [vmem:[%s664] sm:$0xf] %v669
      %671 = vst.msk [vmem:[%s664 + $0x4] sm:$0xf] %vm285, %v359
      %vm672 = vcmask 57344
      %vm673 = vmand %vm672, %vm341
      %v674 = vld [vmem:[%s664 + $0x8] sm:$0x1]
      %v675 = vsel %vm673, %v360, %v674
      %676 = vst [vmem:[%s664 + $0x8] sm:$0x1] %v675
      %v677 = vld [vmem:[%s664 + $0xc] sm:$0xf]
      %v678 = vsel %vm667, %v367, %v677
      %679 = vst [vmem:[%s664 + $0xc] sm:$0xf] %v678
      %680 = vst.msk [vmem:[%s664 + $0x10] sm:$0xf] %vm285, %v376
      %v681 = vld [vmem:[%s664 + $0x14] sm:$0x1]
      %v682 = vsel %vm673, %v377, %v681
      %683 = vst [vmem:[%s664 + $0x14] sm:$0x1] %v682
      %v684 = vld [vmem:[%s664 + $0x18] sm:$0xf]
      %v685 = vsel %vm667, %v384, %v684
      %686 = vst [vmem:[%s664 + $0x18] sm:$0xf] %v685
      %687 = vst.msk [vmem:[%s664 + $0x1c] sm:$0xf] %vm285, %v393
      %v688 = vld [vmem:[%s664 + $0x20] sm:$0x1]
      %v689 = vsel %vm673, %v394, %v688
      %690 = vst [vmem:[%s664 + $0x20] sm:$0x1] %v689
      %v691 = vld [vmem:[%s664 + $0x24] sm:$0xf]
      %v692 = vsel %vm667, %v401, %v691
      %693 = vst [vmem:[%s664 + $0x24] sm:$0xf] %v692
      %694 = vst.msk [vmem:[%s664 + $0x28] sm:$0xf] %vm285, %v410
      %v695 = vld [vmem:[%s664 + $0x2c] sm:$0x1]
      %v696 = vsel %vm673, %v411, %v695
      %697 = vst [vmem:[%s664 + $0x2c] sm:$0x1] %v696
      %v698 = vld [vmem:[%s664 + $0x30] sm:$0xf]
      %v699 = vsel %vm667, %v418, %v698
      %700 = vst [vmem:[%s664 + $0x30] sm:$0xf] %v699
      %701 = vst.msk [vmem:[%s664 + $0x34] sm:$0xf] %vm285, %v427
      %v702 = vld [vmem:[%s664 + $0x38] sm:$0x1]
      %v703 = vsel %vm673, %v428, %v702
      %704 = vst [vmem:[%s664 + $0x38] sm:$0x1] %v703
      %v705 = vld [vmem:[%s664 + $0x3c] sm:$0xf]
      %v706 = vsel %vm667, %v435, %v705
      %707 = vst [vmem:[%s664 + $0x3c] sm:$0xf] %v706
      %708 = vst.msk [vmem:[%s664 + $0x40] sm:$0xf] %vm285, %v444
      %v709 = vld [vmem:[%s664 + $0x44] sm:$0x1]
      %v710 = vsel %vm673, %v445, %v709
      %711 = vst [vmem:[%s664 + $0x44] sm:$0x1] %v710
      %v712 = vld [vmem:[%s664 + $0x48] sm:$0xf]
      %v713 = vsel %vm667, %v452, %v712
      %714 = vst [vmem:[%s664 + $0x48] sm:$0xf] %v713
      %715 = vst.msk [vmem:[%s664 + $0x4c] sm:$0xf] %vm285, %v461
      %v716 = vld [vmem:[%s664 + $0x50] sm:$0x1]
      %v717 = vsel %vm673, %v462, %v716
      %718 = vst [vmem:[%s664 + $0x50] sm:$0x1] %v717
      %v719 = vld [vmem:[%s664 + $0x54] sm:$0xf]
      %v720 = vsel %vm667, %v469, %v719
      %721 = vst [vmem:[%s664 + $0x54] sm:$0xf] %v720
      %722 = vst.msk [vmem:[%s664 + $0x58] sm:$0xf] %vm285, %v478
      %v723 = vld [vmem:[%s664 + $0x5c] sm:$0x1]
      %v724 = vsel %vm673, %v479, %v723
      %725 = vst [vmem:[%s664 + $0x5c] sm:$0x1] %v724
      %v726 = vld [vmem:[%s664 + $0x60] sm:$0xf]
      %v727 = vsel %vm667, %v486, %v726
      %728 = vst [vmem:[%s664 + $0x60] sm:$0xf] %v727
      %729 = vst.msk [vmem:[%s664 + $0x64] sm:$0xf] %vm285, %v495
      %v730 = vld [vmem:[%s664 + $0x68] sm:$0x1]
      %v731 = vsel %vm673, %v496, %v730
      %732 = vst [vmem:[%s664 + $0x68] sm:$0x1] %v731
      %v733 = vld [vmem:[%s664 + $0x6c] sm:$0xf]
      %v734 = vsel %vm667, %v503, %v733
      %735 = vst [vmem:[%s664 + $0x6c] sm:$0xf] %v734
      %736 = vst.msk [vmem:[%s664 + $0x70] sm:$0xf] %vm285, %v512
      %v737 = vld [vmem:[%s664 + $0x74] sm:$0x1]
      %v738 = vsel %vm673, %v513, %v737
      %739 = vst [vmem:[%s664 + $0x74] sm:$0x1] %v738
      %v740 = vld [vmem:[%s664 + $0x78] sm:$0xf]
      %v741 = vsel %vm667, %v520, %v740
      %742 = vst [vmem:[%s664 + $0x78] sm:$0xf] %v741
      %743 = vst.msk [vmem:[%s664 + $0x7c] sm:$0xf] %vm285, %v529
      %v744 = vld [vmem:[%s664 + $0x80] sm:$0x1]
      %v745 = vsel %vm673, %v530, %v744
      %746 = vst [vmem:[%s664 + $0x80] sm:$0x1] %v745
      %v747 = vld [vmem:[%s664 + $0x84] sm:$0xf]
      %v748 = vsel %vm667, %v537, %v747
      %749 = vst [vmem:[%s664 + $0x84] sm:$0xf] %v748
      %750 = vst.msk [vmem:[%s664 + $0x88] sm:$0xf] %vm285, %v546
      %v751 = vld [vmem:[%s664 + $0x8c] sm:$0x1]
      %v752 = vsel %vm673, %v547, %v751
      %753 = vst [vmem:[%s664 + $0x8c] sm:$0x1] %v752
      %v754 = vld [vmem:[%s664 + $0x90] sm:$0xf]
      %v755 = vsel %vm667, %v554, %v754
      %756 = vst [vmem:[%s664 + $0x90] sm:$0xf] %v755
      %757 = vst.msk [vmem:[%s664 + $0x94] sm:$0xf] %vm285, %v563
      %v758 = vld [vmem:[%s664 + $0x98] sm:$0x1]
      %v759 = vsel %vm673, %v564, %v758
      %760 = vst [vmem:[%s664 + $0x98] sm:$0x1] %v759
      %v761 = vld [vmem:[%s664 + $0x9c] sm:$0xf]
      %v762 = vsel %vm667, %v571, %v761
      %763 = vst [vmem:[%s664 + $0x9c] sm:$0xf] %v762
      %764 = vst.msk [vmem:[%s664 + $0xa0] sm:$0xf] %vm285, %v580
      %v765 = vld [vmem:[%s664 + $0xa4] sm:$0x1]
      %v766 = vsel %vm673, %v581, %v765
      %767 = vst [vmem:[%s664 + $0xa4] sm:$0x1] %v766
      %v768 = vld [vmem:[%s664 + $0xa8] sm:$0xf]
      %v769 = vsel %vm667, %v588, %v768
      %770 = vst [vmem:[%s664 + $0xa8] sm:$0xf] %v769
      %771 = vst.msk [vmem:[%s664 + $0xac] sm:$0xf] %vm285, %v597
      %v772 = vld [vmem:[%s664 + $0xb0] sm:$0x1]
      %v773 = vsel %vm673, %v598, %v772
      %774 = vst [vmem:[%s664 + $0xb0] sm:$0x1] %v773
      %v775 = vld [vmem:[%s664 + $0xb4] sm:$0xf]
      %v776 = vsel %vm667, %v605, %v775
      %777 = vst [vmem:[%s664 + $0xb4] sm:$0xf] %v776
      %778 = vst.msk [vmem:[%s664 + $0xb8] sm:$0xf] %vm285, %v614
      %v779 = vld [vmem:[%s664 + $0xbc] sm:$0x1]
      %v780 = vsel %vm673, %v615, %v779
      %781 = vst [vmem:[%s664 + $0xbc] sm:$0x1] %v780
      %v782 = vld [vmem:[#allocation2] sm:$0xf]
      %v783 = vld [vmem:[#allocation2 + $0x4] sm:$0xf]
      %v784 = vld [vmem:[#allocation2 + $0x8] sm:$0x1]
      %v785 = vld [vmem:[#allocation2 + $0xc] sm:$0xf]
      %v786 = vld [vmem:[#allocation2 + $0x10] sm:$0xf]
      %v787 = vld [vmem:[#allocation2 + $0x14] sm:$0x1]
      %v788 = vld [vmem:[#allocation2 + $0x18] sm:$0xf]
      %v789 = vld [vmem:[#allocation2 + $0x1c] sm:$0xf]
      %v790 = vld [vmem:[#allocation2 + $0x20] sm:$0x1]
      %v791 = vld [vmem:[#allocation2 + $0x24] sm:$0xf]
      %v792 = vld [vmem:[#allocation2 + $0x28] sm:$0xf]
      %v793 = vld [vmem:[#allocation2 + $0x2c] sm:$0x1]
      %v794 = vld [vmem:[#allocation2 + $0x30] sm:$0xf]
      %v795 = vld [vmem:[#allocation2 + $0x34] sm:$0xf]
      %v796 = vld [vmem:[#allocation2 + $0x38] sm:$0x1]
      %v797 = vld [vmem:[#allocation2 + $0x3c] sm:$0xf]
      %v798 = vld [vmem:[#allocation2 + $0x40] sm:$0xf]
      %v799 = vld [vmem:[#allocation2 + $0x44] sm:$0x1]
      %v800 = vld [vmem:[#allocation2 + $0x48] sm:$0xf]
      %v801 = vld [vmem:[#allocation2 + $0x4c] sm:$0xf]
      %v802 = vld [vmem:[#allocation2 + $0x50] sm:$0x1]
      %v803 = vld [vmem:[#allocation2 + $0x54] sm:$0xf]
      %v804 = vld [vmem:[#allocation2 + $0x58] sm:$0xf]
      %v805 = vld [vmem:[#allocation2 + $0x5c] sm:$0x1]
      %v806 = vld [vmem:[#allocation2 + $0x60] sm:$0xf]
      %v807 = vld [vmem:[#allocation2 + $0x64] sm:$0xf]
      %v808 = vld [vmem:[#allocation2 + $0x68] sm:$0x1]
      %v809 = vld [vmem:[#allocation2 + $0x6c] sm:$0xf]
      %v810 = vld [vmem:[#allocation2 + $0x70] sm:$0xf]
      %v811 = vld [vmem:[#allocation2 + $0x74] sm:$0x1]
      %v812 = vld [vmem:[#allocation2 + $0x78] sm:$0xf]
      %v813 = vld [vmem:[#allocation2 + $0x7c] sm:$0xf]
      %v814 = vld [vmem:[#allocation2 + $0x80] sm:$0x1]
      %v815 = vld [vmem:[#allocation2 + $0x84] sm:$0xf]
      %v816 = vld [vmem:[#allocation2 + $0x88] sm:$0xf]
      %v817 = vld [vmem:[#allocation2 + $0x8c] sm:$0x1]
      %v818 = vld [vmem:[#allocation2 + $0x90] sm:$0xf]
      %v819 = vld [vmem:[#allocation2 + $0x94] sm:$0xf]
      %v820 = vld [vmem:[#allocation2 + $0x98] sm:$0x1]
      %v821 = vld [vmem:[#allocation2 + $0x9c] sm:$0xf]
      %v822 = vld [vmem:[#allocation2 + $0xa0] sm:$0xf]
      %v823 = vld [vmem:[#allocation2 + $0xa4] sm:$0x1]
      %v824 = vld [vmem:[#allocation2 + $0xa8] sm:$0xf]
      %v825 = vld [vmem:[#allocation2 + $0xac] sm:$0xf]
      %v826 = vld [vmem:[#allocation2 + $0xb0] sm:$0x1]
      %v827 = vld [vmem:[#allocation2 + $0xb4] sm:$0xf]
      %v828 = vld [vmem:[#allocation2 + $0xb8] sm:$0xf]
      %v829 = vld [vmem:[#allocation2 + $0xbc] sm:$0x1]
      %v830 = vld [vmem:[#allocation2 + $0xc0] sm:$0xf]
      %v831 = vld [vmem:[#allocation2 + $0xc4] sm:$0xf]
      %v832 = vld [vmem:[#allocation2 + $0xc8] sm:$0x1]
      %v833 = vld [vmem:[#allocation2 + $0xcc] sm:$0xf]
      %v834 = vld [vmem:[#allocation2 + $0xd0] sm:$0xf]
      %v835 = vld [vmem:[#allocation2 + $0xd4] sm:$0x1]
      %v868 = vunpack.c.l.b16 %v782
      %v869 = vunpack.c.l.b16 %v783
      %v870 = vunpack.c.l.b16 %v785
      %v871 = vunpack.c.l.b16 %v786
      %v872 = vunpack.c.l.b16 %v788
      %v873 = vunpack.c.l.b16 %v789
      %v874 = vunpack.c.l.b16 %v791
      %v875 = vunpack.c.l.b16 %v792
      %v876 = vunpack.c.l.b16 %v794
      %v877 = vunpack.c.l.b16 %v795
      %v878 = vunpack.c.l.b16 %v797
      %v879 = vunpack.c.l.b16 %v798
      %v880 = vunpack.c.l.b16 %v800
      %v881 = vunpack.c.l.b16 %v801
      %v882 = vunpack.c.l.b16 %v803
      %v883 = vunpack.c.l.b16 %v804
      %v884 = vunpack.c.l.b16 %v806
      %v885 = vunpack.c.l.b16 %v807
      %v886 = vunpack.c.l.b16 %v809
      %v887 = vunpack.c.l.b16 %v810
      %v888 = vunpack.c.l.b16 %v812
      %v889 = vunpack.c.l.b16 %v813
      %v890 = vunpack.c.l.b16 %v815
      %v891 = vunpack.c.l.b16 %v816
      %v892 = vunpack.c.l.b16 %v818
      %v893 = vunpack.c.l.b16 %v819
      %v894 = vunpack.c.l.b16 %v821
      %v895 = vunpack.c.l.b16 %v822
      %v896 = vunpack.c.l.b16 %v824
      %v897 = vunpack.c.l.b16 %v825
      %v898 = vunpack.c.l.b16 %v827
      %v899 = vunpack.c.l.b16 %v828
      %v900 = vpack.c.b16 %v869, %v868
      %v901 = vpack.c.b16 %v871, %v870
      %v902 = vpack.c.b16 %v873, %v872
      %v903 = vpack.c.b16 %v875, %v874
      %v904 = vpack.c.b16 %v877, %v876
      %v905 = vpack.c.b16 %v879, %v878
      %v906 = vpack.c.b16 %v881, %v880
      %v907 = vpack.c.b16 %v883, %v882
      %v908 = vpack.c.b16 %v885, %v884
      %v909 = vpack.c.b16 %v887, %v886
      %v910 = vpack.c.b16 %v889, %v888
      %v911 = vpack.c.b16 %v891, %v890
      %v912 = vpack.c.b16 %v893, %v892
      %v913 = vpack.c.b16 %v895, %v894
      %v914 = vpack.c.b16 %v897, %v896
      %v915 = vpack.c.b16 %v899, %v898
      %v932 = vunpack.c.l.b16 %v784
      %v933 = vunpack.c.l.b16 %v787
      %v934 = vunpack.c.l.b16 %v790
      %v935 = vunpack.c.l.b16 %v793
      %v936 = vunpack.c.l.b16 %v796
      %v937 = vunpack.c.l.b16 %v799
      %v938 = vunpack.c.l.b16 %v802
      %v939 = vunpack.c.l.b16 %v805
      %v940 = vunpack.c.l.b16 %v808
      %v941 = vunpack.c.l.b16 %v811
      %v942 = vunpack.c.l.b16 %v814
      %v943 = vunpack.c.l.b16 %v817
      %v944 = vunpack.c.l.b16 %v820
      %v945 = vunpack.c.l.b16 %v823
      %v946 = vunpack.c.l.b16 %v826
      %v947 = vunpack.c.l.b16 %v829
      %v948 = vpack.c.b16 %v932, %v932
      %v949 = vpack.c.b16 %v933, %v933
      %v950 = vpack.c.b16 %v934, %v934
      %v951 = vpack.c.b16 %v935, %v935
      %v952 = vpack.c.b16 %v936, %v936
      %v953 = vpack.c.b16 %v937, %v937
      %v954 = vpack.c.b16 %v938, %v938
      %v955 = vpack.c.b16 %v939, %v939
      %v956 = vpack.c.b16 %v940, %v940
      %v957 = vpack.c.b16 %v941, %v941
      %v958 = vpack.c.b16 %v942, %v942
      %v959 = vpack.c.b16 %v943, %v943
      %v960 = vpack.c.b16 %v944, %v944
      %v961 = vpack.c.b16 %v945, %v945
      %v962 = vpack.c.b16 %v946, %v946
      %v963 = vpack.c.b16 %v947, %v947
      %vm964 = vsmask.f32 7424
      %v966 = vshrl.u32 %v900, 16
      %v968 = vshll.u32 %v900, 16
      %v970 = vrot.slane %v968, 1
      %v971 = vor.u32 %v966, %v970
      %v973 = vshll.u32 %v948, 16
      %v975 = vrot.slane %v973, 1
      %v976 = vsel %vm964, %v971, %v975
      %v978 = vshrl.u32 %v901, 16
      %v980 = vshll.u32 %v901, 16
      %v982 = vrot.slane %v980, 1
      %v983 = vor.u32 %v978, %v982
      %v985 = vshll.u32 %v949, 16
      %v987 = vrot.slane %v985, 1
      %v988 = vsel %vm964, %v983, %v987
      %v990 = vshrl.u32 %v902, 16
      %v992 = vshll.u32 %v902, 16
      %v994 = vrot.slane %v992, 1
      %v995 = vor.u32 %v990, %v994
      %v997 = vshll.u32 %v950, 16
      %v999 = vrot.slane %v997, 1
      %v1000 = vsel %vm964, %v995, %v999
      %v1002 = vshrl.u32 %v903, 16
      %v1004 = vshll.u32 %v903, 16
      %v1006 = vrot.slane %v1004, 1
      %v1007 = vor.u32 %v1002, %v1006
      %v1009 = vshll.u32 %v951, 16
      %v1011 = vrot.slane %v1009, 1
      %v1012 = vsel %vm964, %v1007, %v1011
      %v1014 = vshrl.u32 %v904, 16
      %v1016 = vshll.u32 %v904, 16
      %v1018 = vrot.slane %v1016, 1
      %v1019 = vor.u32 %v1014, %v1018
      %v1021 = vshll.u32 %v952, 16
      %v1023 = vrot.slane %v1021, 1
      %v1024 = vsel %vm964, %v1019, %v1023
      %v1026 = vshrl.u32 %v905, 16
      %v1028 = vshll.u32 %v905, 16
      %v1030 = vrot.slane %v1028, 1
      %v1031 = vor.u32 %v1026, %v1030
      %v1033 = vshll.u32 %v953, 16
      %v1035 = vrot.slane %v1033, 1
      %v1036 = vsel %vm964, %v1031, %v1035
      %v1038 = vshrl.u32 %v906, 16
      %v1040 = vshll.u32 %v906, 16
      %v1042 = vrot.slane %v1040, 1
      %v1043 = vor.u32 %v1038, %v1042
      %v1045 = vshll.u32 %v954, 16
      %v1047 = vrot.slane %v1045, 1
      %v1048 = vsel %vm964, %v1043, %v1047
      %v1050 = vshrl.u32 %v907, 16
      %v1052 = vshll.u32 %v907, 16
      %v1054 = vrot.slane %v1052, 1
      %v1055 = vor.u32 %v1050, %v1054
      %v1057 = vshll.u32 %v955, 16
      %v1059 = vrot.slane %v1057, 1
      %v1060 = vsel %vm964, %v1055, %v1059
      %v1062 = vshrl.u32 %v908, 16
      %v1064 = vshll.u32 %v908, 16
      %v1066 = vrot.slane %v1064, 1
      %v1067 = vor.u32 %v1062, %v1066
      %v1069 = vshll.u32 %v956, 16
      %v1071 = vrot.slane %v1069, 1
      %v1072 = vsel %vm964, %v1067, %v1071
      %v1074 = vshrl.u32 %v909, 16
      %v1076 = vshll.u32 %v909, 16
      %v1078 = vrot.slane %v1076, 1
      %v1079 = vor.u32 %v1074, %v1078
      %v1081 = vshll.u32 %v957, 16
      %v1083 = vrot.slane %v1081, 1
      %v1084 = vsel %vm964, %v1079, %v1083
      %v1086 = vshrl.u32 %v910, 16
      %v1088 = vshll.u32 %v910, 16
      %v1090 = vrot.slane %v1088, 1
      %v1091 = vor.u32 %v1086, %v1090
      %v1093 = vshll.u32 %v958, 16
      %v1095 = vrot.slane %v1093, 1
      %v1096 = vsel %vm964, %v1091, %v1095
      %v1098 = vshrl.u32 %v911, 16
      %v1100 = vshll.u32 %v911, 16
      %v1102 = vrot.slane %v1100, 1
      %v1103 = vor.u32 %v1098, %v1102
      %v1105 = vshll.u32 %v959, 16
      %v1107 = vrot.slane %v1105, 1
      %v1108 = vsel %vm964, %v1103, %v1107
      %v1110 = vshrl.u32 %v912, 16
      %v1112 = vshll.u32 %v912, 16
      %v1114 = vrot.slane %v1112, 1
      %v1115 = vor.u32 %v1110, %v1114
      %v1117 = vshll.u32 %v960, 16
      %v1119 = vrot.slane %v1117, 1
      %v1120 = vsel %vm964, %v1115, %v1119
      %v1122 = vshrl.u32 %v913, 16
      %v1124 = vshll.u32 %v913, 16
      %v1126 = vrot.slane %v1124, 1
      %v1127 = vor.u32 %v1122, %v1126
      %v1129 = vshll.u32 %v961, 16
      %v1131 = vrot.slane %v1129, 1
      %v1132 = vsel %vm964, %v1127, %v1131
      %v1134 = vshrl.u32 %v914, 16
      %v1136 = vshll.u32 %v914, 16
      %v1138 = vrot.slane %v1136, 1
      %v1139 = vor.u32 %v1134, %v1138
      %v1141 = vshll.u32 %v962, 16
      %v1143 = vrot.slane %v1141, 1
      %v1144 = vsel %vm964, %v1139, %v1143
      %v1146 = vshrl.u32 %v915, 16
      %v1148 = vshll.u32 %v915, 16
      %v1150 = vrot.slane %v1148, 1
      %v1151 = vor.u32 %v1146, %v1150
      %v1153 = vshll.u32 %v963, 16
      %v1155 = vrot.slane %v1153, 1
      %v1156 = vsel %vm964, %v1151, %v1155
      %1157 = vrot.lane.b32.xlu0 %v976, 8
      %v1158 = vpop.permute.xlu0 %1157
      %1159 = vrot.lane.b32.xlu0 %v988, 8
      %v1160 = vpop.permute.xlu0 %1159
      %1161 = vrot.lane.b32.xlu0 %v1000, 8
      %v1162 = vpop.permute.xlu0 %1161
      %1163 = vrot.lane.b32.xlu0 %v1012, 8
      %v1164 = vpop.permute.xlu0 %1163
      %1165 = vrot.lane.b32.xlu0 %v1024, 8
      %v1166 = vpop.permute.xlu0 %1165
      %1167 = vrot.lane.b32.xlu0 %v1036, 8
      %v1168 = vpop.permute.xlu0 %1167
      %1169 = vrot.lane.b32.xlu0 %v1048, 8
      %v1170 = vpop.permute.xlu0 %1169
      %1171 = vrot.lane.b32.xlu0 %v1060, 8
      %v1172 = vpop.permute.xlu0 %1171
      %1173 = vrot.lane.b32.xlu0 %v1072, 8
      %v1174 = vpop.permute.xlu0 %1173
      %1175 = vrot.lane.b32.xlu0 %v1084, 8
      %v1176 = vpop.permute.xlu0 %1175
      %1177 = vrot.lane.b32.xlu0 %v1096, 8
      %v1178 = vpop.permute.xlu0 %1177
      %1179 = vrot.lane.b32.xlu0 %v1108, 8
      %v1180 = vpop.permute.xlu0 %1179
      %1181 = vrot.lane.b32.xlu0 %v1120, 8
      %v1182 = vpop.permute.xlu0 %1181
      %1183 = vrot.lane.b32.xlu0 %v1132, 8
      %v1184 = vpop.permute.xlu0 %1183
      %1185 = vrot.lane.b32.xlu0 %v1144, 8
      %v1186 = vpop.permute.xlu0 %1185
      %1187 = vrot.lane.b32.xlu0 %v1156, 8
      %v1188 = vpop.permute.xlu0 %1187
      %vm1189 = vcmask 1046528
      %v1190 = vrot.slane %v900, 1
      %v1191 = vrot.slane %v948, 1
      %v1192 = vsel %vm1189, %v1190, %v1191
      %v1193 = vrot.slane %v901, 1
      %v1194 = vrot.slane %v949, 1
      %v1195 = vsel %vm1189, %v1193, %v1194
      %v1196 = vrot.slane %v902, 1
      %v1197 = vrot.slane %v950, 1
      %v1198 = vsel %vm1189, %v1196, %v1197
      %v1199 = vrot.slane %v903, 1
      %v1200 = vrot.slane %v951, 1
      %v1201 = vsel %vm1189, %v1199, %v1200
      %v1202 = vrot.slane %v904, 1
      %v1203 = vrot.slane %v952, 1
      %v1204 = vsel %vm1189, %v1202, %v1203
      %v1205 = vrot.slane %v905, 1
      %v1206 = vrot.slane %v953, 1
      %v1207 = vsel %vm1189, %v1205, %v1206
      %v1208 = vrot.slane %v906, 1
      %v1209 = vrot.slane %v954, 1
      %v1210 = vsel %vm1189, %v1208, %v1209
      %v1211 = vrot.slane %v907, 1
      %v1212 = vrot.slane %v955, 1
      %v1213 = vsel %vm1189, %v1211, %v1212
      %v1214 = vrot.slane %v908, 1
      %v1215 = vrot.slane %v956, 1
      %v1216 = vsel %vm1189, %v1214, %v1215
      %v1217 = vrot.slane %v909, 1
      %v1218 = vrot.slane %v957, 1
      %v1219 = vsel %vm1189, %v1217, %v1218
      %v1220 = vrot.slane %v910, 1
      %v1221 = vrot.slane %v958, 1
      %v1222 = vsel %vm1189, %v1220, %v1221
      %v1223 = vrot.slane %v911, 1
      %v1224 = vrot.slane %v959, 1
      %v1225 = vsel %vm1189, %v1223, %v1224
      %v1226 = vrot.slane %v912, 1
      %v1227 = vrot.slane %v960, 1
      %v1228 = vsel %vm1189, %v1226, %v1227
      %v1229 = vrot.slane %v913, 1
      %v1230 = vrot.slane %v961, 1
      %v1231 = vsel %vm1189, %v1229, %v1230
      %v1232 = vrot.slane %v914, 1
      %v1233 = vrot.slane %v962, 1
      %v1234 = vsel %vm1189, %v1232, %v1233
      %v1235 = vrot.slane %v915, 1
      %v1236 = vrot.slane %v963, 1
      %v1237 = vsel %vm1189, %v1235, %v1236
      %1238 = vrot.lane.b32.xlu0 %v1192, 16
      %v1239 = vpop.permute.xlu0 %1238
      %1240 = vrot.lane.b32.xlu0 %v1195, 16
      %v1241 = vpop.permute.xlu0 %1240
      %1242 = vrot.lane.b32.xlu0 %v1198, 16
      %v1243 = vpop.permute.xlu0 %1242
      %1244 = vrot.lane.b32.xlu0 %v1201, 16
      %v1245 = vpop.permute.xlu0 %1244
      %1246 = vrot.lane.b32.xlu0 %v1204, 16
      %v1247 = vpop.permute.xlu0 %1246
      %1248 = vrot.lane.b32.xlu0 %v1207, 16
      %v1249 = vpop.permute.xlu0 %1248
      %1250 = vrot.lane.b32.xlu0 %v1210, 16
      %v1251 = vpop.permute.xlu0 %1250
      %1252 = vrot.lane.b32.xlu0 %v1213, 16
      %v1253 = vpop.permute.xlu0 %1252
      %1254 = vrot.lane.b32.xlu0 %v1216, 16
      %v1255 = vpop.permute.xlu0 %1254
      %1256 = vrot.lane.b32.xlu0 %v1219, 16
      %v1257 = vpop.permute.xlu0 %1256
      %1258 = vrot.lane.b32.xlu0 %v1222, 16
      %v1259 = vpop.permute.xlu0 %1258
      %1260 = vrot.lane.b32.xlu0 %v1225, 16
      %v1261 = vpop.permute.xlu0 %1260
      %1262 = vrot.lane.b32.xlu0 %v1228, 16
      %v1263 = vpop.permute.xlu0 %1262
      %1264 = vrot.lane.b32.xlu0 %v1231, 16
      %v1265 = vpop.permute.xlu0 %1264
      %1266 = vrot.lane.b32.xlu0 %v1234, 16
      %v1267 = vpop.permute.xlu0 %1266
      %1268 = vrot.lane.b32.xlu0 %v1237, 16
      %v1269 = vpop.permute.xlu0 %1268
      %v1272 = vunpack.c.l.b16 %v830
      %v1273 = vunpack.c.l.b16 %v831
      %v1274 = vpack.c.b16 %v1273, %v1272
      %1275 = vrot.lane.b32.xlu0 %v901, 24
      %v1276 = vpop.permute.xlu0 %1275
      %1277 = vrot.lane.b32.xlu0 %v902, 24
      %v1278 = vpop.permute.xlu0 %1277
      %1279 = vrot.lane.b32.xlu0 %v903, 24
      %v1280 = vpop.permute.xlu0 %1279
      %1281 = vrot.lane.b32.xlu0 %v904, 24
      %v1282 = vpop.permute.xlu0 %1281
      %1283 = vrot.lane.b32.xlu0 %v905, 24
      %v1284 = vpop.permute.xlu0 %1283
      %1285 = vrot.lane.b32.xlu0 %v906, 24
      %v1286 = vpop.permute.xlu0 %1285
      %1287 = vrot.lane.b32.xlu0 %v907, 24
      %v1288 = vpop.permute.xlu0 %1287
      %1289 = vrot.lane.b32.xlu0 %v908, 24
      %v1290 = vpop.permute.xlu0 %1289
      %1291 = vrot.lane.b32.xlu0 %v909, 24
      %v1292 = vpop.permute.xlu0 %1291
      %1293 = vrot.lane.b32.xlu0 %v910, 24
      %v1294 = vpop.permute.xlu0 %1293
      %1295 = vrot.lane.b32.xlu0 %v911, 24
      %v1296 = vpop.permute.xlu0 %1295
      %1297 = vrot.lane.b32.xlu0 %v912, 24
      %v1298 = vpop.permute.xlu0 %1297
      %1299 = vrot.lane.b32.xlu0 %v913, 24
      %v1300 = vpop.permute.xlu0 %1299
      %1301 = vrot.lane.b32.xlu0 %v914, 24
      %v1302 = vpop.permute.xlu0 %1301
      %1303 = vrot.lane.b32.xlu0 %v915, 24
      %v1304 = vpop.permute.xlu0 %1303
      %1305 = vrot.lane.b32.xlu0 %v1274, 24
      %v1306 = vpop.permute.xlu0 %1305
      %v1308 = vunpack.c.l.b16 %v832
      %v1309 = vpack.c.b16 %v1308, %v1308
      %v1311 = vshrl.u32 %v1274, 16
      %v1313 = vshll.u32 %v1274, 16
      %v1315 = vrot.slane %v1313, 1
      %v1316 = vor.u32 %v1311, %v1315
      %v1318 = vshll.u32 %v1309, 16
      %v1320 = vrot.slane %v1318, 1
      %v1321 = vsel %vm964, %v1316, %v1320
      %1322 = vrot.lane.b32.xlu0 %v988, 32
      %v1323 = vpop.permute.xlu0 %1322
      %1324 = vrot.lane.b32.xlu0 %v1000, 32
      %v1325 = vpop.permute.xlu0 %1324
      %1326 = vrot.lane.b32.xlu0 %v1012, 32
      %v1327 = vpop.permute.xlu0 %1326
      %1328 = vrot.lane.b32.xlu0 %v1024, 32
      %v1329 = vpop.permute.xlu0 %1328
      %1330 = vrot.lane.b32.xlu0 %v1036, 32
      %v1331 = vpop.permute.xlu0 %1330
      %1332 = vrot.lane.b32.xlu0 %v1048, 32
      %v1333 = vpop.permute.xlu0 %1332
      %1334 = vrot.lane.b32.xlu0 %v1060, 32
      %v1335 = vpop.permute.xlu0 %1334
      %1336 = vrot.lane.b32.xlu0 %v1072, 32
      %v1337 = vpop.permute.xlu0 %1336
      %1338 = vrot.lane.b32.xlu0 %v1084, 32
      %v1339 = vpop.permute.xlu0 %1338
      %1340 = vrot.lane.b32.xlu0 %v1096, 32
      %v1341 = vpop.permute.xlu0 %1340
      %1342 = vrot.lane.b32.xlu0 %v1108, 32
      %v1343 = vpop.permute.xlu0 %1342
      %1344 = vrot.lane.b32.xlu0 %v1120, 32
      %v1345 = vpop.permute.xlu0 %1344
      %1346 = vrot.lane.b32.xlu0 %v1132, 32
      %v1347 = vpop.permute.xlu0 %1346
      %1348 = vrot.lane.b32.xlu0 %v1144, 32
      %v1349 = vpop.permute.xlu0 %1348
      %1350 = vrot.lane.b32.xlu0 %v1156, 32
      %v1351 = vpop.permute.xlu0 %1350
      %1352 = vrot.lane.b32.xlu0 %v1321, 32
      %v1353 = vpop.permute.xlu0 %1352
      %v1354 = vrot.slane %v1274, 1
      %v1355 = vrot.slane %v1309, 1
      %v1356 = vsel %vm1189, %v1354, %v1355
      %1357 = vrot.lane.b32.xlu0 %v1195, 40
      %v1358 = vpop.permute.xlu0 %1357
      %1359 = vrot.lane.b32.xlu0 %v1198, 40
      %v1360 = vpop.permute.xlu0 %1359
      %1361 = vrot.lane.b32.xlu0 %v1201, 40
      %v1362 = vpop.permute.xlu0 %1361
      %1363 = vrot.lane.b32.xlu0 %v1204, 40
      %v1364 = vpop.permute.xlu0 %1363
      %1365 = vrot.lane.b32.xlu0 %v1207, 40
      %v1366 = vpop.permute.xlu0 %1365
      %1367 = vrot.lane.b32.xlu0 %v1210, 40
      %v1368 = vpop.permute.xlu0 %1367
      %1369 = vrot.lane.b32.xlu0 %v1213, 40
      %v1370 = vpop.permute.xlu0 %1369
      %1371 = vrot.lane.b32.xlu0 %v1216, 40
      %v1372 = vpop.permute.xlu0 %1371
      %1373 = vrot.lane.b32.xlu0 %v1219, 40
      %v1374 = vpop.permute.xlu0 %1373
      %1375 = vrot.lane.b32.xlu0 %v1222, 40
      %v1376 = vpop.permute.xlu0 %1375
      %1377 = vrot.lane.b32.xlu0 %v1225, 40
      %v1378 = vpop.permute.xlu0 %1377
      %1379 = vrot.lane.b32.xlu0 %v1228, 40
      %v1380 = vpop.permute.xlu0 %1379
      %1381 = vrot.lane.b32.xlu0 %v1231, 40
      %v1382 = vpop.permute.xlu0 %1381
      %1383 = vrot.lane.b32.xlu0 %v1234, 40
      %v1384 = vpop.permute.xlu0 %1383
      %1385 = vrot.lane.b32.xlu0 %v1237, 40
      %v1386 = vpop.permute.xlu0 %1385
      %1387 = vrot.lane.b32.xlu0 %v1356, 40
      %v1388 = vpop.permute.xlu0 %1387
      %v1391 = vunpack.c.l.b16 %v833
      %v1392 = vunpack.c.l.b16 %v834
      %v1393 = vpack.c.b16 %v1392, %v1391
      %1394 = vrot.lane.b32.xlu0 %v902, 48
      %v1395 = vpop.permute.xlu0 %1394
      %1396 = vrot.lane.b32.xlu0 %v903, 48
      %v1397 = vpop.permute.xlu0 %1396
      %1398 = vrot.lane.b32.xlu0 %v904, 48
      %v1399 = vpop.permute.xlu0 %1398
      %1400 = vrot.lane.b32.xlu0 %v905, 48
      %v1401 = vpop.permute.xlu0 %1400
      %1402 = vrot.lane.b32.xlu0 %v906, 48
      %v1403 = vpop.permute.xlu0 %1402
      %1404 = vrot.lane.b32.xlu0 %v907, 48
      %v1405 = vpop.permute.xlu0 %1404
      %1406 = vrot.lane.b32.xlu0 %v908, 48
      %v1407 = vpop.permute.xlu0 %1406
      %1408 = vrot.lane.b32.xlu0 %v909, 48
      %v1409 = vpop.permute.xlu0 %1408
      %1410 = vrot.lane.b32.xlu0 %v910, 48
      %v1411 = vpop.permute.xlu0 %1410
      %1412 = vrot.lane.b32.xlu0 %v911, 48
      %v1413 = vpop.permute.xlu0 %1412
      %1414 = vrot.lane.b32.xlu0 %v912, 48
      %v1415 = vpop.permute.xlu0 %1414
      %1416 = vrot.lane.b32.xlu0 %v913, 48
      %v1417 = vpop.permute.xlu0 %1416
      %1418 = vrot.lane.b32.xlu0 %v914, 48
      %v1419 = vpop.permute.xlu0 %1418
      %1420 = vrot.lane.b32.xlu0 %v915, 48
      %v1421 = vpop.permute.xlu0 %1420
      %1422 = vrot.lane.b32.xlu0 %v1274, 48
      %v1423 = vpop.permute.xlu0 %1422
      %1424 = vrot.lane.b32.xlu0 %v1393, 48
      %v1425 = vpop.permute.xlu0 %1424
      %v1427 = vunpack.c.l.b16 %v835
      %v1428 = vpack.c.b16 %v1427, %v1427
      %v1430 = vshrl.u32 %v1393, 16
      %v1432 = vshll.u32 %v1393, 16
      %v1434 = vrot.slane %v1432, 1
      %v1435 = vor.u32 %v1430, %v1434
      %v1437 = vshll.u32 %v1428, 16
      %v1439 = vrot.slane %v1437, 1
      %v1440 = vsel %vm964, %v1435, %v1439
      %1441 = vrot.lane.b32.xlu0 %v1000, 56
      %v1442 = vpop.permute.xlu0 %1441
      %1443 = vrot.lane.b32.xlu0 %v1012, 56
      %v1444 = vpop.permute.xlu0 %1443
      %1445 = vrot.lane.b32.xlu0 %v1024, 56
      %v1446 = vpop.permute.xlu0 %1445
      %1447 = vrot.lane.b32.xlu0 %v1036, 56
      %v1448 = vpop.permute.xlu0 %1447
      %1449 = vrot.lane.b32.xlu0 %v1048, 56
      %v1450 = vpop.permute.xlu0 %1449
      %1451 = vrot.lane.b32.xlu0 %v1060, 56
      %v1452 = vpop.permute.xlu0 %1451
      %1453 = vrot.lane.b32.xlu0 %v1072, 56
      %v1454 = vpop.permute.xlu0 %1453
      %1455 = vrot.lane.b32.xlu0 %v1084, 56
      %v1456 = vpop.permute.xlu0 %1455
      %1457 = vrot.lane.b32.xlu0 %v1096, 56
      %v1458 = vpop.permute.xlu0 %1457
      %1459 = vrot.lane.b32.xlu0 %v1108, 56
      %v1460 = vpop.permute.xlu0 %1459
      %1461 = vrot.lane.b32.xlu0 %v1120, 56
      %v1462 = vpop.permute.xlu0 %1461
      %1463 = vrot.lane.b32.xlu0 %v1132, 56
      %v1464 = vpop.permute.xlu0 %1463
      %1465 = vrot.lane.b32.xlu0 %v1144, 56
      %v1466 = vpop.permute.xlu0 %1465
      %1467 = vrot.lane.b32.xlu0 %v1156, 56
      %v1468 = vpop.permute.xlu0 %1467
      %1469 = vrot.lane.b32.xlu0 %v1321, 56
      %v1470 = vpop.permute.xlu0 %1469
      %1471 = vrot.lane.b32.xlu0 %v1440, 56
      %v1472 = vpop.permute.xlu0 %1471
      %v1473 = vrot.slane %v1393, 1
      %v1474 = vrot.slane %v1428, 1
      %v1475 = vsel %vm1189, %v1473, %v1474
      %1476 = vrot.lane.b32.xlu0 %v1198, 64
      %v1477 = vpop.permute.xlu0 %1476
      %1478 = vrot.lane.b32.xlu0 %v1201, 64
      %v1479 = vpop.permute.xlu0 %1478
      %1480 = vrot.lane.b32.xlu0 %v1204, 64
      %v1481 = vpop.permute.xlu0 %1480
      %1482 = vrot.lane.b32.xlu0 %v1207, 64
      %v1483 = vpop.permute.xlu0 %1482
      %1484 = vrot.lane.b32.xlu0 %v1210, 64
      %v1485 = vpop.permute.xlu0 %1484
      %1486 = vrot.lane.b32.xlu0 %v1213, 64
      %v1487 = vpop.permute.xlu0 %1486
      %1488 = vrot.lane.b32.xlu0 %v1216, 64
      %v1489 = vpop.permute.xlu0 %1488
      %1490 = vrot.lane.b32.xlu0 %v1219, 64
      %v1491 = vpop.permute.xlu0 %1490
      %1492 = vrot.lane.b32.xlu0 %v1222, 64
      %v1493 = vpop.permute.xlu0 %1492
      %1494 = vrot.lane.b32.xlu0 %v1225, 64
      %v1495 = vpop.permute.xlu0 %1494
      %1496 = vrot.lane.b32.xlu0 %v1228, 64
      %v1497 = vpop.permute.xlu0 %1496
      %1498 = vrot.lane.b32.xlu0 %v1231, 64
      %v1499 = vpop.permute.xlu0 %1498
      %1500 = vrot.lane.b32.xlu0 %v1234, 64
      %v1501 = vpop.permute.xlu0 %1500
      %1502 = vrot.lane.b32.xlu0 %v1237, 64
      %v1503 = vpop.permute.xlu0 %1502
      %1504 = vrot.lane.b32.xlu0 %v1356, 64
      %v1505 = vpop.permute.xlu0 %1504
      %1506 = vrot.lane.b32.xlu0 %v1475, 64
      %v1507 = vpop.permute.xlu0 %1506
      %vm1508 = vcmask 64512
      %v1510 = vsel %vm1508, %v900, %v1158
      %v1512 = vsel %vm1508, %v901, %v1160
      %v1514 = vsel %vm1508, %v902, %v1162
      %v1516 = vsel %vm1508, %v903, %v1164
      %v1518 = vsel %vm1508, %v904, %v1166
      %v1520 = vsel %vm1508, %v905, %v1168
      %v1522 = vsel %vm1508, %v906, %v1170
      %v1524 = vsel %vm1508, %v907, %v1172
      %v1526 = vsel %vm1508, %v908, %v1174
      %v1528 = vsel %vm1508, %v909, %v1176
      %v1530 = vsel %vm1508, %v910, %v1178
      %v1532 = vsel %vm1508, %v911, %v1180
      %v1534 = vsel %vm1508, %v912, %v1182
      %v1536 = vsel %vm1508, %v913, %v1184
      %v1538 = vsel %vm1508, %v914, %v1186
      %v1540 = vsel %vm1508, %v915, %v1188
      %vm1541 = vcmask 130048
      %v1543 = vsel %vm1541, %v1510, %v1239
      %v1545 = vsel %vm1541, %v1512, %v1241
      %v1547 = vsel %vm1541, %v1514, %v1243
      %v1549 = vsel %vm1541, %v1516, %v1245
      %v1551 = vsel %vm1541, %v1518, %v1247
      %v1553 = vsel %vm1541, %v1520, %v1249
      %v1555 = vsel %vm1541, %v1522, %v1251
      %v1557 = vsel %vm1541, %v1524, %v1253
      %v1559 = vsel %vm1541, %v1526, %v1255
      %v1561 = vsel %vm1541, %v1528, %v1257
      %v1563 = vsel %vm1541, %v1530, %v1259
      %v1565 = vsel %vm1541, %v1532, %v1261
      %v1567 = vsel %vm1541, %v1534, %v1263
      %v1569 = vsel %vm1541, %v1536, %v1265
      %v1571 = vsel %vm1541, %v1538, %v1267
      %v1573 = vsel %vm1541, %v1540, %v1269
      %vm1574 = vcmask 195584
      %v1576 = vsel %vm1574, %v1543, %v1276
      %v1578 = vsel %vm1574, %v1545, %v1278
      %v1580 = vsel %vm1574, %v1547, %v1280
      %v1582 = vsel %vm1574, %v1549, %v1282
      %v1584 = vsel %vm1574, %v1551, %v1284
      %v1586 = vsel %vm1574, %v1553, %v1286
      %v1588 = vsel %vm1574, %v1555, %v1288
      %v1590 = vsel %vm1574, %v1557, %v1290
      %v1592 = vsel %vm1574, %v1559, %v1292
      %v1594 = vsel %vm1574, %v1561, %v1294
      %v1596 = vsel %vm1574, %v1563, %v1296
      %v1598 = vsel %vm1574, %v1565, %v1298
      %v1600 = vsel %vm1574, %v1567, %v1300
      %v1602 = vsel %vm1574, %v1569, %v1302
      %v1604 = vsel %vm1574, %v1571, %v1304
      %v1606 = vsel %vm1574, %v1573, %v1306
      %vm1607 = vcmask 261120
      %v1609 = vsel %vm1607, %v1576, %v1323
      %v1611 = vsel %vm1607, %v1578, %v1325
      %v1613 = vsel %vm1607, %v1580, %v1327
      %v1615 = vsel %vm1607, %v1582, %v1329
      %v1617 = vsel %vm1607, %v1584, %v1331
      %v1619 = vsel %vm1607, %v1586, %v1333
      %v1621 = vsel %vm1607, %v1588, %v1335
      %v1623 = vsel %vm1607, %v1590, %v1337
      %v1625 = vsel %vm1607, %v1592, %v1339
      %v1627 = vsel %vm1607, %v1594, %v1341
      %v1629 = vsel %vm1607, %v1596, %v1343
      %v1631 = vsel %vm1607, %v1598, %v1345
      %v1633 = vsel %vm1607, %v1600, %v1347
      %v1635 = vsel %vm1607, %v1602, %v1349
      %v1637 = vsel %vm1607, %v1604, %v1351
      %v1639 = vsel %vm1607, %v1606, %v1353
      %vm1640 = vcmask 326656
      %v1642 = vsel %vm1640, %v1609, %v1358
      %v1644 = vsel %vm1640, %v1611, %v1360
      %v1646 = vsel %vm1640, %v1613, %v1362
      %v1648 = vsel %vm1640, %v1615, %v1364
      %v1650 = vsel %vm1640, %v1617, %v1366
      %v1652 = vsel %vm1640, %v1619, %v1368
      %v1654 = vsel %vm1640, %v1621, %v1370
      %v1656 = vsel %vm1640, %v1623, %v1372
      %v1658 = vsel %vm1640, %v1625, %v1374
      %v1660 = vsel %vm1640, %v1627, %v1376
      %v1662 = vsel %vm1640, %v1629, %v1378
      %v1664 = vsel %vm1640, %v1631, %v1380
      %v1666 = vsel %vm1640, %v1633, %v1382
      %v1668 = vsel %vm1640, %v1635, %v1384
      %v1670 = vsel %vm1640, %v1637, %v1386
      %v1672 = vsel %vm1640, %v1639, %v1388
      %vm1673 = vcmask 392192
      %v1675 = vsel %vm1673, %v1642, %v1395
      %v1677 = vsel %vm1673, %v1644, %v1397
      %v1679 = vsel %vm1673, %v1646, %v1399
      %v1681 = vsel %vm1673, %v1648, %v1401
      %v1683 = vsel %vm1673, %v1650, %v1403
      %v1685 = vsel %vm1673, %v1652, %v1405
      %v1687 = vsel %vm1673, %v1654, %v1407
      %v1689 = vsel %vm1673, %v1656, %v1409
      %v1691 = vsel %vm1673, %v1658, %v1411
      %v1693 = vsel %vm1673, %v1660, %v1413
      %v1695 = vsel %vm1673, %v1662, %v1415
      %v1697 = vsel %vm1673, %v1664, %v1417
      %v1699 = vsel %vm1673, %v1666, %v1419
      %v1701 = vsel %vm1673, %v1668, %v1421
      %v1703 = vsel %vm1673, %v1670, %v1423
      %v1705 = vsel %vm1673, %v1672, %v1425
      %vm1706 = vcmask 457728
      %v1708 = vsel %vm1706, %v1675, %v1442
      %v1710 = vsel %vm1706, %v1677, %v1444
      %v1712 = vsel %vm1706, %v1679, %v1446
      %v1714 = vsel %vm1706, %v1681, %v1448
      %v1716 = vsel %vm1706, %v1683, %v1450
      %v1718 = vsel %vm1706, %v1685, %v1452
      %v1720 = vsel %vm1706, %v1687, %v1454
      %v1722 = vsel %vm1706, %v1689, %v1456
      %v1724 = vsel %vm1706, %v1691, %v1458
      %v1726 = vsel %vm1706, %v1693, %v1460
      %v1728 = vsel %vm1706, %v1695, %v1462
      %v1730 = vsel %vm1706, %v1697, %v1464
      %v1732 = vsel %vm1706, %v1699, %v1466
      %v1734 = vsel %vm1706, %v1701, %v1468
      %v1736 = vsel %vm1706, %v1703, %v1470
      %v1738 = vsel %vm1706, %v1705, %v1472
      %vm1739 = vcmask 523264
      %v1741 = vsel %vm1739, %v1708, %v1477
      %v1743 = vsel %vm1739, %v1710, %v1479
      %v1745 = vsel %vm1739, %v1712, %v1481
      %v1747 = vsel %vm1739, %v1714, %v1483
      %v1749 = vsel %vm1739, %v1716, %v1485
      %v1751 = vsel %vm1739, %v1718, %v1487
      %v1753 = vsel %vm1739, %v1720, %v1489
      %v1755 = vsel %vm1739, %v1722, %v1491
      %v1757 = vsel %vm1739, %v1724, %v1493
      %v1759 = vsel %vm1739, %v1726, %v1495
      %v1761 = vsel %vm1739, %v1728, %v1497
      %v1763 = vsel %vm1739, %v1730, %v1499
      %v1765 = vsel %vm1739, %v1732, %v1501
      %v1767 = vsel %vm1739, %v1734, %v1503
      %v1769 = vsel %vm1739, %v1736, %v1505
      %v1771 = vsel %vm1739, %v1738, %v1507
      %v1772 = vld [vmem:[%s1] sm:$0xf]
      %v1773 = vld [vmem:[%s1 + $0x4] sm:$0xf]
      %v1774 = vld [vmem:[%s1 + $0x8] sm:$0xf]
      %v1775 = vld [vmem:[%s1 + $0xc] sm:$0xf]
      %v1776 = vld [vmem:[%s1 + $0x10] sm:$0xf]
      %v1777 = vld [vmem:[%s1 + $0x14] sm:$0xf]
      %v1778 = vld [vmem:[%s1 + $0x18] sm:$0xf]
      %v1779 = vld [vmem:[%s1 + $0x1c] sm:$0xf]
      %v1780 = vld [vmem:[%s1 + $0x20] sm:$0xf]
      %v1790 = vunpack.c.l.b16 %v1772
      %v1791 = vunpack.c.l.b16 %v1773
      %v1792 = vunpack.c.l.b16 %v1774
      %v1793 = vunpack.c.l.b16 %v1775
      %v1794 = vunpack.c.l.b16 %v1776
      %v1795 = vunpack.c.l.b16 %v1777
      %v1796 = vunpack.c.l.b16 %v1778
      %v1797 = vunpack.c.l.b16 %v1779
      %v1798 = vunpack.c.l.b16 %v1780
      %v1799 = vpack.c.b16 %v1791, %v1790
      %v1800 = vpack.c.b16 %v1793, %v1792
      %v1801 = vpack.c.b16 %v1795, %v1794
      %v1802 = vpack.c.b16 %v1797, %v1796
      %v1803 = vpack.c.b16 %v1798, %v1798
      %vm1808 = vcmask 588800
      %v1809 = vsel %vm1808, %v1741, 0
      %v1811 = vsel %vm1808, %v1743, 0
      %v1813 = vsel %vm1808, %v1745, 0
      %v1815 = vsel %vm1808, %v1747, 0
      %v1817 = vsel %vm1808, %v1749, 0
      %v1819 = vsel %vm1808, %v1751, 0
      %v1821 = vsel %vm1808, %v1753, 0
      %v1823 = vsel %vm1808, %v1755, 0
      %v1825 = vsel %vm1808, %v1757, 0
      %v1827 = vsel %vm1808, %v1759, 0
      %v1829 = vsel %vm1808, %v1761, 0
      %v1831 = vsel %vm1808, %v1763, 0
      %v1833 = vsel %vm1808, %v1765, 0
      %v1835 = vsel %vm1808, %v1767, 0
      %v1837 = vsel %vm1808, %v1769, 0
      %v1839 = vsel %vm1808, %v1771, 0
      %vm1841 = vcmask 1043456
      %v1843 = vsel %vm1841, %v1803, 0
      %1845 = vmatprep.subr.bf16.mxu0 0
      %1846 = vmatpush1.bf16.msra.mxu0 0
      %1847 = vmatprep.subr.bf16.mxu0 0
      %1848 = vmatpush1.bf16.msra.mxu0 0
      %1849 = vmatprep.subr.bf16.mxu0 0
      %1850 = vmatpush1.bf16.msra.mxu0 0
      %1851 = vmatprep.subr.bf16.mxu0 0
      %1852 = vmatpush1.bf16.msra.mxu0 %v1843
      %1853 = vmatprep.subr.bf16.mxu0 0
      %1854 = vmatpush1.bf16.msra.mxu0 %v1802
      %1855 = vmatprep.subr.bf16.mxu0 0
      %1856 = vmatpush1.bf16.msra.mxu0 %v1801
      %1857 = vmatprep.subr.bf16.mxu0 0
      %1858 = vmatpush1.bf16.msra.mxu0 %v1800
      %1859 = vmatprep.subr.bf16.mxu0 0
      %1860 = vmatpush1.bf16.msra.mxu0 %v1799
      %1861 = vmatprep.subr.bf16.mxu0 0
      %1862 = vmatpush2.bf16.msra.mxu0 0
      %1863 = vmatprep.subr.bf16.mxu0 0
      %1864 = vmatpush2.bf16.msra.mxu0 0
      %1865 = vmatprep.subr.bf16.mxu0 0
      %1866 = vmatpush2.bf16.msra.mxu0 0
      %1867 = vmatprep.subr.bf16.mxu0 0
      %1868 = vmatpush2.bf16.msra.mxu0 0
      %1869 = vmatprep.subr.bf16.mxu0 0
      %1870 = vmatpush2.bf16.msra.mxu0 0
      %1871 = vmatprep.subr.bf16.mxu0 0
      %1872 = vmatpush2.bf16.msra.mxu0 0
      %1873 = vmatprep.subr.bf16.mxu0 0
      %1874 = vmatpush2.bf16.msra.mxu0 0
      %1875 = vmatprep.subr.bf16.mxu0 0
      %1876 = vmatpush2.bf16.msra.mxu0 0
      %1877 = vmatprep.mubr.bf16.mxu0 0
      %1878 = vmatmul.mubr.bf16.gmra.mxu0 %v1809
      %v1879 = vpop.f32.mrf.mxu0
      %v1880 = vadd.f32 0.0, %v1879
      %v1881 = vpop.f32.mrf.mxu0
      %v1882 = vpop.f32.mrf.mxu0
      %v1883 = vadd.f32 0.0, %v1882
      %v1884 = vpop.f32.mrf.mxu0
      %1885 = vmatprep.mubr.bf16.mxu0 0
      %1886 = vmatmul.mubr.bf16.gmra.mxu0 %v1811
      %v1887 = vpop.f32.mrf.mxu0
      %v1888 = vadd.f32 0.0, %v1887
      %v1889 = vpop.f32.mrf.mxu0
      %v1890 = vpop.f32.mrf.mxu0
      %v1891 = vadd.f32 0.0, %v1890
      %v1892 = vpop.f32.mrf.mxu0
      %1893 = vmatprep.mubr.bf16.mxu0 0
      %1894 = vmatmul.mubr.bf16.gmra.mxu0 %v1813
      %v1895 = vpop.f32.mrf.mxu0
      %v1896 = vadd.f32 0.0, %v1895
      %v1897 = vpop.f32.mrf.mxu0
      %v1898 = vpop.f32.mrf.mxu0
      %v1899 = vadd.f32 0.0, %v1898
      %v1900 = vpop.f32.mrf.mxu0
      %1901 = vmatprep.mubr.bf16.mxu0 0
      %1902 = vmatmul.mubr.bf16.gmra.mxu0 %v1815
      %v1903 = vpop.f32.mrf.mxu0
      %v1904 = vadd.f32 0.0, %v1903
      %v1905 = vpop.f32.mrf.mxu0
      %v1906 = vpop.f32.mrf.mxu0
      %v1907 = vadd.f32 0.0, %v1906
      %v1908 = vpop.f32.mrf.mxu0
      %1909 = vmatprep.mubr.bf16.mxu0 0
      %1910 = vmatmul.mubr.bf16.gmra.mxu0 %v1817
      %v1911 = vpop.f32.mrf.mxu0
      %v1912 = vadd.f32 0.0, %v1911
      %v1913 = vpop.f32.mrf.mxu0
      %v1914 = vpop.f32.mrf.mxu0
      %v1915 = vadd.f32 0.0, %v1914
      %v1916 = vpop.f32.mrf.mxu0
      %1917 = vmatprep.mubr.bf16.mxu0 0
      %1918 = vmatmul.mubr.bf16.gmra.mxu0 %v1819
      %v1919 = vpop.f32.mrf.mxu0
      %v1920 = vadd.f32 0.0, %v1919
      %v1921 = vpop.f32.mrf.mxu0
      %v1922 = vpop.f32.mrf.mxu0
      %v1923 = vadd.f32 0.0, %v1922
      %v1924 = vpop.f32.mrf.mxu0
      %1925 = vmatprep.mubr.bf16.mxu0 0
      %1926 = vmatmul.mubr.bf16.gmra.mxu0 %v1821
      %v1927 = vpop.f32.mrf.mxu0
      %v1928 = vadd.f32 0.0, %v1927
      %v1929 = vpop.f32.mrf.mxu0
      %v1930 = vpop.f32.mrf.mxu0
      %v1931 = vadd.f32 0.0, %v1930
      %v1932 = vpop.f32.mrf.mxu0
      %1933 = vmatprep.mubr.bf16.mxu0 0
      %1934 = vmatmul.mubr.bf16.gmra.mxu0 %v1823
      %v1935 = vpop.f32.mrf.mxu0
      %v1936 = vadd.f32 0.0, %v1935
      %v1937 = vpop.f32.mrf.mxu0
      %v1938 = vpop.f32.mrf.mxu0
      %v1939 = vadd.f32 0.0, %v1938
      %v1940 = vpop.f32.mrf.mxu0
      %1941 = vmatprep.mubr.bf16.mxu0 0
      %1942 = vmatmul.mubr.bf16.gmra.mxu0 %v1825
      %v1943 = vpop.f32.mrf.mxu0
      %v1944 = vadd.f32 0.0, %v1943
      %v1945 = vpop.f32.mrf.mxu0
      %v1946 = vpop.f32.mrf.mxu0
      %v1947 = vadd.f32 0.0, %v1946
      %v1948 = vpop.f32.mrf.mxu0
      %1949 = vmatprep.mubr.bf16.mxu0 0
      %1950 = vmatmul.mubr.bf16.gmra.mxu0 %v1827
      %v1951 = vpop.f32.mrf.mxu0
      %v1952 = vadd.f32 0.0, %v1951
      %v1953 = vpop.f32.mrf.mxu0
      %v1954 = vpop.f32.mrf.mxu0
      %v1955 = vadd.f32 0.0, %v1954
      %v1956 = vpop.f32.mrf.mxu0
      %1957 = vmatprep.mubr.bf16.mxu0 0
      %1958 = vmatmul.mubr.bf16.gmra.mxu0 %v1829
      %v1959 = vpop.f32.mrf.mxu0
      %v1960 = vadd.f32 0.0, %v1959
      %v1961 = vpop.f32.mrf.mxu0
      %v1962 = vpop.f32.mrf.mxu0
      %v1963 = vadd.f32 0.0, %v1962
      %v1964 = vpop.f32.mrf.mxu0
      %1965 = vmatprep.mubr.bf16.mxu0 0
      %1966 = vmatmul.mubr.bf16.gmra.mxu0 %v1831
      %v1967 = vpop.f32.mrf.mxu0
      %v1968 = vadd.f32 0.0, %v1967
      %v1969 = vpop.f32.mrf.mxu0
      %v1970 = vpop.f32.mrf.mxu0
      %v1971 = vadd.f32 0.0, %v1970
      %v1972 = vpop.f32.mrf.mxu0
      %1973 = vmatprep.mubr.bf16.mxu0 0
      %1974 = vmatmul.mubr.bf16.gmra.mxu0 %v1833
      %v1975 = vpop.f32.mrf.mxu0
      %v1976 = vadd.f32 0.0, %v1975
      %v1977 = vpop.f32.mrf.mxu0
      %v1978 = vpop.f32.mrf.mxu0
      %v1979 = vadd.f32 0.0, %v1978
      %v1980 = vpop.f32.mrf.mxu0
      %1981 = vmatprep.mubr.bf16.mxu0 0
      %1982 = vmatmul.mubr.bf16.gmra.mxu0 %v1835
      %v1983 = vpop.f32.mrf.mxu0
      %v1984 = vadd.f32 0.0, %v1983
      %v1985 = vpop.f32.mrf.mxu0
      %v1986 = vpop.f32.mrf.mxu0
      %v1987 = vadd.f32 0.0, %v1986
      %v1988 = vpop.f32.mrf.mxu0
      %1989 = vmatprep.mubr.bf16.mxu0 0
      %1990 = vmatmul.mubr.bf16.gmra.mxu0 %v1837
      %v1991 = vpop.f32.mrf.mxu0
      %v1992 = vadd.f32 0.0, %v1991
      %v1993 = vpop.f32.mrf.mxu0
      %v1994 = vpop.f32.mrf.mxu0
      %v1995 = vadd.f32 0.0, %v1994
      %v1996 = vpop.f32.mrf.mxu0
      %1997 = vmatprep.mubr.bf16.mxu0 0
      %1998 = vmatmul.mubr.bf16.gmra.mxu0 %v1839
      %v1999 = vpop.f32.mrf.mxu0
      %v2000 = vadd.f32 0.0, %v1999
      %v2001 = vpop.f32.mrf.mxu0
      %v2002 = vpop.f32.mrf.mxu0
      %v2003 = vadd.f32 0.0, %v2002
      %v2004 = vpop.f32.mrf.mxu0
      %2005 = vdwg.mxu0
      %v2006 = vpack.c.bf16 %v1883, %v1880
      %v2007 = vpack.c.bf16 %v1891, %v1888
      %v2008 = vpack.c.bf16 %v1899, %v1896
      %v2009 = vpack.c.bf16 %v1907, %v1904
      %v2010 = vpack.c.bf16 %v1915, %v1912
      %v2011 = vpack.c.bf16 %v1923, %v1920
      %v2012 = vpack.c.bf16 %v1931, %v1928
      %v2013 = vpack.c.bf16 %v1939, %v1936
      %v2014 = vpack.c.bf16 %v1947, %v1944
      %v2015 = vpack.c.bf16 %v1955, %v1952
      %v2016 = vpack.c.bf16 %v1963, %v1960
      %v2017 = vpack.c.bf16 %v1971, %v1968
      %v2018 = vpack.c.bf16 %v1979, %v1976
      %v2019 = vpack.c.bf16 %v1987, %v1984
      %v2020 = vpack.c.bf16 %v1995, %v1992
      %v2021 = vpack.c.bf16 %v2003, %v2000
      %v2054 = vunpack.c.l.b16 %v253
      %v2055 = vunpack.c.l.b16 %v254
      %v2056 = vunpack.c.l.b16 %v255
      %v2057 = vunpack.c.l.b16 %v256
      %v2058 = vunpack.c.l.b16 %v257
      %v2059 = vunpack.c.l.b16 %v258
      %v2060 = vunpack.c.l.b16 %v259
      %v2061 = vunpack.c.l.b16 %v260
      %v2062 = vunpack.c.l.b16 %v261
      %v2063 = vunpack.c.l.b16 %v262
      %v2064 = vunpack.c.l.b16 %v263
      %v2065 = vunpack.c.l.b16 %v264
      %v2066 = vunpack.c.l.b16 %v265
      %v2067 = vunpack.c.l.b16 %v266
      %v2068 = vunpack.c.l.b16 %v267
      %v2069 = vunpack.c.l.b16 %v268
      %v2070 = vunpack.c.l.b16 %v269
      %v2071 = vunpack.c.l.b16 %v270
      %v2072 = vunpack.c.l.b16 %v271
      %v2073 = vunpack.c.l.b16 %v272
      %v2074 = vunpack.c.l.b16 %v273
      %v2075 = vunpack.c.l.b16 %v274
      %v2076 = vunpack.c.l.b16 %v275
      %v2077 = vunpack.c.l.b16 %v276
      %v2078 = vunpack.c.l.b16 %v277
      %v2079 = vunpack.c.l.b16 %v278
      %v2080 = vunpack.c.l.b16 %v279
      %v2081 = vunpack.c.l.b16 %v280
      %v2082 = vunpack.c.l.b16 %v281
      %v2083 = vunpack.c.l.b16 %v282
      %v2084 = vunpack.c.l.b16 %v283
      %v2085 = vunpack.c.l.b16 %v284
      %v2086 = vpack.c.b16 %v2055, %v2054
      %v2087 = vpack.c.b16 %v2057, %v2056
      %v2088 = vpack.c.b16 %v2059, %v2058
      %v2089 = vpack.c.b16 %v2061, %v2060
      %v2090 = vpack.c.b16 %v2063, %v2062
      %v2091 = vpack.c.b16 %v2065, %v2064
      %v2092 = vpack.c.b16 %v2067, %v2066
      %v2093 = vpack.c.b16 %v2069, %v2068
      %v2094 = vpack.c.b16 %v2071, %v2070
      %v2095 = vpack.c.b16 %v2073, %v2072
      %v2096 = vpack.c.b16 %v2075, %v2074
      %v2097 = vpack.c.b16 %v2077, %v2076
      %v2098 = vpack.c.b16 %v2079, %v2078
      %v2099 = vpack.c.b16 %v2081, %v2080
      %v2100 = vpack.c.b16 %v2083, %v2082
      %v2101 = vpack.c.b16 %v2085, %v2084
      %v2104 = vsel %vm1508, %v2006, %v2086
      %v2107 = vsel %vm1508, %v2007, %v2087
      %v2110 = vsel %vm1508, %v2008, %v2088
      %v2113 = vsel %vm1508, %v2009, %v2089
      %v2116 = vsel %vm1508, %v2010, %v2090
      %v2119 = vsel %vm1508, %v2011, %v2091
      %v2122 = vsel %vm1508, %v2012, %v2092
      %v2125 = vsel %vm1508, %v2013, %v2093
      %v2128 = vsel %vm1508, %v2014, %v2094
      %v2131 = vsel %vm1508, %v2015, %v2095
      %v2134 = vsel %vm1508, %v2016, %v2096
      %v2137 = vsel %vm1508, %v2017, %v2097
      %v2140 = vsel %vm1508, %v2018, %v2098
      %v2143 = vsel %vm1508, %v2019, %v2099
      %v2146 = vsel %vm1508, %v2020, %v2100
      %v2149 = vsel %vm1508, %v2021, %v2101
      %v2150 = vld [vmem:[%s2] sm:$0xf]
      %v2151 = vld [vmem:[%s2 + $0x4] sm:$0xf]
      %v2154 = vunpack.c.l.b16 %v2150
      %v2155 = vunpack.c.l.b16 %v2151
      %v2156 = vpack.c.b16 %v2155, %v2154
      %v2158 = vsel %vm1541, %v2104, 0
      %v2160 = vsel %vm1541, %v2107, 0
      %v2162 = vsel %vm1541, %v2110, 0
      %v2164 = vsel %vm1541, %v2113, 0
      %v2166 = vsel %vm1541, %v2116, 0
      %v2168 = vsel %vm1541, %v2119, 0
      %v2170 = vsel %vm1541, %v2122, 0
      %v2172 = vsel %vm1541, %v2125, 0
      %v2174 = vsel %vm1541, %v2128, 0
      %v2176 = vsel %vm1541, %v2131, 0
      %v2178 = vsel %vm1541, %v2134, 0
      %v2180 = vsel %vm1541, %v2137, 0
      %v2182 = vsel %vm1541, %v2140, 0
      %v2184 = vsel %vm1541, %v2143, 0
      %v2186 = vsel %vm1541, %v2146, 0
      %v2188 = vsel %vm1541, %v2149, 0
      %2190 = vmatprep.subr.bf16.mxu0 0
      %2191 = vmatpush1.bf16.msra.mxu0 0
      %2192 = vmatprep.subr.bf16.mxu0 0
      %2193 = vmatpush1.bf16.msra.mxu0 0
      %2194 = vmatprep.subr.bf16.mxu0 0
      %2195 = vmatpush1.bf16.msra.mxu0 0
      %2196 = vmatprep.subr.bf16.mxu0 0
      %2197 = vmatpush1.bf16.msra.mxu0 0
      %2198 = vmatprep.subr.bf16.mxu0 0
      %2199 = vmatpush1.bf16.msra.mxu0 0
      %2200 = vmatprep.subr.bf16.mxu0 0
      %2201 = vmatpush1.bf16.msra.mxu0 0
      %2202 = vmatprep.subr.bf16.mxu0 0
      %2203 = vmatpush1.bf16.msra.mxu0 0
      %2204 = vmatprep.subr.bf16.mxu0 0
      %2205 = vmatpush1.bf16.msra.mxu0 %v2156
      %2206 = vmatprep.subr.bf16.mxu0 0
      %2207 = vmatpush2.bf16.msra.mxu0 0
      %2208 = vmatprep.subr.bf16.mxu0 0
      %2209 = vmatpush2.bf16.msra.mxu0 0
      %2210 = vmatprep.subr.bf16.mxu0 0
      %2211 = vmatpush2.bf16.msra.mxu0 0
      %2212 = vmatprep.subr.bf16.mxu0 0
      %2213 = vmatpush2.bf16.msra.mxu0 0
      %2214 = vmatprep.subr.bf16.mxu0 0
      %2215 = vmatpush2.bf16.msra.mxu0 0
      %2216 = vmatprep.subr.bf16.mxu0 0
      %2217 = vmatpush2.bf16.msra.mxu0 0
      %2218 = vmatprep.subr.bf16.mxu0 0
      %2219 = vmatpush2.bf16.msra.mxu0 0
      %2220 = vmatprep.subr.bf16.mxu0 0
      %2221 = vmatpush2.bf16.msra.mxu0 0
      %2222 = vmatprep.mubr.bf16.mxu0 0
      %2223 = vmatmul.mubr.bf16.gmra.mxu0 %v2158
      %v2224 = vpop.f32.mrf.mxu0
      %v2225 = vadd.f32 0.0, %v2224
      %v2226 = vpop.f32.mrf.mxu0
      %v2227 = vpop.f32.mrf.mxu0
      %v2228 = vadd.f32 0.0, %v2227
      %v2229 = vpop.f32.mrf.mxu0
      %2230 = vmatprep.mubr.bf16.mxu0 0
      %2231 = vmatmul.mubr.bf16.gmra.mxu0 %v2160
      %v2232 = vpop.f32.mrf.mxu0
      %v2233 = vadd.f32 0.0, %v2232
      %v2234 = vpop.f32.mrf.mxu0
      %v2235 = vpop.f32.mrf.mxu0
      %v2236 = vadd.f32 0.0, %v2235
      %v2237 = vpop.f32.mrf.mxu0
      %2238 = vmatprep.mubr.bf16.mxu0 0
      %2239 = vmatmul.mubr.bf16.gmra.mxu0 %v2162
      %v2240 = vpop.f32.mrf.mxu0
      %v2241 = vadd.f32 0.0, %v2240
      %v2242 = vpop.f32.mrf.mxu0
      %v2243 = vpop.f32.mrf.mxu0
      %v2244 = vadd.f32 0.0, %v2243
      %v2245 = vpop.f32.mrf.mxu0
      %2246 = vmatprep.mubr.bf16.mxu0 0
      %2247 = vmatmul.mubr.bf16.gmra.mxu0 %v2164
      %v2248 = vpop.f32.mrf.mxu0
      %v2249 = vadd.f32 0.0, %v2248
      %v2250 = vpop.f32.mrf.mxu0
      %v2251 = vpop.f32.mrf.mxu0
      %v2252 = vadd.f32 0.0, %v2251
      %v2253 = vpop.f32.mrf.mxu0
      %2254 = vmatprep.mubr.bf16.mxu0 0
      %2255 = vmatmul.mubr.bf16.gmra.mxu0 %v2166
      %v2256 = vpop.f32.mrf.mxu0
      %v2257 = vadd.f32 0.0, %v2256
      %v2258 = vpop.f32.mrf.mxu0
      %v2259 = vpop.f32.mrf.mxu0
      %v2260 = vadd.f32 0.0, %v2259
      %v2261 = vpop.f32.mrf.mxu0
      %2262 = vmatprep.mubr.bf16.mxu0 0
      %2263 = vmatmul.mubr.bf16.gmra.mxu0 %v2168
      %v2264 = vpop.f32.mrf.mxu0
      %v2265 = vadd.f32 0.0, %v2264
      %v2266 = vpop.f32.mrf.mxu0
      %v2267 = vpop.f32.mrf.mxu0
      %v2268 = vadd.f32 0.0, %v2267
      %v2269 = vpop.f32.mrf.mxu0
      %2270 = vmatprep.mubr.bf16.mxu0 0
      %2271 = vmatmul.mubr.bf16.gmra.mxu0 %v2170
      %v2272 = vpop.f32.mrf.mxu0
      %v2273 = vadd.f32 0.0, %v2272
      %v2274 = vpop.f32.mrf.mxu0
      %v2275 = vpop.f32.mrf.mxu0
      %v2276 = vadd.f32 0.0, %v2275
      %v2277 = vpop.f32.mrf.mxu0
      %2278 = vmatprep.mubr.bf16.mxu0 0
      %2279 = vmatmul.mubr.bf16.gmra.mxu0 %v2172
      %v2280 = vpop.f32.mrf.mxu0
      %v2281 = vadd.f32 0.0, %v2280
      %v2282 = vpop.f32.mrf.mxu0
      %v2283 = vpop.f32.mrf.mxu0
      %v2284 = vadd.f32 0.0, %v2283
      %v2285 = vpop.f32.mrf.mxu0
      %2286 = vmatprep.mubr.bf16.mxu0 0
      %2287 = vmatmul.mubr.bf16.gmra.mxu0 %v2174
      %v2288 = vpop.f32.mrf.mxu0
      %v2289 = vadd.f32 0.0, %v2288
      %v2290 = vpop.f32.mrf.mxu0
      %v2291 = vpop.f32.mrf.mxu0
      %v2292 = vadd.f32 0.0, %v2291
      %v2293 = vpop.f32.mrf.mxu0
      %2294 = vmatprep.mubr.bf16.mxu0 0
      %2295 = vmatmul.mubr.bf16.gmra.mxu0 %v2176
      %v2296 = vpop.f32.mrf.mxu0
      %v2297 = vadd.f32 0.0, %v2296
      %v2298 = vpop.f32.mrf.mxu0
      %v2299 = vpop.f32.mrf.mxu0
      %v2300 = vadd.f32 0.0, %v2299
      %v2301 = vpop.f32.mrf.mxu0
      %2302 = vmatprep.mubr.bf16.mxu0 0
      %2303 = vmatmul.mubr.bf16.gmra.mxu0 %v2178
      %v2304 = vpop.f32.mrf.mxu0
      %v2305 = vadd.f32 0.0, %v2304
      %v2306 = vpop.f32.mrf.mxu0
      %v2307 = vpop.f32.mrf.mxu0
      %v2308 = vadd.f32 0.0, %v2307
      %v2309 = vpop.f32.mrf.mxu0
      %2310 = vmatprep.mubr.bf16.mxu0 0
      %2311 = vmatmul.mubr.bf16.gmra.mxu0 %v2180
      %v2312 = vpop.f32.mrf.mxu0
      %v2313 = vadd.f32 0.0, %v2312
      %v2314 = vpop.f32.mrf.mxu0
      %v2315 = vpop.f32.mrf.mxu0
      %v2316 = vadd.f32 0.0, %v2315
      %v2317 = vpop.f32.mrf.mxu0
      %2318 = vmatprep.mubr.bf16.mxu0 0
      %2319 = vmatmul.mubr.bf16.gmra.mxu0 %v2182
      %v2320 = vpop.f32.mrf.mxu0
      %v2321 = vadd.f32 0.0, %v2320
      %v2322 = vpop.f32.mrf.mxu0
      %v2323 = vpop.f32.mrf.mxu0
      %v2324 = vadd.f32 0.0, %v2323
      %v2325 = vpop.f32.mrf.mxu0
      %2326 = vmatprep.mubr.bf16.mxu0 0
      %2327 = vmatmul.mubr.bf16.gmra.mxu0 %v2184
      %v2328 = vpop.f32.mrf.mxu0
      %v2329 = vadd.f32 0.0, %v2328
      %v2330 = vpop.f32.mrf.mxu0
      %v2331 = vpop.f32.mrf.mxu0
      %v2332 = vadd.f32 0.0, %v2331
      %v2333 = vpop.f32.mrf.mxu0
      %2334 = vmatprep.mubr.bf16.mxu0 0
      %2335 = vmatmul.mubr.bf16.gmra.mxu0 %v2186
      %v2336 = vpop.f32.mrf.mxu0
      %v2337 = vadd.f32 0.0, %v2336
      %v2338 = vpop.f32.mrf.mxu0
      %v2339 = vpop.f32.mrf.mxu0
      %v2340 = vadd.f32 0.0, %v2339
      %v2341 = vpop.f32.mrf.mxu0
      %2342 = vmatprep.mubr.bf16.mxu0 0
      %2343 = vmatmul.mubr.bf16.gmra.mxu0 %v2188
      %v2344 = vpop.f32.mrf.mxu0
      %v2345 = vadd.f32 0.0, %v2344
      %v2346 = vpop.f32.mrf.mxu0
      %v2347 = vpop.f32.mrf.mxu0
      %v2348 = vadd.f32 0.0, %v2347
      %v2349 = vpop.f32.mrf.mxu0
      %2350 = vdwg.mxu0
      %v2351 = vld [vmem:[%s3] sm:$0x1]
      %v2353 = vlaneseq
      %v2354 = vshrl.u32 %v2353, 7
      %v2355 = vsub.s32 0, %v2354
      %v2356 = vrot.slane %v2351, %v2355
      %v2358 = vmul.f32 %v2225, %v2356
      %v2359 = vmul.f32 %v2228, %v2356
      %v2360 = vmul.f32 %v2233, %v2356
      %v2361 = vmul.f32 %v2236, %v2356
      %v2362 = vmul.f32 %v2241, %v2356
      %v2363 = vmul.f32 %v2244, %v2356
      %v2364 = vmul.f32 %v2249, %v2356
      %v2365 = vmul.f32 %v2252, %v2356
      %v2366 = vmul.f32 %v2257, %v2356
      %v2367 = vmul.f32 %v2260, %v2356
      %v2368 = vmul.f32 %v2265, %v2356
      %v2369 = vmul.f32 %v2268, %v2356
      %v2370 = vmul.f32 %v2273, %v2356
      %v2371 = vmul.f32 %v2276, %v2356
      %v2372 = vmul.f32 %v2281, %v2356
      %v2373 = vmul.f32 %v2284, %v2356
      %v2374 = vmul.f32 %v2289, %v2356
      %v2375 = vmul.f32 %v2292, %v2356
      %v2376 = vmul.f32 %v2297, %v2356
      %v2377 = vmul.f32 %v2300, %v2356
      %v2378 = vmul.f32 %v2305, %v2356
      %v2379 = vmul.f32 %v2308, %v2356
      %v2380 = vmul.f32 %v2313, %v2356
      %v2381 = vmul.f32 %v2316, %v2356
      %v2382 = vmul.f32 %v2321, %v2356
      %v2383 = vmul.f32 %v2324, %v2356
      %v2384 = vmul.f32 %v2329, %v2356
      %v2385 = vmul.f32 %v2332, %v2356
      %v2386 = vmul.f32 %v2337, %v2356
      %v2387 = vmul.f32 %v2340, %v2356
      %v2388 = vmul.f32 %v2345, %v2356
      %v2389 = vmul.f32 %v2348, %v2356
      %v2390 = vld [vmem:[%s4] sm:$0x1]
      %v2392 = vlaneseq
      %v2393 = vshrl.u32 %v2392, 7
      %v2394 = vsub.s32 0, %v2393
      %v2395 = vrot.slane %v2390, %v2394
      %v2397 = vadd.f32 %v2358, %v2395
      %v2398 = vadd.f32 %v2359, %v2395
      %v2399 = vadd.f32 %v2360, %v2395
      %v2400 = vadd.f32 %v2361, %v2395
      %v2401 = vadd.f32 %v2362, %v2395
      %v2402 = vadd.f32 %v2363, %v2395
      %v2403 = vadd.f32 %v2364, %v2395
      %v2404 = vadd.f32 %v2365, %v2395
      %v2405 = vadd.f32 %v2366, %v2395
      %v2406 = vadd.f32 %v2367, %v2395
      %v2407 = vadd.f32 %v2368, %v2395
      %v2408 = vadd.f32 %v2369, %v2395
      %v2409 = vadd.f32 %v2370, %v2395
      %v2410 = vadd.f32 %v2371, %v2395
      %v2411 = vadd.f32 %v2372, %v2395
      %v2412 = vadd.f32 %v2373, %v2395
      %v2413 = vadd.f32 %v2374, %v2395
      %v2414 = vadd.f32 %v2375, %v2395
      %v2415 = vadd.f32 %v2376, %v2395
      %v2416 = vadd.f32 %v2377, %v2395
      %v2417 = vadd.f32 %v2378, %v2395
      %v2418 = vadd.f32 %v2379, %v2395
      %v2419 = vadd.f32 %v2380, %v2395
      %v2420 = vadd.f32 %v2381, %v2395
      %v2421 = vadd.f32 %v2382, %v2395
      %v2422 = vadd.f32 %v2383, %v2395
      %v2423 = vadd.f32 %v2384, %v2395
      %v2424 = vadd.f32 %v2385, %v2395
      %v2425 = vadd.f32 %v2386, %v2395
      %v2426 = vadd.f32 %v2387, %v2395
      %v2427 = vadd.f32 %v2388, %v2395
      %v2428 = vadd.f32 %v2389, %v2395
      %v2429 = vmax.f32 %v2397, 0.0
      %v2430 = vmax.f32 %v2398, 0.0
      %v2431 = vmax.f32 %v2399, 0.0
      %v2432 = vmax.f32 %v2400, 0.0
      %v2433 = vmax.f32 %v2401, 0.0
      %v2434 = vmax.f32 %v2402, 0.0
      %v2435 = vmax.f32 %v2403, 0.0
      %v2436 = vmax.f32 %v2404, 0.0
      %v2437 = vmax.f32 %v2405, 0.0
      %v2438 = vmax.f32 %v2406, 0.0
      %v2439 = vmax.f32 %v2407, 0.0
      %v2440 = vmax.f32 %v2408, 0.0
      %v2441 = vmax.f32 %v2409, 0.0
      %v2442 = vmax.f32 %v2410, 0.0
      %v2443 = vmax.f32 %v2411, 0.0
      %v2444 = vmax.f32 %v2412, 0.0
      %v2445 = vmax.f32 %v2413, 0.0
      %v2446 = vmax.f32 %v2414, 0.0
      %v2447 = vmax.f32 %v2415, 0.0
      %v2448 = vmax.f32 %v2416, 0.0
      %v2449 = vmax.f32 %v2417, 0.0
      %v2450 = vmax.f32 %v2418, 0.0
      %v2451 = vmax.f32 %v2419, 0.0
      %v2452 = vmax.f32 %v2420, 0.0
      %v2453 = vmax.f32 %v2421, 0.0
      %v2454 = vmax.f32 %v2422, 0.0
      %v2455 = vmax.f32 %v2423, 0.0
      %v2456 = vmax.f32 %v2424, 0.0
      %v2457 = vmax.f32 %v2425, 0.0
      %v2458 = vmax.f32 %v2426, 0.0
      %v2459 = vmax.f32 %v2427, 0.0
      %v2460 = vmax.f32 %v2428, 0.0
      %v2461 = vpack.c.bf16 %v2430, %v2429
      %v2462 = vpack.c.bf16 %v2432, %v2431
      %v2463 = vpack.c.bf16 %v2434, %v2433
      %v2464 = vpack.c.bf16 %v2436, %v2435
      %v2465 = vpack.c.bf16 %v2438, %v2437
      %v2466 = vpack.c.bf16 %v2440, %v2439
      %v2467 = vpack.c.bf16 %v2442, %v2441
      %v2468 = vpack.c.bf16 %v2444, %v2443
      %v2469 = vpack.c.bf16 %v2446, %v2445
      %v2470 = vpack.c.bf16 %v2448, %v2447
      %v2471 = vpack.c.bf16 %v2450, %v2449
      %v2472 = vpack.c.bf16 %v2452, %v2451
      %v2473 = vpack.c.bf16 %v2454, %v2453
      %v2474 = vpack.c.bf16 %v2456, %v2455
      %v2475 = vpack.c.bf16 %v2458, %v2457
      %v2476 = vpack.c.bf16 %v2460, %v2459
      %v2477 = vld [vmem:[%s5] sm:$0xf]
      %v2478 = vld [vmem:[%s5 + $0x4] sm:$0xf]
      %v2479 = vld [vmem:[%s5 + $0x8] sm:$0xf]
      %v2480 = vld [vmem:[%s5 + $0xc] sm:$0xf]
      %v2485 = vunpack.c.l.b16 %v2477
      %v2486 = vunpack.c.l.b16 %v2478
      %v2487 = vunpack.c.l.b16 %v2479
      %v2488 = vunpack.c.l.b16 %v2480
      %v2489 = vpack.c.b16 %v2486, %v2485
      %v2490 = vpack.c.b16 %v2488, %v2487
      %v2494 = vsel %vm1607, %v2461, 0
      %v2497 = vsel %vm1607, %v2462, 0
      %v2500 = vsel %vm1607, %v2463, 0
      %v2503 = vsel %vm1607, %v2464, 0
      %v2506 = vsel %vm1607, %v2465, 0
      %v2509 = vsel %vm1607, %v2466, 0
      %v2512 = vsel %vm1607, %v2467, 0
      %v2515 = vsel %vm1607, %v2468, 0
      %v2518 = vsel %vm1607, %v2469, 0
      %v2521 = vsel %vm1607, %v2470, 0
      %v2524 = vsel %vm1607, %v2471, 0
      %v2527 = vsel %vm1607, %v2472, 0
      %v2530 = vsel %vm1607, %v2473, 0
      %v2533 = vsel %vm1607, %v2474, 0
      %v2536 = vsel %vm1607, %v2475, 0
      %v2539 = vsel %vm1607, %v2476, 0
      %2541 = vmatprep.subr.bf16.mxu0 0
      %2542 = vmatpush1.bf16.msra.mxu0 0
      %2543 = vmatprep.subr.bf16.mxu0 0
      %2544 = vmatpush1.bf16.msra.mxu0 0
      %2545 = vmatprep.subr.bf16.mxu0 0
      %2546 = vmatpush1.bf16.msra.mxu0 0
      %2547 = vmatprep.subr.bf16.mxu0 0
      %2548 = vmatpush1.bf16.msra.mxu0 0
      %2549 = vmatprep.subr.bf16.mxu0 0
      %2550 = vmatpush1.bf16.msra.mxu0 0
      %2551 = vmatprep.subr.bf16.mxu0 0
      %2552 = vmatpush1.bf16.msra.mxu0 0
      %2553 = vmatprep.subr.bf16.mxu0 0
      %2554 = vmatpush1.bf16.msra.mxu0 %v2490
      %2555 = vmatprep.subr.bf16.mxu0 0
      %2556 = vmatpush1.bf16.msra.mxu0 %v2489
      %2557 = vmatprep.subr.bf16.mxu0 0
      %2558 = vmatpush2.bf16.msra.mxu0 0
      %2559 = vmatprep.subr.bf16.mxu0 0
      %2560 = vmatpush2.bf16.msra.mxu0 0
      %2561 = vmatprep.subr.bf16.mxu0 0
      %2562 = vmatpush2.bf16.msra.mxu0 0
      %2563 = vmatprep.subr.bf16.mxu0 0
      %2564 = vmatpush2.bf16.msra.mxu0 0
      %2565 = vmatprep.subr.bf16.mxu0 0
      %2566 = vmatpush2.bf16.msra.mxu0 0
      %2567 = vmatprep.subr.bf16.mxu0 0
      %2568 = vmatpush2.bf16.msra.mxu0 0
      %2569 = vmatprep.subr.bf16.mxu0 0
      %2570 = vmatpush2.bf16.msra.mxu0 0
      %2571 = vmatprep.subr.bf16.mxu0 0
      %2572 = vmatpush2.bf16.msra.mxu0 0
      %2573 = vmatprep.mubr.bf16.mxu0 0
      %2574 = vmatmul.mubr.bf16.gmra.mxu0 %v2494
      %v2575 = vpop.f32.mrf.mxu0
      %v2576 = vadd.f32 0.0, %v2575
      %v2577 = vpop.f32.mrf.mxu0
      %v2578 = vpop.f32.mrf.mxu0
      %v2579 = vadd.f32 0.0, %v2578
      %v2580 = vpop.f32.mrf.mxu0
      %2581 = vmatprep.mubr.bf16.mxu0 0
      %2582 = vmatmul.mubr.bf16.gmra.mxu0 %v2497
      %v2583 = vpop.f32.mrf.mxu0
      %v2584 = vadd.f32 0.0, %v2583
      %v2585 = vpop.f32.mrf.mxu0
      %v2586 = vpop.f32.mrf.mxu0
      %v2587 = vadd.f32 0.0, %v2586
      %v2588 = vpop.f32.mrf.mxu0
      %2589 = vmatprep.mubr.bf16.mxu0 0
      %2590 = vmatmul.mubr.bf16.gmra.mxu0 %v2500
      %v2591 = vpop.f32.mrf.mxu0
      %v2592 = vadd.f32 0.0, %v2591
      %v2593 = vpop.f32.mrf.mxu0
      %v2594 = vpop.f32.mrf.mxu0
      %v2595 = vadd.f32 0.0, %v2594
      %v2596 = vpop.f32.mrf.mxu0
      %2597 = vmatprep.mubr.bf16.mxu0 0
      %2598 = vmatmul.mubr.bf16.gmra.mxu0 %v2503
      %v2599 = vpop.f32.mrf.mxu0
      %v2600 = vadd.f32 0.0, %v2599
      %v2601 = vpop.f32.mrf.mxu0
      %v2602 = vpop.f32.mrf.mxu0
      %v2603 = vadd.f32 0.0, %v2602
      %v2604 = vpop.f32.mrf.mxu0
      %2605 = vmatprep.mubr.bf16.mxu0 0
      %2606 = vmatmul.mubr.bf16.gmra.mxu0 %v2506
      %v2607 = vpop.f32.mrf.mxu0
      %v2608 = vadd.f32 0.0, %v2607
      %v2609 = vpop.f32.mrf.mxu0
      %v2610 = vpop.f32.mrf.mxu0
      %v2611 = vadd.f32 0.0, %v2610
      %v2612 = vpop.f32.mrf.mxu0
      %2613 = vmatprep.mubr.bf16.mxu0 0
      %2614 = vmatmul.mubr.bf16.gmra.mxu0 %v2509
      %v2615 = vpop.f32.mrf.mxu0
      %v2616 = vadd.f32 0.0, %v2615
      %v2617 = vpop.f32.mrf.mxu0
      %v2618 = vpop.f32.mrf.mxu0
      %v2619 = vadd.f32 0.0, %v2618
      %v2620 = vpop.f32.mrf.mxu0
      %2621 = vmatprep.mubr.bf16.mxu0 0
      %2622 = vmatmul.mubr.bf16.gmra.mxu0 %v2512
      %v2623 = vpop.f32.mrf.mxu0
      %v2624 = vadd.f32 0.0, %v2623
      %v2625 = vpop.f32.mrf.mxu0
      %v2626 = vpop.f32.mrf.mxu0
      %v2627 = vadd.f32 0.0, %v2626
      %v2628 = vpop.f32.mrf.mxu0
      %2629 = vmatprep.mubr.bf16.mxu0 0
      %2630 = vmatmul.mubr.bf16.gmra.mxu0 %v2515
      %v2631 = vpop.f32.mrf.mxu0
      %v2632 = vadd.f32 0.0, %v2631
      %v2633 = vpop.f32.mrf.mxu0
      %v2634 = vpop.f32.mrf.mxu0
      %v2635 = vadd.f32 0.0, %v2634
      %v2636 = vpop.f32.mrf.mxu0
      %2637 = vmatprep.mubr.bf16.mxu0 0
      %2638 = vmatmul.mubr.bf16.gmra.mxu0 %v2518
      %v2639 = vpop.f32.mrf.mxu0
      %v2640 = vadd.f32 0.0, %v2639
      %v2641 = vpop.f32.mrf.mxu0
      %v2642 = vpop.f32.mrf.mxu0
      %v2643 = vadd.f32 0.0, %v2642
      %v2644 = vpop.f32.mrf.mxu0
      %2645 = vmatprep.mubr.bf16.mxu0 0
      %2646 = vmatmul.mubr.bf16.gmra.mxu0 %v2521
      %v2647 = vpop.f32.mrf.mxu0
      %v2648 = vadd.f32 0.0, %v2647
      %v2649 = vpop.f32.mrf.mxu0
      %v2650 = vpop.f32.mrf.mxu0
      %v2651 = vadd.f32 0.0, %v2650
      %v2652 = vpop.f32.mrf.mxu0
      %2653 = vmatprep.mubr.bf16.mxu0 0
      %2654 = vmatmul.mubr.bf16.gmra.mxu0 %v2524
      %v2655 = vpop.f32.mrf.mxu0
      %v2656 = vadd.f32 0.0, %v2655
      %v2657 = vpop.f32.mrf.mxu0
      %v2658 = vpop.f32.mrf.mxu0
      %v2659 = vadd.f32 0.0, %v2658
      %v2660 = vpop.f32.mrf.mxu0
      %2661 = vmatprep.mubr.bf16.mxu0 0
      %2662 = vmatmul.mubr.bf16.gmra.mxu0 %v2527
      %v2663 = vpop.f32.mrf.mxu0
      %v2664 = vadd.f32 0.0, %v2663
      %v2665 = vpop.f32.mrf.mxu0
      %v2666 = vpop.f32.mrf.mxu0
      %v2667 = vadd.f32 0.0, %v2666
      %v2668 = vpop.f32.mrf.mxu0
      %2669 = vmatprep.mubr.bf16.mxu0 0
      %2670 = vmatmul.mubr.bf16.gmra.mxu0 %v2530
      %v2671 = vpop.f32.mrf.mxu0
      %v2672 = vadd.f32 0.0, %v2671
      %v2673 = vpop.f32.mrf.mxu0
      %v2674 = vpop.f32.mrf.mxu0
      %v2675 = vadd.f32 0.0, %v2674
      %v2676 = vpop.f32.mrf.mxu0
      %2677 = vmatprep.mubr.bf16.mxu0 0
      %2678 = vmatmul.mubr.bf16.gmra.mxu0 %v2533
      %v2679 = vpop.f32.mrf.mxu0
      %v2680 = vadd.f32 0.0, %v2679
      %v2681 = vpop.f32.mrf.mxu0
      %v2682 = vpop.f32.mrf.mxu0
      %v2683 = vadd.f32 0.0, %v2682
      %v2684 = vpop.f32.mrf.mxu0
      %2685 = vmatprep.mubr.bf16.mxu0 0
      %2686 = vmatmul.mubr.bf16.gmra.mxu0 %v2536
      %v2687 = vpop.f32.mrf.mxu0
      %v2688 = vadd.f32 0.0, %v2687
      %v2689 = vpop.f32.mrf.mxu0
      %v2690 = vpop.f32.mrf.mxu0
      %v2691 = vadd.f32 0.0, %v2690
      %v2692 = vpop.f32.mrf.mxu0
      %2693 = vmatprep.mubr.bf16.mxu0 0
      %2694 = vmatmul.mubr.bf16.gmra.mxu0 %v2539
      %v2695 = vpop.f32.mrf.mxu0
      %v2696 = vadd.f32 0.0, %v2695
      %v2697 = vpop.f32.mrf.mxu0
      %v2698 = vpop.f32.mrf.mxu0
      %v2699 = vadd.f32 0.0, %v2698
      %v2700 = vpop.f32.mrf.mxu0
      %2701 = vdwg.mxu0
      %v2702 = vpack.c.bf16 %v2579, %v2576
      %v2703 = vpack.c.bf16 %v2587, %v2584
      %v2704 = vpack.c.bf16 %v2595, %v2592
      %v2705 = vpack.c.bf16 %v2603, %v2600
      %v2706 = vpack.c.bf16 %v2611, %v2608
      %v2707 = vpack.c.bf16 %v2619, %v2616
      %v2708 = vpack.c.bf16 %v2627, %v2624
      %v2709 = vpack.c.bf16 %v2635, %v2632
      %v2710 = vpack.c.bf16 %v2643, %v2640
      %v2711 = vpack.c.bf16 %v2651, %v2648
      %v2712 = vpack.c.bf16 %v2659, %v2656
      %v2713 = vpack.c.bf16 %v2667, %v2664
      %v2714 = vpack.c.bf16 %v2675, %v2672
      %v2715 = vpack.c.bf16 %v2683, %v2680
      %v2716 = vpack.c.bf16 %v2691, %v2688
      %v2717 = vpack.c.bf16 %v2699, %v2696
      %v2734 = vunpack.c.l.b16 %v2702
      %v2735 = vunpack.c.h.b16 %v2702
      %v2736 = vunpack.c.l.b16 %v2703
      %v2737 = vunpack.c.h.b16 %v2703
      %v2738 = vunpack.c.l.b16 %v2704
      %v2739 = vunpack.c.h.b16 %v2704
      %v2740 = vunpack.c.l.b16 %v2705
      %v2741 = vunpack.c.h.b16 %v2705
      %v2742 = vunpack.c.l.b16 %v2706
      %v2743 = vunpack.c.h.b16 %v2706
      %v2744 = vunpack.c.l.b16 %v2707
      %v2745 = vunpack.c.h.b16 %v2707
      %v2746 = vunpack.c.l.b16 %v2708
      %v2747 = vunpack.c.h.b16 %v2708
      %v2748 = vunpack.c.l.b16 %v2709
      %v2749 = vunpack.c.h.b16 %v2709
      %v2750 = vunpack.c.l.b16 %v2710
      %v2751 = vunpack.c.h.b16 %v2710
      %v2752 = vunpack.c.l.b16 %v2711
      %v2753 = vunpack.c.h.b16 %v2711
      %v2754 = vunpack.c.l.b16 %v2712
      %v2755 = vunpack.c.h.b16 %v2712
      %v2756 = vunpack.c.l.b16 %v2713
      %v2757 = vunpack.c.h.b16 %v2713
      %v2758 = vunpack.c.l.b16 %v2714
      %v2759 = vunpack.c.h.b16 %v2714
      %v2760 = vunpack.c.l.b16 %v2715
      %v2761 = vunpack.c.h.b16 %v2715
      %v2762 = vunpack.c.l.b16 %v2716
      %v2763 = vunpack.c.h.b16 %v2716
      %v2764 = vunpack.c.l.b16 %v2717
      %v2765 = vunpack.c.h.b16 %v2717
      %v2766 = vpack.c.b16 %v2734, %v2734
      %v2767 = vpack.c.b16 %v2735, %v2735
      %v2768 = vpack.c.b16 %v2736, %v2736
      %v2769 = vpack.c.b16 %v2737, %v2737
      %v2770 = vpack.c.b16 %v2738, %v2738
      %v2771 = vpack.c.b16 %v2739, %v2739
      %v2772 = vpack.c.b16 %v2740, %v2740
      %v2773 = vpack.c.b16 %v2741, %v2741
      %v2774 = vpack.c.b16 %v2742, %v2742
      %v2775 = vpack.c.b16 %v2743, %v2743
      %v2776 = vpack.c.b16 %v2744, %v2744
      %v2777 = vpack.c.b16 %v2745, %v2745
      %v2778 = vpack.c.b16 %v2746, %v2746
      %v2779 = vpack.c.b16 %v2747, %v2747
      %v2780 = vpack.c.b16 %v2748, %v2748
      %v2781 = vpack.c.b16 %v2749, %v2749
      %v2782 = vpack.c.b16 %v2750, %v2750
      %v2783 = vpack.c.b16 %v2751, %v2751
      %v2784 = vpack.c.b16 %v2752, %v2752
      %v2785 = vpack.c.b16 %v2753, %v2753
      %v2786 = vpack.c.b16 %v2754, %v2754
      %v2787 = vpack.c.b16 %v2755, %v2755
      %v2788 = vpack.c.b16 %v2756, %v2756
      %v2789 = vpack.c.b16 %v2757, %v2757
      %v2790 = vpack.c.b16 %v2758, %v2758
      %v2791 = vpack.c.b16 %v2759, %v2759
      %v2792 = vpack.c.b16 %v2760, %v2760
      %v2793 = vpack.c.b16 %v2761, %v2761
      %v2794 = vpack.c.b16 %v2762, %v2762
      %v2795 = vpack.c.b16 %v2763, %v2763
      %v2796 = vpack.c.b16 %v2764, %v2764
      %v2797 = vpack.c.b16 %v2765, %v2765
      %vm2830 = vcmask 125952
      %2831 = vst.msk [vmem:[%s251] sm:$0xf] %vm2830, %v2766
      %2832 = vst.msk [vmem:[%s251 + $0x4] sm:$0xf] %vm2830, %v2767
      %2833 = vst.msk [vmem:[%s251 + $0x8] sm:$0xf] %vm2830, %v2768
      %2834 = vst.msk [vmem:[%s251 + $0xc] sm:$0xf] %vm2830, %v2769
      %2835 = vst.msk [vmem:[%s251 + $0x10] sm:$0xf] %vm2830, %v2770
      %2836 = vst.msk [vmem:[%s251 + $0x14] sm:$0xf] %vm2830, %v2771
      %2837 = vst.msk [vmem:[%s251 + $0x18] sm:$0xf] %vm2830, %v2772
      %2838 = vst.msk [vmem:[%s251 + $0x1c] sm:$0xf] %vm2830, %v2773
      %2839 = vst.msk [vmem:[%s251 + $0x20] sm:$0xf] %vm2830, %v2774
      %2840 = vst.msk [vmem:[%s251 + $0x24] sm:$0xf] %vm2830, %v2775
      %2841 = vst.msk [vmem:[%s251 + $0x28] sm:$0xf] %vm2830, %v2776
      %2842 = vst.msk [vmem:[%s251 + $0x2c] sm:$0xf] %vm2830, %v2777
      %2843 = vst.msk [vmem:[%s251 + $0x30] sm:$0xf] %vm2830, %v2778
      %2844 = vst.msk [vmem:[%s251 + $0x34] sm:$0xf] %vm2830, %v2779
      %2845 = vst.msk [vmem:[%s251 + $0x38] sm:$0xf] %vm2830, %v2780
      %2846 = vst.msk [vmem:[%s251 + $0x3c] sm:$0xf] %vm2830, %v2781
      %2847 = vst.msk [vmem:[%s251 + $0x40] sm:$0xf] %vm2830, %v2782
      %2848 = vst.msk [vmem:[%s251 + $0x44] sm:$0xf] %vm2830, %v2783
      %2849 = vst.msk [vmem:[%s251 + $0x48] sm:$0xf] %vm2830, %v2784
      %2850 = vst.msk [vmem:[%s251 + $0x4c] sm:$0xf] %vm2830, %v2785
      %2851 = vst.msk [vmem:[%s251 + $0x50] sm:$0xf] %vm2830, %v2786
      %2852 = vst.msk [vmem:[%s251 + $0x54] sm:$0xf] %vm2830, %v2787
      %2853 = vst.msk [vmem:[%s251 + $0x58] sm:$0xf] %vm2830, %v2788
      %2854 = vst.msk [vmem:[%s251 + $0x5c] sm:$0xf] %vm2830, %v2789
      %2855 = vst.msk [vmem:[%s251 + $0x60] sm:$0xf] %vm2830, %v2790
      %2856 = vst.msk [vmem:[%s251 + $0x64] sm:$0xf] %vm2830, %v2791
      %2857 = vst.msk [vmem:[%s251 + $0x68] sm:$0xf] %vm2830, %v2792
      %2858 = vst.msk [vmem:[%s251 + $0x6c] sm:$0xf] %vm2830, %v2793
      %2859 = vst.msk [vmem:[%s251 + $0x70] sm:$0xf] %vm2830, %v2794
      %2860 = vst.msk [vmem:[%s251 + $0x74] sm:$0xf] %vm2830, %v2795
      %2861 = vst.msk [vmem:[%s251 + $0x78] sm:$0xf] %vm2830, %v2796
      %2862 = vst.msk [vmem:[%s251 + $0x7c] sm:$0xf] %vm2830, %v2797
      %p2863 = scmp.lt.s32.totalorder %s17, 1
      %s2864 = scalar_select %p2863, %s17, 1
      %s2865 = smul.addr %s2864, 32
      %s2866 = smul.addr %s2865, 4
      %s2867 = scalar_lea.vmem %s6, %s2866
      // Predicated region
      $region45: #{_lambda_.5} parent=43 // pred_check
        %p2868 = pneg %p166
      $region46: #{_lambda_.5} parent=43 // pred_check_branch
        %2870 = sbr.rel (%p2868) target = $region48
      $region47: #{_lambda_.5} parent=43 // pred_region
        _
      $region48: #{_lambda_.5} parent=43 // pred_fallthru
        _
    $region44: #{_lambda_.5} parent=5 // pred_fallthru
      _
    %p2871 = scmp.le.s32.totalorder 2, %s12
    // Predicated region
    $region49: #{_lambda_.5} parent=5 // pred_check
      %p2872 = pneg %p2871
    $region50: #{_lambda_.5} parent=5 // pred_check_branch
      %2874 = sbr.rel (%p2872) target = $region52
    $region51: #{_lambda_.5} parent=5 // pred_region
      %s2875 = ssub.s32 %s12, 2
      // Predicated region
      $region53: #{_lambda_.5} parent=51 // pred_check
        %p2876 = pneg %p172
      $region54: #{_lambda_.5} parent=51 // pred_check_branch
        %2878 = sbr.rel (%p2876) target = $region56
      $region55: #{_lambda_.5} parent=51 // pred_region
        %p2879 = scmp.lt.s32.totalorder %s18, 1
        %s2880 = scalar_select %p2879, %s18, 1
        %s2881 = smul.addr %s2880, 32
        %s2882 = smul.addr %s2881, 4
        %s2883 = scalar_lea.vmem %s6, %s2882
      $region56: #{_lambda_.5} parent=51 // pred_fallthru
        _
    $region52: #{_lambda_.5} parent=5 // pred_fallthru
      _
  $region6: #{_lambda_.5} parent=0 // loop_footer
    %s16 = sadd.s32 1, %s12
  $region7: #{_lambda_.5} parent=0 // loop_footer_branch
    %11 = sbr.rel target = $region3
  $region8: #{_lambda_.5} parent=0 // loop_exit
    _

// kernel: _lambda_.6
$region0: #{_lambda_.6}
  #allocation0 [shape = 'u32[]', space=smem, size = 0x4, offset = 0x4, fixed_abs, tag = 'smem constant byte address 0x4 - core index']
  #allocation1 [shape = 'u32[144,128]{1,0:T(1,128)}', space=vmem, size = 0x12000, scoped, tag = 'internal scratch']
  #allocation2 [shape = 'bf16[18,18,8]{2,1,0:T(8,128)(2,1)}', space=vmem, size = 0x1b000, scoped, tag = 'scratch operand']
  %s0 = inlined_call_operand.vmem [shape: bf16[2,16,16,16], index: 0, kind: input, shape index: {}]
  %s1 = inlined_call_operand.vmem [shape: bf16[2,256,16], index: 1, kind: input, shape index: {}]
  %s2 = inlined_call_operand.vmem [shape: bf16[8,8], index: 2, kind: input, shape index: {}]
  %s3 = inlined_call_operand.vmem [shape: f32[1,8], index: 3, kind: input, shape index: {}]
  %s4 = inlined_call_operand.vmem [shape: bf16[72,8], index: 4, kind: input, shape index: {}]
  %s5 = inlined_call_operand.vmem [shape: f32[1,8], index: 5, kind: input, shape index: {}]
  %s6 = inlined_call_operand.vmem [shape: f32[1,8], index: 6, kind: input, shape index: {}]
  %s7 = inlined_call_operand.vmem [shape: f32[1,8], index: 7, kind: input, shape index: {}]
  %s8 = inlined_call_operand.vmem [shape: bf16[2,256,16], index: 8, kind: output, shape index: {}]
  %s9 = sld [smem:[#allocation0]]
  $region65: #{_lambda_.6} parent=0
    _
  %s11 = ssub.s32 1, %s9
  %s12 = scalar_select 0, %s11, %s9
  loop: start=0, step=1, limit=4
  $region2: #{_lambda_.6} parent=0 // loop_pre_header
    _
  $region3: #{_lambda_.6} parent=0 // loop_header
    %s14 = sphi 0, %s18
    %p15 = scmp.ge.s32.totalorder %s14, 4
    %s24 = sphi 0, %s26
    %s27 = sphi 0, %s24
    %s28 = sphi 0, %s27
    %s44 = sphi 0, %s28
    %s50 = sphi 0, %s52
    %s53 = sphi 0, %s50
    %s54 = sphi 0, %s53
    %s70 = sphi 0, %s54
    %s74 = sphi 0, %s74
    %s76 = sphi 0, %s74
    %s77 = sphi 0, %s76
    %s91 = sphi 0, %s77
    %s95 = sphi 0, %s95
    %s97 = sphi 0, %s95
    %s98 = sphi 0, %s97
    %s112 = sphi 0, %s98
    %s116 = sphi 0, %s116
    %s118 = sphi 0, %s116
    %s119 = sphi 0, %s118
    %s133 = sphi 0, %s119
    %s137 = sphi 0, %s137
    %s139 = sphi 0, %s137
    %s140 = sphi 0, %s139
    %s154 = sphi 0, %s140
    %s158 = sphi 0, %s158
    %s160 = sphi 0, %s158
    %s161 = sphi 0, %s160
    %s175 = sphi 0, %s161
    %s179 = sphi 0, %s179
    %s181 = sphi 0, %s179
    %s182 = sphi 0, %s181
    %s196 = sphi 0, %s182
    %s202 = sphi 0, %s204
    %s205 = sphi 0, %s202
    %s206 = sphi 0, %s205
    %s222 = sphi 0, %s206
  $region4: #{_lambda_.6} parent=0 // loop_header_branch
    %17 = sbr.rel (%p15) target = $region8
  $region5: #{_lambda_.6} parent=0 // loop_body
    %s19 = ssub.s32 %s14, 1
    %s20 = ssub.s32 %s14, 2
    %s21 = sadd.s32 %s14, 1
    %s22 = ssub.s32 %s14, %s21
    %p23 = scmp.eq.s32.totalorder %s22, 0
    %s25 = sadd.s32 %s24, 1
    %s26 = scalar_select %p23, %s24, %s25
    %p29 = pneg %p23
    %p30 = scmp.eq.s32.totalorder %s14, 1
    %p31 = por %p29, %p30
    %p32 = scmp.ne.s32.totalorder %s24, %s27
    %p33 = scmp.eq.s32.totalorder %s14, 0
    %p34 = por %p32, %p33
    %p35 = scmp.ne.s32.totalorder %s24, %s27
    %p36 = scmp.eq.s32.totalorder %s19, 1
    %p37 = por %p35, %p36
    %p38 = scmp.ne.s32.totalorder %s27, %s28
    %p39 = scmp.eq.s32.totalorder %s19, 0
    %p40 = por %p38, %p39
    %p41 = scmp.ne.s32.totalorder %s27, %s28
    %p42 = scmp.eq.s32.totalorder %s20, 1
    %p43 = por %p41, %p42
    %p45 = scmp.ne.s32.totalorder %s28, %s44
    %p46 = scmp.eq.s32.totalorder %s20, 0
    %p47 = por %p45, %p46
    %s48 = ssub.s32 %s14, %s21
    %p49 = scmp.eq.s32.totalorder %s48, 0
    %s51 = sadd.s32 %s50, 1
    %s52 = scalar_select %p49, %s50, %s51
    %p55 = pneg %p49
    %p56 = scmp.eq.s32.totalorder %s14, 1
    %p57 = por %p55, %p56
    %p58 = scmp.ne.s32.totalorder %s50, %s53
    %p59 = scmp.eq.s32.totalorder %s14, 0
    %p60 = por %p58, %p59
    %p61 = scmp.ne.s32.totalorder %s50, %s53
    %p62 = scmp.eq.s32.totalorder %s19, 1
    %p63 = por %p61, %p62
    %p64 = scmp.ne.s32.totalorder %s53, %s54
    %p65 = scmp.eq.s32.totalorder %s19, 0
    %p66 = por %p64, %p65
    %p67 = scmp.ne.s32.totalorder %s53, %s54
    %p68 = scmp.eq.s32.totalorder %s20, 1
    %p69 = por %p67, %p68
    %p71 = scmp.ne.s32.totalorder %s54, %s70
    %p72 = scmp.eq.s32.totalorder %s20, 0
    %p73 = por %p71, %p72
    %s75 = sadd.s32 %s74, 1
    %p78 = scmp.eq.s32.totalorder %s14, 1
    %p79 = scmp.ne.s32.totalorder %s74, %s76
    %p80 = scmp.eq.s32.totalorder %s14, 0
    %p81 = por %p79, %p80
    %p82 = scmp.ne.s32.totalorder %s74, %s76
    %p83 = scmp.eq.s32.totalorder %s19, 1
    %p84 = por %p82, %p83
    %p85 = scmp.ne.s32.totalorder %s76, %s77
    %p86 = scmp.eq.s32.totalorder %s19, 0
    %p87 = por %p85, %p86
    %p88 = scmp.ne.s32.totalorder %s76, %s77
    %p89 = scmp.eq.s32.totalorder %s20, 1
    %p90 = por %p88, %p89
    %p92 = scmp.ne.s32.totalorder %s77, %s91
    %p93 = scmp.eq.s32.totalorder %s20, 0
    %p94 = por %p92, %p93
    %s96 = sadd.s32 %s95, 1
    %p99 = scmp.eq.s32.totalorder %s14, 1
    %p100 = scmp.ne.s32.totalorder %s95, %s97
    %p101 = scmp.eq.s32.totalorder %s14, 0
    %p102 = por %p100, %p101
    %p103 = scmp.ne.s32.totalorder %s95, %s97
    %p104 = scmp.eq.s32.totalorder %s19, 1
    %p105 = por %p103, %p104
    %p106 = scmp.ne.s32.totalorder %s97, %s98
    %p107 = scmp.eq.s32.totalorder %s19, 0
    %p108 = por %p106, %p107
    %p109 = scmp.ne.s32.totalorder %s97, %s98
    %p110 = scmp.eq.s32.totalorder %s20, 1
    %p111 = por %p109, %p110
    %p113 = scmp.ne.s32.totalorder %s98, %s112
    %p114 = scmp.eq.s32.totalorder %s20, 0
    %p115 = por %p113, %p114
    %s117 = sadd.s32 %s116, 1
    %p120 = scmp.eq.s32.totalorder %s14, 1
    %p121 = scmp.ne.s32.totalorder %s116, %s118
    %p122 = scmp.eq.s32.totalorder %s14, 0
    %p123 = por %p121, %p122
    %p124 = scmp.ne.s32.totalorder %s116, %s118
    %p125 = scmp.eq.s32.totalorder %s19, 1
    %p126 = por %p124, %p125
    %p127 = scmp.ne.s32.totalorder %s118, %s119
    %p128 = scmp.eq.s32.totalorder %s19, 0
    %p129 = por %p127, %p128
    %p130 = scmp.ne.s32.totalorder %s118, %s119
    %p131 = scmp.eq.s32.totalorder %s20, 1
    %p132 = por %p130, %p131
    %p134 = scmp.ne.s32.totalorder %s119, %s133
    %p135 = scmp.eq.s32.totalorder %s20, 0
    %p136 = por %p134, %p135
    %s138 = sadd.s32 %s137, 1
    %p141 = scmp.eq.s32.totalorder %s14, 1
    %p142 = scmp.ne.s32.totalorder %s137, %s139
    %p143 = scmp.eq.s32.totalorder %s14, 0
    %p144 = por %p142, %p143
    %p145 = scmp.ne.s32.totalorder %s137, %s139
    %p146 = scmp.eq.s32.totalorder %s19, 1
    %p147 = por %p145, %p146
    %p148 = scmp.ne.s32.totalorder %s139, %s140
    %p149 = scmp.eq.s32.totalorder %s19, 0
    %p150 = por %p148, %p149
    %p151 = scmp.ne.s32.totalorder %s139, %s140
    %p152 = scmp.eq.s32.totalorder %s20, 1
    %p153 = por %p151, %p152
    %p155 = scmp.ne.s32.totalorder %s140, %s154
    %p156 = scmp.eq.s32.totalorder %s20, 0
    %p157 = por %p155, %p156
    %s159 = sadd.s32 %s158, 1
    %p162 = scmp.eq.s32.totalorder %s14, 1
    %p163 = scmp.ne.s32.totalorder %s158, %s160
    %p164 = scmp.eq.s32.totalorder %s14, 0
    %p165 = por %p163, %p164
    %p166 = scmp.ne.s32.totalorder %s158, %s160
    %p167 = scmp.eq.s32.totalorder %s19, 1
    %p168 = por %p166, %p167
    %p169 = scmp.ne.s32.totalorder %s160, %s161
    %p170 = scmp.eq.s32.totalorder %s19, 0
    %p171 = por %p169, %p170
    %p172 = scmp.ne.s32.totalorder %s160, %s161
    %p173 = scmp.eq.s32.totalorder %s20, 1
    %p174 = por %p172, %p173
    %p176 = scmp.ne.s32.totalorder %s161, %s175
    %p177 = scmp.eq.s32.totalorder %s20, 0
    %p178 = por %p176, %p177
    %s180 = sadd.s32 %s179, 1
    %p183 = scmp.eq.s32.totalorder %s14, 1
    %p184 = scmp.ne.s32.totalorder %s179, %s181
    %p185 = scmp.eq.s32.totalorder %s14, 0
    %p186 = por %p184, %p185
    %p187 = scmp.ne.s32.totalorder %s179, %s181
    %p188 = scmp.eq.s32.totalorder %s19, 1
    %p189 = por %p187, %p188
    %p190 = scmp.ne.s32.totalorder %s181, %s182
    %p191 = scmp.eq.s32.totalorder %s19, 0
    %p192 = por %p190, %p191
    %p193 = scmp.ne.s32.totalorder %s181, %s182
    %p194 = scmp.eq.s32.totalorder %s20, 1
    %p195 = por %p193, %p194
    %p197 = scmp.ne.s32.totalorder %s182, %s196
    %p198 = scmp.eq.s32.totalorder %s20, 0
    %p199 = por %p197, %p198
    %s200 = ssub.s32 %s14, %s21
    %p201 = scmp.eq.s32.totalorder %s200, 0
    %s203 = sadd.s32 %s202, 1
    %s204 = scalar_select %p201, %s202, %s203
    %p207 = pneg %p201
    %p208 = scmp.eq.s32.totalorder %s14, 1
    %p209 = por %p207, %p208
    %p210 = scmp.ne.s32.totalorder %s202, %s205
    %p211 = scmp.eq.s32.totalorder %s14, 0
    %p212 = por %p210, %p211
    %p213 = scmp.ne.s32.totalorder %s202, %s205
    %p214 = scmp.eq.s32.totalorder %s19, 1
    %p215 = por %p213, %p214
    %p216 = scmp.ne.s32.totalorder %s205, %s206
    %p217 = scmp.eq.s32.totalorder %s19, 0
    %p218 = por %p216, %p217
    %p219 = scmp.ne.s32.totalorder %s205, %s206
    %p220 = scmp.eq.s32.totalorder %s20, 1
    %p221 = por %p219, %p220
    %p223 = scmp.ne.s32.totalorder %s206, %s222
    %p224 = scmp.eq.s32.totalorder %s20, 0
    %p225 = por %p223, %p224
    %p226 = scmp.le.s32.totalorder 1, %s14
    %p227 = scmp.lt.s32.totalorder %s14, 3
    %p228 = pnand %p226, %p227
    %p229 = pneg %p228
    // Predicated region
    $region9: #{_lambda_.6} parent=5 // pred_check
      _
    $region10: #{_lambda_.6} parent=5 // pred_check_branch
      %231 = sbr.rel (%p228) target = $region12
    $region11: #{_lambda_.6} parent=5 // pred_region
      %s232 = ssub.s32 %s14, 1
      // Predicated region
      $region13: #{_lambda_.6} parent=11 // pred_check
        %p233 = pneg %p87
      $region14: #{_lambda_.6} parent=11 // pred_check_branch
        %235 = sbr.rel (%p233) target = $region16
      $region15: #{_lambda_.6} parent=11 // pred_region
        _
      $region16: #{_lambda_.6} parent=11 // pred_fallthru
        _
      // Predicated region
      $region17: #{_lambda_.6} parent=11 // pred_check
        %p236 = pneg %p108
      $region18: #{_lambda_.6} parent=11 // pred_check_branch
        %238 = sbr.rel (%p236) target = $region20
      $region19: #{_lambda_.6} parent=11 // pred_region
        _
      $region20: #{_lambda_.6} parent=11 // pred_fallthru
        _
      // Predicated region
      $region21: #{_lambda_.6} parent=11 // pred_check
        %p239 = pneg %p129
      $region22: #{_lambda_.6} parent=11 // pred_check_branch
        %241 = sbr.rel (%p239) target = $region24
      $region23: #{_lambda_.6} parent=11 // pred_region
        _
      $region24: #{_lambda_.6} parent=11 // pred_fallthru
        _
      // Predicated region
      $region25: #{_lambda_.6} parent=11 // pred_check
        %p242 = pneg %p150
      $region26: #{_lambda_.6} parent=11 // pred_check_branch
        %244 = sbr.rel (%p242) target = $region28
      $region27: #{_lambda_.6} parent=11 // pred_region
        _
      $region28: #{_lambda_.6} parent=11 // pred_fallthru
        _
      // Predicated region
      $region29: #{_lambda_.6} parent=11 // pred_check
        %p245 = pneg %p171
      $region30: #{_lambda_.6} parent=11 // pred_check_branch
        %247 = sbr.rel (%p245) target = $region32
      $region31: #{_lambda_.6} parent=11 // pred_region
        _
      $region32: #{_lambda_.6} parent=11 // pred_fallthru
        _
      // Predicated region
      $region33: #{_lambda_.6} parent=11 // pred_check
        %p248 = pneg %p192
      $region34: #{_lambda_.6} parent=11 // pred_check_branch
        %250 = sbr.rel (%p248) target = $region36
      $region35: #{_lambda_.6} parent=11 // pred_region
        _
      $region36: #{_lambda_.6} parent=11 // pred_fallthru
        _
    $region12: #{_lambda_.6} parent=5 // pred_fallthru
      _
    %p251 = scmp.lt.s32.totalorder %s14, 2
    // Predicated region
    $region37: #{_lambda_.6} parent=5 // pred_check
      %p252 = pneg %p251
    $region38: #{_lambda_.6} parent=5 // pred_check_branch
      %254 = sbr.rel (%p252) target = $region40
    $region39: #{_lambda_.6} parent=5 // pred_region
      // Predicated region
      $region41: #{_lambda_.6} parent=39 // pred_check
        %p255 = pneg %p34
      $region42: #{_lambda_.6} parent=39 // pred_check_branch
        %257 = sbr.rel (%p255) target = $region44
      $region43: #{_lambda_.6} parent=39 // pred_region
        %p258 = scmp.lt.s32.totalorder %s14, 1
        %s259 = scalar_select %p258, %s14, 1
        %s260 = smul.addr %s259, 32
        %s261 = smul.addr %s260, 4
        %s262 = scalar_lea.vmem %s0, %s261
      $region44: #{_lambda_.6} parent=39 // pred_fallthru
        _
      // Predicated region
      $region45: #{_lambda_.6} parent=39 // pred_check
        %p263 = pneg %p60
      $region46: #{_lambda_.6} parent=39 // pred_check_branch
        %265 = sbr.rel (%p263) target = $region48
      $region47: #{_lambda_.6} parent=39 // pred_region
        %p266 = scmp.lt.s32.totalorder %s14, 1
        %s267 = scalar_select %p266, %s14, 1
        %s268 = smul.addr %s267, 32
        %s269 = smul.addr %s268, 4
        %s270 = scalar_lea.vmem %s1, %s269
      $region48: #{_lambda_.6} parent=39 // pred_fallthru
        _
    $region40: #{_lambda_.6} parent=5 // pred_fallthru
      _
    %p271 = scmp.le.s32.totalorder 1, %s14
    %p272 = scmp.lt.s32.totalorder %s14, 3
    %p273 = pnand %p271, %p272
    %p274 = pneg %p273
    // Predicated region
    $region49: #{_lambda_.6} parent=5 // pred_check
      _
    $region50: #{_lambda_.6} parent=5 // pred_check_branch
      %276 = sbr.rel (%p273) target = $region52
    $region51: #{_lambda_.6} parent=5 // pred_region
      %s277 = ssub.s32 %s14, 1
      %p278 = scmp.lt.s32.totalorder %s19, 1
      %s279 = scalar_select %p278, %s19, 1
      %s280 = smul.addr %s279, 32
      %s281 = smul.addr %s280, 4
      %s282 = scalar_lea.vmem %s0, %s281
      %p283 = pneg %p40
      %p284 = pneg %p37
      %p285 = scmp.lt.s32.totalorder %s19, 1
      %s286 = scalar_select %p285, %s19, 1
      %s287 = smul.addr %s286, 32
      %s288 = smul.addr %s287, 4
      %s289 = scalar_lea.vmem %s1, %s288
      %p290 = pneg %p66
      %p291 = pneg %p63
      %p292 = pneg %p87
      %p293 = pneg %p84
      %p294 = pneg %p108
      %p295 = pneg %p105
      %p296 = pneg %p129
      %p297 = pneg %p126
      %p298 = pneg %p150
      %p299 = pneg %p147
      %p300 = pneg %p171
      %p301 = pneg %p168
      %p302 = pneg %p192
      %p303 = pneg %p189
      %p304 = pneg %p218
      %p305 = pneg %p215
      %p306 = scmp.lt.s32.totalorder %s19, 1
      %s307 = scalar_select %p306, %s19, 1
      %s308 = smul.addr %s307, 32
      %s309 = smul.addr %s308, 4
      %s310 = scalar_lea.vmem %s8, %s309
      %p311 = scmp.lt.s32.totalorder %s19, 1
      %s312 = scalar_select %p311, %s19, 1
      %s313 = smul.addr %s312, 32
      %s314 = smul.addr %s313, 4
      %s315 = scalar_lea.vmem %s0, %s314
      %p316 = scmp.lt.s32.totalorder %s19, 1
      %s317 = scalar_select %p316, %s19, 1
      %s318 = smul.addr %s317, 32
      %s319 = smul.addr %s318, 4
      %s320 = scalar_lea.vmem %s1, %s319
      %p321 = scmp.lt.s32.totalorder %s19, 1
      %s322 = scalar_select %p321, %s19, 1
      %s323 = smul.addr %s322, 32
      %s324 = smul.addr %s323, 4
      %s325 = scalar_lea.vmem %s8, %s324
      %v327 = vld [vmem:[%s315] sm:$0xf]
      %v328 = vld [vmem:[%s315 + $0x4] sm:$0xf]
      %v329 = vld [vmem:[%s315 + $0x8] sm:$0xf]
      %v330 = vld [vmem:[%s315 + $0xc] sm:$0xf]
      %v331 = vld [vmem:[%s315 + $0x10] sm:$0xf]
      %v332 = vld [vmem:[%s315 + $0x14] sm:$0xf]
      %v333 = vld [vmem:[%s315 + $0x18] sm:$0xf]
      %v334 = vld [vmem:[%s315 + $0x1c] sm:$0xf]
      %v335 = vld [vmem:[%s315 + $0x20] sm:$0xf]
      %v336 = vld [vmem:[%s315 + $0x24] sm:$0xf]
      %v337 = vld [vmem:[%s315 + $0x28] sm:$0xf]
      %v338 = vld [vmem:[%s315 + $0x2c] sm:$0xf]
      %v339 = vld [vmem:[%s315 + $0x30] sm:$0xf]
      %v340 = vld [vmem:[%s315 + $0x34] sm:$0xf]
      %v341 = vld [vmem:[%s315 + $0x38] sm:$0xf]
      %v342 = vld [vmem:[%s315 + $0x3c] sm:$0xf]
      %v343 = vld [vmem:[%s315 + $0x40] sm:$0xf]
      %v344 = vld [vmem:[%s315 + $0x44] sm:$0xf]
      %v345 = vld [vmem:[%s315 + $0x48] sm:$0xf]
      %v346 = vld [vmem:[%s315 + $0x4c] sm:$0xf]
      %v347 = vld [vmem:[%s315 + $0x50] sm:$0xf]
      %v348 = vld [vmem:[%s315 + $0x54] sm:$0xf]
      %v349 = vld [vmem:[%s315 + $0x58] sm:$0xf]
      %v350 = vld [vmem:[%s315 + $0x5c] sm:$0xf]
      %v351 = vld [vmem:[%s315 + $0x60] sm:$0xf]
      %v352 = vld [vmem:[%s315 + $0x64] sm:$0xf]
      %v353 = vld [vmem:[%s315 + $0x68] sm:$0xf]
      %v354 = vld [vmem:[%s315 + $0x6c] sm:$0xf]
      %v355 = vld [vmem:[%s315 + $0x70] sm:$0xf]
      %v356 = vld [vmem:[%s315 + $0x74] sm:$0xf]
      %v357 = vld [vmem:[%s315 + $0x78] sm:$0xf]
      %v358 = vld [vmem:[%s315 + $0x7c] sm:$0xf]
      %v359 = vld [vmem:[%s320] sm:$0xf]
      %v360 = vld [vmem:[%s320 + $0x4] sm:$0xf]
      %v361 = vld [vmem:[%s320 + $0x8] sm:$0xf]
      %v362 = vld [vmem:[%s320 + $0xc] sm:$0xf]
      %v363 = vld [vmem:[%s320 + $0x10] sm:$0xf]
      %v364 = vld [vmem:[%s320 + $0x14] sm:$0xf]
      %v365 = vld [vmem:[%s320 + $0x18] sm:$0xf]
      %v366 = vld [vmem:[%s320 + $0x1c] sm:$0xf]
      %v367 = vld [vmem:[%s320 + $0x20] sm:$0xf]
      %v368 = vld [vmem:[%s320 + $0x24] sm:$0xf]
      %v369 = vld [vmem:[%s320 + $0x28] sm:$0xf]
      %v370 = vld [vmem:[%s320 + $0x2c] sm:$0xf]
      %v371 = vld [vmem:[%s320 + $0x30] sm:$0xf]
      %v372 = vld [vmem:[%s320 + $0x34] sm:$0xf]
      %v373 = vld [vmem:[%s320 + $0x38] sm:$0xf]
      %v374 = vld [vmem:[%s320 + $0x3c] sm:$0xf]
      %v375 = vld [vmem:[%s320 + $0x40] sm:$0xf]
      %v376 = vld [vmem:[%s320 + $0x44] sm:$0xf]
      %v377 = vld [vmem:[%s320 + $0x48] sm:$0xf]
      %v378 = vld [vmem:[%s320 + $0x4c] sm:$0xf]
      %v379 = vld [vmem:[%s320 + $0x50] sm:$0xf]
      %v380 = vld [vmem:[%s320 + $0x54] sm:$0xf]
      %v381 = vld [vmem:[%s320 + $0x58] sm:$0xf]
      %v382 = vld [vmem:[%s320 + $0x5c] sm:$0xf]
      %v383 = vld [vmem:[%s320 + $0x60] sm:$0xf]
      %v384 = vld [vmem:[%s320 + $0x64] sm:$0xf]
      %v385 = vld [vmem:[%s320 + $0x68] sm:$0xf]
      %v386 = vld [vmem:[%s320 + $0x6c] sm:$0xf]
      %v387 = vld [vmem:[%s320 + $0x70] sm:$0xf]
      %v388 = vld [vmem:[%s320 + $0x74] sm:$0xf]
      %v389 = vld [vmem:[%s320 + $0x78] sm:$0xf]
      %v390 = vld [vmem:[%s320 + $0x7c] sm:$0xf]
      %v391 = vunpack.c.l.bf16 %v327
      %v392 = vunpack.c.l.bf16 %v328
      %v393 = vunpack.c.l.bf16 %v329
      %v394 = vunpack.c.l.bf16 %v330
      %v395 = vunpack.c.l.bf16 %v331
      %v396 = vunpack.c.l.bf16 %v332
      %v397 = vunpack.c.l.bf16 %v333
      %v398 = vunpack.c.l.bf16 %v334
      %v399 = vunpack.c.l.bf16 %v335
      %v400 = vunpack.c.l.bf16 %v336
      %v401 = vunpack.c.l.bf16 %v337
      %v402 = vunpack.c.l.bf16 %v338
      %v403 = vunpack.c.l.bf16 %v339
      %v404 = vunpack.c.l.bf16 %v340
      %v405 = vunpack.c.l.bf16 %v341
      %v406 = vunpack.c.l.bf16 %v342
      %v407 = vunpack.c.l.bf16 %v343
      %v408 = vunpack.c.l.bf16 %v344
      %v409 = vunpack.c.l.bf16 %v345
      %v410 = vunpack.c.l.bf16 %v346
      %v411 = vunpack.c.l.bf16 %v347
      %v412 = vunpack.c.l.bf16 %v348
      %v413 = vunpack.c.l.bf16 %v349
      %v414 = vunpack.c.l.bf16 %v350
      %v415 = vunpack.c.l.bf16 %v351
      %v416 = vunpack.c.l.bf16 %v352
      %v417 = vunpack.c.l.bf16 %v353
      %v418 = vunpack.c.l.bf16 %v354
      %v419 = vunpack.c.l.bf16 %v355
      %v420 = vunpack.c.l.bf16 %v356
      %v421 = vunpack.c.l.bf16 %v357
      %v422 = vunpack.c.l.bf16 %v358
      %vm423 = vcmask 64512
      %v424 = vsel %vm423, %v391, 0.0
      %v425 = vsel %vm423, %v392, 0.0
      %v426 = vadd.f32 %v424, %v425
      %v427 = vrot.slane %v426, 4
      %v428 = vadd.f32 %v426, %v427
      %v429 = vrot.slane %v428, 2
      %v430 = vadd.f32 %v428, %v429
      %v431 = vrot.slane %v430, 1
      %v432 = vadd.f32 %v430, %v431
      %v433 = vsel %vm423, %v393, 0.0
      %v434 = vsel %vm423, %v394, 0.0
      %v435 = vadd.f32 %v433, %v434
      %v436 = vrot.slane %v435, 4
      %v437 = vadd.f32 %v435, %v436
      %v438 = vrot.slane %v437, 2
      %v439 = vadd.f32 %v437, %v438
      %v440 = vrot.slane %v439, 1
      %v441 = vadd.f32 %v439, %v440
      %v442 = vsel %vm423, %v395, 0.0
      %v443 = vsel %vm423, %v396, 0.0
      %v444 = vadd.f32 %v442, %v443
      %v445 = vrot.slane %v444, 4
      %v446 = vadd.f32 %v444, %v445
      %v447 = vrot.slane %v446, 2
      %v448 = vadd.f32 %v446, %v447
      %v449 = vrot.slane %v448, 1
      %v450 = vadd.f32 %v448, %v449
      %v451 = vsel %vm423, %v397, 0.0
      %v452 = vsel %vm423, %v398, 0.0
      %v453 = vadd.f32 %v451, %v452
      %v454 = vrot.slane %v453, 4
      %v455 = vadd.f32 %v453, %v454
      %v456 = vrot.slane %v455, 2
      %v457 = vadd.f32 %v455, %v456
      %v458 = vrot.slane %v457, 1
      %v459 = vadd.f32 %v457, %v458
      %v460 = vsel %vm423, %v399, 0.0
      %v461 = vsel %vm423, %v400, 0.0
      %v462 = vadd.f32 %v460, %v461
      %v463 = vrot.slane %v462, 4
      %v464 = vadd.f32 %v462, %v463
      %v465 = vrot.slane %v464, 2
      %v466 = vadd.f32 %v464, %v465
      %v467 = vrot.slane %v466, 1
      %v468 = vadd.f32 %v466, %v467
      %v469 = vsel %vm423, %v401, 0.0
      %v470 = vsel %vm423, %v402, 0.0
      %v471 = vadd.f32 %v469, %v470
      %v472 = vrot.slane %v471, 4
      %v473 = vadd.f32 %v471, %v472
      %v474 = vrot.slane %v473, 2
      %v475 = vadd.f32 %v473, %v474
      %v476 = vrot.slane %v475, 1
      %v477 = vadd.f32 %v475, %v476
      %v478 = vsel %vm423, %v403, 0.0
      %v479 = vsel %vm423, %v404, 0.0
      %v480 = vadd.f32 %v478, %v479
      %v481 = vrot.slane %v480, 4
      %v482 = vadd.f32 %v480, %v481
      %v483 = vrot.slane %v482, 2
      %v484 = vadd.f32 %v482, %v483
      %v485 = vrot.slane %v484, 1
      %v486 = vadd.f32 %v484, %v485
      %v487 = vsel %vm423, %v405, 0.0
      %v488 = vsel %vm423, %v406, 0.0
      %v489 = vadd.f32 %v487, %v488
      %v490 = vrot.slane %v489, 4
      %v491 = vadd.f32 %v489, %v490
      %v492 = vrot.slane %v491, 2
      %v493 = vadd.f32 %v491, %v492
      %v494 = vrot.slane %v493, 1
      %v495 = vadd.f32 %v493, %v494
      %v496 = vsel %vm423, %v407, 0.0
      %v497 = vsel %vm423, %v408, 0.0
      %v498 = vadd.f32 %v496, %v497
      %v499 = vrot.slane %v498, 4
      %v500 = vadd.f32 %v498, %v499
      %v501 = vrot.slane %v500, 2
      %v502 = vadd.f32 %v500, %v501
      %v503 = vrot.slane %v502, 1
      %v504 = vadd.f32 %v502, %v503
      %v505 = vsel %vm423, %v409, 0.0
      %v506 = vsel %vm423, %v410, 0.0
      %v507 = vadd.f32 %v505, %v506
      %v508 = vrot.slane %v507, 4
      %v509 = vadd.f32 %v507, %v508
      %v510 = vrot.slane %v509, 2
      %v511 = vadd.f32 %v509, %v510
      %v512 = vrot.slane %v511, 1
      %v513 = vadd.f32 %v511, %v512
      %v514 = vsel %vm423, %v411, 0.0
      %v515 = vsel %vm423, %v412, 0.0
      %v516 = vadd.f32 %v514, %v515
      %v517 = vrot.slane %v516, 4
      %v518 = vadd.f32 %v516, %v517
      %v519 = vrot.slane %v518, 2
      %v520 = vadd.f32 %v518, %v519
      %v521 = vrot.slane %v520, 1
      %v522 = vadd.f32 %v520, %v521
      %v523 = vsel %vm423, %v413, 0.0
      %v524 = vsel %vm423, %v414, 0.0
      %v525 = vadd.f32 %v523, %v524
      %v526 = vrot.slane %v525, 4
      %v527 = vadd.f32 %v525, %v526
      %v528 = vrot.slane %v527, 2
      %v529 = vadd.f32 %v527, %v528
      %v530 = vrot.slane %v529, 1
      %v531 = vadd.f32 %v529, %v530
      %v532 = vsel %vm423, %v415, 0.0
      %v533 = vsel %vm423, %v416, 0.0
      %v534 = vadd.f32 %v532, %v533
      %v535 = vrot.slane %v534, 4
      %v536 = vadd.f32 %v534, %v535
      %v537 = vrot.slane %v536, 2
      %v538 = vadd.f32 %v536, %v537
      %v539 = vrot.slane %v538, 1
      %v540 = vadd.f32 %v538, %v539
      %v541 = vsel %vm423, %v417, 0.0
      %v542 = vsel %vm423, %v418, 0.0
      %v543 = vadd.f32 %v541, %v542
      %v544 = vrot.slane %v543, 4
      %v545 = vadd.f32 %v543, %v544
      %v546 = vrot.slane %v545, 2
      %v547 = vadd.f32 %v545, %v546
      %v548 = vrot.slane %v547, 1
      %v549 = vadd.f32 %v547, %v548
      %v550 = vsel %vm423, %v419, 0.0
      %v551 = vsel %vm423, %v420, 0.0
      %v552 = vadd.f32 %v550, %v551
      %v553 = vrot.slane %v552, 4
      %v554 = vadd.f32 %v552, %v553
      %v555 = vrot.slane %v554, 2
      %v556 = vadd.f32 %v554, %v555
      %v557 = vrot.slane %v556, 1
      %v558 = vadd.f32 %v556, %v557
      %v559 = vsel %vm423, %v421, 0.0
      %v560 = vsel %vm423, %v422, 0.0
      %v561 = vadd.f32 %v559, %v560
      %v562 = vrot.slane %v561, 4
      %v563 = vadd.f32 %v561, %v562
      %v564 = vrot.slane %v563, 2
      %v565 = vadd.f32 %v563, %v564
      %v566 = vrot.slane %v565, 1
      %v567 = vadd.f32 %v565, %v566
      %v568 = vrcp.pop 16.0
      %v569 = vmul.f32 %v432, %v568
      %v570 = vmul.f32 %v441, %v568
      %v571 = vmul.f32 %v450, %v568
      %v572 = vmul.f32 %v459, %v568
      %v573 = vmul.f32 %v468, %v568
      %v574 = vmul.f32 %v477, %v568
      %v575 = vmul.f32 %v486, %v568
      %v576 = vmul.f32 %v495, %v568
      %v577 = vmul.f32 %v504, %v568
      %v578 = vmul.f32 %v513, %v568
      %v579 = vmul.f32 %v522, %v568
      %v580 = vmul.f32 %v531, %v568
      %v581 = vmul.f32 %v540, %v568
      %v582 = vmul.f32 %v549, %v568
      %v583 = vmul.f32 %v558, %v568
      %v584 = vmul.f32 %v567, %v568
      %v585 = vadd.f32 %v424, %v433
      %v586 = vadd.f32 %v585, %v442
      %v587 = vadd.f32 %v586, %v451
      %v588 = vadd.f32 %v587, %v460
      %v589 = vadd.f32 %v588, %v469
      %v590 = vadd.f32 %v589, %v478
      %v591 = vadd.f32 %v590, %v487
      %v592 = vadd.f32 %v591, %v496
      %v593 = vadd.f32 %v592, %v505
      %v594 = vadd.f32 %v593, %v514
      %v595 = vadd.f32 %v594, %v523
      %v596 = vadd.f32 %v595, %v532
      %v597 = vadd.f32 %v596, %v541
      %v598 = vadd.f32 %v597, %v550
      %v599 = vadd.f32 %v598, %v559
      %v600 = vadd.f32 %v425, %v434
      %v601 = vadd.f32 %v600, %v443
      %v602 = vadd.f32 %v601, %v452
      %v603 = vadd.f32 %v602, %v461
      %v604 = vadd.f32 %v603, %v470
      %v605 = vadd.f32 %v604, %v479
      %v606 = vadd.f32 %v605, %v488
      %v607 = vadd.f32 %v606, %v497
      %v608 = vadd.f32 %v607, %v506
      %v609 = vadd.f32 %v608, %v515
      %v610 = vadd.f32 %v609, %v524
      %v611 = vadd.f32 %v610, %v533
      %v612 = vadd.f32 %v611, %v542
      %v613 = vadd.f32 %v612, %v551
      %v614 = vadd.f32 %v613, %v560
      %v615 = vmul.f32 %v599, %v568
      %v616 = vmul.f32 %v614, %v568
      %vm633 = vcmask 1041409
      %v634 = vsel %vm633, %v570, %v569
      %vm635 = vcmask 1042434
      %v636 = vsel %vm635, %v571, %v634
      %vm637 = vcmask 1043459
      %v638 = vsel %vm637, %v572, %v636
      %vm639 = vcmask 1044484
      %v640 = vsel %vm639, %v573, %v638
      %vm641 = vcmask 1045509
      %v642 = vsel %vm641, %v574, %v640
      %vm643 = vcmask 1046534
      %v644 = vsel %vm643, %v575, %v642
      %vm645 = vcmask 1047559
      %v646 = vsel %vm645, %v576, %v644
      %v647 = vsel %vm633, %v578, %v577
      %v648 = vsel %vm635, %v579, %v647
      %v649 = vsel %vm637, %v580, %v648
      %v650 = vsel %vm639, %v581, %v649
      %v651 = vsel %vm641, %v582, %v650
      %v652 = vsel %vm643, %v583, %v651
      %v653 = vsel %vm645, %v584, %v652
      %v656 = vpack.c.bf16 %v653, %v646
      %v657 = vpack.c.bf16 %v616, %v615
      %v658 = vld [vmem:[%s2] sm:$0xf]
      %v659 = vld [vmem:[%s3] sm:$0x1]
      %v661 = vlaneseq
      %v662 = vshrl.u32 %v661, 7
      %v663 = vsub.s32 0, %v662
      %v664 = vrot.slane %v659, %v663
      %v667 = vsel %vm423, %v656, 0
      %v670 = vsel %vm423, %v657, 0
      %vm672 = vcmask 1043456
      %v674 = vsel %vm672, %v658, 0
      %676 = vmatprep.subr.bf16.mxu0 0
      %677 = vmatpush1.bf16.msra.mxu0 0
      %678 = vmatprep.subr.bf16.mxu0 0
      %679 = vmatpush1.bf16.msra.mxu0 0
      %680 = vmatprep.subr.bf16.mxu0 0
      %681 = vmatpush1.bf16.msra.mxu0 0
      %682 = vmatprep.subr.bf16.mxu0 0
      %683 = vmatpush1.bf16.msra.mxu0 0
      %684 = vmatprep.subr.bf16.mxu0 0
      %685 = vmatpush1.bf16.msra.mxu0 0
      %686 = vmatprep.subr.bf16.mxu0 0
      %687 = vmatpush1.bf16.msra.mxu0 0
      %688 = vmatprep.subr.bf16.mxu0 0
      %689 = vmatpush1.bf16.msra.mxu0 0
      %690 = vmatprep.subr.bf16.mxu0 0
      %691 = vmatpush1.bf16.msra.mxu0 %v674
      %692 = vmatprep.subr.bf16.mxu0 0
      %693 = vmatpush2.bf16.msra.mxu0 0
      %694 = vmatprep.subr.bf16.mxu0 0
      %695 = vmatpush2.bf16.msra.mxu0 0
      %696 = vmatprep.subr.bf16.mxu0 0
      %697 = vmatpush2.bf16.msra.mxu0 0
      %698 = vmatprep.subr.bf16.mxu0 0
      %699 = vmatpush2.bf16.msra.mxu0 0
      %700 = vmatprep.subr.bf16.mxu0 0
      %701 = vmatpush2.bf16.msra.mxu0 0
      %702 = vmatprep.subr.bf16.mxu0 0
      %703 = vmatpush2.bf16.msra.mxu0 0
      %704 = vmatprep.subr.bf16.mxu0 0
      %705 = vmatpush2.bf16.msra.mxu0 0
      %706 = vmatprep.subr.bf16.mxu0 0
      %707 = vmatpush2.bf16.msra.mxu0 0
      %708 = vmatprep.mubr.bf16.mxu0 0
      %709 = vmatmul.mubr.bf16.gmra.mxu0 %v667
      %v710 = vpop.f32.mrf.mxu0
      %v711 = vadd.f32 %v664, %v710
      %v712 = vpop.f32.mrf.mxu0
      %v713 = vpop.f32.mrf.mxu0
      %v714 = vadd.f32 %v664, %v713
      %v715 = vpop.f32.mrf.mxu0
      %716 = vmatprep.mubr.bf16.mxu0 0
      %717 = vmatmul.mubr.bf16.gmra.mxu0 %v670
      %v718 = vpop.f32.mrf.mxu0
      %v719 = vadd.f32 %v664, %v718
      %v720 = vpop.f32.mrf.mxu0
      %v721 = vpop.f32.mrf.mxu0
      %v722 = vadd.f32 %v664, %v721
      %v723 = vpop.f32.mrf.mxu0
      %724 = vdwg.mxu0
      %v725 = vxor.u32 %v711, 2147483648
      %v726 = vxor.u32 %v714, 2147483648
      %v727 = vmul.f32 %v725, 1.442695
      %v728 = vpow.pop %v727
      %v729 = vmul.f32 %v726, 1.442695
      %v730 = vpow.pop %v729
      %v731 = vadd.f32 %v728, 1.0
      %v732 = vadd.f32 %v730, 1.0
      %v733 = vrcp.pop %v731
      %v734 = vmul.f32 1.0, %v733
      %v735 = vrcp.pop %v732
      %v736 = vmul.f32 1.0, %v735
      %v737 = vxor.u32 %v719, 2147483648
      %v738 = vxor.u32 %v722, 2147483648
      %v739 = vmul.f32 %v737, 1.442695
      %v740 = vpow.pop %v739
      %v741 = vmul.f32 %v738, 1.442695
      %v742 = vpow.pop %v741
      %v743 = vadd.f32 %v740, 1.0
      %v744 = vadd.f32 %v742, 1.0
      %v745 = vrcp.pop %v743
      %v746 = vmul.f32 1.0, %v745
      %v747 = vrcp.pop %v744
      %v748 = vmul.f32 1.0, %v747
      %v751 = vcombine.high %v734, %v734
      %v753 = vunpack.c.l.s4 1966171168
      %v754 = vunpack.c.0.s8 %v753
      %v755 = vlaneseq
      %v756 = vshrl.u32 %v755, 7
      %v757 = vsub.s32 %v754, %v756
      %v758 = vrot.slane %v734, %v757
      %v760 = vunpack.c.l.s4 1966171168
      %v761 = vunpack.c.0.s8 %v760
      %v762 = vlaneseq
      %v763 = vshrl.u32 %v762, 7
      %v764 = vsub.s32 %v761, %v763
      %v765 = vrot.slane %v751, %v764
      %v766 = vcombine.high %v758, %v758
      %v767 = vcombine.high %v765, %v765
      %v769 = vunpack.c.l.s4 1966171168
      %v770 = vunpack.c.0.s8 %v769
      %v771 = vlaneseq
      %v772 = vshrl.u32 %v771, 7
      %v773 = vsub.s32 %v770, %v772
      %v774 = vrot.slane %v758, %v773
      %v776 = vunpack.c.l.s4 1966171168
      %v777 = vunpack.c.0.s8 %v776
      %v778 = vlaneseq
      %v779 = vshrl.u32 %v778, 7
      %v780 = vsub.s32 %v777, %v779
      %v781 = vrot.slane %v765, %v780
      %v783 = vunpack.c.l.s4 1966171168
      %v784 = vunpack.c.0.s8 %v783
      %v785 = vlaneseq
      %v786 = vshrl.u32 %v785, 7
      %v787 = vsub.s32 %v784, %v786
      %v788 = vrot.slane %v766, %v787
      %v790 = vunpack.c.l.s4 1966171168
      %v791 = vunpack.c.0.s8 %v790
      %v792 = vlaneseq
      %v793 = vshrl.u32 %v792, 7
      %v794 = vsub.s32 %v791, %v793
      %v795 = vrot.slane %v767, %v794
      %v796 = vcombine.high %v774, %v774
      %v797 = vcombine.high %v781, %v781
      %v798 = vcombine.high %v788, %v788
      %v799 = vcombine.high %v795, %v795
      %v800 = vcombine.high %v736, %v736
      %v802 = vunpack.c.l.s4 1966171168
      %v803 = vunpack.c.0.s8 %v802
      %v804 = vlaneseq
      %v805 = vshrl.u32 %v804, 7
      %v806 = vsub.s32 %v803, %v805
      %v807 = vrot.slane %v736, %v806
      %v809 = vunpack.c.l.s4 1966171168
      %v810 = vunpack.c.0.s8 %v809
      %v811 = vlaneseq
      %v812 = vshrl.u32 %v811, 7
      %v813 = vsub.s32 %v810, %v812
      %v814 = vrot.slane %v800, %v813
      %v815 = vcombine.high %v807, %v807
      %v816 = vcombine.high %v814, %v814
      %v818 = vunpack.c.l.s4 1966171168
      %v819 = vunpack.c.0.s8 %v818
      %v820 = vlaneseq
      %v821 = vshrl.u32 %v820, 7
      %v822 = vsub.s32 %v819, %v821
      %v823 = vrot.slane %v807, %v822
      %v825 = vunpack.c.l.s4 1966171168
      %v826 = vunpack.c.0.s8 %v825
      %v827 = vlaneseq
      %v828 = vshrl.u32 %v827, 7
      %v829 = vsub.s32 %v826, %v828
      %v830 = vrot.slane %v814, %v829
      %v832 = vunpack.c.l.s4 1966171168
      %v833 = vunpack.c.0.s8 %v832
      %v834 = vlaneseq
      %v835 = vshrl.u32 %v834, 7
      %v836 = vsub.s32 %v833, %v835
      %v837 = vrot.slane %v815, %v836
      %v839 = vunpack.c.l.s4 1966171168
      %v840 = vunpack.c.0.s8 %v839
      %v841 = vlaneseq
      %v842 = vshrl.u32 %v841, 7
      %v843 = vsub.s32 %v840, %v842
      %v844 = vrot.slane %v816, %v843
      %v845 = vcombine.high %v823, %v823
      %v846 = vcombine.high %v830, %v830
      %v847 = vcombine.high %v837, %v837
      %v848 = vcombine.high %v844, %v844
      %v849 = vlaneseq
      %v850 = vshrl.u32 %v849, 7
      %v851 = vsub.s32 0, %v850
      %v852 = vrot.slane %v774, %v851
      %v853 = vlaneseq
      %v854 = vshrl.u32 %v853, 7
      %v855 = vsub.s32 0, %v854
      %v856 = vrot.slane %v788, %v855
      %v857 = vlaneseq
      %v858 = vshrl.u32 %v857, 7
      %v859 = vsub.s32 0, %v858
      %v860 = vrot.slane %v796, %v859
      %v861 = vlaneseq
      %v862 = vshrl.u32 %v861, 7
      %v863 = vsub.s32 0, %v862
      %v864 = vrot.slane %v798, %v863
      %v865 = vlaneseq
      %v866 = vshrl.u32 %v865, 7
      %v867 = vsub.s32 0, %v866
      %v868 = vrot.slane %v781, %v867
      %v869 = vlaneseq
      %v870 = vshrl.u32 %v869, 7
      %v871 = vsub.s32 0, %v870
      %v872 = vrot.slane %v795, %v871
      %v873 = vlaneseq
      %v874 = vshrl.u32 %v873, 7
      %v875 = vsub.s32 0, %v874
      %v876 = vrot.slane %v797, %v875
      %v877 = vlaneseq
      %v878 = vshrl.u32 %v877, 7
      %v879 = vsub.s32 0, %v878
      %v880 = vrot.slane %v799, %v879
      %v881 = vlaneseq
      %v882 = vshrl.u32 %v881, 7
      %v883 = vsub.s32 0, %v882
      %v884 = vrot.slane %v823, %v883
      %v885 = vlaneseq
      %v886 = vshrl.u32 %v885, 7
      %v887 = vsub.s32 0, %v886
      %v888 = vrot.slane %v837, %v887
      %v889 = vlaneseq
      %v890 = vshrl.u32 %v889, 7
      %v891 = vsub.s32 0, %v890
      %v892 = vrot.slane %v845, %v891
      %v893 = vlaneseq
      %v894 = vshrl.u32 %v893, 7
      %v895 = vsub.s32 0, %v894
      %v896 = vrot.slane %v847, %v895
      %v897 = vlaneseq
      %v898 = vshrl.u32 %v897, 7
      %v899 = vsub.s32 0, %v898
      %v900 = vrot.slane %v830, %v899
      %v901 = vlaneseq
      %v902 = vshrl.u32 %v901, 7
      %v903 = vsub.s32 0, %v902
      %v904 = vrot.slane %v844, %v903
      %v905 = vlaneseq
      %v906 = vshrl.u32 %v905, 7
      %v907 = vsub.s32 0, %v906
      %v908 = vrot.slane %v846, %v907
      %v909 = vlaneseq
      %v910 = vshrl.u32 %v909, 7
      %v911 = vsub.s32 0, %v910
      %v912 = vrot.slane %v848, %v911
      %v929 = vmul.f32 %v391, %v852
      %v930 = vmul.f32 %v392, %v852
      %v931 = vmul.f32 %v393, %v856
      %v932 = vmul.f32 %v394, %v856
      %v933 = vmul.f32 %v395, %v860
      %v934 = vmul.f32 %v396, %v860
      %v935 = vmul.f32 %v397, %v864
      %v936 = vmul.f32 %v398, %v864
      %v937 = vmul.f32 %v399, %v868
      %v938 = vmul.f32 %v400, %v868
      %v939 = vmul.f32 %v401, %v872
      %v940 = vmul.f32 %v402, %v872
      %v941 = vmul.f32 %v403, %v876
      %v942 = vmul.f32 %v404, %v876
      %v943 = vmul.f32 %v405, %v880
      %v944 = vmul.f32 %v406, %v880
      %v945 = vmul.f32 %v407, %v884
      %v946 = vmul.f32 %v408, %v884
      %v947 = vmul.f32 %v409, %v888
      %v948 = vmul.f32 %v410, %v888
      %v949 = vmul.f32 %v411, %v892
      %v950 = vmul.f32 %v412, %v892
      %v951 = vmul.f32 %v413, %v896
      %v952 = vmul.f32 %v414, %v896
      %v953 = vmul.f32 %v415, %v900
      %v954 = vmul.f32 %v416, %v900
      %v955 = vmul.f32 %v417, %v904
      %v956 = vmul.f32 %v418, %v904
      %v957 = vmul.f32 %v419, %v908
      %v958 = vmul.f32 %v420, %v908
      %v959 = vmul.f32 %v421, %v912
      %v960 = vmul.f32 %v422, %v912
      %v961 = vmul.f32 %v929, %v746
      %v962 = vmul.f32 %v930, %v748
      %v963 = vmul.f32 %v931, %v746
      %v964 = vmul.f32 %v932, %v748
      %v965 = vmul.f32 %v933, %v746
      %v966 = vmul.f32 %v934, %v748
      %v967 = vmul.f32 %v935, %v746
      %v968 = vmul.f32 %v936, %v748
      %v969 = vmul.f32 %v937, %v746
      %v970 = vmul.f32 %v938, %v748
      %v971 = vmul.f32 %v939, %v746
      %v972 = vmul.f32 %v940, %v748
      %v973 = vmul.f32 %v941, %v746
      %v974 = vmul.f32 %v942, %v748
      %v975 = vmul.f32 %v943, %v746
      %v976 = vmul.f32 %v944, %v748
      %v977 = vmul.f32 %v945, %v746
      %v978 = vmul.f32 %v946, %v748
      %v979 = vmul.f32 %v947, %v746
      %v980 = vmul.f32 %v948, %v748
      %v981 = vmul.f32 %v949, %v746
      %v982 = vmul.f32 %v950, %v748
      %v983 = vmul.f32 %v951, %v746
      %v984 = vmul.f32 %v952, %v748
      %v985 = vmul.f32 %v953, %v746
      %v986 = vmul.f32 %v954, %v748
      %v987 = vmul.f32 %v955, %v746
      %v988 = vmul.f32 %v956, %v748
      %v989 = vmul.f32 %v957, %v746
      %v990 = vmul.f32 %v958, %v748
      %v991 = vmul.f32 %v959, %v746
      %v992 = vmul.f32 %v960, %v748
      %v993 = vsel %vm423, %v961, 0.0
      %v994 = vsel %vm423, %v962, 0.0
      %v995 = vadd.f32 %v993, %v994
      %v996 = vsel %vm423, %v963, 0.0
      %v997 = vadd.f32 %v995, %v996
      %v998 = vsel %vm423, %v964, 0.0
      %v999 = vadd.f32 %v997, %v998
      %v1000 = vsel %vm423, %v965, 0.0
      %v1001 = vadd.f32 %v999, %v1000
      %v1002 = vsel %vm423, %v966, 0.0
      %v1003 = vadd.f32 %v1001, %v1002
      %v1004 = vsel %vm423, %v967, 0.0
      %v1005 = vadd.f32 %v1003, %v1004
      %v1006 = vsel %vm423, %v968, 0.0
      %v1007 = vadd.f32 %v1005, %v1006
      %v1008 = vsel %vm423, %v969, 0.0
      %v1009 = vadd.f32 %v1007, %v1008
      %v1010 = vsel %vm423, %v970, 0.0
      %v1011 = vadd.f32 %v1009, %v1010
      %v1012 = vsel %vm423, %v971, 0.0
      %v1013 = vadd.f32 %v1011, %v1012
      %v1014 = vsel %vm423, %v972, 0.0
      %v1015 = vadd.f32 %v1013, %v1014
      %v1016 = vsel %vm423, %v973, 0.0
      %v1017 = vadd.f32 %v1015, %v1016
      %v1018 = vsel %vm423, %v974, 0.0
      %v1019 = vadd.f32 %v1017, %v1018
      %v1020 = vsel %vm423, %v975, 0.0
      %v1021 = vadd.f32 %v1019, %v1020
      %v1022 = vsel %vm423, %v976, 0.0
      %v1023 = vadd.f32 %v1021, %v1022
      %v1024 = vsel %vm423, %v977, 0.0
      %v1025 = vadd.f32 %v1023, %v1024
      %v1026 = vsel %vm423, %v978, 0.0
      %v1027 = vadd.f32 %v1025, %v1026
      %v1028 = vsel %vm423, %v979, 0.0
      %v1029 = vadd.f32 %v1027, %v1028
      %v1030 = vsel %vm423, %v980, 0.0
      %v1031 = vadd.f32 %v1029, %v1030
      %v1032 = vsel %vm423, %v981, 0.0
      %v1033 = vadd.f32 %v1031, %v1032
      %v1034 = vsel %vm423, %v982, 0.0
      %v1035 = vadd.f32 %v1033, %v1034
      %v1036 = vsel %vm423, %v983, 0.0
      %v1037 = vadd.f32 %v1035, %v1036
      %v1038 = vsel %vm423, %v984, 0.0
      %v1039 = vadd.f32 %v1037, %v1038
      %v1040 = vsel %vm423, %v985, 0.0
      %v1041 = vadd.f32 %v1039, %v1040
      %v1042 = vsel %vm423, %v986, 0.0
      %v1043 = vadd.f32 %v1041, %v1042
      %v1044 = vsel %vm423, %v987, 0.0
      %v1045 = vadd.f32 %v1043, %v1044
      %v1046 = vsel %vm423, %v988, 0.0
      %v1047 = vadd.f32 %v1045, %v1046
      %v1048 = vsel %vm423, %v989, 0.0
      %v1049 = vadd.f32 %v1047, %v1048
      %v1050 = vsel %vm423, %v990, 0.0
      %v1051 = vadd.f32 %v1049, %v1050
      %v1052 = vsel %vm423, %v991, 0.0
      %v1053 = vadd.f32 %v1051, %v1052
      %v1054 = vsel %vm423, %v992, 0.0
      %v1055 = vadd.f32 %v1053, %v1054
      %v1056 = vrot.slane %v1055, 4
      %v1057 = vadd.f32 %v1055, %v1056
      %v1058 = vrot.slane %v1057, 2
      %v1059 = vadd.f32 %v1057, %v1058
      %v1060 = vrot.slane %v1059, 1
      %v1061 = vadd.f32 %v1059, %v1060
      %v1062 = vrcp.pop 256.0
      %v1063 = vmul.f32 %v1061, %v1062
      %v1064 = vsub.f32 %v961, %v1063
      %v1065 = vsub.f32 %v962, %v1063
      %v1066 = vsub.f32 %v963, %v1063
      %v1067 = vsub.f32 %v964, %v1063
      %v1068 = vsub.f32 %v965, %v1063
      %v1069 = vsub.f32 %v966, %v1063
      %v1070 = vsub.f32 %v967, %v1063
      %v1071 = vsub.f32 %v968, %v1063
      %v1072 = vsub.f32 %v969, %v1063
      %v1073 = vsub.f32 %v970, %v1063
      %v1074 = vsub.f32 %v971, %v1063
      %v1075 = vsub.f32 %v972, %v1063
      %v1076 = vsub.f32 %v973, %v1063
      %v1077 = vsub.f32 %v974, %v1063
      %v1078 = vsub.f32 %v975, %v1063
      %v1079 = vsub.f32 %v976, %v1063
      %v1080 = vsub.f32 %v977, %v1063
      %v1081 = vsub.f32 %v978, %v1063
      %v1082 = vsub.f32 %v979, %v1063
      %v1083 = vsub.f32 %v980, %v1063
      %v1084 = vsub.f32 %v981, %v1063
      %v1085 = vsub.f32 %v982, %v1063
      %v1086 = vsub.f32 %v983, %v1063
      %v1087 = vsub.f32 %v984, %v1063
      %v1088 = vsub.f32 %v985, %v1063
      %v1089 = vsub.f32 %v986, %v1063
      %v1090 = vsub.f32 %v987, %v1063
      %v1091 = vsub.f32 %v988, %v1063
      %v1092 = vsub.f32 %v989, %v1063
      %v1093 = vsub.f32 %v990, %v1063
      %v1094 = vsub.f32 %v991, %v1063
      %v1095 = vsub.f32 %v992, %v1063
      %v1096 = vmul.f32 %v1064, %v1064
      %v1097 = vmul.f32 %v1065, %v1065
      %v1098 = vmul.f32 %v1066, %v1066
      %v1099 = vmul.f32 %v1067, %v1067
      %v1100 = vmul.f32 %v1068, %v1068
      %v1101 = vmul.f32 %v1069, %v1069
      %v1102 = vmul.f32 %v1070, %v1070
      %v1103 = vmul.f32 %v1071, %v1071
      %v1104 = vmul.f32 %v1072, %v1072
      %v1105 = vmul.f32 %v1073, %v1073
      %v1106 = vmul.f32 %v1074, %v1074
      %v1107 = vmul.f32 %v1075, %v1075
      %v1108 = vmul.f32 %v1076, %v1076
      %v1109 = vmul.f32 %v1077, %v1077
      %v1110 = vmul.f32 %v1078, %v1078
      %v1111 = vmul.f32 %v1079, %v1079
      %v1112 = vmul.f32 %v1080, %v1080
      %v1113 = vmul.f32 %v1081, %v1081
      %v1114 = vmul.f32 %v1082, %v1082
      %v1115 = vmul.f32 %v1083, %v1083
      %v1116 = vmul.f32 %v1084, %v1084
      %v1117 = vmul.f32 %v1085, %v1085
      %v1118 = vmul.f32 %v1086, %v1086
      %v1119 = vmul.f32 %v1087, %v1087
      %v1120 = vmul.f32 %v1088, %v1088
      %v1121 = vmul.f32 %v1089, %v1089
      %v1122 = vmul.f32 %v1090, %v1090
      %v1123 = vmul.f32 %v1091, %v1091
      %v1124 = vmul.f32 %v1092, %v1092
      %v1125 = vmul.f32 %v1093, %v1093
      %v1126 = vmul.f32 %v1094, %v1094
      %v1127 = vmul.f32 %v1095, %v1095
      %v1128 = vsel %vm423, %v1096, 0.0
      %v1129 = vsel %vm423, %v1097, 0.0
      %v1130 = vadd.f32 %v1128, %v1129
      %v1131 = vsel %vm423, %v1098, 0.0
      %v1132 = vadd.f32 %v1130, %v1131
      %v1133 = vsel %vm423, %v1099, 0.0
      %v1134 = vadd.f32 %v1132, %v1133
      %v1135 = vsel %vm423, %v1100, 0.0
      %v1136 = vadd.f32 %v1134, %v1135
      %v1137 = vsel %vm423, %v1101, 0.0
      %v1138 = vadd.f32 %v1136, %v1137
      %v1139 = vsel %vm423, %v1102, 0.0
      %v1140 = vadd.f32 %v1138, %v1139
      %v1141 = vsel %vm423, %v1103, 0.0
      %v1142 = vadd.f32 %v1140, %v1141
      %v1143 = vsel %vm423, %v1104, 0.0
      %v1144 = vadd.f32 %v1142, %v1143
      %v1145 = vsel %vm423, %v1105, 0.0
      %v1146 = vadd.f32 %v1144, %v1145
      %v1147 = vsel %vm423, %v1106, 0.0
      %v1148 = vadd.f32 %v1146, %v1147
      %v1149 = vsel %vm423, %v1107, 0.0
      %v1150 = vadd.f32 %v1148, %v1149
      %v1151 = vsel %vm423, %v1108, 0.0
      %v1152 = vadd.f32 %v1150, %v1151
      %v1153 = vsel %vm423, %v1109, 0.0
      %v1154 = vadd.f32 %v1152, %v1153
      %v1155 = vsel %vm423, %v1110, 0.0
      %v1156 = vadd.f32 %v1154, %v1155
      %v1157 = vsel %vm423, %v1111, 0.0
      %v1158 = vadd.f32 %v1156, %v1157
      %v1159 = vsel %vm423, %v1112, 0.0
      %v1160 = vadd.f32 %v1158, %v1159
      %v1161 = vsel %vm423, %v1113, 0.0
      %v1162 = vadd.f32 %v1160, %v1161
      %v1163 = vsel %vm423, %v1114, 0.0
      %v1164 = vadd.f32 %v1162, %v1163
      %v1165 = vsel %vm423, %v1115, 0.0
      %v1166 = vadd.f32 %v1164, %v1165
      %v1167 = vsel %vm423, %v1116, 0.0
      %v1168 = vadd.f32 %v1166, %v1167
      %v1169 = vsel %vm423, %v1117, 0.0
      %v1170 = vadd.f32 %v1168, %v1169
      %v1171 = vsel %vm423, %v1118, 0.0
      %v1172 = vadd.f32 %v1170, %v1171
      %v1173 = vsel %vm423, %v1119, 0.0
      %v1174 = vadd.f32 %v1172, %v1173
      %v1175 = vsel %vm423, %v1120, 0.0
      %v1176 = vadd.f32 %v1174, %v1175
      %v1177 = vsel %vm423, %v1121, 0.0
      %v1178 = vadd.f32 %v1176, %v1177
      %v1179 = vsel %vm423, %v1122, 0.0
      %v1180 = vadd.f32 %v1178, %v1179
      %v1181 = vsel %vm423, %v1123, 0.0
      %v1182 = vadd.f32 %v1180, %v1181
      %v1183 = vsel %vm423, %v1124, 0.0
      %v1184 = vadd.f32 %v1182, %v1183
      %v1185 = vsel %vm423, %v1125, 0.0
      %v1186 = vadd.f32 %v1184, %v1185
      %v1187 = vsel %vm423, %v1126, 0.0
      %v1188 = vadd.f32 %v1186, %v1187
      %v1189 = vsel %vm423, %v1127, 0.0
      %v1190 = vadd.f32 %v1188, %v1189
      %v1191 = vrot.slane %v1190, 4
      %v1192 = vadd.f32 %v1190, %v1191
      %v1193 = vrot.slane %v1192, 2
      %v1194 = vadd.f32 %v1192, %v1193
      %v1195 = vrot.slane %v1194, 1
      %v1196 = vadd.f32 %v1194, %v1195
      %v1197 = vmul.f32 %v1196, %v1062
      %v1198 = vadd.f32 %v1197, 1e-05
      %v1199 = vrsqrt.pop %v1198
      %v1200 = vmul.f32 %v1064, %v1199
      %v1201 = vmul.f32 %v1065, %v1199
      %v1202 = vmul.f32 %v1066, %v1199
      %v1203 = vmul.f32 %v1067, %v1199
      %v1204 = vmul.f32 %v1068, %v1199
      %v1205 = vmul.f32 %v1069, %v1199
      %v1206 = vmul.f32 %v1070, %v1199
      %v1207 = vmul.f32 %v1071, %v1199
      %v1208 = vmul.f32 %v1072, %v1199
      %v1209 = vmul.f32 %v1073, %v1199
      %v1210 = vmul.f32 %v1074, %v1199
      %v1211 = vmul.f32 %v1075, %v1199
      %v1212 = vmul.f32 %v1076, %v1199
      %v1213 = vmul.f32 %v1077, %v1199
      %v1214 = vmul.f32 %v1078, %v1199
      %v1215 = vmul.f32 %v1079, %v1199
      %v1216 = vmul.f32 %v1080, %v1199
      %v1217 = vmul.f32 %v1081, %v1199
      %v1218 = vmul.f32 %v1082, %v1199
      %v1219 = vmul.f32 %v1083, %v1199
      %v1220 = vmul.f32 %v1084, %v1199
      %v1221 = vmul.f32 %v1085, %v1199
      %v1222 = vmul.f32 %v1086, %v1199
      %v1223 = vmul.f32 %v1087, %v1199
      %v1224 = vmul.f32 %v1088, %v1199
      %v1225 = vmul.f32 %v1089, %v1199
      %v1226 = vmul.f32 %v1090, %v1199
      %v1227 = vmul.f32 %v1091, %v1199
      %v1228 = vmul.f32 %v1092, %v1199
      %v1229 = vmul.f32 %v1093, %v1199
      %v1230 = vmul.f32 %v1094, %v1199
      %v1231 = vmul.f32 %v1095, %v1199
      %v1232 = vld [vmem:[%s6] sm:$0x1]
      %v1234 = vlaneseq
      %v1235 = vshrl.u32 %v1234, 7
      %v1236 = vsub.s32 0, %v1235
      %v1237 = vrot.slane %v1232, %v1236
      %v1239 = vmul.f32 %v1200, %v1237
      %v1240 = vmul.f32 %v1201, %v1237
      %v1241 = vmul.f32 %v1202, %v1237
      %v1242 = vmul.f32 %v1203, %v1237
      %v1243 = vmul.f32 %v1204, %v1237
      %v1244 = vmul.f32 %v1205, %v1237
      %v1245 = vmul.f32 %v1206, %v1237
      %v1246 = vmul.f32 %v1207, %v1237
      %v1247 = vmul.f32 %v1208, %v1237
      %v1248 = vmul.f32 %v1209, %v1237
      %v1249 = vmul.f32 %v1210, %v1237
      %v1250 = vmul.f32 %v1211, %v1237
      %v1251 = vmul.f32 %v1212, %v1237
      %v1252 = vmul.f32 %v1213, %v1237
      %v1253 = vmul.f32 %v1214, %v1237
      %v1254 = vmul.f32 %v1215, %v1237
      %v1255 = vmul.f32 %v1216, %v1237
      %v1256 = vmul.f32 %v1217, %v1237
      %v1257 = vmul.f32 %v1218, %v1237
      %v1258 = vmul.f32 %v1219, %v1237
      %v1259 = vmul.f32 %v1220, %v1237
      %v1260 = vmul.f32 %v1221, %v1237
      %v1261 = vmul.f32 %v1222, %v1237
      %v1262 = vmul.f32 %v1223, %v1237
      %v1263 = vmul.f32 %v1224, %v1237
      %v1264 = vmul.f32 %v1225, %v1237
      %v1265 = vmul.f32 %v1226, %v1237
      %v1266 = vmul.f32 %v1227, %v1237
      %v1267 = vmul.f32 %v1228, %v1237
      %v1268 = vmul.f32 %v1229, %v1237
      %v1269 = vmul.f32 %v1230, %v1237
      %v1270 = vmul.f32 %v1231, %v1237
      %v1271 = vld [vmem:[%s7] sm:$0x1]
      %v1273 = vlaneseq
      %v1274 = vshrl.u32 %v1273, 7
      %v1275 = vsub.s32 0, %v1274
      %v1276 = vrot.slane %v1271, %v1275
      %v1278 = vadd.f32 %v1239, %v1276
      %v1279 = vadd.f32 %v1240, %v1276
      %v1280 = vadd.f32 %v1241, %v1276
      %v1281 = vadd.f32 %v1242, %v1276
      %v1282 = vadd.f32 %v1243, %v1276
      %v1283 = vadd.f32 %v1244, %v1276
      %v1284 = vadd.f32 %v1245, %v1276
      %v1285 = vadd.f32 %v1246, %v1276
      %v1286 = vadd.f32 %v1247, %v1276
      %v1287 = vadd.f32 %v1248, %v1276
      %v1288 = vadd.f32 %v1249, %v1276
      %v1289 = vadd.f32 %v1250, %v1276
      %v1290 = vadd.f32 %v1251, %v1276
      %v1291 = vadd.f32 %v1252, %v1276
      %v1292 = vadd.f32 %v1253, %v1276
      %v1293 = vadd.f32 %v1254, %v1276
      %v1294 = vadd.f32 %v1255, %v1276
      %v1295 = vadd.f32 %v1256, %v1276
      %v1296 = vadd.f32 %v1257, %v1276
      %v1297 = vadd.f32 %v1258, %v1276
      %v1298 = vadd.f32 %v1259, %v1276
      %v1299 = vadd.f32 %v1260, %v1276
      %v1300 = vadd.f32 %v1261, %v1276
      %v1301 = vadd.f32 %v1262, %v1276
      %v1302 = vadd.f32 %v1263, %v1276
      %v1303 = vadd.f32 %v1264, %v1276
      %v1304 = vadd.f32 %v1265, %v1276
      %v1305 = vadd.f32 %v1266, %v1276
      %v1306 = vadd.f32 %v1267, %v1276
      %v1307 = vadd.f32 %v1268, %v1276
      %v1308 = vadd.f32 %v1269, %v1276
      %v1309 = vadd.f32 %v1270, %v1276
      %vm1310 = vcmask 60416
      %1311 = vst.msk [vmem:[#allocation2] sm:$0xf] %vm1310, 0
      %1312 = vst.msk [vmem:[#allocation2 + $0x4] sm:$0xf] %vm1310, 0
      %vm1313 = vcmask 57344
      %1314 = vst.msk [vmem:[#allocation2 + $0x8] sm:$0x1] %vm1313, 0
      %1315 = vst.msk [vmem:[#allocation2 + $0xc] sm:$0xf] %vm1310, 0
      %1316 = vst.msk [vmem:[#allocation2 + $0x10] sm:$0xf] %vm1310, 0
      %1317 = vst.msk [vmem:[#allocation2 + $0x14] sm:$0x1] %vm1313, 0
      %1318 = vst.msk [vmem:[#allocation2 + $0x18] sm:$0xf] %vm1310, 0
      %1319 = vst.msk [vmem:[#allocation2 + $0x1c] sm:$0xf] %vm1310, 0
      %1320 = vst.msk [vmem:[#allocation2 + $0x20] sm:$0x1] %vm1313, 0
      %1321 = vst.msk [vmem:[#allocation2 + $0x24] sm:$0xf] %vm1310, 0
      %1322 = vst.msk [vmem:[#allocation2 + $0x28] sm:$0xf] %vm1310, 0
      %1323 = vst.msk [vmem:[#allocation2 + $0x2c] sm:$0x1] %vm1313, 0
      %1324 = vst.msk [vmem:[#allocation2 + $0x30] sm:$0xf] %vm1310, 0
      %1325 = vst.msk [vmem:[#allocation2 + $0x34] sm:$0xf] %vm1310, 0
      %1326 = vst.msk [vmem:[#allocation2 + $0x38] sm:$0x1] %vm1313, 0
      %1327 = vst.msk [vmem:[#allocation2 + $0x3c] sm:$0xf] %vm1310, 0
      %1328 = vst.msk [vmem:[#allocation2 + $0x40] sm:$0xf] %vm1310, 0
      %1329 = vst.msk [vmem:[#allocation2 + $0x44] sm:$0x1] %vm1313, 0
      %1330 = vst.msk [vmem:[#allocation2 + $0x48] sm:$0xf] %vm1310, 0
      %1331 = vst.msk [vmem:[#allocation2 + $0x4c] sm:$0xf] %vm1310, 0
      %1332 = vst.msk [vmem:[#allocation2 + $0x50] sm:$0x1] %vm1313, 0
      %1333 = vst.msk [vmem:[#allocation2 + $0x54] sm:$0xf] %vm1310, 0
      %1334 = vst.msk [vmem:[#allocation2 + $0x58] sm:$0xf] %vm1310, 0
      %1335 = vst.msk [vmem:[#allocation2 + $0x5c] sm:$0x1] %vm1313, 0
      %1336 = vst.msk [vmem:[#allocation2 + $0x60] sm:$0xf] %vm1310, 0
      %1337 = vst.msk [vmem:[#allocation2 + $0x64] sm:$0xf] %vm1310, 0
      %1338 = vst.msk [vmem:[#allocation2 + $0x68] sm:$0x1] %vm1313, 0
      %1339 = vst.msk [vmem:[#allocation2 + $0x6c] sm:$0xf] %vm1310, 0
      %1340 = vst.msk [vmem:[#allocation2 + $0x70] sm:$0xf] %vm1310, 0
      %1341 = vst.msk [vmem:[#allocation2 + $0x74] sm:$0x1] %vm1313, 0
      %1342 = vst.msk [vmem:[#allocation2 + $0x78] sm:$0xf] %vm1310, 0
      %1343 = vst.msk [vmem:[#allocation2 + $0x7c] sm:$0xf] %vm1310, 0
      %1344 = vst.msk [vmem:[#allocation2 + $0x80] sm:$0x1] %vm1313, 0
      %1345 = vst.msk [vmem:[#allocation2 + $0x84] sm:$0xf] %vm1310, 0
      %1346 = vst.msk [vmem:[#allocation2 + $0x88] sm:$0xf] %vm1310, 0
      %1347 = vst.msk [vmem:[#allocation2 + $0x8c] sm:$0x1] %vm1313, 0
      %1348 = vst.msk [vmem:[#allocation2 + $0x90] sm:$0xf] %vm1310, 0
      %1349 = vst.msk [vmem:[#allocation2 + $0x94] sm:$0xf] %vm1310, 0
      %1350 = vst.msk [vmem:[#allocation2 + $0x98] sm:$0x1] %vm1313, 0
      %1351 = vst.msk [vmem:[#allocation2 + $0x9c] sm:$0xf] %vm1310, 0
      %1352 = vst.msk [vmem:[#allocation2 + $0xa0] sm:$0xf] %vm1310, 0
      %1353 = vst.msk [vmem:[#allocation2 + $0xa4] sm:$0x1] %vm1313, 0
      %1354 = vst.msk [vmem:[#allocation2 + $0xa8] sm:$0xf] %vm1310, 0
      %1355 = vst.msk [vmem:[#allocation2 + $0xac] sm:$0xf] %vm1310, 0
      %1356 = vst.msk [vmem:[#allocation2 + $0xb0] sm:$0x1] %vm1313, 0
      %1357 = vst.msk [vmem:[#allocation2 + $0xb4] sm:$0xf] %vm1310, 0
      %1358 = vst.msk [vmem:[#allocation2 + $0xb8] sm:$0xf] %vm1310, 0
      %1359 = vst.msk [vmem:[#allocation2 + $0xbc] sm:$0x1] %vm1313, 0
      %1360 = vst.msk [vmem:[#allocation2 + $0xc0] sm:$0xf] %vm1310, 0
      %1361 = vst.msk [vmem:[#allocation2 + $0xc4] sm:$0xf] %vm1310, 0
      %1362 = vst.msk [vmem:[#allocation2 + $0xc8] sm:$0x1] %vm1313, 0
      %1363 = vst.msk [vmem:[#allocation2 + $0xcc] sm:$0xf] %vm1310, 0
      %1364 = vst.msk [vmem:[#allocation2 + $0xd0] sm:$0xf] %vm1310, 0
      %1365 = vst.msk [vmem:[#allocation2 + $0xd4] sm:$0x1] %vm1313, 0
      %vm1366 = vsmask.f32 256
      %vm1367 = vsmask.f32 4368
      %vm1368 = vmor %vm1366, %vm1367
      %v1370 = vshrl.u32 %v327, 16
      %v1372 = vrot.slane %v1370, 7
      %v1373 = vshll.u32 %v327, 16
      %v1375 = vor.u32 %v1372, %v1373
      %v1376 = vrot.slane %v1372, 4
      %v1378 = vshrl.u32 %v328, 16
      %v1380 = vrot.slane %v1378, 7
      %v1381 = vshll.u32 %v328, 16
      %v1383 = vor.u32 %v1380, %v1381
      %v1384 = vsel %vm1368, %v1376, %v1383
      %v1385 = vrot.slane %v1380, 4
      %v1387 = vshrl.u32 %v329, 16
      %v1389 = vrot.slane %v1387, 7
      %v1390 = vshll.u32 %v329, 16
      %v1392 = vor.u32 %v1389, %v1390
      %v1393 = vrot.slane %v1389, 4
      %v1395 = vshrl.u32 %v330, 16
      %v1397 = vrot.slane %v1395, 7
      %v1398 = vshll.u32 %v330, 16
      %v1400 = vor.u32 %v1397, %v1398
      %v1401 = vsel %vm1368, %v1393, %v1400
      %v1402 = vrot.slane %v1397, 4
      %v1404 = vshrl.u32 %v331, 16
      %v1406 = vrot.slane %v1404, 7
      %v1407 = vshll.u32 %v331, 16
      %v1409 = vor.u32 %v1406, %v1407
      %v1410 = vrot.slane %v1406, 4
      %v1412 = vshrl.u32 %v332, 16
      %v1414 = vrot.slane %v1412, 7
      %v1415 = vshll.u32 %v332, 16
      %v1417 = vor.u32 %v1414, %v1415
      %v1418 = vsel %vm1368, %v1410, %v1417
      %v1419 = vrot.slane %v1414, 4
      %v1421 = vshrl.u32 %v333, 16
      %v1423 = vrot.slane %v1421, 7
      %v1424 = vshll.u32 %v333, 16
      %v1426 = vor.u32 %v1423, %v1424
      %v1427 = vrot.slane %v1423, 4
      %v1429 = vshrl.u32 %v334, 16
      %v1431 = vrot.slane %v1429, 7
      %v1432 = vshll.u32 %v334, 16
      %v1434 = vor.u32 %v1431, %v1432
      %v1435 = vsel %vm1368, %v1427, %v1434
      %v1436 = vrot.slane %v1431, 4
      %v1438 = vshrl.u32 %v335, 16
      %v1440 = vrot.slane %v1438, 7
      %v1441 = vshll.u32 %v335, 16
      %v1443 = vor.u32 %v1440, %v1441
      %v1444 = vrot.slane %v1440, 4
      %v1446 = vshrl.u32 %v336, 16
      %v1448 = vrot.slane %v1446, 7
      %v1449 = vshll.u32 %v336, 16
      %v1451 = vor.u32 %v1448, %v1449
      %v1452 = vsel %vm1368, %v1444, %v1451
      %v1453 = vrot.slane %v1448, 4
      %v1455 = vshrl.u32 %v337, 16
      %v1457 = vrot.slane %v1455, 7
      %v1458 = vshll.u32 %v337, 16
      %v1460 = vor.u32 %v1457, %v1458
      %v1461 = vrot.slane %v1457, 4
      %v1463 = vshrl.u32 %v338, 16
      %v1465 = vrot.slane %v1463, 7
      %v1466 = vshll.u32 %v338, 16
      %v1468 = vor.u32 %v1465, %v1466
      %v1469 = vsel %vm1368, %v1461, %v1468
      %v1470 = vrot.slane %v1465, 4
      %v1472 = vshrl.u32 %v339, 16
      %v1474 = vrot.slane %v1472, 7
      %v1475 = vshll.u32 %v339, 16
      %v1477 = vor.u32 %v1474, %v1475
      %v1478 = vrot.slane %v1474, 4
      %v1480 = vshrl.u32 %v340, 16
      %v1482 = vrot.slane %v1480, 7
      %v1483 = vshll.u32 %v340, 16
      %v1485 = vor.u32 %v1482, %v1483
      %v1486 = vsel %vm1368, %v1478, %v1485
      %v1487 = vrot.slane %v1482, 4
      %v1489 = vshrl.u32 %v341, 16
      %v1491 = vrot.slane %v1489, 7
      %v1492 = vshll.u32 %v341, 16
      %v1494 = vor.u32 %v1491, %v1492
      %v1495 = vrot.slane %v1491, 4
      %v1497 = vshrl.u32 %v342, 16
      %v1499 = vrot.slane %v1497, 7
      %v1500 = vshll.u32 %v342, 16
      %v1502 = vor.u32 %v1499, %v1500
      %v1503 = vsel %vm1368, %v1495, %v1502
      %v1504 = vrot.slane %v1499, 4
      %v1506 = vshrl.u32 %v343, 16
      %v1508 = vrot.slane %v1506, 7
      %v1509 = vshll.u32 %v343, 16
      %v1511 = vor.u32 %v1508, %v1509
      %v1512 = vrot.slane %v1508, 4
      %v1514 = vshrl.u32 %v344, 16
      %v1516 = vrot.slane %v1514, 7
      %v1517 = vshll.u32 %v344, 16
      %v1519 = vor.u32 %v1516, %v1517
      %v1520 = vsel %vm1368, %v1512, %v1519
      %v1521 = vrot.slane %v1516, 4
      %v1523 = vshrl.u32 %v345, 16
      %v1525 = vrot.slane %v1523, 7
      %v1526 = vshll.u32 %v345, 16
      %v1528 = vor.u32 %v1525, %v1526
      %v1529 = vrot.slane %v1525, 4
      %v1531 = vshrl.u32 %v346, 16
      %v1533 = vrot.slane %v1531, 7
      %v1534 = vshll.u32 %v346, 16
      %v1536 = vor.u32 %v1533, %v1534
      %v1537 = vsel %vm1368, %v1529, %v1536
      %v1538 = vrot.slane %v1533, 4
      %v1540 = vshrl.u32 %v347, 16
      %v1542 = vrot.slane %v1540, 7
      %v1543 = vshll.u32 %v347, 16
      %v1545 = vor.u32 %v1542, %v1543
      %v1546 = vrot.slane %v1542, 4
      %v1548 = vshrl.u32 %v348, 16
      %v1550 = vrot.slane %v1548, 7
      %v1551 = vshll.u32 %v348, 16
      %v1553 = vor.u32 %v1550, %v1551
      %v1554 = vsel %vm1368, %v1546, %v1553
      %v1555 = vrot.slane %v1550, 4
      %v1557 = vshrl.u32 %v349, 16
      %v1559 = vrot.slane %v1557, 7
      %v1560 = vshll.u32 %v349, 16
      %v1562 = vor.u32 %v1559, %v1560
      %v1563 = vrot.slane %v1559, 4
      %v1565 = vshrl.u32 %v350, 16
      %v1567 = vrot.slane %v1565, 7
      %v1568 = vshll.u32 %v350, 16
      %v1570 = vor.u32 %v1567, %v1568
      %v1571 = vsel %vm1368, %v1563, %v1570
      %v1572 = vrot.slane %v1567, 4
      %v1574 = vshrl.u32 %v351, 16
      %v1576 = vrot.slane %v1574, 7
      %v1577 = vshll.u32 %v351, 16
      %v1579 = vor.u32 %v1576, %v1577
      %v1580 = vrot.slane %v1576, 4
      %v1582 = vshrl.u32 %v352, 16
      %v1584 = vrot.slane %v1582, 7
      %v1585 = vshll.u32 %v352, 16
      %v1587 = vor.u32 %v1584, %v1585
      %v1588 = vsel %vm1368, %v1580, %v1587
      %v1589 = vrot.slane %v1584, 4
      %v1591 = vshrl.u32 %v353, 16
      %v1593 = vrot.slane %v1591, 7
      %v1594 = vshll.u32 %v353, 16
      %v1596 = vor.u32 %v1593, %v1594
      %v1597 = vrot.slane %v1593, 4
      %v1599 = vshrl.u32 %v354, 16
      %v1601 = vrot.slane %v1599, 7
      %v1602 = vshll.u32 %v354, 16
      %v1604 = vor.u32 %v1601, %v1602
      %v1605 = vsel %vm1368, %v1597, %v1604
      %v1606 = vrot.slane %v1601, 4
      %v1608 = vshrl.u32 %v355, 16
      %v1610 = vrot.slane %v1608, 7
      %v1611 = vshll.u32 %v355, 16
      %v1613 = vor.u32 %v1610, %v1611
      %v1614 = vrot.slane %v1610, 4
      %v1616 = vshrl.u32 %v356, 16
      %v1618 = vrot.slane %v1616, 7
      %v1619 = vshll.u32 %v356, 16
      %v1621 = vor.u32 %v1618, %v1619
      %v1622 = vsel %vm1368, %v1614, %v1621
      %v1623 = vrot.slane %v1618, 4
      %v1625 = vshrl.u32 %v357, 16
      %v1627 = vrot.slane %v1625, 7
      %v1628 = vshll.u32 %v357, 16
      %v1630 = vor.u32 %v1627, %v1628
      %v1631 = vrot.slane %v1627, 4
      %v1633 = vshrl.u32 %v358, 16
      %v1635 = vrot.slane %v1633, 7
      %v1636 = vshll.u32 %v358, 16
      %v1638 = vor.u32 %v1635, %v1636
      %v1639 = vsel %vm1368, %v1631, %v1638
      %v1640 = vrot.slane %v1635, 4
      %s1689 = scalar_lea.vmem [#allocation2], 12
      %vm1690 = vcmask 60416
      %vm1691 = vsmask.f32 7938
      %vm1692 = vmand %vm1690, %vm1691
      %v1693 = vld [vmem:[%s1689] sm:$0xf]
      %v1694 = vsel %vm1692, %v1375, %v1693
      %1695 = vst [vmem:[%s1689] sm:$0xf] %v1694
      %1696 = vst.msk [vmem:[%s1689 + $0x4] sm:$0xf] %vm1310, %v1384
      %vm1697 = vcmask 57344
      %vm1698 = vmand %vm1697, %vm1366
      %v1699 = vld [vmem:[%s1689 + $0x8] sm:$0x1]
      %v1700 = vsel %vm1698, %v1385, %v1699
      %1701 = vst [vmem:[%s1689 + $0x8] sm:$0x1] %v1700
      %v1702 = vld [vmem:[%s1689 + $0xc] sm:$0xf]
      %v1703 = vsel %vm1692, %v1392, %v1702
      %1704 = vst [vmem:[%s1689 + $0xc] sm:$0xf] %v1703
      %1705 = vst.msk [vmem:[%s1689 + $0x10] sm:$0xf] %vm1310, %v1401
      %v1706 = vld [vmem:[%s1689 + $0x14] sm:$0x1]
      %v1707 = vsel %vm1698, %v1402, %v1706
      %1708 = vst [vmem:[%s1689 + $0x14] sm:$0x1] %v1707
      %v1709 = vld [vmem:[%s1689 + $0x18] sm:$0xf]
      %v1710 = vsel %vm1692, %v1409, %v1709
      %1711 = vst [vmem:[%s1689 + $0x18] sm:$0xf] %v1710
      %1712 = vst.msk [vmem:[%s1689 + $0x1c] sm:$0xf] %vm1310, %v1418
      %v1713 = vld [vmem:[%s1689 + $0x20] sm:$0x1]
      %v1714 = vsel %vm1698, %v1419, %v1713
      %1715 = vst [vmem:[%s1689 + $0x20] sm:$0x1] %v1714
      %v1716 = vld [vmem:[%s1689 + $0x24] sm:$0xf]
      %v1717 = vsel %vm1692, %v1426, %v1716
      %1718 = vst [vmem:[%s1689 + $0x24] sm:$0xf] %v1717
      %1719 = vst.msk [vmem:[%s1689 + $0x28] sm:$0xf] %vm1310, %v1435
      %v1720 = vld [vmem:[%s1689 + $0x2c] sm:$0x1]
      %v1721 = vsel %vm1698, %v1436, %v1720
      %1722 = vst [vmem:[%s1689 + $0x2c] sm:$0x1] %v1721
      %v1723 = vld [vmem:[%s1689 + $0x30] sm:$0xf]
      %v1724 = vsel %vm1692, %v1443, %v1723
      %1725 = vst [vmem:[%s1689 + $0x30] sm:$0xf] %v1724
      %1726 = vst.msk [vmem:[%s1689 + $0x34] sm:$0xf] %vm1310, %v1452
      %v1727 = vld [vmem:[%s1689 + $0x38] sm:$0x1]
      %v1728 = vsel %vm1698, %v1453, %v1727
      %1729 = vst [vmem:[%s1689 + $0x38] sm:$0x1] %v1728
      %v1730 = vld [vmem:[%s1689 + $0x3c] sm:$0xf]
      %v1731 = vsel %vm1692, %v1460, %v1730
      %1732 = vst [vmem:[%s1689 + $0x3c] sm:$0xf] %v1731
      %1733 = vst.msk [vmem:[%s1689 + $0x40] sm:$0xf] %vm1310, %v1469
      %v1734 = vld [vmem:[%s1689 + $0x44] sm:$0x1]
      %v1735 = vsel %vm1698, %v1470, %v1734
      %1736 = vst [vmem:[%s1689 + $0x44] sm:$0x1] %v1735
      %v1737 = vld [vmem:[%s1689 + $0x48] sm:$0xf]
      %v1738 = vsel %vm1692, %v1477, %v1737
      %1739 = vst [vmem:[%s1689 + $0x48] sm:$0xf] %v1738
      %1740 = vst.msk [vmem:[%s1689 + $0x4c] sm:$0xf] %vm1310, %v1486
      %v1741 = vld [vmem:[%s1689 + $0x50] sm:$0x1]
      %v1742 = vsel %vm1698, %v1487, %v1741
      %1743 = vst [vmem:[%s1689 + $0x50] sm:$0x1] %v1742
      %v1744 = vld [vmem:[%s1689 + $0x54] sm:$0xf]
      %v1745 = vsel %vm1692, %v1494, %v1744
      %1746 = vst [vmem:[%s1689 + $0x54] sm:$0xf] %v1745
      %1747 = vst.msk [vmem:[%s1689 + $0x58] sm:$0xf] %vm1310, %v1503
      %v1748 = vld [vmem:[%s1689 + $0x5c] sm:$0x1]
      %v1749 = vsel %vm1698, %v1504, %v1748
      %1750 = vst [vmem:[%s1689 + $0x5c] sm:$0x1] %v1749
      %v1751 = vld [vmem:[%s1689 + $0x60] sm:$0xf]
      %v1752 = vsel %vm1692, %v1511, %v1751
      %1753 = vst [vmem:[%s1689 + $0x60] sm:$0xf] %v1752
      %1754 = vst.msk [vmem:[%s1689 + $0x64] sm:$0xf] %vm1310, %v1520
      %v1755 = vld [vmem:[%s1689 + $0x68] sm:$0x1]
      %v1756 = vsel %vm1698, %v1521, %v1755
      %1757 = vst [vmem:[%s1689 + $0x68] sm:$0x1] %v1756
      %v1758 = vld [vmem:[%s1689 + $0x6c] sm:$0xf]
      %v1759 = vsel %vm1692, %v1528, %v1758
      %1760 = vst [vmem:[%s1689 + $0x6c] sm:$0xf] %v1759
      %1761 = vst.msk [vmem:[%s1689 + $0x70] sm:$0xf] %vm1310, %v1537
      %v1762 = vld [vmem:[%s1689 + $0x74] sm:$0x1]
      %v1763 = vsel %vm1698, %v1538, %v1762
      %1764 = vst [vmem:[%s1689 + $0x74] sm:$0x1] %v1763
      %v1765 = vld [vmem:[%s1689 + $0x78] sm:$0xf]
      %v1766 = vsel %vm1692, %v1545, %v1765
      %1767 = vst [vmem:[%s1689 + $0x78] sm:$0xf] %v1766
      %1768 = vst.msk [vmem:[%s1689 + $0x7c] sm:$0xf] %vm1310, %v1554
      %v1769 = vld [vmem:[%s1689 + $0x80] sm:$0x1]
      %v1770 = vsel %vm1698, %v1555, %v1769
      %1771 = vst [vmem:[%s1689 + $0x80] sm:$0x1] %v1770
      %v1772 = vld [vmem:[%s1689 + $0x84] sm:$0xf]
      %v1773 = vsel %vm1692, %v1562, %v1772
      %1774 = vst [vmem:[%s1689 + $0x84] sm:$0xf] %v1773
      %1775 = vst.msk [vmem:[%s1689 + $0x88] sm:$0xf] %vm1310, %v1571
      %v1776 = vld [vmem:[%s1689 + $0x8c] sm:$0x1]
      %v1777 = vsel %vm1698, %v1572, %v1776
      %1778 = vst [vmem:[%s1689 + $0x8c] sm:$0x1] %v1777
      %v1779 = vld [vmem:[%s1689 + $0x90] sm:$0xf]
      %v1780 = vsel %vm1692, %v1579, %v1779
      %1781 = vst [vmem:[%s1689 + $0x90] sm:$0xf] %v1780
      %1782 = vst.msk [vmem:[%s1689 + $0x94] sm:$0xf] %vm1310, %v1588
      %v1783 = vld [vmem:[%s1689 + $0x98] sm:$0x1]
      %v1784 = vsel %vm1698, %v1589, %v1783
      %1785 = vst [vmem:[%s1689 + $0x98] sm:$0x1] %v1784
      %v1786 = vld [vmem:[%s1689 + $0x9c] sm:$0xf]
      %v1787 = vsel %vm1692, %v1596, %v1786
      %1788 = vst [vmem:[%s1689 + $0x9c] sm:$0xf] %v1787
      %1789 = vst.msk [vmem:[%s1689 + $0xa0] sm:$0xf] %vm1310, %v1605
      %v1790 = vld [vmem:[%s1689 + $0xa4] sm:$0x1]
      %v1791 = vsel %vm1698, %v1606, %v1790
      %1792 = vst [vmem:[%s1689 + $0xa4] sm:$0x1] %v1791
      %v1793 = vld [vmem:[%s1689 + $0xa8] sm:$0xf]
      %v1794 = vsel %vm1692, %v1613, %v1793
      %1795 = vst [vmem:[%s1689 + $0xa8] sm:$0xf] %v1794
      %1796 = vst.msk [vmem:[%s1689 + $0xac] sm:$0xf] %vm1310, %v1622
      %v1797 = vld [vmem:[%s1689 + $0xb0] sm:$0x1]
      %v1798 = vsel %vm1698, %v1623, %v1797
      %1799 = vst [vmem:[%s1689 + $0xb0] sm:$0x1] %v1798
      %v1800 = vld [vmem:[%s1689 + $0xb4] sm:$0xf]
      %v1801 = vsel %vm1692, %v1630, %v1800
      %1802 = vst [vmem:[%s1689 + $0xb4] sm:$0xf] %v1801
      %1803 = vst.msk [vmem:[%s1689 + $0xb8] sm:$0xf] %vm1310, %v1639
      %v1804 = vld [vmem:[%s1689 + $0xbc] sm:$0x1]
      %v1805 = vsel %vm1698, %v1640, %v1804
      %1806 = vst [vmem:[%s1689 + $0xbc] sm:$0x1] %v1805
      %v1807 = vld [vmem:[#allocation2] sm:$0xf]
      %v1808 = vld [vmem:[#allocation2 + $0x4] sm:$0xf]
      %v1809 = vld [vmem:[#allocation2 + $0x8] sm:$0x1]
      %v1810 = vld [vmem:[#allocation2 + $0xc] sm:$0xf]
      %v1811 = vld [vmem:[#allocation2 + $0x10] sm:$0xf]
      %v1812 = vld [vmem:[#allocation2 + $0x14] sm:$0x1]
      %v1813 = vld [vmem:[#allocation2 + $0x18] sm:$0xf]
      %v1814 = vld [vmem:[#allocation2 + $0x1c] sm:$0xf]
      %v1815 = vld [vmem:[#allocation2 + $0x20] sm:$0x1]
      %v1816 = vld [vmem:[#allocation2 + $0x24] sm:$0xf]
      %v1817 = vld [vmem:[#allocation2 + $0x28] sm:$0xf]
      %v1818 = vld [vmem:[#allocation2 + $0x2c] sm:$0x1]
      %v1819 = vld [vmem:[#allocation2 + $0x30] sm:$0xf]
      %v1820 = vld [vmem:[#allocation2 + $0x34] sm:$0xf]
      %v1821 = vld [vmem:[#allocation2 + $0x38] sm:$0x1]
      %v1822 = vld [vmem:[#allocation2 + $0x3c] sm:$0xf]
      %v1823 = vld [vmem:[#allocation2 + $0x40] sm:$0xf]
      %v1824 = vld [vmem:[#allocation2 + $0x44] sm:$0x1]
      %v1825 = vld [vmem:[#allocation2 + $0x48] sm:$0xf]
      %v1826 = vld [vmem:[#allocation2 + $0x4c] sm:$0xf]
      %v1827 = vld [vmem:[#allocation2 + $0x50] sm:$0x1]
      %v1828 = vld [vmem:[#allocation2 + $0x54] sm:$0xf]
      %v1829 = vld [vmem:[#allocation2 + $0x58] sm:$0xf]
      %v1830 = vld [vmem:[#allocation2 + $0x5c] sm:$0x1]
      %v1831 = vld [vmem:[#allocation2 + $0x60] sm:$0xf]
      %v1832 = vld [vmem:[#allocation2 + $0x64] sm:$0xf]
      %v1833 = vld [vmem:[#allocation2 + $0x68] sm:$0x1]
      %v1834 = vld [vmem:[#allocation2 + $0x6c] sm:$0xf]
      %v1835 = vld [vmem:[#allocation2 + $0x70] sm:$0xf]
      %v1836 = vld [vmem:[#allocation2 + $0x74] sm:$0x1]
      %v1837 = vld [vmem:[#allocation2 + $0x78] sm:$0xf]
      %v1838 = vld [vmem:[#allocation2 + $0x7c] sm:$0xf]
      %v1839 = vld [vmem:[#allocation2 + $0x80] sm:$0x1]
      %v1840 = vld [vmem:[#allocation2 + $0x84] sm:$0xf]
      %v1841 = vld [vmem:[#allocation2 + $0x88] sm:$0xf]
      %v1842 = vld [vmem:[#allocation2 + $0x8c] sm:$0x1]
      %v1843 = vld [vmem:[#allocation2 + $0x90] sm:$0xf]
      %v1844 = vld [vmem:[#allocation2 + $0x94] sm:$0xf]
      %v1845 = vld [vmem:[#allocation2 + $0x98] sm:$0x1]
      %v1846 = vld [vmem:[#allocation2 + $0x9c] sm:$0xf]
      %v1847 = vld [vmem:[#allocation2 + $0xa0] sm:$0xf]
      %v1848 = vld [vmem:[#allocation2 + $0xa4] sm:$0x1]
      %v1849 = vld [vmem:[#allocation2 + $0xa8] sm:$0xf]
      %v1850 = vld [vmem:[#allocation2 + $0xac] sm:$0xf]
      %v1851 = vld [vmem:[#allocation2 + $0xb0] sm:$0x1]
      %v1852 = vld [vmem:[#allocation2 + $0xb4] sm:$0xf]
      %v1853 = vld [vmem:[#allocation2 + $0xb8] sm:$0xf]
      %v1854 = vld [vmem:[#allocation2 + $0xbc] sm:$0x1]
      %v1855 = vld [vmem:[#allocation2 + $0xc0] sm:$0xf]
      %v1856 = vld [vmem:[#allocation2 + $0xc4] sm:$0xf]
      %v1857 = vld [vmem:[#allocation2 + $0xc8] sm:$0x1]
      %v1858 = vld [vmem:[#allocation2 + $0xcc] sm:$0xf]
      %v1859 = vld [vmem:[#allocation2 + $0xd0] sm:$0xf]
      %v1860 = vld [vmem:[#allocation2 + $0xd4] sm:$0x1]
      %v1893 = vunpack.c.l.b16 %v1807
      %v1894 = vunpack.c.l.b16 %v1808
      %v1895 = vunpack.c.l.b16 %v1810
      %v1896 = vunpack.c.l.b16 %v1811
      %v1897 = vunpack.c.l.b16 %v1813
      %v1898 = vunpack.c.l.b16 %v1814
      %v1899 = vunpack.c.l.b16 %v1816
      %v1900 = vunpack.c.l.b16 %v1817
      %v1901 = vunpack.c.l.b16 %v1819
      %v1902 = vunpack.c.l.b16 %v1820
      %v1903 = vunpack.c.l.b16 %v1822
      %v1904 = vunpack.c.l.b16 %v1823
      %v1905 = vunpack.c.l.b16 %v1825
      %v1906 = vunpack.c.l.b16 %v1826
      %v1907 = vunpack.c.l.b16 %v1828
      %v1908 = vunpack.c.l.b16 %v1829
      %v1909 = vunpack.c.l.b16 %v1831
      %v1910 = vunpack.c.l.b16 %v1832
      %v1911 = vunpack.c.l.b16 %v1834
      %v1912 = vunpack.c.l.b16 %v1835
      %v1913 = vunpack.c.l.b16 %v1837
      %v1914 = vunpack.c.l.b16 %v1838
      %v1915 = vunpack.c.l.b16 %v1840
      %v1916 = vunpack.c.l.b16 %v1841
      %v1917 = vunpack.c.l.b16 %v1843
      %v1918 = vunpack.c.l.b16 %v1844
      %v1919 = vunpack.c.l.b16 %v1846
      %v1920 = vunpack.c.l.b16 %v1847
      %v1921 = vunpack.c.l.b16 %v1849
      %v1922 = vunpack.c.l.b16 %v1850
      %v1923 = vunpack.c.l.b16 %v1852
      %v1924 = vunpack.c.l.b16 %v1853
      %v1925 = vpack.c.b16 %v1894, %v1893
      %v1926 = vpack.c.b16 %v1896, %v1895
      %v1927 = vpack.c.b16 %v1898, %v1897
      %v1928 = vpack.c.b16 %v1900, %v1899
      %v1929 = vpack.c.b16 %v1902, %v1901
      %v1930 = vpack.c.b16 %v1904, %v1903
      %v1931 = vpack.c.b16 %v1906, %v1905
      %v1932 = vpack.c.b16 %v1908, %v1907
      %v1933 = vpack.c.b16 %v1910, %v1909
      %v1934 = vpack.c.b16 %v1912, %v1911
      %v1935 = vpack.c.b16 %v1914, %v1913
      %v1936 = vpack.c.b16 %v1916, %v1915
      %v1937 = vpack.c.b16 %v1918, %v1917
      %v1938 = vpack.c.b16 %v1920, %v1919
      %v1939 = vpack.c.b16 %v1922, %v1921
      %v1940 = vpack.c.b16 %v1924, %v1923
      %v1957 = vunpack.c.l.b16 %v1809
      %v1958 = vunpack.c.l.b16 %v1812
      %v1959 = vunpack.c.l.b16 %v1815
      %v1960 = vunpack.c.l.b16 %v1818
      %v1961 = vunpack.c.l.b16 %v1821
      %v1962 = vunpack.c.l.b16 %v1824
      %v1963 = vunpack.c.l.b16 %v1827
      %v1964 = vunpack.c.l.b16 %v1830
      %v1965 = vunpack.c.l.b16 %v1833
      %v1966 = vunpack.c.l.b16 %v1836
      %v1967 = vunpack.c.l.b16 %v1839
      %v1968 = vunpack.c.l.b16 %v1842
      %v1969 = vunpack.c.l.b16 %v1845
      %v1970 = vunpack.c.l.b16 %v1848
      %v1971 = vunpack.c.l.b16 %v1851
      %v1972 = vunpack.c.l.b16 %v1854
      %v1973 = vpack.c.b16 %v1957, %v1957
      %v1974 = vpack.c.b16 %v1958, %v1958
      %v1975 = vpack.c.b16 %v1959, %v1959
      %v1976 = vpack.c.b16 %v1960, %v1960
      %v1977 = vpack.c.b16 %v1961, %v1961
      %v1978 = vpack.c.b16 %v1962, %v1962
      %v1979 = vpack.c.b16 %v1963, %v1963
      %v1980 = vpack.c.b16 %v1964, %v1964
      %v1981 = vpack.c.b16 %v1965, %v1965
      %v1982 = vpack.c.b16 %v1966, %v1966
      %v1983 = vpack.c.b16 %v1967, %v1967
      %v1984 = vpack.c.b16 %v1968, %v1968
      %v1985 = vpack.c.b16 %v1969, %v1969
      %v1986 = vpack.c.b16 %v1970, %v1970
      %v1987 = vpack.c.b16 %v1971, %v1971
      %v1988 = vpack.c.b16 %v1972, %v1972
      %vm1989 = vsmask.f32 7424
      %v1991 = vshrl.u32 %v1925, 16
      %v1993 = vshll.u32 %v1925, 16
      %v1995 = vrot.slane %v1993, 1
      %v1996 = vor.u32 %v1991, %v1995
      %v1998 = vshll.u32 %v1973, 16
      %v2000 = vrot.slane %v1998, 1
      %v2001 = vsel %vm1989, %v1996, %v2000
      %v2003 = vshrl.u32 %v1926, 16
      %v2005 = vshll.u32 %v1926, 16
      %v2007 = vrot.slane %v2005, 1
      %v2008 = vor.u32 %v2003, %v2007
      %v2010 = vshll.u32 %v1974, 16
      %v2012 = vrot.slane %v2010, 1
      %v2013 = vsel %vm1989, %v2008, %v2012
      %v2015 = vshrl.u32 %v1927, 16
      %v2017 = vshll.u32 %v1927, 16
      %v2019 = vrot.slane %v2017, 1
      %v2020 = vor.u32 %v2015, %v2019
      %v2022 = vshll.u32 %v1975, 16
      %v2024 = vrot.slane %v2022, 1
      %v2025 = vsel %vm1989, %v2020, %v2024
      %v2027 = vshrl.u32 %v1928, 16
      %v2029 = vshll.u32 %v1928, 16
      %v2031 = vrot.slane %v2029, 1
      %v2032 = vor.u32 %v2027, %v2031
      %v2034 = vshll.u32 %v1976, 16
      %v2036 = vrot.slane %v2034, 1
      %v2037 = vsel %vm1989, %v2032, %v2036
      %v2039 = vshrl.u32 %v1929, 16
      %v2041 = vshll.u32 %v1929, 16
      %v2043 = vrot.slane %v2041, 1
      %v2044 = vor.u32 %v2039, %v2043
      %v2046 = vshll.u32 %v1977, 16
      %v2048 = vrot.slane %v2046, 1
      %v2049 = vsel %vm1989, %v2044, %v2048
      %v2051 = vshrl.u32 %v1930, 16
      %v2053 = vshll.u32 %v1930, 16
      %v2055 = vrot.slane %v2053, 1
      %v2056 = vor.u32 %v2051, %v2055
      %v2058 = vshll.u32 %v1978, 16
      %v2060 = vrot.slane %v2058, 1
      %v2061 = vsel %vm1989, %v2056, %v2060
      %v2063 = vshrl.u32 %v1931, 16
      %v2065 = vshll.u32 %v1931, 16
      %v2067 = vrot.slane %v2065, 1
      %v2068 = vor.u32 %v2063, %v2067
      %v2070 = vshll.u32 %v1979, 16
      %v2072 = vrot.slane %v2070, 1
      %v2073 = vsel %vm1989, %v2068, %v2072
      %v2075 = vshrl.u32 %v1932, 16
      %v2077 = vshll.u32 %v1932, 16
      %v2079 = vrot.slane %v2077, 1
      %v2080 = vor.u32 %v2075, %v2079
      %v2082 = vshll.u32 %v1980, 16
      %v2084 = vrot.slane %v2082, 1
      %v2085 = vsel %vm1989, %v2080, %v2084
      %v2087 = vshrl.u32 %v1933, 16
      %v2089 = vshll.u32 %v1933, 16
      %v2091 = vrot.slane %v2089, 1
      %v2092 = vor.u32 %v2087, %v2091
      %v2094 = vshll.u32 %v1981, 16
      %v2096 = vrot.slane %v2094, 1
      %v2097 = vsel %vm1989, %v2092, %v2096
      %v2099 = vshrl.u32 %v1934, 16
      %v2101 = vshll.u32 %v1934, 16
      %v2103 = vrot.slane %v2101, 1
      %v2104 = vor.u32 %v2099, %v2103
      %v2106 = vshll.u32 %v1982, 16
      %v2108 = vrot.slane %v2106, 1
      %v2109 = vsel %vm1989, %v2104, %v2108
      %v2111 = vshrl.u32 %v1935, 16
      %v2113 = vshll.u32 %v1935, 16
      %v2115 = vrot.slane %v2113, 1
      %v2116 = vor.u32 %v2111, %v2115
      %v2118 = vshll.u32 %v1983, 16
      %v2120 = vrot.slane %v2118, 1
      %v2121 = vsel %vm1989, %v2116, %v2120
      %v2123 = vshrl.u32 %v1936, 16
      %v2125 = vshll.u32 %v1936, 16
      %v2127 = vrot.slane %v2125, 1
      %v2128 = vor.u32 %v2123, %v2127
      %v2130 = vshll.u32 %v1984, 16
      %v2132 = vrot.slane %v2130, 1
      %v2133 = vsel %vm1989, %v2128, %v2132
      %v2135 = vshrl.u32 %v1937, 16
      %v2137 = vshll.u32 %v1937, 16
      %v2139 = vrot.slane %v2137, 1
      %v2140 = vor.u32 %v2135, %v2139
      %v2142 = vshll.u32 %v1985, 16
      %v2144 = vrot.slane %v2142, 1
      %v2145 = vsel %vm1989, %v2140, %v2144
      %v2147 = vshrl.u32 %v1938, 16
      %v2149 = vshll.u32 %v1938, 16
      %v2151 = vrot.slane %v2149, 1
      %v2152 = vor.u32 %v2147, %v2151
      %v2154 = vshll.u32 %v1986, 16
      %v2156 = vrot.slane %v2154, 1
      %v2157 = vsel %vm1989, %v2152, %v2156
      %v2159 = vshrl.u32 %v1939, 16
      %v2161 = vshll.u32 %v1939, 16
      %v2163 = vrot.slane %v2161, 1
      %v2164 = vor.u32 %v2159, %v2163
      %v2166 = vshll.u32 %v1987, 16
      %v2168 = vrot.slane %v2166, 1
      %v2169 = vsel %vm1989, %v2164, %v2168
      %v2171 = vshrl.u32 %v1940, 16
      %v2173 = vshll.u32 %v1940, 16
      %v2175 = vrot.slane %v2173, 1
      %v2176 = vor.u32 %v2171, %v2175
      %v2178 = vshll.u32 %v1988, 16
      %v2180 = vrot.slane %v2178, 1
      %v2181 = vsel %vm1989, %v2176, %v2180
      %2182 = vrot.lane.b32.xlu0 %v2001, 8
      %v2183 = vpop.permute.xlu0 %2182
      %2184 = vrot.lane.b32.xlu0 %v2013, 8
      %v2185 = vpop.permute.xlu0 %2184
      %2186 = vrot.lane.b32.xlu0 %v2025, 8
      %v2187 = vpop.permute.xlu0 %2186
      %2188 = vrot.lane.b32.xlu0 %v2037, 8
      %v2189 = vpop.permute.xlu0 %2188
      %2190 = vrot.lane.b32.xlu0 %v2049, 8
      %v2191 = vpop.permute.xlu0 %2190
      %2192 = vrot.lane.b32.xlu0 %v2061, 8
      %v2193 = vpop.permute.xlu0 %2192
      %2194 = vrot.lane.b32.xlu0 %v2073, 8
      %v2195 = vpop.permute.xlu0 %2194
      %2196 = vrot.lane.b32.xlu0 %v2085, 8
      %v2197 = vpop.permute.xlu0 %2196
      %2198 = vrot.lane.b32.xlu0 %v2097, 8
      %v2199 = vpop.permute.xlu0 %2198
      %2200 = vrot.lane.b32.xlu0 %v2109, 8
      %v2201 = vpop.permute.xlu0 %2200
      %2202 = vrot.lane.b32.xlu0 %v2121, 8
      %v2203 = vpop.permute.xlu0 %2202
      %2204 = vrot.lane.b32.xlu0 %v2133, 8
      %v2205 = vpop.permute.xlu0 %2204
      %2206 = vrot.lane.b32.xlu0 %v2145, 8
      %v2207 = vpop.permute.xlu0 %2206
      %2208 = vrot.lane.b32.xlu0 %v2157, 8
      %v2209 = vpop.permute.xlu0 %2208
      %2210 = vrot.lane.b32.xlu0 %v2169, 8
      %v2211 = vpop.permute.xlu0 %2210
      %2212 = vrot.lane.b32.xlu0 %v2181, 8
      %v2213 = vpop.permute.xlu0 %2212
      %vm2214 = vcmask 1046528
      %v2215 = vrot.slane %v1925, 1
      %v2216 = vrot.slane %v1973, 1
      %v2217 = vsel %vm2214, %v2215, %v2216
      %v2218 = vrot.slane %v1926, 1
      %v2219 = vrot.slane %v1974, 1
      %v2220 = vsel %vm2214, %v2218, %v2219
      %v2221 = vrot.slane %v1927, 1
      %v2222 = vrot.slane %v1975, 1
      %v2223 = vsel %vm2214, %v2221, %v2222
      %v2224 = vrot.slane %v1928, 1
      %v2225 = vrot.slane %v1976, 1
      %v2226 = vsel %vm2214, %v2224, %v2225
      %v2227 = vrot.slane %v1929, 1
      %v2228 = vrot.slane %v1977, 1
      %v2229 = vsel %vm2214, %v2227, %v2228
      %v2230 = vrot.slane %v1930, 1
      %v2231 = vrot.slane %v1978, 1
      %v2232 = vsel %vm2214, %v2230, %v2231
      %v2233 = vrot.slane %v1931, 1
      %v2234 = vrot.slane %v1979, 1
      %v2235 = vsel %vm2214, %v2233, %v2234
      %v2236 = vrot.slane %v1932, 1
      %v2237 = vrot.slane %v1980, 1
      %v2238 = vsel %vm2214, %v2236, %v2237
      %v2239 = vrot.slane %v1933, 1
      %v2240 = vrot.slane %v1981, 1
      %v2241 = vsel %vm2214, %v2239, %v2240
      %v2242 = vrot.slane %v1934, 1
      %v2243 = vrot.slane %v1982, 1
      %v2244 = vsel %vm2214, %v2242, %v2243
      %v2245 = vrot.slane %v1935, 1
      %v2246 = vrot.slane %v1983, 1
      %v2247 = vsel %vm2214, %v2245, %v2246
      %v2248 = vrot.slane %v1936, 1
      %v2249 = vrot.slane %v1984, 1
      %v2250 = vsel %vm2214, %v2248, %v2249
      %v2251 = vrot.slane %v1937, 1
      %v2252 = vrot.slane %v1985, 1
      %v2253 = vsel %vm2214, %v2251, %v2252
      %v2254 = vrot.slane %v1938, 1
      %v2255 = vrot.slane %v1986, 1
      %v2256 = vsel %vm2214, %v2254, %v2255
      %v2257 = vrot.slane %v1939, 1
      %v2258 = vrot.slane %v1987, 1
      %v2259 = vsel %vm2214, %v2257, %v2258
      %v2260 = vrot.slane %v1940, 1
      %v2261 = vrot.slane %v1988, 1
      %v2262 = vsel %vm2214, %v2260, %v2261
      %2263 = vrot.lane.b32.xlu0 %v2217, 16
      %v2264 = vpop.permute.xlu0 %2263
      %2265 = vrot.lane.b32.xlu0 %v2220, 16
      %v2266 = vpop.permute.xlu0 %2265
      %2267 = vrot.lane.b32.xlu0 %v2223, 16
      %v2268 = vpop.permute.xlu0 %2267
      %2269 = vrot.lane.b32.xlu0 %v2226, 16
      %v2270 = vpop.permute.xlu0 %2269
      %2271 = vrot.lane.b32.xlu0 %v2229, 16
      %v2272 = vpop.permute.xlu0 %2271
      %2273 = vrot.lane.b32.xlu0 %v2232, 16
      %v2274 = vpop.permute.xlu0 %2273
      %2275 = vrot.lane.b32.xlu0 %v2235, 16
      %v2276 = vpop.permute.xlu0 %2275
      %2277 = vrot.lane.b32.xlu0 %v2238, 16
      %v2278 = vpop.permute.xlu0 %2277
      %2279 = vrot.lane.b32.xlu0 %v2241, 16
      %v2280 = vpop.permute.xlu0 %2279
      %2281 = vrot.lane.b32.xlu0 %v2244, 16
      %v2282 = vpop.permute.xlu0 %2281
      %2283 = vrot.lane.b32.xlu0 %v2247, 16
      %v2284 = vpop.permute.xlu0 %2283
      %2285 = vrot.lane.b32.xlu0 %v2250, 16
      %v2286 = vpop.permute.xlu0 %2285
      %2287 = vrot.lane.b32.xlu0 %v2253, 16
      %v2288 = vpop.permute.xlu0 %2287
      %2289 = vrot.lane.b32.xlu0 %v2256, 16
      %v2290 = vpop.permute.xlu0 %2289
      %2291 = vrot.lane.b32.xlu0 %v2259, 16
      %v2292 = vpop.permute.xlu0 %2291
      %2293 = vrot.lane.b32.xlu0 %v2262, 16
      %v2294 = vpop.permute.xlu0 %2293
      %v2297 = vunpack.c.l.b16 %v1855
      %v2298 = vunpack.c.l.b16 %v1856
      %v2299 = vpack.c.b16 %v2298, %v2297
      %2300 = vrot.lane.b32.xlu0 %v1926, 24
      %v2301 = vpop.permute.xlu0 %2300
      %2302 = vrot.lane.b32.xlu0 %v1927, 24
      %v2303 = vpop.permute.xlu0 %2302
      %2304 = vrot.lane.b32.xlu0 %v1928, 24
      %v2305 = vpop.permute.xlu0 %2304
      %2306 = vrot.lane.b32.xlu0 %v1929, 24
      %v2307 = vpop.permute.xlu0 %2306
      %2308 = vrot.lane.b32.xlu0 %v1930, 24
      %v2309 = vpop.permute.xlu0 %2308
      %2310 = vrot.lane.b32.xlu0 %v1931, 24
      %v2311 = vpop.permute.xlu0 %2310
      %2312 = vrot.lane.b32.xlu0 %v1932, 24
      %v2313 = vpop.permute.xlu0 %2312
      %2314 = vrot.lane.b32.xlu0 %v1933, 24
      %v2315 = vpop.permute.xlu0 %2314
      %2316 = vrot.lane.b32.xlu0 %v1934, 24
      %v2317 = vpop.permute.xlu0 %2316
      %2318 = vrot.lane.b32.xlu0 %v1935, 24
      %v2319 = vpop.permute.xlu0 %2318
      %2320 = vrot.lane.b32.xlu0 %v1936, 24
      %v2321 = vpop.permute.xlu0 %2320
      %2322 = vrot.lane.b32.xlu0 %v1937, 24
      %v2323 = vpop.permute.xlu0 %2322
      %2324 = vrot.lane.b32.xlu0 %v1938, 24
      %v2325 = vpop.permute.xlu0 %2324
      %2326 = vrot.lane.b32.xlu0 %v1939, 24
      %v2327 = vpop.permute.xlu0 %2326
      %2328 = vrot.lane.b32.xlu0 %v1940, 24
      %v2329 = vpop.permute.xlu0 %2328
      %2330 = vrot.lane.b32.xlu0 %v2299, 24
      %v2331 = vpop.permute.xlu0 %2330
      %v2333 = vunpack.c.l.b16 %v1857
      %v2334 = vpack.c.b16 %v2333, %v2333
      %v2336 = vshrl.u32 %v2299, 16
      %v2338 = vshll.u32 %v2299, 16
      %v2340 = vrot.slane %v2338, 1
      %v2341 = vor.u32 %v2336, %v2340
      %v2343 = vshll.u32 %v2334, 16
      %v2345 = vrot.slane %v2343, 1
      %v2346 = vsel %vm1989, %v2341, %v2345
      %2347 = vrot.lane.b32.xlu0 %v2013, 32
      %v2348 = vpop.permute.xlu0 %2347
      %2349 = vrot.lane.b32.xlu0 %v2025, 32
      %v2350 = vpop.permute.xlu0 %2349
      %2351 = vrot.lane.b32.xlu0 %v2037, 32
      %v2352 = vpop.permute.xlu0 %2351
      %2353 = vrot.lane.b32.xlu0 %v2049, 32
      %v2354 = vpop.permute.xlu0 %2353
      %2355 = vrot.lane.b32.xlu0 %v2061, 32
      %v2356 = vpop.permute.xlu0 %2355
      %2357 = vrot.lane.b32.xlu0 %v2073, 32
      %v2358 = vpop.permute.xlu0 %2357
      %2359 = vrot.lane.b32.xlu0 %v2085, 32
      %v2360 = vpop.permute.xlu0 %2359
      %2361 = vrot.lane.b32.xlu0 %v2097, 32
      %v2362 = vpop.permute.xlu0 %2361
      %2363 = vrot.lane.b32.xlu0 %v2109, 32
      %v2364 = vpop.permute.xlu0 %2363
      %2365 = vrot.lane.b32.xlu0 %v2121, 32
      %v2366 = vpop.permute.xlu0 %2365
      %2367 = vrot.lane.b32.xlu0 %v2133, 32
      %v2368 = vpop.permute.xlu0 %2367
      %2369 = vrot.lane.b32.xlu0 %v2145, 32
      %v2370 = vpop.permute.xlu0 %2369
      %2371 = vrot.lane.b32.xlu0 %v2157, 32
      %v2372 = vpop.permute.xlu0 %2371
      %2373 = vrot.lane.b32.xlu0 %v2169, 32
      %v2374 = vpop.permute.xlu0 %2373
      %2375 = vrot.lane.b32.xlu0 %v2181, 32
      %v2376 = vpop.permute.xlu0 %2375
      %2377 = vrot.lane.b32.xlu0 %v2346, 32
      %v2378 = vpop.permute.xlu0 %2377
      %v2379 = vrot.slane %v2299, 1
      %v2380 = vrot.slane %v2334, 1
      %v2381 = vsel %vm2214, %v2379, %v2380
      %2382 = vrot.lane.b32.xlu0 %v2220, 40
      %v2383 = vpop.permute.xlu0 %2382
      %2384 = vrot.lane.b32.xlu0 %v2223, 40
      %v2385 = vpop.permute.xlu0 %2384
      %2386 = vrot.lane.b32.xlu0 %v2226, 40
      %v2387 = vpop.permute.xlu0 %2386
      %2388 = vrot.lane.b32.xlu0 %v2229, 40
      %v2389 = vpop.permute.xlu0 %2388
      %2390 = vrot.lane.b32.xlu0 %v2232, 40
      %v2391 = vpop.permute.xlu0 %2390
      %2392 = vrot.lane.b32.xlu0 %v2235, 40
      %v2393 = vpop.permute.xlu0 %2392
      %2394 = vrot.lane.b32.xlu0 %v2238, 40
      %v2395 = vpop.permute.xlu0 %2394
      %2396 = vrot.lane.b32.xlu0 %v2241, 40
      %v2397 = vpop.permute.xlu0 %2396
      %2398 = vrot.lane.b32.xlu0 %v2244, 40
      %v2399 = vpop.permute.xlu0 %2398
      %2400 = vrot.lane.b32.xlu0 %v2247, 40
      %v2401 = vpop.permute.xlu0 %2400
      %2402 = vrot.lane.b32.xlu0 %v2250, 40
      %v2403 = vpop.permute.xlu0 %2402
      %2404 = vrot.lane.b32.xlu0 %v2253, 40
      %v2405 = vpop.permute.xlu0 %2404
      %2406 = vrot.lane.b32.xlu0 %v2256, 40
      %v2407 = vpop.permute.xlu0 %2406
      %2408 = vrot.lane.b32.xlu0 %v2259, 40
      %v2409 = vpop.permute.xlu0 %2408
      %2410 = vrot.lane.b32.xlu0 %v2262, 40
      %v2411 = vpop.permute.xlu0 %2410
      %2412 = vrot.lane.b32.xlu0 %v2381, 40
      %v2413 = vpop.permute.xlu0 %2412
      %v2416 = vunpack.c.l.b16 %v1858
      %v2417 = vunpack.c.l.b16 %v1859
      %v2418 = vpack.c.b16 %v2417, %v2416
      %2419 = vrot.lane.b32.xlu0 %v1927, 48
      %v2420 = vpop.permute.xlu0 %2419
      %2421 = vrot.lane.b32.xlu0 %v1928, 48
      %v2422 = vpop.permute.xlu0 %2421
      %2423 = vrot.lane.b32.xlu0 %v1929, 48
      %v2424 = vpop.permute.xlu0 %2423
      %2425 = vrot.lane.b32.xlu0 %v1930, 48
      %v2426 = vpop.permute.xlu0 %2425
      %2427 = vrot.lane.b32.xlu0 %v1931, 48
      %v2428 = vpop.permute.xlu0 %2427
      %2429 = vrot.lane.b32.xlu0 %v1932, 48
      %v2430 = vpop.permute.xlu0 %2429
      %2431 = vrot.lane.b32.xlu0 %v1933, 48
      %v2432 = vpop.permute.xlu0 %2431
      %2433 = vrot.lane.b32.xlu0 %v1934, 48
      %v2434 = vpop.permute.xlu0 %2433
      %2435 = vrot.lane.b32.xlu0 %v1935, 48
      %v2436 = vpop.permute.xlu0 %2435
      %2437 = vrot.lane.b32.xlu0 %v1936, 48
      %v2438 = vpop.permute.xlu0 %2437
      %2439 = vrot.lane.b32.xlu0 %v1937, 48
      %v2440 = vpop.permute.xlu0 %2439
      %2441 = vrot.lane.b32.xlu0 %v1938, 48
      %v2442 = vpop.permute.xlu0 %2441
      %2443 = vrot.lane.b32.xlu0 %v1939, 48
      %v2444 = vpop.permute.xlu0 %2443
      %2445 = vrot.lane.b32.xlu0 %v1940, 48
      %v2446 = vpop.permute.xlu0 %2445
      %2447 = vrot.lane.b32.xlu0 %v2299, 48
      %v2448 = vpop.permute.xlu0 %2447
      %2449 = vrot.lane.b32.xlu0 %v2418, 48
      %v2450 = vpop.permute.xlu0 %2449
      %v2452 = vunpack.c.l.b16 %v1860
      %v2453 = vpack.c.b16 %v2452, %v2452
      %v2455 = vshrl.u32 %v2418, 16
      %v2457 = vshll.u32 %v2418, 16
      %v2459 = vrot.slane %v2457, 1
      %v2460 = vor.u32 %v2455, %v2459
      %v2462 = vshll.u32 %v2453, 16
      %v2464 = vrot.slane %v2462, 1
      %v2465 = vsel %vm1989, %v2460, %v2464
      %2466 = vrot.lane.b32.xlu0 %v2025, 56
      %v2467 = vpop.permute.xlu0 %2466
      %2468 = vrot.lane.b32.xlu0 %v2037, 56
      %v2469 = vpop.permute.xlu0 %2468
      %2470 = vrot.lane.b32.xlu0 %v2049, 56
      %v2471 = vpop.permute.xlu0 %2470
      %2472 = vrot.lane.b32.xlu0 %v2061, 56
      %v2473 = vpop.permute.xlu0 %2472
      %2474 = vrot.lane.b32.xlu0 %v2073, 56
      %v2475 = vpop.permute.xlu0 %2474
      %2476 = vrot.lane.b32.xlu0 %v2085, 56
      %v2477 = vpop.permute.xlu0 %2476
      %2478 = vrot.lane.b32.xlu0 %v2097, 56
      %v2479 = vpop.permute.xlu0 %2478
      %2480 = vrot.lane.b32.xlu0 %v2109, 56
      %v2481 = vpop.permute.xlu0 %2480
      %2482 = vrot.lane.b32.xlu0 %v2121, 56
      %v2483 = vpop.permute.xlu0 %2482
      %2484 = vrot.lane.b32.xlu0 %v2133, 56
      %v2485 = vpop.permute.xlu0 %2484
      %2486 = vrot.lane.b32.xlu0 %v2145, 56
      %v2487 = vpop.permute.xlu0 %2486
      %2488 = vrot.lane.b32.xlu0 %v2157, 56
      %v2489 = vpop.permute.xlu0 %2488
      %2490 = vrot.lane.b32.xlu0 %v2169, 56
      %v2491 = vpop.permute.xlu0 %2490
      %2492 = vrot.lane.b32.xlu0 %v2181, 56
      %v2493 = vpop.permute.xlu0 %2492
      %2494 = vrot.lane.b32.xlu0 %v2346, 56
      %v2495 = vpop.permute.xlu0 %2494
      %2496 = vrot.lane.b32.xlu0 %v2465, 56
      %v2497 = vpop.permute.xlu0 %2496
      %v2498 = vrot.slane %v2418, 1
      %v2499 = vrot.slane %v2453, 1
      %v2500 = vsel %vm2214, %v2498, %v2499
      %2501 = vrot.lane.b32.xlu0 %v2223, 64
      %v2502 = vpop.permute.xlu0 %2501
      %2503 = vrot.lane.b32.xlu0 %v2226, 64
      %v2504 = vpop.permute.xlu0 %2503
      %2505 = vrot.lane.b32.xlu0 %v2229, 64
      %v2506 = vpop.permute.xlu0 %2505
      %2507 = vrot.lane.b32.xlu0 %v2232, 64
      %v2508 = vpop.permute.xlu0 %2507
      %2509 = vrot.lane.b32.xlu0 %v2235, 64
      %v2510 = vpop.permute.xlu0 %2509
      %2511 = vrot.lane.b32.xlu0 %v2238, 64
      %v2512 = vpop.permute.xlu0 %2511
      %2513 = vrot.lane.b32.xlu0 %v2241, 64
      %v2514 = vpop.permute.xlu0 %2513
      %2515 = vrot.lane.b32.xlu0 %v2244, 64
      %v2516 = vpop.permute.xlu0 %2515
      %2517 = vrot.lane.b32.xlu0 %v2247, 64
      %v2518 = vpop.permute.xlu0 %2517
      %2519 = vrot.lane.b32.xlu0 %v2250, 64
      %v2520 = vpop.permute.xlu0 %2519
      %2521 = vrot.lane.b32.xlu0 %v2253, 64
      %v2522 = vpop.permute.xlu0 %2521
      %2523 = vrot.lane.b32.xlu0 %v2256, 64
      %v2524 = vpop.permute.xlu0 %2523
      %2525 = vrot.lane.b32.xlu0 %v2259, 64
      %v2526 = vpop.permute.xlu0 %2525
      %2527 = vrot.lane.b32.xlu0 %v2262, 64
      %v2528 = vpop.permute.xlu0 %2527
      %2529 = vrot.lane.b32.xlu0 %v2381, 64
      %v2530 = vpop.permute.xlu0 %2529
      %2531 = vrot.lane.b32.xlu0 %v2500, 64
      %v2532 = vpop.permute.xlu0 %2531
      %v2534 = vsel %vm423, %v1925, %v2183
      %v2536 = vsel %vm423, %v1926, %v2185
      %v2538 = vsel %vm423, %v1927, %v2187
      %v2540 = vsel %vm423, %v1928, %v2189
      %v2542 = vsel %vm423, %v1929, %v2191
      %v2544 = vsel %vm423, %v1930, %v2193
      %v2546 = vsel %vm423, %v1931, %v2195
      %v2548 = vsel %vm423, %v1932, %v2197
      %v2550 = vsel %vm423, %v1933, %v2199
      %v2552 = vsel %vm423, %v1934, %v2201
      %v2554 = vsel %vm423, %v1935, %v2203
      %v2556 = vsel %vm423, %v1936, %v2205
      %v2558 = vsel %vm423, %v1937, %v2207
      %v2560 = vsel %vm423, %v1938, %v2209
      %v2562 = vsel %vm423, %v1939, %v2211
      %v2564 = vsel %vm423, %v1940, %v2213
      %vm2565 = vcmask 130048
      %v2567 = vsel %vm2565, %v2534, %v2264
      %v2569 = vsel %vm2565, %v2536, %v2266
      %v2571 = vsel %vm2565, %v2538, %v2268
      %v2573 = vsel %vm2565, %v2540, %v2270
      %v2575 = vsel %vm2565, %v2542, %v2272
      %v2577 = vsel %vm2565, %v2544, %v2274
      %v2579 = vsel %vm2565, %v2546, %v2276
      %v2581 = vsel %vm2565, %v2548, %v2278
      %v2583 = vsel %vm2565, %v2550, %v2280
      %v2585 = vsel %vm2565, %v2552, %v2282
      %v2587 = vsel %vm2565, %v2554, %v2284
      %v2589 = vsel %vm2565, %v2556, %v2286
      %v2591 = vsel %vm2565, %v2558, %v2288
      %v2593 = vsel %vm2565, %v2560, %v2290
      %v2595 = vsel %vm2565, %v2562, %v2292
      %v2597 = vsel %vm2565, %v2564, %v2294
      %vm2598 = vcmask 195584
      %v2600 = vsel %vm2598, %v2567, %v2301
      %v2602 = vsel %vm2598, %v2569, %v2303
      %v2604 = vsel %vm2598, %v2571, %v2305
      %v2606 = vsel %vm2598, %v2573, %v2307
      %v2608 = vsel %vm2598, %v2575, %v2309
      %v2610 = vsel %vm2598, %v2577, %v2311
      %v2612 = vsel %vm2598, %v2579, %v2313
      %v2614 = vsel %vm2598, %v2581, %v2315
      %v2616 = vsel %vm2598, %v2583, %v2317
      %v2618 = vsel %vm2598, %v2585, %v2319
      %v2620 = vsel %vm2598, %v2587, %v2321
      %v2622 = vsel %vm2598, %v2589, %v2323
      %v2624 = vsel %vm2598, %v2591, %v2325
      %v2626 = vsel %vm2598, %v2593, %v2327
      %v2628 = vsel %vm2598, %v2595, %v2329
      %v2630 = vsel %vm2598, %v2597, %v2331
      %vm2631 = vcmask 261120
      %v2633 = vsel %vm2631, %v2600, %v2348
      %v2635 = vsel %vm2631, %v2602, %v2350
      %v2637 = vsel %vm2631, %v2604, %v2352
      %v2639 = vsel %vm2631, %v2606, %v2354
      %v2641 = vsel %vm2631, %v2608, %v2356
      %v2643 = vsel %vm2631, %v2610, %v2358
      %v2645 = vsel %vm2631, %v2612, %v2360
      %v2647 = vsel %vm2631, %v2614, %v2362
      %v2649 = vsel %vm2631, %v2616, %v2364
      %v2651 = vsel %vm2631, %v2618, %v2366
      %v2653 = vsel %vm2631, %v2620, %v2368
      %v2655 = vsel %vm2631, %v2622, %v2370
      %v2657 = vsel %vm2631, %v2624, %v2372
      %v2659 = vsel %vm2631, %v2626, %v2374
      %v2661 = vsel %vm2631, %v2628, %v2376
      %v2663 = vsel %vm2631, %v2630, %v2378
      %vm2664 = vcmask 326656
      %v2666 = vsel %vm2664, %v2633, %v2383
      %v2668 = vsel %vm2664, %v2635, %v2385
      %v2670 = vsel %vm2664, %v2637, %v2387
      %v2672 = vsel %vm2664, %v2639, %v2389
      %v2674 = vsel %vm2664, %v2641, %v2391
      %v2676 = vsel %vm2664, %v2643, %v2393
      %v2678 = vsel %vm2664, %v2645, %v2395
      %v2680 = vsel %vm2664, %v2647, %v2397
      %v2682 = vsel %vm2664, %v2649, %v2399
      %v2684 = vsel %vm2664, %v2651, %v2401
      %v2686 = vsel %vm2664, %v2653, %v2403
      %v2688 = vsel %vm2664, %v2655, %v2405
      %v2690 = vsel %vm2664, %v2657, %v2407
      %v2692 = vsel %vm2664, %v2659, %v2409
      %v2694 = vsel %vm2664, %v2661, %v2411
      %v2696 = vsel %vm2664, %v2663, %v2413
      %vm2697 = vcmask 392192
      %v2699 = vsel %vm2697, %v2666, %v2420
      %v2701 = vsel %vm2697, %v2668, %v2422
      %v2703 = vsel %vm2697, %v2670, %v2424
      %v2705 = vsel %vm2697, %v2672, %v2426
      %v2707 = vsel %vm2697, %v2674, %v2428
      %v2709 = vsel %vm2697, %v2676, %v2430
      %v2711 = vsel %vm2697, %v2678, %v2432
      %v2713 = vsel %vm2697, %v2680, %v2434
      %v2715 = vsel %vm2697, %v2682, %v2436
      %v2717 = vsel %vm2697, %v2684, %v2438
      %v2719 = vsel %vm2697, %v2686, %v2440
      %v2721 = vsel %vm2697, %v2688, %v2442
      %v2723 = vsel %vm2697, %v2690, %v2444
      %v2725 = vsel %vm2697, %v2692, %v2446
      %v2727 = vsel %vm2697, %v2694, %v2448
      %v2729 = vsel %vm2697, %v2696, %v2450
      %vm2730 = vcmask 457728
      %v2732 = vsel %vm2730, %v2699, %v2467
      %v2734 = vsel %vm2730, %v2701, %v2469
      %v2736 = vsel %vm2730, %v2703, %v2471
      %v2738 = vsel %vm2730, %v2705, %v2473
      %v2740 = vsel %vm2730, %v2707, %v2475
      %v2742 = vsel %vm2730, %v2709, %v2477
      %v2744 = vsel %vm2730, %v2711, %v2479
      %v2746 = vsel %vm2730, %v2713, %v2481
      %v2748 = vsel %vm2730, %v2715, %v2483
      %v2750 = vsel %vm2730, %v2717, %v2485
      %v2752 = vsel %vm2730, %v2719, %v2487
      %v2754 = vsel %vm2730, %v2721, %v2489
      %v2756 = vsel %vm2730, %v2723, %v2491
      %v2758 = vsel %vm2730, %v2725, %v2493
      %v2760 = vsel %vm2730, %v2727, %v2495
      %v2762 = vsel %vm2730, %v2729, %v2497
      %vm2763 = vcmask 523264
      %v2765 = vsel %vm2763, %v2732, %v2502
      %v2767 = vsel %vm2763, %v2734, %v2504
      %v2769 = vsel %vm2763, %v2736, %v2506
      %v2771 = vsel %vm2763, %v2738, %v2508
      %v2773 = vsel %vm2763, %v2740, %v2510
      %v2775 = vsel %vm2763, %v2742, %v2512
      %v2777 = vsel %vm2763, %v2744, %v2514
      %v2779 = vsel %vm2763, %v2746, %v2516
      %v2781 = vsel %vm2763, %v2748, %v2518
      %v2783 = vsel %vm2763, %v2750, %v2520
      %v2785 = vsel %vm2763, %v2752, %v2522
      %v2787 = vsel %vm2763, %v2754, %v2524
      %v2789 = vsel %vm2763, %v2756, %v2526
      %v2791 = vsel %vm2763, %v2758, %v2528
      %v2793 = vsel %vm2763, %v2760, %v2530
      %v2795 = vsel %vm2763, %v2762, %v2532
      %v2796 = vld [vmem:[%s4] sm:$0xf]
      %v2797 = vld [vmem:[%s4 + $0x4] sm:$0xf]
      %v2798 = vld [vmem:[%s4 + $0x8] sm:$0xf]
      %v2799 = vld [vmem:[%s4 + $0xc] sm:$0xf]
      %v2800 = vld [vmem:[%s4 + $0x10] sm:$0xf]
      %v2801 = vld [vmem:[%s4 + $0x14] sm:$0xf]
      %v2802 = vld [vmem:[%s4 + $0x18] sm:$0xf]
      %v2803 = vld [vmem:[%s4 + $0x1c] sm:$0xf]
      %v2804 = vld [vmem:[%s4 + $0x20] sm:$0xf]
      %v2805 = vld [vmem:[%s5] sm:$0x1]
      %v2807 = vlaneseq
      %v2808 = vshrl.u32 %v2807, 7
      %v2809 = vsub.s32 0, %v2808
      %v2810 = vrot.slane %v2805, %v2809
      %v2821 = vunpack.c.l.b16 %v2796
      %v2822 = vunpack.c.l.b16 %v2797
      %v2823 = vunpack.c.l.b16 %v2798
      %v2824 = vunpack.c.l.b16 %v2799
      %v2825 = vunpack.c.l.b16 %v2800
      %v2826 = vunpack.c.l.b16 %v2801
      %v2827 = vunpack.c.l.b16 %v2802
      %v2828 = vunpack.c.l.b16 %v2803
      %v2829 = vunpack.c.l.b16 %v2804
      %v2830 = vpack.c.b16 %v2822, %v2821
      %v2831 = vpack.c.b16 %v2824, %v2823
      %v2832 = vpack.c.b16 %v2826, %v2825
      %v2833 = vpack.c.b16 %v2828, %v2827
      %v2834 = vpack.c.b16 %v2829, %v2829
      %vm2839 = vcmask 588800
      %v2840 = vsel %vm2839, %v2765, 0
      %v2842 = vsel %vm2839, %v2767, 0
      %v2844 = vsel %vm2839, %v2769, 0
      %v2846 = vsel %vm2839, %v2771, 0
      %v2848 = vsel %vm2839, %v2773, 0
      %v2850 = vsel %vm2839, %v2775, 0
      %v2852 = vsel %vm2839, %v2777, 0
      %v2854 = vsel %vm2839, %v2779, 0
      %v2856 = vsel %vm2839, %v2781, 0
      %v2858 = vsel %vm2839, %v2783, 0
      %v2860 = vsel %vm2839, %v2785, 0
      %v2862 = vsel %vm2839, %v2787, 0
      %v2864 = vsel %vm2839, %v2789, 0
      %v2866 = vsel %vm2839, %v2791, 0
      %v2868 = vsel %vm2839, %v2793, 0
      %v2870 = vsel %vm2839, %v2795, 0
      %v2873 = vsel %vm672, %v2834, 0
      %2875 = vmatprep.subr.bf16.mxu0 0
      %2876 = vmatpush1.bf16.msra.mxu0 0
      %2877 = vmatprep.subr.bf16.mxu0 0
      %2878 = vmatpush1.bf16.msra.mxu0 0
      %2879 = vmatprep.subr.bf16.mxu0 0
      %2880 = vmatpush1.bf16.msra.mxu0 0
      %2881 = vmatprep.subr.bf16.mxu0 0
      %2882 = vmatpush1.bf16.msra.mxu0 %v2873
      %2883 = vmatprep.subr.bf16.mxu0 0
      %2884 = vmatpush1.bf16.msra.mxu0 %v2833
      %2885 = vmatprep.subr.bf16.mxu0 0
      %2886 = vmatpush1.bf16.msra.mxu0 %v2832
      %2887 = vmatprep.subr.bf16.mxu0 0
      %2888 = vmatpush1.bf16.msra.mxu0 %v2831
      %2889 = vmatprep.subr.bf16.mxu0 0
      %2890 = vmatpush1.bf16.msra.mxu0 %v2830
      %2891 = vmatprep.subr.bf16.mxu0 0
      %2892 = vmatpush2.bf16.msra.mxu0 0
      %2893 = vmatprep.subr.bf16.mxu0 0
      %2894 = vmatpush2.bf16.msra.mxu0 0
      %2895 = vmatprep.subr.bf16.mxu0 0
      %2896 = vmatpush2.bf16.msra.mxu0 0
      %2897 = vmatprep.subr.bf16.mxu0 0
      %2898 = vmatpush2.bf16.msra.mxu0 0
      %2899 = vmatprep.subr.bf16.mxu0 0
      %2900 = vmatpush2.bf16.msra.mxu0 0
      %2901 = vmatprep.subr.bf16.mxu0 0
      %2902 = vmatpush2.bf16.msra.mxu0 0
      %2903 = vmatprep.subr.bf16.mxu0 0
      %2904 = vmatpush2.bf16.msra.mxu0 0
      %2905 = vmatprep.subr.bf16.mxu0 0
      %2906 = vmatpush2.bf16.msra.mxu0 0
      %2907 = vmatprep.mubr.bf16.mxu0 0
      %2908 = vmatmul.mubr.bf16.gmra.mxu0 %v2840
      %v2909 = vpop.f32.mrf.mxu0
      %v2910 = vadd.f32 %v2810, %v2909
      %v2911 = vpop.f32.mrf.mxu0
      %v2912 = vpop.f32.mrf.mxu0
      %v2913 = vadd.f32 %v2810, %v2912
      %v2914 = vpop.f32.mrf.mxu0
      %2915 = vmatprep.mubr.bf16.mxu0 0
      %2916 = vmatmul.mubr.bf16.gmra.mxu0 %v2842
      %v2917 = vpop.f32.mrf.mxu0
      %v2918 = vadd.f32 %v2810, %v2917
      %v2919 = vpop.f32.mrf.mxu0
      %v2920 = vpop.f32.mrf.mxu0
      %v2921 = vadd.f32 %v2810, %v2920
      %v2922 = vpop.f32.mrf.mxu0
      %2923 = vmatprep.mubr.bf16.mxu0 0
      %2924 = vmatmul.mubr.bf16.gmra.mxu0 %v2844
      %v2925 = vpop.f32.mrf.mxu0
      %v2926 = vadd.f32 %v2810, %v2925
      %v2927 = vpop.f32.mrf.mxu0
      %v2928 = vpop.f32.mrf.mxu0
      %v2929 = vadd.f32 %v2810, %v2928
      %v2930 = vpop.f32.mrf.mxu0
      %2931 = vmatprep.mubr.bf16.mxu0 0
      %2932 = vmatmul.mubr.bf16.gmra.mxu0 %v2846
      %v2933 = vpop.f32.mrf.mxu0
      %v2934 = vadd.f32 %v2810, %v2933
      %v2935 = vpop.f32.mrf.mxu0
      %v2936 = vpop.f32.mrf.mxu0
      %v2937 = vadd.f32 %v2810, %v2936
      %v2938 = vpop.f32.mrf.mxu0
      %2939 = vmatprep.mubr.bf16.mxu0 0
      %2940 = vmatmul.mubr.bf16.gmra.mxu0 %v2848
      %v2941 = vpop.f32.mrf.mxu0
      %v2942 = vadd.f32 %v2810, %v2941
      %v2943 = vpop.f32.mrf.mxu0
      %v2944 = vpop.f32.mrf.mxu0
      %v2945 = vadd.f32 %v2810, %v2944
      %v2946 = vpop.f32.mrf.mxu0
      %2947 = vmatprep.mubr.bf16.mxu0 0
      %2948 = vmatmul.mubr.bf16.gmra.mxu0 %v2850
      %v2949 = vpop.f32.mrf.mxu0
      %v2950 = vadd.f32 %v2810, %v2949
      %v2951 = vpop.f32.mrf.mxu0
      %v2952 = vpop.f32.mrf.mxu0
      %v2953 = vadd.f32 %v2810, %v2952
      %v2954 = vpop.f32.mrf.mxu0
      %2955 = vmatprep.mubr.bf16.mxu0 0
      %2956 = vmatmul.mubr.bf16.gmra.mxu0 %v2852
      %v2957 = vpop.f32.mrf.mxu0
      %v2958 = vadd.f32 %v2810, %v2957
      %v2959 = vpop.f32.mrf.mxu0
      %v2960 = vpop.f32.mrf.mxu0
      %v2961 = vadd.f32 %v2810, %v2960
      %v2962 = vpop.f32.mrf.mxu0
      %2963 = vmatprep.mubr.bf16.mxu0 0
      %2964 = vmatmul.mubr.bf16.gmra.mxu0 %v2854
      %v2965 = vpop.f32.mrf.mxu0
      %v2966 = vadd.f32 %v2810, %v2965
      %v2967 = vpop.f32.mrf.mxu0
      %v2968 = vpop.f32.mrf.mxu0
      %v2969 = vadd.f32 %v2810, %v2968
      %v2970 = vpop.f32.mrf.mxu0
      %2971 = vmatprep.mubr.bf16.mxu0 0
      %2972 = vmatmul.mubr.bf16.gmra.mxu0 %v2856
      %v2973 = vpop.f32.mrf.mxu0
      %v2974 = vadd.f32 %v2810, %v2973
      %v2975 = vpop.f32.mrf.mxu0
      %v2976 = vpop.f32.mrf.mxu0
      %v2977 = vadd.f32 %v2810, %v2976
      %v2978 = vpop.f32.mrf.mxu0
      %2979 = vmatprep.mubr.bf16.mxu0 0
      %2980 = vmatmul.mubr.bf16.gmra.mxu0 %v2858
      %v2981 = vpop.f32.mrf.mxu0
      %v2982 = vadd.f32 %v2810, %v2981
      %v2983 = vpop.f32.mrf.mxu0
      %v2984 = vpop.f32.mrf.mxu0
      %v2985 = vadd.f32 %v2810, %v2984
      %v2986 = vpop.f32.mrf.mxu0
      %2987 = vmatprep.mubr.bf16.mxu0 0
      %2988 = vmatmul.mubr.bf16.gmra.mxu0 %v2860
      %v2989 = vpop.f32.mrf.mxu0
      %v2990 = vadd.f32 %v2810, %v2989
      %v2991 = vpop.f32.mrf.mxu0
      %v2992 = vpop.f32.mrf.mxu0
      %v2993 = vadd.f32 %v2810, %v2992
      %v2994 = vpop.f32.mrf.mxu0
      %2995 = vmatprep.mubr.bf16.mxu0 0
      %2996 = vmatmul.mubr.bf16.gmra.mxu0 %v2862
      %v2997 = vpop.f32.mrf.mxu0
      %v2998 = vadd.f32 %v2810, %v2997
      %v2999 = vpop.f32.mrf.mxu0
      %v3000 = vpop.f32.mrf.mxu0
      %v3001 = vadd.f32 %v2810, %v3000
      %v3002 = vpop.f32.mrf.mxu0
      %3003 = vmatprep.mubr.bf16.mxu0 0
      %3004 = vmatmul.mubr.bf16.gmra.mxu0 %v2864
      %v3005 = vpop.f32.mrf.mxu0
      %v3006 = vadd.f32 %v2810, %v3005
      %v3007 = vpop.f32.mrf.mxu0
      %v3008 = vpop.f32.mrf.mxu0
      %v3009 = vadd.f32 %v2810, %v3008
      %v3010 = vpop.f32.mrf.mxu0
      %3011 = vmatprep.mubr.bf16.mxu0 0
      %3012 = vmatmul.mubr.bf16.gmra.mxu0 %v2866
      %v3013 = vpop.f32.mrf.mxu0
      %v3014 = vadd.f32 %v2810, %v3013
      %v3015 = vpop.f32.mrf.mxu0
      %v3016 = vpop.f32.mrf.mxu0
      %v3017 = vadd.f32 %v2810, %v3016
      %v3018 = vpop.f32.mrf.mxu0
      %3019 = vmatprep.mubr.bf16.mxu0 0
      %3020 = vmatmul.mubr.bf16.gmra.mxu0 %v2868
      %v3021 = vpop.f32.mrf.mxu0
      %v3022 = vadd.f32 %v2810, %v3021
      %v3023 = vpop.f32.mrf.mxu0
      %v3024 = vpop.f32.mrf.mxu0
      %v3025 = vadd.f32 %v2810, %v3024
      %v3026 = vpop.f32.mrf.mxu0
      %3027 = vmatprep.mubr.bf16.mxu0 0
      %3028 = vmatmul.mubr.bf16.gmra.mxu0 %v2870
      %v3029 = vpop.f32.mrf.mxu0
      %v3030 = vadd.f32 %v2810, %v3029
      %v3031 = vpop.f32.mrf.mxu0
      %v3032 = vpop.f32.mrf.mxu0
      %v3033 = vadd.f32 %v2810, %v3032
      %v3034 = vpop.f32.mrf.mxu0
      %3035 = vdwg.mxu0
      %v3036 = vsel %vm423, %v1278, 0.0
      %v3037 = vsel %vm423, %v1279, 0.0
      %v3038 = vadd.f32 %v3036, %v3037
      %v3039 = vsel %vm423, %v1280, 0.0
      %v3040 = vadd.f32 %v3038, %v3039
      %v3041 = vsel %vm423, %v1281, 0.0
      %v3042 = vadd.f32 %v3040, %v3041
      %v3043 = vsel %vm423, %v1282, 0.0
      %v3044 = vadd.f32 %v3042, %v3043
      %v3045 = vsel %vm423, %v1283, 0.0
      %v3046 = vadd.f32 %v3044, %v3045
      %v3047 = vsel %vm423, %v1284, 0.0
      %v3048 = vadd.f32 %v3046, %v3047
      %v3049 = vsel %vm423, %v1285, 0.0
      %v3050 = vadd.f32 %v3048, %v3049
      %v3051 = vsel %vm423, %v1286, 0.0
      %v3052 = vadd.f32 %v3050, %v3051
      %v3053 = vsel %vm423, %v1287, 0.0
      %v3054 = vadd.f32 %v3052, %v3053
      %v3055 = vsel %vm423, %v1288, 0.0
      %v3056 = vadd.f32 %v3054, %v3055
      %v3057 = vsel %vm423, %v1289, 0.0
      %v3058 = vadd.f32 %v3056, %v3057
      %v3059 = vsel %vm423, %v1290, 0.0
      %v3060 = vadd.f32 %v3058, %v3059
      %v3061 = vsel %vm423, %v1291, 0.0
      %v3062 = vadd.f32 %v3060, %v3061
      %v3063 = vsel %vm423, %v1292, 0.0
      %v3064 = vadd.f32 %v3062, %v3063
      %v3065 = vsel %vm423, %v1293, 0.0
      %v3066 = vadd.f32 %v3064, %v3065
      %v3067 = vsel %vm423, %v1294, 0.0
      %v3068 = vadd.f32 %v3066, %v3067
      %v3069 = vsel %vm423, %v1295, 0.0
      %v3070 = vadd.f32 %v3068, %v3069
      %v3071 = vsel %vm423, %v1296, 0.0
      %v3072 = vadd.f32 %v3070, %v3071
      %v3073 = vsel %vm423, %v1297, 0.0
      %v3074 = vadd.f32 %v3072, %v3073
      %v3075 = vsel %vm423, %v1298, 0.0
      %v3076 = vadd.f32 %v3074, %v3075
      %v3077 = vsel %vm423, %v1299, 0.0
      %v3078 = vadd.f32 %v3076, %v3077
      %v3079 = vsel %vm423, %v1300, 0.0
      %v3080 = vadd.f32 %v3078, %v3079
      %v3081 = vsel %vm423, %v1301, 0.0
      %v3082 = vadd.f32 %v3080, %v3081
      %v3083 = vsel %vm423, %v1302, 0.0
      %v3084 = vadd.f32 %v3082, %v3083
      %v3085 = vsel %vm423, %v1303, 0.0
      %v3086 = vadd.f32 %v3084, %v3085
      %v3087 = vsel %vm423, %v1304, 0.0
      %v3088 = vadd.f32 %v3086, %v3087
      %v3089 = vsel %vm423, %v1305, 0.0
      %v3090 = vadd.f32 %v3088, %v3089
      %v3091 = vsel %vm423, %v1306, 0.0
      %v3092 = vadd.f32 %v3090, %v3091
      %v3093 = vsel %vm423, %v1307, 0.0
      %v3094 = vadd.f32 %v3092, %v3093
      %v3095 = vsel %vm423, %v1308, 0.0
      %v3096 = vadd.f32 %v3094, %v3095
      %v3097 = vsel %vm423, %v1309, 0.0
      %v3098 = vadd.f32 %v3096, %v3097
      %v3099 = vrot.slane %v3098, 4
      %v3100 = vadd.f32 %v3098, %v3099
      %v3101 = vrot.slane %v3100, 2
      %v3102 = vadd.f32 %v3100, %v3101
      %v3103 = vrot.slane %v3102, 1
      %v3104 = vadd.f32 %v3102, %v3103
      %v3105 = vmul.f32 %v3104, %v1062
      %v3106 = vsel %vm423, %v2910, 0.0
      %v3107 = vsel %vm423, %v2913, 0.0
      %v3108 = vadd.f32 %v3106, %v3107
      %v3109 = vsel %vm423, %v2918, 0.0
      %v3110 = vadd.f32 %v3108, %v3109
      %v3111 = vsel %vm423, %v2921, 0.0
      %v3112 = vadd.f32 %v3110, %v3111
      %v3113 = vsel %vm423, %v2926, 0.0
      %v3114 = vadd.f32 %v3112, %v3113
      %v3115 = vsel %vm423, %v2929, 0.0
      %v3116 = vadd.f32 %v3114, %v3115
      %v3117 = vsel %vm423, %v2934, 0.0
      %v3118 = vadd.f32 %v3116, %v3117
      %v3119 = vsel %vm423, %v2937, 0.0
      %v3120 = vadd.f32 %v3118, %v3119
      %v3121 = vsel %vm423, %v2942, 0.0
      %v3122 = vadd.f32 %v3120, %v3121
      %v3123 = vsel %vm423, %v2945, 0.0
      %v3124 = vadd.f32 %v3122, %v3123
      %v3125 = vsel %vm423, %v2950, 0.0
      %v3126 = vadd.f32 %v3124, %v3125
      %v3127 = vsel %vm423, %v2953, 0.0
      %v3128 = vadd.f32 %v3126, %v3127
      %v3129 = vsel %vm423, %v2958, 0.0
      %v3130 = vadd.f32 %v3128, %v3129
      %v3131 = vsel %vm423, %v2961, 0.0
      %v3132 = vadd.f32 %v3130, %v3131
      %v3133 = vsel %vm423, %v2966, 0.0
      %v3134 = vadd.f32 %v3132, %v3133
      %v3135 = vsel %vm423, %v2969, 0.0
      %v3136 = vadd.f32 %v3134, %v3135
      %v3137 = vsel %vm423, %v2974, 0.0
      %v3138 = vadd.f32 %v3136, %v3137
      %v3139 = vsel %vm423, %v2977, 0.0
      %v3140 = vadd.f32 %v3138, %v3139
      %v3141 = vsel %vm423, %v2982, 0.0
      %v3142 = vadd.f32 %v3140, %v3141
      %v3143 = vsel %vm423, %v2985, 0.0
      %v3144 = vadd.f32 %v3142, %v3143
      %v3145 = vsel %vm423, %v2990, 0.0
      %v3146 = vadd.f32 %v3144, %v3145
      %v3147 = vsel %vm423, %v2993, 0.0
      %v3148 = vadd.f32 %v3146, %v3147
      %v3149 = vsel %vm423, %v2998, 0.0
      %v3150 = vadd.f32 %v3148, %v3149
      %v3151 = vsel %vm423, %v3001, 0.0
      %v3152 = vadd.f32 %v3150, %v3151
      %v3153 = vsel %vm423, %v3006, 0.0
      %v3154 = vadd.f32 %v3152, %v3153
      %v3155 = vsel %vm423, %v3009, 0.0
      %v3156 = vadd.f32 %v3154, %v3155
      %v3157 = vsel %vm423, %v3014, 0.0
      %v3158 = vadd.f32 %v3156, %v3157
      %v3159 = vsel %vm423, %v3017, 0.0
      %v3160 = vadd.f32 %v3158, %v3159
      %v3161 = vsel %vm423, %v3022, 0.0
      %v3162 = vadd.f32 %v3160, %v3161
      %v3163 = vsel %vm423, %v3025, 0.0
      %v3164 = vadd.f32 %v3162, %v3163
      %v3165 = vsel %vm423, %v3030, 0.0
      %v3166 = vadd.f32 %v3164, %v3165
      %v3167 = vsel %vm423, %v3033, 0.0
      %v3168 = vadd.f32 %v3166, %v3167
      %v3169 = vrot.slane %v3168, 4
      %v3170 = vadd.f32 %v3168, %v3169
      %v3171 = vrot.slane %v3170, 2
      %v3172 = vadd.f32 %v3170, %v3171
      %v3173 = vrot.slane %v3172, 1
      %v3174 = vadd.f32 %v3172, %v3173
      %v3175 = vmul.f32 %v3174, %v1062
      %v3176 = vsel %vm423, %v3105, -inf
      %3177 = vmax.xlane.f32.xlu0 %v3176
      %v3178 = vpop.xlane.xlu0 %3177
      %v3179 = vsub.f32 %v3105, %v3178
      %v3180 = vmul.f32 %v3179, 1.442695
      %v3181 = vpow.pop %v3180
      %v3182 = vsel %vm423, %v3175, -inf
      %3183 = vmax.xlane.f32.xlu0 %v3182
      %v3184 = vpop.xlane.xlu0 %3183
      %v3185 = vsub.f32 %v3175, %v3184
      %v3186 = vmul.f32 %v3185, 1.442695
      %v3187 = vpow.pop %v3186
      %v3188 = vsel %vm423, %v3181, 0.0
      %3189 = vadd.xlane.f32.xlu0 %v3188
      %v3190 = vpop.xlane.xlu0 %3189
      %v3191 = vrcp.pop %v3190
      %v3192 = vmul.f32 %v3181, %v3191
      %v3193 = vsel %vm423, %v3187, 0.0
      %3194 = vadd.xlane.f32.xlu0 %v3193
      %v3195 = vpop.xlane.xlu0 %3194
      %v3196 = vrcp.pop %v3195
      %v3197 = vmul.f32 %v3187, %v3196
      %v3198 = vmul.f32 %v2910, %v3192
      %v3199 = vmul.f32 %v2913, %v3192
      %v3200 = vmul.f32 %v2918, %v3192
      %v3201 = vmul.f32 %v2921, %v3192
      %v3202 = vmul.f32 %v2926, %v3192
      %v3203 = vmul.f32 %v2929, %v3192
      %v3204 = vmul.f32 %v2934, %v3192
      %v3205 = vmul.f32 %v2937, %v3192
      %v3206 = vmul.f32 %v2942, %v3192
      %v3207 = vmul.f32 %v2945, %v3192
      %v3208 = vmul.f32 %v2950, %v3192
      %v3209 = vmul.f32 %v2953, %v3192
      %v3210 = vmul.f32 %v2958, %v3192
      %v3211 = vmul.f32 %v2961, %v3192
      %v3212 = vmul.f32 %v2966, %v3192
      %v3213 = vmul.f32 %v2969, %v3192
      %v3214 = vmul.f32 %v2974, %v3192
      %v3215 = vmul.f32 %v2977, %v3192
      %v3216 = vmul.f32 %v2982, %v3192
      %v3217 = vmul.f32 %v2985, %v3192
      %v3218 = vmul.f32 %v2990, %v3192
      %v3219 = vmul.f32 %v2993, %v3192
      %v3220 = vmul.f32 %v2998, %v3192
      %v3221 = vmul.f32 %v3001, %v3192
      %v3222 = vmul.f32 %v3006, %v3192
      %v3223 = vmul.f32 %v3009, %v3192
      %v3224 = vmul.f32 %v3014, %v3192
      %v3225 = vmul.f32 %v3017, %v3192
      %v3226 = vmul.f32 %v3022, %v3192
      %v3227 = vmul.f32 %v3025, %v3192
      %v3228 = vmul.f32 %v3030, %v3192
      %v3229 = vmul.f32 %v3033, %v3192
      %v3230 = vsel %vm423, %v3198, 0.0
      %3231 = vadd.xlane.f32.xlu0 %v3230
      %v3232 = vpop.xlane.xlu0 %3231
      %v3233 = vsel %vm423, %v3199, 0.0
      %3234 = vadd.xlane.f32.xlu0 %v3233
      %v3235 = vpop.xlane.xlu0 %3234
      %v3236 = vsel %vm423, %v3200, 0.0
      %3237 = vadd.xlane.f32.xlu0 %v3236
      %v3238 = vpop.xlane.xlu0 %3237
      %v3239 = vsel %vm423, %v3201, 0.0
      %3240 = vadd.xlane.f32.xlu0 %v3239
      %v3241 = vpop.xlane.xlu0 %3240
      %v3242 = vsel %vm423, %v3202, 0.0
      %3243 = vadd.xlane.f32.xlu0 %v3242
      %v3244 = vpop.xlane.xlu0 %3243
      %v3245 = vsel %vm423, %v3203, 0.0
      %3246 = vadd.xlane.f32.xlu0 %v3245
      %v3247 = vpop.xlane.xlu0 %3246
      %v3248 = vsel %vm423, %v3204, 0.0
      %3249 = vadd.xlane.f32.xlu0 %v3248
      %v3250 = vpop.xlane.xlu0 %3249
      %v3251 = vsel %vm423, %v3205, 0.0
      %3252 = vadd.xlane.f32.xlu0 %v3251
      %v3253 = vpop.xlane.xlu0 %3252
      %v3254 = vsel %vm423, %v3206, 0.0
      %3255 = vadd.xlane.f32.xlu0 %v3254
      %v3256 = vpop.xlane.xlu0 %3255
      %v3257 = vsel %vm423, %v3207, 0.0
      %3258 = vadd.xlane.f32.xlu0 %v3257
      %v3259 = vpop.xlane.xlu0 %3258
      %v3260 = vsel %vm423, %v3208, 0.0
      %3261 = vadd.xlane.f32.xlu0 %v3260
      %v3262 = vpop.xlane.xlu0 %3261
      %v3263 = vsel %vm423, %v3209, 0.0
      %3264 = vadd.xlane.f32.xlu0 %v3263
      %v3265 = vpop.xlane.xlu0 %3264
      %v3266 = vsel %vm423, %v3210, 0.0
      %3267 = vadd.xlane.f32.xlu0 %v3266
      %v3268 = vpop.xlane.xlu0 %3267
      %v3269 = vsel %vm423, %v3211, 0.0
      %3270 = vadd.xlane.f32.xlu0 %v3269
      %v3271 = vpop.xlane.xlu0 %3270
      %v3272 = vsel %vm423, %v3212, 0.0
      %3273 = vadd.xlane.f32.xlu0 %v3272
      %v3274 = vpop.xlane.xlu0 %3273
      %v3275 = vsel %vm423, %v3213, 0.0
      %3276 = vadd.xlane.f32.xlu0 %v3275
      %v3277 = vpop.xlane.xlu0 %3276
      %v3278 = vsel %vm423, %v3214, 0.0
      %3279 = vadd.xlane.f32.xlu0 %v3278
      %v3280 = vpop.xlane.xlu0 %3279
      %v3281 = vsel %vm423, %v3215, 0.0
      %3282 = vadd.xlane.f32.xlu0 %v3281
      %v3283 = vpop.xlane.xlu0 %3282
      %v3284 = vsel %vm423, %v3216, 0.0
      %3285 = vadd.xlane.f32.xlu0 %v3284
      %v3286 = vpop.xlane.xlu0 %3285
      %v3287 = vsel %vm423, %v3217, 0.0
      %3288 = vadd.xlane.f32.xlu0 %v3287
      %v3289 = vpop.xlane.xlu0 %3288
      %v3290 = vsel %vm423, %v3218, 0.0
      %3291 = vadd.xlane.f32.xlu0 %v3290
      %v3292 = vpop.xlane.xlu0 %3291
      %v3293 = vsel %vm423, %v3219, 0.0
      %3294 = vadd.xlane.f32.xlu0 %v3293
      %v3295 = vpop.xlane.xlu0 %3294
      %v3296 = vsel %vm423, %v3220, 0.0
      %3297 = vadd.xlane.f32.xlu0 %v3296
      %v3298 = vpop.xlane.xlu0 %3297
      %v3299 = vsel %vm423, %v3221, 0.0
      %3300 = vadd.xlane.f32.xlu0 %v3299
      %v3301 = vpop.xlane.xlu0 %3300
      %v3302 = vsel %vm423, %v3222, 0.0
      %3303 = vadd.xlane.f32.xlu0 %v3302
      %v3304 = vpop.xlane.xlu0 %3303
      %v3305 = vsel %vm423, %v3223, 0.0
      %3306 = vadd.xlane.f32.xlu0 %v3305
      %v3307 = vpop.xlane.xlu0 %3306
      %v3308 = vsel %vm423, %v3224, 0.0
      %3309 = vadd.xlane.f32.xlu0 %v3308
      %v3310 = vpop.xlane.xlu0 %3309
      %v3311 = vsel %vm423, %v3225, 0.0
      %3312 = vadd.xlane.f32.xlu0 %v3311
      %v3313 = vpop.xlane.xlu0 %3312
      %v3314 = vsel %vm423, %v3226, 0.0
      %3315 = vadd.xlane.f32.xlu0 %v3314
      %v3316 = vpop.xlane.xlu0 %3315
      %v3317 = vsel %vm423, %v3227, 0.0
      %3318 = vadd.xlane.f32.xlu0 %v3317
      %v3319 = vpop.xlane.xlu0 %3318
      %v3320 = vsel %vm423, %v3228, 0.0
      %3321 = vadd.xlane.f32.xlu0 %v3320
      %v3322 = vpop.xlane.xlu0 %3321
      %v3323 = vsel %vm423, %v3229, 0.0
      %3324 = vadd.xlane.f32.xlu0 %v3323
      %v3325 = vpop.xlane.xlu0 %3324
      %v3326 = vmul.f32 %v1278, %v3197
      %v3327 = vmul.f32 %v1279, %v3197
      %v3328 = vmul.f32 %v1280, %v3197
      %v3329 = vmul.f32 %v1281, %v3197
      %v3330 = vmul.f32 %v1282, %v3197
      %v3331 = vmul.f32 %v1283, %v3197
      %v3332 = vmul.f32 %v1284, %v3197
      %v3333 = vmul.f32 %v1285, %v3197
      %v3334 = vmul.f32 %v1286, %v3197
      %v3335 = vmul.f32 %v1287, %v3197
      %v3336 = vmul.f32 %v1288, %v3197
      %v3337 = vmul.f32 %v1289, %v3197
      %v3338 = vmul.f32 %v1290, %v3197
      %v3339 = vmul.f32 %v1291, %v3197
      %v3340 = vmul.f32 %v1292, %v3197
      %v3341 = vmul.f32 %v1293, %v3197
      %v3342 = vmul.f32 %v1294, %v3197
      %v3343 = vmul.f32 %v1295, %v3197
      %v3344 = vmul.f32 %v1296, %v3197
      %v3345 = vmul.f32 %v1297, %v3197
      %v3346 = vmul.f32 %v1298, %v3197
      %v3347 = vmul.f32 %v1299, %v3197
      %v3348 = vmul.f32 %v1300, %v3197
      %v3349 = vmul.f32 %v1301, %v3197
      %v3350 = vmul.f32 %v1302, %v3197
      %v3351 = vmul.f32 %v1303, %v3197
      %v3352 = vmul.f32 %v1304, %v3197
      %v3353 = vmul.f32 %v1305, %v3197
      %v3354 = vmul.f32 %v1306, %v3197
      %v3355 = vmul.f32 %v1307, %v3197
      %v3356 = vmul.f32 %v1308, %v3197
      %v3357 = vmul.f32 %v1309, %v3197
      %v3358 = vsel %vm423, %v3326, 0.0
      %3359 = vadd.xlane.f32.xlu0 %v3358
      %v3360 = vpop.xlane.xlu0 %3359
      %v3361 = vsel %vm423, %v3327, 0.0
      %3362 = vadd.xlane.f32.xlu0 %v3361
      %v3363 = vpop.xlane.xlu0 %3362
      %v3364 = vsel %vm423, %v3328, 0.0
      %3365 = vadd.xlane.f32.xlu0 %v3364
      %v3366 = vpop.xlane.xlu0 %3365
      %v3367 = vsel %vm423, %v3329, 0.0
      %3368 = vadd.xlane.f32.xlu0 %v3367
      %v3369 = vpop.xlane.xlu0 %3368
      %v3370 = vsel %vm423, %v3330, 0.0
      %3371 = vadd.xlane.f32.xlu0 %v3370
      %v3372 = vpop.xlane.xlu0 %3371
      %v3373 = vsel %vm423, %v3331, 0.0
      %3374 = vadd.xlane.f32.xlu0 %v3373
      %v3375 = vpop.xlane.xlu0 %3374
      %v3376 = vsel %vm423, %v3332, 0.0
      %3377 = vadd.xlane.f32.xlu0 %v3376
      %v3378 = vpop.xlane.xlu0 %3377
      %v3379 = vsel %vm423, %v3333, 0.0
      %3380 = vadd.xlane.f32.xlu0 %v3379
      %v3381 = vpop.xlane.xlu0 %3380
      %v3382 = vsel %vm423, %v3334, 0.0
      %3383 = vadd.xlane.f32.xlu0 %v3382
      %v3384 = vpop.xlane.xlu0 %3383
      %v3385 = vsel %vm423, %v3335, 0.0
      %3386 = vadd.xlane.f32.xlu0 %v3385
      %v3387 = vpop.xlane.xlu0 %3386
      %v3388 = vsel %vm423, %v3336, 0.0
      %3389 = vadd.xlane.f32.xlu0 %v3388
      %v3390 = vpop.xlane.xlu0 %3389
      %v3391 = vsel %vm423, %v3337, 0.0
      %3392 = vadd.xlane.f32.xlu0 %v3391
      %v3393 = vpop.xlane.xlu0 %3392
      %v3394 = vsel %vm423, %v3338, 0.0
      %3395 = vadd.xlane.f32.xlu0 %v3394
      %v3396 = vpop.xlane.xlu0 %3395
      %v3397 = vsel %vm423, %v3339, 0.0
      %3398 = vadd.xlane.f32.xlu0 %v3397
      %v3399 = vpop.xlane.xlu0 %3398
      %v3400 = vsel %vm423, %v3340, 0.0
      %3401 = vadd.xlane.f32.xlu0 %v3400
      %v3402 = vpop.xlane.xlu0 %3401
      %v3403 = vsel %vm423, %v3341, 0.0
      %3404 = vadd.xlane.f32.xlu0 %v3403
      %v3405 = vpop.xlane.xlu0 %3404
      %v3406 = vsel %vm423, %v3342, 0.0
      %3407 = vadd.xlane.f32.xlu0 %v3406
      %v3408 = vpop.xlane.xlu0 %3407
      %v3409 = vsel %vm423, %v3343, 0.0
      %3410 = vadd.xlane.f32.xlu0 %v3409
      %v3411 = vpop.xlane.xlu0 %3410
      %v3412 = vsel %vm423, %v3344, 0.0
      %3413 = vadd.xlane.f32.xlu0 %v3412
      %v3414 = vpop.xlane.xlu0 %3413
      %v3415 = vsel %vm423, %v3345, 0.0
      %3416 = vadd.xlane.f32.xlu0 %v3415
      %v3417 = vpop.xlane.xlu0 %3416
      %v3418 = vsel %vm423, %v3346, 0.0
      %3419 = vadd.xlane.f32.xlu0 %v3418
      %v3420 = vpop.xlane.xlu0 %3419
      %v3421 = vsel %vm423, %v3347, 0.0
      %3422 = vadd.xlane.f32.xlu0 %v3421
      %v3423 = vpop.xlane.xlu0 %3422
      %v3424 = vsel %vm423, %v3348, 0.0
      %3425 = vadd.xlane.f32.xlu0 %v3424
      %v3426 = vpop.xlane.xlu0 %3425
      %v3427 = vsel %vm423, %v3349, 0.0
      %3428 = vadd.xlane.f32.xlu0 %v3427
      %v3429 = vpop.xlane.xlu0 %3428
      %v3430 = vsel %vm423, %v3350, 0.0
      %3431 = vadd.xlane.f32.xlu0 %v3430
      %v3432 = vpop.xlane.xlu0 %3431
      %v3433 = vsel %vm423, %v3351, 0.0
      %3434 = vadd.xlane.f32.xlu0 %v3433
      %v3435 = vpop.xlane.xlu0 %3434
      %v3436 = vsel %vm423, %v3352, 0.0
      %3437 = vadd.xlane.f32.xlu0 %v3436
      %v3438 = vpop.xlane.xlu0 %3437
      %v3439 = vsel %vm423, %v3353, 0.0
      %3440 = vadd.xlane.f32.xlu0 %v3439
      %v3441 = vpop.xlane.xlu0 %3440
      %v3442 = vsel %vm423, %v3354, 0.0
      %3443 = vadd.xlane.f32.xlu0 %v3442
      %v3444 = vpop.xlane.xlu0 %3443
      %v3445 = vsel %vm423, %v3355, 0.0
      %3446 = vadd.xlane.f32.xlu0 %v3445
      %v3447 = vpop.xlane.xlu0 %3446
      %v3448 = vsel %vm423, %v3356, 0.0
      %3449 = vadd.xlane.f32.xlu0 %v3448
      %v3450 = vpop.xlane.xlu0 %3449
      %v3451 = vsel %vm423, %v3357, 0.0
      %3452 = vadd.xlane.f32.xlu0 %v3451
      %v3453 = vpop.xlane.xlu0 %3452
      %v3454 = vadd.f32 %v3232, %v3360
      %v3455 = vadd.f32 %v3235, %v3363
      %v3456 = vadd.f32 %v3238, %v3366
      %v3457 = vadd.f32 %v3241, %v3369
      %v3458 = vadd.f32 %v3244, %v3372
      %v3459 = vadd.f32 %v3247, %v3375
      %v3460 = vadd.f32 %v3250, %v3378
      %v3461 = vadd.f32 %v3253, %v3381
      %v3462 = vadd.f32 %v3256, %v3384
      %v3463 = vadd.f32 %v3259, %v3387
      %v3464 = vadd.f32 %v3262, %v3390
      %v3465 = vadd.f32 %v3265, %v3393
      %v3466 = vadd.f32 %v3268, %v3396
      %v3467 = vadd.f32 %v3271, %v3399
      %v3468 = vadd.f32 %v3274, %v3402
      %v3469 = vadd.f32 %v3277, %v3405
      %v3470 = vadd.f32 %v3280, %v3408
      %v3471 = vadd.f32 %v3283, %v3411
      %v3472 = vadd.f32 %v3286, %v3414
      %v3473 = vadd.f32 %v3289, %v3417
      %v3474 = vadd.f32 %v3292, %v3420
      %v3475 = vadd.f32 %v3295, %v3423
      %v3476 = vadd.f32 %v3298, %v3426
      %v3477 = vadd.f32 %v3301, %v3429
      %v3478 = vadd.f32 %v3304, %v3432
      %v3479 = vadd.f32 %v3307, %v3435
      %v3480 = vadd.f32 %v3310, %v3438
      %v3481 = vadd.f32 %v3313, %v3441
      %v3482 = vadd.f32 %v3316, %v3444
      %v3483 = vadd.f32 %v3319, %v3447
      %v3484 = vadd.f32 %v3322, %v3450
      %v3485 = vadd.f32 %v3325, %v3453
      %v3486 = vxor.u32 %v3454, 2147483648
      %v3487 = vxor.u32 %v3455, 2147483648
      %v3488 = vxor.u32 %v3456, 2147483648
      %v3489 = vxor.u32 %v3457, 2147483648
      %v3490 = vxor.u32 %v3458, 2147483648
      %v3491 = vxor.u32 %v3459, 2147483648
      %v3492 = vxor.u32 %v3460, 2147483648
      %v3493 = vxor.u32 %v3461, 2147483648
      %v3494 = vxor.u32 %v3462, 2147483648
      %v3495 = vxor.u32 %v3463, 2147483648
      %v3496 = vxor.u32 %v3464, 2147483648
      %v3497 = vxor.u32 %v3465, 2147483648
      %v3498 = vxor.u32 %v3466, 2147483648
      %v3499 = vxor.u32 %v3467, 2147483648
      %v3500 = vxor.u32 %v3468, 2147483648
      %v3501 = vxor.u32 %v3469, 2147483648
      %v3502 = vxor.u32 %v3470, 2147483648
      %v3503 = vxor.u32 %v3471, 2147483648
      %v3504 = vxor.u32 %v3472, 2147483648
      %v3505 = vxor.u32 %v3473, 2147483648
      %v3506 = vxor.u32 %v3474, 2147483648
      %v3507 = vxor.u32 %v3475, 2147483648
      %v3508 = vxor.u32 %v3476, 2147483648
      %v3509 = vxor.u32 %v3477, 2147483648
      %v3510 = vxor.u32 %v3478, 2147483648
      %v3511 = vxor.u32 %v3479, 2147483648
      %v3512 = vxor.u32 %v3480, 2147483648
      %v3513 = vxor.u32 %v3481, 2147483648
      %v3514 = vxor.u32 %v3482, 2147483648
      %v3515 = vxor.u32 %v3483, 2147483648
      %v3516 = vxor.u32 %v3484, 2147483648
      %v3517 = vxor.u32 %v3485, 2147483648
      %v3518 = vmul.f32 %v3486, 1.442695
      %v3519 = vpow.pop %v3518
      %v3520 = vmul.f32 %v3487, 1.442695
      %v3521 = vpow.pop %v3520
      %v3522 = vmul.f32 %v3488, 1.442695
      %v3523 = vpow.pop %v3522
      %v3524 = vmul.f32 %v3489, 1.442695
      %v3525 = vpow.pop %v3524
      %v3526 = vmul.f32 %v3490, 1.442695
      %v3527 = vpow.pop %v3526
      %v3528 = vmul.f32 %v3491, 1.442695
      %v3529 = vpow.pop %v3528
      %v3530 = vmul.f32 %v3492, 1.442695
      %v3531 = vpow.pop %v3530
      %v3532 = vmul.f32 %v3493, 1.442695
      %v3533 = vpow.pop %v3532
      %v3534 = vmul.f32 %v3494, 1.442695
      %v3535 = vpow.pop %v3534
      %v3536 = vmul.f32 %v3495, 1.442695
      %v3537 = vpow.pop %v3536
      %v3538 = vmul.f32 %v3496, 1.442695
      %v3539 = vpow.pop %v3538
      %v3540 = vmul.f32 %v3497, 1.442695
      %v3541 = vpow.pop %v3540
      %v3542 = vmul.f32 %v3498, 1.442695
      %v3543 = vpow.pop %v3542
      %v3544 = vmul.f32 %v3499, 1.442695
      %v3545 = vpow.pop %v3544
      %v3546 = vmul.f32 %v3500, 1.442695
      %v3547 = vpow.pop %v3546
      %v3548 = vmul.f32 %v3501, 1.442695
      %v3549 = vpow.pop %v3548
      %v3550 = vmul.f32 %v3502, 1.442695
      %v3551 = vpow.pop %v3550
      %v3552 = vmul.f32 %v3503, 1.442695
      %v3553 = vpow.pop %v3552
      %v3554 = vmul.f32 %v3504, 1.442695
      %v3555 = vpow.pop %v3554
      %v3556 = vmul.f32 %v3505, 1.442695
      %v3557 = vpow.pop %v3556
      %v3558 = vmul.f32 %v3506, 1.442695
      %v3559 = vpow.pop %v3558
      %v3560 = vmul.f32 %v3507, 1.442695
      %v3561 = vpow.pop %v3560
      %v3562 = vmul.f32 %v3508, 1.442695
      %v3563 = vpow.pop %v3562
      %v3564 = vmul.f32 %v3509, 1.442695
      %v3565 = vpow.pop %v3564
      %v3566 = vmul.f32 %v3510, 1.442695
      %v3567 = vpow.pop %v3566
      %v3568 = vmul.f32 %v3511, 1.442695
      %v3569 = vpow.pop %v3568
      %v3570 = vmul.f32 %v3512, 1.442695
      %v3571 = vpow.pop %v3570
      %v3572 = vmul.f32 %v3513, 1.442695
      %v3573 = vpow.pop %v3572
      %v3574 = vmul.f32 %v3514, 1.442695
      %v3575 = vpow.pop %v3574
      %v3576 = vmul.f32 %v3515, 1.442695
      %v3577 = vpow.pop %v3576
      %v3578 = vmul.f32 %v3516, 1.442695
      %v3579 = vpow.pop %v3578
      %v3580 = vmul.f32 %v3517, 1.442695
      %v3581 = vpow.pop %v3580
      %v3582 = vadd.f32 %v3519, 1.0
      %v3583 = vadd.f32 %v3521, 1.0
      %v3584 = vadd.f32 %v3523, 1.0
      %v3585 = vadd.f32 %v3525, 1.0
      %v3586 = vadd.f32 %v3527, 1.0
      %v3587 = vadd.f32 %v3529, 1.0
      %v3588 = vadd.f32 %v3531, 1.0
      %v3589 = vadd.f32 %v3533, 1.0
      %v3590 = vadd.f32 %v3535, 1.0
      %v3591 = vadd.f32 %v3537, 1.0
      %v3592 = vadd.f32 %v3539, 1.0
      %v3593 = vadd.f32 %v3541, 1.0
      %v3594 = vadd.f32 %v3543, 1.0
      %v3595 = vadd.f32 %v3545, 1.0
      %v3596 = vadd.f32 %v3547, 1.0
      %v3597 = vadd.f32 %v3549, 1.0
      %v3598 = vadd.f32 %v3551, 1.0
      %v3599 = vadd.f32 %v3553, 1.0
      %v3600 = vadd.f32 %v3555, 1.0
      %v3601 = vadd.f32 %v3557, 1.0
      %v3602 = vadd.f32 %v3559, 1.0
      %v3603 = vadd.f32 %v3561, 1.0
      %v3604 = vadd.f32 %v3563, 1.0
      %v3605 = vadd.f32 %v3565, 1.0
      %v3606 = vadd.f32 %v3567, 1.0
      %v3607 = vadd.f32 %v3569, 1.0
      %v3608 = vadd.f32 %v3571, 1.0
      %v3609 = vadd.f32 %v3573, 1.0
      %v3610 = vadd.f32 %v3575, 1.0
      %v3611 = vadd.f32 %v3577, 1.0
      %v3612 = vadd.f32 %v3579, 1.0
      %v3613 = vadd.f32 %v3581, 1.0
      %v3614 = vrcp.pop %v3582
      %v3615 = vmul.f32 1.0, %v3614
      %v3616 = vrcp.pop %v3583
      %v3617 = vmul.f32 1.0, %v3616
      %v3618 = vrcp.pop %v3584
      %v3619 = vmul.f32 1.0, %v3618
      %v3620 = vrcp.pop %v3585
      %v3621 = vmul.f32 1.0, %v3620
      %v3622 = vrcp.pop %v3586
      %v3623 = vmul.f32 1.0, %v3622
      %v3624 = vrcp.pop %v3587
      %v3625 = vmul.f32 1.0, %v3624
      %v3626 = vrcp.pop %v3588
      %v3627 = vmul.f32 1.0, %v3626
      %v3628 = vrcp.pop %v3589
      %v3629 = vmul.f32 1.0, %v3628
      %v3630 = vrcp.pop %v3590
      %v3631 = vmul.f32 1.0, %v3630
      %v3632 = vrcp.pop %v3591
      %v3633 = vmul.f32 1.0, %v3632
      %v3634 = vrcp.pop %v3592
      %v3635 = vmul.f32 1.0, %v3634
      %v3636 = vrcp.pop %v3593
      %v3637 = vmul.f32 1.0, %v3636
      %v3638 = vrcp.pop %v3594
      %v3639 = vmul.f32 1.0, %v3638
      %v3640 = vrcp.pop %v3595
      %v3641 = vmul.f32 1.0, %v3640
      %v3642 = vrcp.pop %v3596
      %v3643 = vmul.f32 1.0, %v3642
      %v3644 = vrcp.pop %v3597
      %v3645 = vmul.f32 1.0, %v3644
      %v3646 = vrcp.pop %v3598
      %v3647 = vmul.f32 1.0, %v3646
      %v3648 = vrcp.pop %v3599
      %v3649 = vmul.f32 1.0, %v3648
      %v3650 = vrcp.pop %v3600
      %v3651 = vmul.f32 1.0, %v3650
      %v3652 = vrcp.pop %v3601
      %v3653 = vmul.f32 1.0, %v3652
      %v3654 = vrcp.pop %v3602
      %v3655 = vmul.f32 1.0, %v3654
      %v3656 = vrcp.pop %v3603
      %v3657 = vmul.f32 1.0, %v3656
      %v3658 = vrcp.pop %v3604
      %v3659 = vmul.f32 1.0, %v3658
      %v3660 = vrcp.pop %v3605
      %v3661 = vmul.f32 1.0, %v3660
      %v3662 = vrcp.pop %v3606
      %v3663 = vmul.f32 1.0, %v3662
      %v3664 = vrcp.pop %v3607
      %v3665 = vmul.f32 1.0, %v3664
      %v3666 = vrcp.pop %v3608
      %v3667 = vmul.f32 1.0, %v3666
      %v3668 = vrcp.pop %v3609
      %v3669 = vmul.f32 1.0, %v3668
      %v3670 = vrcp.pop %v3610
      %v3671 = vmul.f32 1.0, %v3670
      %v3672 = vrcp.pop %v3611
      %v3673 = vmul.f32 1.0, %v3672
      %v3674 = vrcp.pop %v3612
      %v3675 = vmul.f32 1.0, %v3674
      %v3676 = vrcp.pop %v3613
      %v3677 = vmul.f32 1.0, %v3676
      %v3678 = vmul.f32 %v391, %v3615
      %v3679 = vmul.f32 %v392, %v3617
      %v3680 = vmul.f32 %v393, %v3619
      %v3681 = vmul.f32 %v394, %v3621
      %v3682 = vmul.f32 %v395, %v3623
      %v3683 = vmul.f32 %v396, %v3625
      %v3684 = vmul.f32 %v397, %v3627
      %v3685 = vmul.f32 %v398, %v3629
      %v3686 = vmul.f32 %v399, %v3631
      %v3687 = vmul.f32 %v400, %v3633
      %v3688 = vmul.f32 %v401, %v3635
      %v3689 = vmul.f32 %v402, %v3637
      %v3690 = vmul.f32 %v403, %v3639
      %v3691 = vmul.f32 %v404, %v3641
      %v3692 = vmul.f32 %v405, %v3643
      %v3693 = vmul.f32 %v406, %v3645
      %v3694 = vmul.f32 %v407, %v3647
      %v3695 = vmul.f32 %v408, %v3649
      %v3696 = vmul.f32 %v409, %v3651
      %v3697 = vmul.f32 %v410, %v3653
      %v3698 = vmul.f32 %v411, %v3655
      %v3699 = vmul.f32 %v412, %v3657
      %v3700 = vmul.f32 %v413, %v3659
      %v3701 = vmul.f32 %v414, %v3661
      %v3702 = vmul.f32 %v415, %v3663
      %v3703 = vmul.f32 %v416, %v3665
      %v3704 = vmul.f32 %v417, %v3667
      %v3705 = vmul.f32 %v418, %v3669
      %v3706 = vmul.f32 %v419, %v3671
      %v3707 = vmul.f32 %v420, %v3673
      %v3708 = vmul.f32 %v421, %v3675
      %v3709 = vmul.f32 %v422, %v3677
      %v3710 = vunpack.c.l.bf16 %v359
      %v3711 = vunpack.c.l.bf16 %v360
      %v3712 = vunpack.c.l.bf16 %v361
      %v3713 = vunpack.c.l.bf16 %v362
      %v3714 = vunpack.c.l.bf16 %v363
      %v3715 = vunpack.c.l.bf16 %v364
      %v3716 = vunpack.c.l.bf16 %v365
      %v3717 = vunpack.c.l.bf16 %v366
      %v3718 = vunpack.c.l.bf16 %v367
      %v3719 = vunpack.c.l.bf16 %v368
      %v3720 = vunpack.c.l.bf16 %v369
      %v3721 = vunpack.c.l.bf16 %v370
      %v3722 = vunpack.c.l.bf16 %v371
      %v3723 = vunpack.c.l.bf16 %v372
      %v3724 = vunpack.c.l.bf16 %v373
      %v3725 = vunpack.c.l.bf16 %v374
      %v3726 = vunpack.c.l.bf16 %v375
      %v3727 = vunpack.c.l.bf16 %v376
      %v3728 = vunpack.c.l.bf16 %v377
      %v3729 = vunpack.c.l.bf16 %v378
      %v3730 = vunpack.c.l.bf16 %v379
      %v3731 = vunpack.c.l.bf16 %v380
      %v3732 = vunpack.c.l.bf16 %v381
      %v3733 = vunpack.c.l.bf16 %v382
      %v3734 = vunpack.c.l.bf16 %v383
      %v3735 = vunpack.c.l.bf16 %v384
      %v3736 = vunpack.c.l.bf16 %v385
      %v3737 = vunpack.c.l.bf16 %v386
      %v3738 = vunpack.c.l.bf16 %v387
      %v3739 = vunpack.c.l.bf16 %v388
      %v3740 = vunpack.c.l.bf16 %v389
      %v3741 = vunpack.c.l.bf16 %v390
      %v3742 = vadd.f32 %v3710, %v3678
      %v3743 = vadd.f32 %v3711, %v3679
      %v3744 = vadd.f32 %v3712, %v3680
      %v3745 = vadd.f32 %v3713, %v3681
      %v3746 = vadd.f32 %v3714, %v3682
      %v3747 = vadd.f32 %v3715, %v3683
      %v3748 = vadd.f32 %v3716, %v3684
      %v3749 = vadd.f32 %v3717, %v3685
      %v3750 = vadd.f32 %v3718, %v3686
      %v3751 = vadd.f32 %v3719, %v3687
      %v3752 = vadd.f32 %v3720, %v3688
      %v3753 = vadd.f32 %v3721, %v3689
      %v3754 = vadd.f32 %v3722, %v3690
      %v3755 = vadd.f32 %v3723, %v3691
      %v3756 = vadd.f32 %v3724, %v3692
      %v3757 = vadd.f32 %v3725, %v3693
      %v3758 = vadd.f32 %v3726, %v3694
      %v3759 = vadd.f32 %v3727, %v3695
      %v3760 = vadd.f32 %v3728, %v3696
      %v3761 = vadd.f32 %v3729, %v3697
      %v3762 = vadd.f32 %v3730, %v3698
      %v3763 = vadd.f32 %v3731, %v3699
      %v3764 = vadd.f32 %v3732, %v3700
      %v3765 = vadd.f32 %v3733, %v3701
      %v3766 = vadd.f32 %v3734, %v3702
      %v3767 = vadd.f32 %v3735, %v3703
      %v3768 = vadd.f32 %v3736, %v3704
      %v3769 = vadd.f32 %v3737, %v3705
      %v3770 = vadd.f32 %v3738, %v3706
      %v3771 = vadd.f32 %v3739, %v3707
      %v3772 = vadd.f32 %v3740, %v3708
      %v3773 = vadd.f32 %v3741, %v3709
      %v3774 = vpack.c.bf16 %v3743, %v3742
      %v3775 = vpack.c.bf16 %v3745, %v3744
      %v3776 = vpack.c.bf16 %v3747, %v3746
      %v3777 = vpack.c.bf16 %v3749, %v3748
      %v3778 = vpack.c.bf16 %v3751, %v3750
      %v3779 = vpack.c.bf16 %v3753, %v3752
      %v3780 = vpack.c.bf16 %v3755, %v3754
      %v3781 = vpack.c.bf16 %v3757, %v3756
      %v3782 = vpack.c.bf16 %v3759, %v3758
      %v3783 = vpack.c.bf16 %v3761, %v3760
      %v3784 = vpack.c.bf16 %v3763, %v3762
      %v3785 = vpack.c.bf16 %v3765, %v3764
      %v3786 = vpack.c.bf16 %v3767, %v3766
      %v3787 = vpack.c.bf16 %v3769, %v3768
      %v3788 = vpack.c.bf16 %v3771, %v3770
      %v3789 = vpack.c.bf16 %v3773, %v3772
      %v3806 = vunpack.c.l.b16 %v3774
      %v3807 = vunpack.c.h.b16 %v3774
      %v3808 = vunpack.c.l.b16 %v3775
      %v3809 = vunpack.c.h.b16 %v3775
      %v3810 = vunpack.c.l.b16 %v3776
      %v3811 = vunpack.c.h.b16 %v3776
      %v3812 = vunpack.c.l.b16 %v3777
      %v3813 = vunpack.c.h.b16 %v3777
      %v3814 = vunpack.c.l.b16 %v3778
      %v3815 = vunpack.c.h.b16 %v3778
      %v3816 = vunpack.c.l.b16 %v3779
      %v3817 = vunpack.c.h.b16 %v3779
      %v3818 = vunpack.c.l.b16 %v3780
      %v3819 = vunpack.c.h.b16 %v3780
      %v3820 = vunpack.c.l.b16 %v3781
      %v3821 = vunpack.c.h.b16 %v3781
      %v3822 = vunpack.c.l.b16 %v3782
      %v3823 = vunpack.c.h.b16 %v3782
      %v3824 = vunpack.c.l.b16 %v3783
      %v3825 = vunpack.c.h.b16 %v3783
      %v3826 = vunpack.c.l.b16 %v3784
      %v3827 = vunpack.c.h.b16 %v3784
      %v3828 = vunpack.c.l.b16 %v3785
      %v3829 = vunpack.c.h.b16 %v3785
      %v3830 = vunpack.c.l.b16 %v3786
      %v3831 = vunpack.c.h.b16 %v3786
      %v3832 = vunpack.c.l.b16 %v3787
      %v3833 = vunpack.c.h.b16 %v3787
      %v3834 = vunpack.c.l.b16 %v3788
      %v3835 = vunpack.c.h.b16 %v3788
      %v3836 = vunpack.c.l.b16 %v3789
      %v3837 = vunpack.c.h.b16 %v3789
      %v3838 = vpack.c.b16 %v3806, %v3806
      %v3839 = vpack.c.b16 %v3807, %v3807
      %v3840 = vpack.c.b16 %v3808, %v3808
      %v3841 = vpack.c.b16 %v3809, %v3809
      %v3842 = vpack.c.b16 %v3810, %v3810
      %v3843 = vpack.c.b16 %v3811, %v3811
      %v3844 = vpack.c.b16 %v3812, %v3812
      %v3845 = vpack.c.b16 %v3813, %v3813
      %v3846 = vpack.c.b16 %v3814, %v3814
      %v3847 = vpack.c.b16 %v3815, %v3815
      %v3848 = vpack.c.b16 %v3816, %v3816
      %v3849 = vpack.c.b16 %v3817, %v3817
      %v3850 = vpack.c.b16 %v3818, %v3818
      %v3851 = vpack.c.b16 %v3819, %v3819
      %v3852 = vpack.c.b16 %v3820, %v3820
      %v3853 = vpack.c.b16 %v3821, %v3821
      %v3854 = vpack.c.b16 %v3822, %v3822
      %v3855 = vpack.c.b16 %v3823, %v3823
      %v3856 = vpack.c.b16 %v3824, %v3824
      %v3857 = vpack.c.b16 %v3825, %v3825
      %v3858 = vpack.c.b16 %v3826, %v3826
      %v3859 = vpack.c.b16 %v3827, %v3827
      %v3860 = vpack.c.b16 %v3828, %v3828
      %v3861 = vpack.c.b16 %v3829, %v3829
      %v3862 = vpack.c.b16 %v3830, %v3830
      %v3863 = vpack.c.b16 %v3831, %v3831
      %v3864 = vpack.c.b16 %v3832, %v3832
      %v3865 = vpack.c.b16 %v3833, %v3833
      %v3866 = vpack.c.b16 %v3834, %v3834
      %v3867 = vpack.c.b16 %v3835, %v3835
      %v3868 = vpack.c.b16 %v3836, %v3836
      %v3869 = vpack.c.b16 %v3837, %v3837
      %3902 = vst.msk [vmem:[%s325] sm:$0xf] %vm1310, %v3838
      %3903 = vst.msk [vmem:[%s325 + $0x4] sm:$0xf] %vm1310, %v3839
      %3904 = vst.msk [vmem:[%s325 + $0x8] sm:$0xf] %vm1310, %v3840
      %3905 = vst.msk [vmem:[%s325 + $0xc] sm:$0xf] %vm1310, %v3841
      %3906 = vst.msk [vmem:[%s325 + $0x10] sm:$0xf] %vm1310, %v3842
      %3907 = vst.msk [vmem:[%s325 + $0x14] sm:$0xf] %vm1310, %v3843
      %3908 = vst.msk [vmem:[%s325 + $0x18] sm:$0xf] %vm1310, %v3844
      %3909 = vst.msk [vmem:[%s325 + $0x1c] sm:$0xf] %vm1310, %v3845
      %3910 = vst.msk [vmem:[%s325 + $0x20] sm:$0xf] %vm1310, %v3846
      %3911 = vst.msk [vmem:[%s325 + $0x24] sm:$0xf] %vm1310, %v3847
      %3912 = vst.msk [vmem:[%s325 + $0x28] sm:$0xf] %vm1310, %v3848
      %3913 = vst.msk [vmem:[%s325 + $0x2c] sm:$0xf] %vm1310, %v3849
      %3914 = vst.msk [vmem:[%s325 + $0x30] sm:$0xf] %vm1310, %v3850
      %3915 = vst.msk [vmem:[%s325 + $0x34] sm:$0xf] %vm1310, %v3851
      %3916 = vst.msk [vmem:[%s325 + $0x38] sm:$0xf] %vm1310, %v3852
      %3917 = vst.msk [vmem:[%s325 + $0x3c] sm:$0xf] %vm1310, %v3853
      %3918 = vst.msk [vmem:[%s325 + $0x40] sm:$0xf] %vm1310, %v3854
      %3919 = vst.msk [vmem:[%s325 + $0x44] sm:$0xf] %vm1310, %v3855
      %3920 = vst.msk [vmem:[%s325 + $0x48] sm:$0xf] %vm1310, %v3856
      %3921 = vst.msk [vmem:[%s325 + $0x4c] sm:$0xf] %vm1310, %v3857
      %3922 = vst.msk [vmem:[%s325 + $0x50] sm:$0xf] %vm1310, %v3858
      %3923 = vst.msk [vmem:[%s325 + $0x54] sm:$0xf] %vm1310, %v3859
      %3924 = vst.msk [vmem:[%s325 + $0x58] sm:$0xf] %vm1310, %v3860
      %3925 = vst.msk [vmem:[%s325 + $0x5c] sm:$0xf] %vm1310, %v3861
      %3926 = vst.msk [vmem:[%s325 + $0x60] sm:$0xf] %vm1310, %v3862
      %3927 = vst.msk [vmem:[%s325 + $0x64] sm:$0xf] %vm1310, %v3863
      %3928 = vst.msk [vmem:[%s325 + $0x68] sm:$0xf] %vm1310, %v3864
      %3929 = vst.msk [vmem:[%s325 + $0x6c] sm:$0xf] %vm1310, %v3865
      %3930 = vst.msk [vmem:[%s325 + $0x70] sm:$0xf] %vm1310, %v3866
      %3931 = vst.msk [vmem:[%s325 + $0x74] sm:$0xf] %vm1310, %v3867
      %3932 = vst.msk [vmem:[%s325 + $0x78] sm:$0xf] %vm1310, %v3868
      %3933 = vst.msk [vmem:[%s325 + $0x7c] sm:$0xf] %vm1310, %v3869
      %vm3934 = vcmask 130112
      %v3935 = vsel %vm3934, %v391, 0.0
      %v3936 = vsel %vm3934, %v392, 0.0
      %v3937 = vadd.f32 %v3935, %v3936
      %v3938 = vrot.slane %v3937, 4
      %v3939 = vadd.f32 %v3937, %v3938
      %v3940 = vrot.slane %v3939, 2
      %v3941 = vadd.f32 %v3939, %v3940
      %v3942 = vrot.slane %v3941, 1
      %v3943 = vadd.f32 %v3941, %v3942
      %v3944 = vsel %vm3934, %v393, 0.0
      %v3945 = vsel %vm3934, %v394, 0.0
      %v3946 = vadd.f32 %v3944, %v3945
      %v3947 = vrot.slane %v3946, 4
      %v3948 = vadd.f32 %v3946, %v3947
      %v3949 = vrot.slane %v3948, 2
      %v3950 = vadd.f32 %v3948, %v3949
      %v3951 = vrot.slane %v3950, 1
      %v3952 = vadd.f32 %v3950, %v3951
      %v3953 = vsel %vm3934, %v395, 0.0
      %v3954 = vsel %vm3934, %v396, 0.0
      %v3955 = vadd.f32 %v3953, %v3954
      %v3956 = vrot.slane %v3955, 4
      %v3957 = vadd.f32 %v3955, %v3956
      %v3958 = vrot.slane %v3957, 2
      %v3959 = vadd.f32 %v3957, %v3958
      %v3960 = vrot.slane %v3959, 1
      %v3961 = vadd.f32 %v3959, %v3960
      %v3962 = vsel %vm3934, %v397, 0.0
      %v3963 = vsel %vm3934, %v398, 0.0
      %v3964 = vadd.f32 %v3962, %v3963
      %v3965 = vrot.slane %v3964, 4
      %v3966 = vadd.f32 %v3964, %v3965
      %v3967 = vrot.slane %v3966, 2
      %v3968 = vadd.f32 %v3966, %v3967
      %v3969 = vrot.slane %v3968, 1
      %v3970 = vadd.f32 %v3968, %v3969
      %v3971 = vsel %vm3934, %v399, 0.0
      %v3972 = vsel %vm3934, %v400, 0.0
      %v3973 = vadd.f32 %v3971, %v3972
      %v3974 = vrot.slane %v3973, 4
      %v3975 = vadd.f32 %v3973, %v3974
      %v3976 = vrot.slane %v3975, 2
      %v3977 = vadd.f32 %v3975, %v3976
      %v3978 = vrot.slane %v3977, 1
      %v3979 = vadd.f32 %v3977, %v3978
      %v3980 = vsel %vm3934, %v401, 0.0
      %v3981 = vsel %vm3934, %v402, 0.0
      %v3982 = vadd.f32 %v3980, %v3981
      %v3983 = vrot.slane %v3982, 4
      %v3984 = vadd.f32 %v3982, %v3983
      %v3985 = vrot.slane %v3984, 2
      %v3986 = vadd.f32 %v3984, %v3985
      %v3987 = vrot.slane %v3986, 1
      %v3988 = vadd.f32 %v3986, %v3987
      %v3989 = vsel %vm3934, %v403, 0.0
      %v3990 = vsel %vm3934, %v404, 0.0
      %v3991 = vadd.f32 %v3989, %v3990
      %v3992 = vrot.slane %v3991, 4
      %v3993 = vadd.f32 %v3991, %v3992
      %v3994 = vrot.slane %v3993, 2
      %v3995 = vadd.f32 %v3993, %v3994
      %v3996 = vrot.slane %v3995, 1
      %v3997 = vadd.f32 %v3995, %v3996
      %v3998 = vsel %vm3934, %v405, 0.0
      %v3999 = vsel %vm3934, %v406, 0.0
      %v4000 = vadd.f32 %v3998, %v3999
      %v4001 = vrot.slane %v4000, 4
      %v4002 = vadd.f32 %v4000, %v4001
      %v4003 = vrot.slane %v4002, 2
      %v4004 = vadd.f32 %v4002, %v4003
      %v4005 = vrot.slane %v4004, 1
      %v4006 = vadd.f32 %v4004, %v4005
      %v4007 = vsel %vm3934, %v407, 0.0
      %v4008 = vsel %vm3934, %v408, 0.0
      %v4009 = vadd.f32 %v4007, %v4008
      %v4010 = vrot.slane %v4009, 4
      %v4011 = vadd.f32 %v4009, %v4010
      %v4012 = vrot.slane %v4011, 2
      %v4013 = vadd.f32 %v4011, %v4012
      %v4014 = vrot.slane %v4013, 1
      %v4015 = vadd.f32 %v4013, %v4014
      %v4016 = vsel %vm3934, %v409, 0.0
      %v4017 = vsel %vm3934, %v410, 0.0
      %v4018 = vadd.f32 %v4016, %v4017
      %v4019 = vrot.slane %v4018, 4
      %v4020 = vadd.f32 %v4018, %v4019
      %v4021 = vrot.slane %v4020, 2
      %v4022 = vadd.f32 %v4020, %v4021
      %v4023 = vrot.slane %v4022, 1
      %v4024 = vadd.f32 %v4022, %v4023
      %v4025 = vsel %vm3934, %v411, 0.0
      %v4026 = vsel %vm3934, %v412, 0.0
      %v4027 = vadd.f32 %v4025, %v4026
      %v4028 = vrot.slane %v4027, 4
      %v4029 = vadd.f32 %v4027, %v4028
      %v4030 = vrot.slane %v4029, 2
      %v4031 = vadd.f32 %v4029, %v4030
      %v4032 = vrot.slane %v4031, 1
      %v4033 = vadd.f32 %v4031, %v4032
      %v4034 = vsel %vm3934, %v413, 0.0
      %v4035 = vsel %vm3934, %v414, 0.0
      %v4036 = vadd.f32 %v4034, %v4035
      %v4037 = vrot.slane %v4036, 4
      %v4038 = vadd.f32 %v4036, %v4037
      %v4039 = vrot.slane %v4038, 2
      %v4040 = vadd.f32 %v4038, %v4039
      %v4041 = vrot.slane %v4040, 1
      %v4042 = vadd.f32 %v4040, %v4041
      %v4043 = vsel %vm3934, %v415, 0.0
      %v4044 = vsel %vm3934, %v416, 0.0
      %v4045 = vadd.f32 %v4043, %v4044
      %v4046 = vrot.slane %v4045, 4
      %v4047 = vadd.f32 %v4045, %v4046
      %v4048 = vrot.slane %v4047, 2
      %v4049 = vadd.f32 %v4047, %v4048
      %v4050 = vrot.slane %v4049, 1
      %v4051 = vadd.f32 %v4049, %v4050
      %v4052 = vsel %vm3934, %v417, 0.0
      %v4053 = vsel %vm3934, %v418, 0.0
      %v4054 = vadd.f32 %v4052, %v4053
      %v4055 = vrot.slane %v4054, 4
      %v4056 = vadd.f32 %v4054, %v4055
      %v4057 = vrot.slane %v4056, 2
      %v4058 = vadd.f32 %v4056, %v4057
      %v4059 = vrot.slane %v4058, 1
      %v4060 = vadd.f32 %v4058, %v4059
      %v4061 = vsel %vm3934, %v419, 0.0
      %v4062 = vsel %vm3934, %v420, 0.0
      %v4063 = vadd.f32 %v4061, %v4062
      %v4064 = vrot.slane %v4063, 4
      %v4065 = vadd.f32 %v4063, %v4064
      %v4066 = vrot.slane %v4065, 2
      %v4067 = vadd.f32 %v4065, %v4066
      %v4068 = vrot.slane %v4067, 1
      %v4069 = vadd.f32 %v4067, %v4068
      %v4070 = vsel %vm3934, %v421, 0.0
      %v4071 = vsel %vm3934, %v422, 0.0
      %v4072 = vadd.f32 %v4070, %v4071
      %v4073 = vrot.slane %v4072, 4
      %v4074 = vadd.f32 %v4072, %v4073
      %v4075 = vrot.slane %v4074, 2
      %v4076 = vadd.f32 %v4074, %v4075
      %v4077 = vrot.slane %v4076, 1
      %v4078 = vadd.f32 %v4076, %v4077
      %v4079 = vmul.f32 %v3943, %v568
      %v4080 = vmul.f32 %v3952, %v568
      %v4081 = vmul.f32 %v3961, %v568
      %v4082 = vmul.f32 %v3970, %v568
      %v4083 = vmul.f32 %v3979, %v568
      %v4084 = vmul.f32 %v3988, %v568
      %v4085 = vmul.f32 %v3997, %v568
      %v4086 = vmul.f32 %v4006, %v568
      %v4087 = vmul.f32 %v4015, %v568
      %v4088 = vmul.f32 %v4024, %v568
      %v4089 = vmul.f32 %v4033, %v568
      %v4090 = vmul.f32 %v4042, %v568
      %v4091 = vmul.f32 %v4051, %v568
      %v4092 = vmul.f32 %v4060, %v568
      %v4093 = vmul.f32 %v4069, %v568
      %v4094 = vmul.f32 %v4078, %v568
      %v4095 = vadd.f32 %v3935, %v3944
      %v4096 = vadd.f32 %v4095, %v3953
      %v4097 = vadd.f32 %v4096, %v3962
      %v4098 = vadd.f32 %v4097, %v3971
      %v4099 = vadd.f32 %v4098, %v3980
      %v4100 = vadd.f32 %v4099, %v3989
      %v4101 = vadd.f32 %v4100, %v3998
      %v4102 = vadd.f32 %v4101, %v4007
      %v4103 = vadd.f32 %v4102, %v4016
      %v4104 = vadd.f32 %v4103, %v4025
      %v4105 = vadd.f32 %v4104, %v4034
      %v4106 = vadd.f32 %v4105, %v4043
      %v4107 = vadd.f32 %v4106, %v4052
      %v4108 = vadd.f32 %v4107, %v4061
      %v4109 = vadd.f32 %v4108, %v4070
      %v4110 = vadd.f32 %v3936, %v3945
      %v4111 = vadd.f32 %v4110, %v3954
      %v4112 = vadd.f32 %v4111, %v3963
      %v4113 = vadd.f32 %v4112, %v3972
      %v4114 = vadd.f32 %v4113, %v3981
      %v4115 = vadd.f32 %v4114, %v3990
      %v4116 = vadd.f32 %v4115, %v3999
      %v4117 = vadd.f32 %v4116, %v4008
      %v4118 = vadd.f32 %v4117, %v4017
      %v4119 = vadd.f32 %v4118, %v4026
      %v4120 = vadd.f32 %v4119, %v4035
      %v4121 = vadd.f32 %v4120, %v4044
      %v4122 = vadd.f32 %v4121, %v4053
      %v4123 = vadd.f32 %v4122, %v4062
      %v4124 = vadd.f32 %v4123, %v4071
      %v4125 = vmul.f32 %v4109, %v568
      %v4126 = vmul.f32 %v4124, %v568
      %v4143 = vsel %vm633, %v4080, %v4079
      %v4144 = vsel %vm635, %v4081, %v4143
      %v4145 = vsel %vm637, %v4082, %v4144
      %v4146 = vsel %vm639, %v4083, %v4145
      %v4147 = vsel %vm641, %v4084, %v4146
      %v4148 = vsel %vm643, %v4085, %v4147
      %v4149 = vsel %vm645, %v4086, %v4148
      %v4150 = vsel %vm633, %v4088, %v4087
      %v4151 = vsel %vm635, %v4089, %v4150
      %v4152 = vsel %vm637, %v4090, %v4151
      %v4153 = vsel %vm639, %v4091, %v4152
      %v4154 = vsel %vm641, %v4092, %v4153
      %v4155 = vsel %vm643, %v4093, %v4154
      %v4156 = vsel %vm645, %v4094, %v4155
      %v4159 = vpack.c.bf16 %v4156, %v4149
      %v4160 = vpack.c.bf16 %v4126, %v4125
      %v4161 = vld [vmem:[%s2] sm:$0xf]
      %v4162 = vld [vmem:[%s3] sm:$0x1]
      %v4164 = vlaneseq
      %v4165 = vshrl.u32 %v4164, 7
      %v4166 = vsub.s32 0, %v4165
      %v4167 = vrot.slane %v4162, %v4166
      %4171 = vrot.lane.b32.xlu0 %v4159, 120
      %v4172 = vpop.permute.xlu0 %4171
      %4173 = vrot.lane.b32.xlu0 %v4160, 120
      %v4174 = vpop.permute.xlu0 %4173
      %v4176 = vsel %vm423, %v4172, 0
      %v4179 = vsel %vm423, %v4174, 0
      %v4182 = vsel %vm672, %v4161, 0
      %4184 = vmatprep.subr.bf16.mxu0 0
      %4185 = vmatpush1.bf16.msra.mxu0 0
      %4186 = vmatprep.subr.bf16.mxu0 0
      %4187 = vmatpush1.bf16.msra.mxu0 0
      %4188 = vmatprep.subr.bf16.mxu0 0
      %4189 = vmatpush1.bf16.msra.mxu0 0
      %4190 = vmatprep.subr.bf16.mxu0 0
      %4191 = vmatpush1.bf16.msra.mxu0 0
      %4192 = vmatprep.subr.bf16.mxu0 0
      %4193 = vmatpush1.bf16.msra.mxu0 0
      %4194 = vmatprep.subr.bf16.mxu0 0
      %4195 = vmatpush1.bf16.msra.mxu0 0
      %4196 = vmatprep.subr.bf16.mxu0 0
      %4197 = vmatpush1.bf16.msra.mxu0 0
      %4198 = vmatprep.subr.bf16.mxu0 0
      %4199 = vmatpush1.bf16.msra.mxu0 %v4182
      %4200 = vmatprep.subr.bf16.mxu0 0
      %4201 = vmatpush2.bf16.msra.mxu0 0
      %4202 = vmatprep.subr.bf16.mxu0 0
      %4203 = vmatpush2.bf16.msra.mxu0 0
      %4204 = vmatprep.subr.bf16.mxu0 0
      %4205 = vmatpush2.bf16.msra.mxu0 0
      %4206 = vmatprep.subr.bf16.mxu0 0
      %4207 = vmatpush2.bf16.msra.mxu0 0
      %4208 = vmatprep.subr.bf16.mxu0 0
      %4209 = vmatpush2.bf16.msra.mxu0 0
      %4210 = vmatprep.subr.bf16.mxu0 0
      %4211 = vmatpush2.bf16.msra.mxu0 0
      %4212 = vmatprep.subr.bf16.mxu0 0
      %4213 = vmatpush2.bf16.msra.mxu0 0
      %4214 = vmatprep.subr.bf16.mxu0 0
      %4215 = vmatpush2.bf16.msra.mxu0 0
      %4216 = vmatprep.mubr.bf16.mxu0 0
      %4217 = vmatmul.mubr.bf16.gmra.mxu0 %v4176
      %v4218 = vpop.f32.mrf.mxu0
      %v4219 = vadd.f32 %v4167, %v4218
      %v4220 = vpop.f32.mrf.mxu0
      %v4221 = vpop.f32.mrf.mxu0
      %v4222 = vadd.f32 %v4167, %v4221
      %v4223 = vpop.f32.mrf.mxu0
      %4224 = vmatprep.mubr.bf16.mxu0 0
      %4225 = vmatmul.mubr.bf16.gmra.mxu0 %v4179
      %v4226 = vpop.f32.mrf.mxu0
      %v4227 = vadd.f32 %v4167, %v4226
      %v4228 = vpop.f32.mrf.mxu0
      %v4229 = vpop.f32.mrf.mxu0
      %v4230 = vadd.f32 %v4167, %v4229
      %v4231 = vpop.f32.mrf.mxu0
      %4232 = vdwg.mxu0
      %v4233 = vxor.u32 %v4219, 2147483648
      %v4234 = vxor.u32 %v4222, 2147483648
      %v4235 = vmul.f32 %v4233, 1.442695
      %v4236 = vpow.pop %v4235
      %v4237 = vmul.f32 %v4234, 1.442695
      %v4238 = vpow.pop %v4237
      %v4239 = vadd.f32 %v4236, 1.0
      %v4240 = vadd.f32 %v4238, 1.0
      %v4241 = vrcp.pop %v4239
      %v4242 = vmul.f32 1.0, %v4241
      %v4243 = vrcp.pop %v4240
      %v4244 = vmul.f32 1.0, %v4243
      %v4245 = vxor.u32 %v4227, 2147483648
      %v4246 = vxor.u32 %v4230, 2147483648
      %v4247 = vmul.f32 %v4245, 1.442695
      %v4248 = vpow.pop %v4247
      %v4249 = vmul.f32 %v4246, 1.442695
      %v4250 = vpow.pop %v4249
      %v4251 = vadd.f32 %v4248, 1.0
      %v4252 = vadd.f32 %v4250, 1.0
      %v4253 = vrcp.pop %v4251
      %v4254 = vmul.f32 1.0, %v4253
      %v4255 = vrcp.pop %v4252
      %v4256 = vmul.f32 1.0, %v4255
      %v4259 = vcombine.high %v4242, %v4242
      %v4261 = vunpack.c.l.s4 1966171168
      %v4262 = vunpack.c.0.s8 %v4261
      %v4263 = vlaneseq
      %v4264 = vshrl.u32 %v4263, 7
      %v4265 = vsub.s32 %v4262, %v4264
      %v4266 = vrot.slane %v4242, %v4265
      %v4268 = vunpack.c.l.s4 1966171168
      %v4269 = vunpack.c.0.s8 %v4268
      %v4270 = vlaneseq
      %v4271 = vshrl.u32 %v4270, 7
      %v4272 = vsub.s32 %v4269, %v4271
      %v4273 = vrot.slane %v4259, %v4272
      %v4274 = vcombine.high %v4266, %v4266
      %v4275 = vcombine.high %v4273, %v4273
      %v4277 = vunpack.c.l.s4 1966171168
      %v4278 = vunpack.c.0.s8 %v4277
      %v4279 = vlaneseq
      %v4280 = vshrl.u32 %v4279, 7
      %v4281 = vsub.s32 %v4278, %v4280
      %v4282 = vrot.slane %v4266, %v4281
      %v4284 = vunpack.c.l.s4 1966171168
      %v4285 = vunpack.c.0.s8 %v4284
      %v4286 = vlaneseq
      %v4287 = vshrl.u32 %v4286, 7
      %v4288 = vsub.s32 %v4285, %v4287
      %v4289 = vrot.slane %v4273, %v4288
      %v4291 = vunpack.c.l.s4 1966171168
      %v4292 = vunpack.c.0.s8 %v4291
      %v4293 = vlaneseq
      %v4294 = vshrl.u32 %v4293, 7
      %v4295 = vsub.s32 %v4292, %v4294
      %v4296 = vrot.slane %v4274, %v4295
      %v4298 = vunpack.c.l.s4 1966171168
      %v4299 = vunpack.c.0.s8 %v4298
      %v4300 = vlaneseq
      %v4301 = vshrl.u32 %v4300, 7
      %v4302 = vsub.s32 %v4299, %v4301
      %v4303 = vrot.slane %v4275, %v4302
      %v4304 = vcombine.high %v4282, %v4282
      %v4305 = vcombine.high %v4289, %v4289
      %v4306 = vcombine.high %v4296, %v4296
      %v4307 = vcombine.high %v4303, %v4303
      %v4308 = vcombine.high %v4244, %v4244
      %v4310 = vunpack.c.l.s4 1966171168
      %v4311 = vunpack.c.0.s8 %v4310
      %v4312 = vlaneseq
      %v4313 = vshrl.u32 %v4312, 7
      %v4314 = vsub.s32 %v4311, %v4313
      %v4315 = vrot.slane %v4244, %v4314
      %v4317 = vunpack.c.l.s4 1966171168
      %v4318 = vunpack.c.0.s8 %v4317
      %v4319 = vlaneseq
      %v4320 = vshrl.u32 %v4319, 7
      %v4321 = vsub.s32 %v4318, %v4320
      %v4322 = vrot.slane %v4308, %v4321
      %v4323 = vcombine.high %v4315, %v4315
      %v4324 = vcombine.high %v4322, %v4322
      %v4326 = vunpack.c.l.s4 1966171168
      %v4327 = vunpack.c.0.s8 %v4326
      %v4328 = vlaneseq
      %v4329 = vshrl.u32 %v4328, 7
      %v4330 = vsub.s32 %v4327, %v4329
      %v4331 = vrot.slane %v4315, %v4330
      %v4333 = vunpack.c.l.s4 1966171168
      %v4334 = vunpack.c.0.s8 %v4333
      %v4335 = vlaneseq
      %v4336 = vshrl.u32 %v4335, 7
      %v4337 = vsub.s32 %v4334, %v4336
      %v4338 = vrot.slane %v4322, %v4337
      %v4340 = vunpack.c.l.s4 1966171168
      %v4341 = vunpack.c.0.s8 %v4340
      %v4342 = vlaneseq
      %v4343 = vshrl.u32 %v4342, 7
      %v4344 = vsub.s32 %v4341, %v4343
      %v4345 = vrot.slane %v4323, %v4344
      %v4347 = vunpack.c.l.s4 1966171168
      %v4348 = vunpack.c.0.s8 %v4347
      %v4349 = vlaneseq
      %v4350 = vshrl.u32 %v4349, 7
      %v4351 = vsub.s32 %v4348, %v4350
      %v4352 = vrot.slane %v4324, %v4351
      %v4353 = vcombine.high %v4331, %v4331
      %v4354 = vcombine.high %v4338, %v4338
      %v4355 = vcombine.high %v4345, %v4345
      %v4356 = vcombine.high %v4352, %v4352
      %v4357 = vlaneseq
      %v4358 = vshrl.u32 %v4357, 7
      %v4359 = vsub.s32 0, %v4358
      %v4360 = vrot.slane %v4282, %v4359
      %v4361 = vlaneseq
      %v4362 = vshrl.u32 %v4361, 7
      %v4363 = vsub.s32 0, %v4362
      %v4364 = vrot.slane %v4296, %v4363
      %v4365 = vlaneseq
      %v4366 = vshrl.u32 %v4365, 7
      %v4367 = vsub.s32 0, %v4366
      %v4368 = vrot.slane %v4304, %v4367
      %v4369 = vlaneseq
      %v4370 = vshrl.u32 %v4369, 7
      %v4371 = vsub.s32 0, %v4370
      %v4372 = vrot.slane %v4306, %v4371
      %v4373 = vlaneseq
      %v4374 = vshrl.u32 %v4373, 7
      %v4375 = vsub.s32 0, %v4374
      %v4376 = vrot.slane %v4289, %v4375
      %v4377 = vlaneseq
      %v4378 = vshrl.u32 %v4377, 7
      %v4379 = vsub.s32 0, %v4378
      %v4380 = vrot.slane %v4303, %v4379
      %v4381 = vlaneseq
      %v4382 = vshrl.u32 %v4381, 7
      %v4383 = vsub.s32 0, %v4382
      %v4384 = vrot.slane %v4305, %v4383
      %v4385 = vlaneseq
      %v4386 = vshrl.u32 %v4385, 7
      %v4387 = vsub.s32 0, %v4386
      %v4388 = vrot.slane %v4307, %v4387
      %v4389 = vlaneseq
      %v4390 = vshrl.u32 %v4389, 7
      %v4391 = vsub.s32 0, %v4390
      %v4392 = vrot.slane %v4331, %v4391
      %v4393 = vlaneseq
      %v4394 = vshrl.u32 %v4393, 7
      %v4395 = vsub.s32 0, %v4394
      %v4396 = vrot.slane %v4345, %v4395
      %v4397 = vlaneseq
      %v4398 = vshrl.u32 %v4397, 7
      %v4399 = vsub.s32 0, %v4398
      %v4400 = vrot.slane %v4353, %v4399
      %v4401 = vlaneseq
      %v4402 = vshrl.u32 %v4401, 7
      %v4403 = vsub.s32 0, %v4402
      %v4404 = vrot.slane %v4355, %v4403
      %v4405 = vlaneseq
      %v4406 = vshrl.u32 %v4405, 7
      %v4407 = vsub.s32 0, %v4406
      %v4408 = vrot.slane %v4338, %v4407
      %v4409 = vlaneseq
      %v4410 = vshrl.u32 %v4409, 7
      %v4411 = vsub.s32 0, %v4410
      %v4412 = vrot.slane %v4352, %v4411
      %v4413 = vlaneseq
      %v4414 = vshrl.u32 %v4413, 7
      %v4415 = vsub.s32 0, %v4414
      %v4416 = vrot.slane %v4354, %v4415
      %v4417 = vlaneseq
      %v4418 = vshrl.u32 %v4417, 7
      %v4419 = vsub.s32 0, %v4418
      %v4420 = vrot.slane %v4356, %v4419
      %4421 = vrot.lane.b32.xlu0 %v4360, 8
      %v4422 = vpop.permute.xlu0 %4421
      %4423 = vrot.lane.b32.xlu0 %v4364, 8
      %v4424 = vpop.permute.xlu0 %4423
      %4425 = vrot.lane.b32.xlu0 %v4368, 8
      %v4426 = vpop.permute.xlu0 %4425
      %4427 = vrot.lane.b32.xlu0 %v4372, 8
      %v4428 = vpop.permute.xlu0 %4427
      %4429 = vrot.lane.b32.xlu0 %v4376, 8
      %v4430 = vpop.permute.xlu0 %4429
      %4431 = vrot.lane.b32.xlu0 %v4380, 8
      %v4432 = vpop.permute.xlu0 %4431
      %4433 = vrot.lane.b32.xlu0 %v4384, 8
      %v4434 = vpop.permute.xlu0 %4433
      %4435 = vrot.lane.b32.xlu0 %v4388, 8
      %v4436 = vpop.permute.xlu0 %4435
      %4437 = vrot.lane.b32.xlu0 %v4392, 8
      %v4438 = vpop.permute.xlu0 %4437
      %4439 = vrot.lane.b32.xlu0 %v4396, 8
      %v4440 = vpop.permute.xlu0 %4439
      %4441 = vrot.lane.b32.xlu0 %v4400, 8
      %v4442 = vpop.permute.xlu0 %4441
      %4443 = vrot.lane.b32.xlu0 %v4404, 8
      %v4444 = vpop.permute.xlu0 %4443
      %4445 = vrot.lane.b32.xlu0 %v4408, 8
      %v4446 = vpop.permute.xlu0 %4445
      %4447 = vrot.lane.b32.xlu0 %v4412, 8
      %v4448 = vpop.permute.xlu0 %4447
      %4449 = vrot.lane.b32.xlu0 %v4416, 8
      %v4450 = vpop.permute.xlu0 %4449
      %4451 = vrot.lane.b32.xlu0 %v4420, 8
      %v4452 = vpop.permute.xlu0 %4451
      %v4469 = vmul.f32 %v391, %v4422
      %v4470 = vmul.f32 %v392, %v4422
      %v4471 = vmul.f32 %v393, %v4424
      %v4472 = vmul.f32 %v394, %v4424
      %v4473 = vmul.f32 %v395, %v4426
      %v4474 = vmul.f32 %v396, %v4426
      %v4475 = vmul.f32 %v397, %v4428
      %v4476 = vmul.f32 %v398, %v4428
      %v4477 = vmul.f32 %v399, %v4430
      %v4478 = vmul.f32 %v400, %v4430
      %v4479 = vmul.f32 %v401, %v4432
      %v4480 = vmul.f32 %v402, %v4432
      %v4481 = vmul.f32 %v403, %v4434
      %v4482 = vmul.f32 %v404, %v4434
      %v4483 = vmul.f32 %v405, %v4436
      %v4484 = vmul.f32 %v406, %v4436
      %v4485 = vmul.f32 %v407, %v4438
      %v4486 = vmul.f32 %v408, %v4438
      %v4487 = vmul.f32 %v409, %v4440
      %v4488 = vmul.f32 %v410, %v4440
      %v4489 = vmul.f32 %v411, %v4442
      %v4490 = vmul.f32 %v412, %v4442
      %v4491 = vmul.f32 %v413, %v4444
      %v4492 = vmul.f32 %v414, %v4444
      %v4493 = vmul.f32 %v415, %v4446
      %v4494 = vmul.f32 %v416, %v4446
      %v4495 = vmul.f32 %v417, %v4448
      %v4496 = vmul.f32 %v418, %v4448
      %v4497 = vmul.f32 %v419, %v4450
      %v4498 = vmul.f32 %v420, %v4450
      %v4499 = vmul.f32 %v421, %v4452
      %v4500 = vmul.f32 %v422, %v4452
      %4503 = vrot.lane.b32.xlu0 %v4254, 8
      %v4504 = vpop.permute.xlu0 %4503
      %4505 = vrot.lane.b32.xlu0 %v4256, 8
      %v4506 = vpop.permute.xlu0 %4505
      %v4509 = vmul.f32 %v4469, %v4504
      %v4510 = vmul.f32 %v4470, %v4506
      %v4511 = vmul.f32 %v4471, %v4504
      %v4512 = vmul.f32 %v4472, %v4506
      %v4513 = vmul.f32 %v4473, %v4504
      %v4514 = vmul.f32 %v4474, %v4506
      %v4515 = vmul.f32 %v4475, %v4504
      %v4516 = vmul.f32 %v4476, %v4506
      %v4517 = vmul.f32 %v4477, %v4504
      %v4518 = vmul.f32 %v4478, %v4506
      %v4519 = vmul.f32 %v4479, %v4504
      %v4520 = vmul.f32 %v4480, %v4506
      %v4521 = vmul.f32 %v4481, %v4504
      %v4522 = vmul.f32 %v4482, %v4506
      %v4523 = vmul.f32 %v4483, %v4504
      %v4524 = vmul.f32 %v4484, %v4506
      %v4525 = vmul.f32 %v4485, %v4504
      %v4526 = vmul.f32 %v4486, %v4506
      %v4527 = vmul.f32 %v4487, %v4504
      %v4528 = vmul.f32 %v4488, %v4506
      %v4529 = vmul.f32 %v4489, %v4504
      %v4530 = vmul.f32 %v4490, %v4506
      %v4531 = vmul.f32 %v4491, %v4504
      %v4532 = vmul.f32 %v4492, %v4506
      %v4533 = vmul.f32 %v4493, %v4504
      %v4534 = vmul.f32 %v4494, %v4506
      %v4535 = vmul.f32 %v4495, %v4504
      %v4536 = vmul.f32 %v4496, %v4506
      %v4537 = vmul.f32 %v4497, %v4504
      %v4538 = vmul.f32 %v4498, %v4506
      %v4539 = vmul.f32 %v4499, %v4504
      %v4540 = vmul.f32 %v4500, %v4506
      %v4541 = vsel %vm3934, %v4509, 0.0
      %v4542 = vsel %vm3934, %v4510, 0.0
      %v4543 = vadd.f32 %v4541, %v4542
      %v4544 = vsel %vm3934, %v4511, 0.0
      %v4545 = vadd.f32 %v4543, %v4544
      %v4546 = vsel %vm3934, %v4512, 0.0
      %v4547 = vadd.f32 %v4545, %v4546
      %v4548 = vsel %vm3934, %v4513, 0.0
      %v4549 = vadd.f32 %v4547, %v4548
      %v4550 = vsel %vm3934, %v4514, 0.0
      %v4551 = vadd.f32 %v4549, %v4550
      %v4552 = vsel %vm3934, %v4515, 0.0
      %v4553 = vadd.f32 %v4551, %v4552
      %v4554 = vsel %vm3934, %v4516, 0.0
      %v4555 = vadd.f32 %v4553, %v4554
      %v4556 = vsel %vm3934, %v4517, 0.0
      %v4557 = vadd.f32 %v4555, %v4556
      %v4558 = vsel %vm3934, %v4518, 0.0
      %v4559 = vadd.f32 %v4557, %v4558
      %v4560 = vsel %vm3934, %v4519, 0.0
      %v4561 = vadd.f32 %v4559, %v4560
      %v4562 = vsel %vm3934, %v4520, 0.0
      %v4563 = vadd.f32 %v4561, %v4562
      %v4564 = vsel %vm3934, %v4521, 0.0
      %v4565 = vadd.f32 %v4563, %v4564
      %v4566 = vsel %vm3934, %v4522, 0.0
      %v4567 = vadd.f32 %v4565, %v4566
      %v4568 = vsel %vm3934, %v4523, 0.0
      %v4569 = vadd.f32 %v4567, %v4568
      %v4570 = vsel %vm3934, %v4524, 0.0
      %v4571 = vadd.f32 %v4569, %v4570
      %v4572 = vsel %vm3934, %v4525, 0.0
      %v4573 = vadd.f32 %v4571, %v4572
      %v4574 = vsel %vm3934, %v4526, 0.0
      %v4575 = vadd.f32 %v4573, %v4574
      %v4576 = vsel %vm3934, %v4527, 0.0
      %v4577 = vadd.f32 %v4575, %v4576
      %v4578 = vsel %vm3934, %v4528, 0.0
      %v4579 = vadd.f32 %v4577, %v4578
      %v4580 = vsel %vm3934, %v4529, 0.0
      %v4581 = vadd.f32 %v4579, %v4580
      %v4582 = vsel %vm3934, %v4530, 0.0
      %v4583 = vadd.f32 %v4581, %v4582
      %v4584 = vsel %vm3934, %v4531, 0.0
      %v4585 = vadd.f32 %v4583, %v4584
      %v4586 = vsel %vm3934, %v4532, 0.0
      %v4587 = vadd.f32 %v4585, %v4586
      %v4588 = vsel %vm3934, %v4533, 0.0
      %v4589 = vadd.f32 %v4587, %v4588
      %v4590 = vsel %vm3934, %v4534, 0.0
      %v4591 = vadd.f32 %v4589, %v4590
      %v4592 = vsel %vm3934, %v4535, 0.0
      %v4593 = vadd.f32 %v4591, %v4592
      %v4594 = vsel %vm3934, %v4536, 0.0
      %v4595 = vadd.f32 %v4593, %v4594
      %v4596 = vsel %vm3934, %v4537, 0.0
      %v4597 = vadd.f32 %v4595, %v4596
      %v4598 = vsel %vm3934, %v4538, 0.0
      %v4599 = vadd.f32 %v4597, %v4598
      %v4600 = vsel %vm3934, %v4539, 0.0
      %v4601 = vadd.f32 %v4599, %v4600
      %v4602 = vsel %vm3934, %v4540, 0.0
      %v4603 = vadd.f32 %v4601, %v4602
      %v4604 = vrot.slane %v4603, 4
      %v4605 = vadd.f32 %v4603, %v4604
      %v4606 = vrot.slane %v4605, 2
      %v4607 = vadd.f32 %v4605, %v4606
      %v4608 = vrot.slane %v4607, 1
      %v4609 = vadd.f32 %v4607, %v4608
      %v4610 = vmul.f32 %v4609, %v1062
      %v4611 = vsub.f32 %v4509, %v4610
      %v4612 = vsub.f32 %v4510, %v4610
      %v4613 = vsub.f32 %v4511, %v4610
      %v4614 = vsub.f32 %v4512, %v4610
      %v4615 = vsub.f32 %v4513, %v4610
      %v4616 = vsub.f32 %v4514, %v4610
      %v4617 = vsub.f32 %v4515, %v4610
      %v4618 = vsub.f32 %v4516, %v4610
      %v4619 = vsub.f32 %v4517, %v4610
      %v4620 = vsub.f32 %v4518, %v4610
      %v4621 = vsub.f32 %v4519, %v4610
      %v4622 = vsub.f32 %v4520, %v4610
      %v4623 = vsub.f32 %v4521, %v4610
      %v4624 = vsub.f32 %v4522, %v4610
      %v4625 = vsub.f32 %v4523, %v4610
      %v4626 = vsub.f32 %v4524, %v4610
      %v4627 = vsub.f32 %v4525, %v4610
      %v4628 = vsub.f32 %v4526, %v4610
      %v4629 = vsub.f32 %v4527, %v4610
      %v4630 = vsub.f32 %v4528, %v4610
      %v4631 = vsub.f32 %v4529, %v4610
      %v4632 = vsub.f32 %v4530, %v4610
      %v4633 = vsub.f32 %v4531, %v4610
      %v4634 = vsub.f32 %v4532, %v4610
      %v4635 = vsub.f32 %v4533, %v4610
      %v4636 = vsub.f32 %v4534, %v4610
      %v4637 = vsub.f32 %v4535, %v4610
      %v4638 = vsub.f32 %v4536, %v4610
      %v4639 = vsub.f32 %v4537, %v4610
      %v4640 = vsub.f32 %v4538, %v4610
      %v4641 = vsub.f32 %v4539, %v4610
      %v4642 = vsub.f32 %v4540, %v4610
      %v4643 = vmul.f32 %v4611, %v4611
      %v4644 = vmul.f32 %v4612, %v4612
      %v4645 = vmul.f32 %v4613, %v4613
      %v4646 = vmul.f32 %v4614, %v4614
      %v4647 = vmul.f32 %v4615, %v4615
      %v4648 = vmul.f32 %v4616, %v4616
      %v4649 = vmul.f32 %v4617, %v4617
      %v4650 = vmul.f32 %v4618, %v4618
      %v4651 = vmul.f32 %v4619, %v4619
      %v4652 = vmul.f32 %v4620, %v4620
      %v4653 = vmul.f32 %v4621, %v4621
      %v4654 = vmul.f32 %v4622, %v4622
      %v4655 = vmul.f32 %v4623, %v4623
      %v4656 = vmul.f32 %v4624, %v4624
      %v4657 = vmul.f32 %v4625, %v4625
      %v4658 = vmul.f32 %v4626, %v4626
      %v4659 = vmul.f32 %v4627, %v4627
      %v4660 = vmul.f32 %v4628, %v4628
      %v4661 = vmul.f32 %v4629, %v4629
      %v4662 = vmul.f32 %v4630, %v4630
      %v4663 = vmul.f32 %v4631, %v4631
      %v4664 = vmul.f32 %v4632, %v4632
      %v4665 = vmul.f32 %v4633, %v4633
      %v4666 = vmul.f32 %v4634, %v4634
      %v4667 = vmul.f32 %v4635, %v4635
      %v4668 = vmul.f32 %v4636, %v4636
      %v4669 = vmul.f32 %v4637, %v4637
      %v4670 = vmul.f32 %v4638, %v4638
      %v4671 = vmul.f32 %v4639, %v4639
      %v4672 = vmul.f32 %v4640, %v4640
      %v4673 = vmul.f32 %v4641, %v4641
      %v4674 = vmul.f32 %v4642, %v4642
      %v4675 = vsel %vm3934, %v4643, 0.0
      %v4676 = vsel %vm3934, %v4644, 0.0
      %v4677 = vadd.f32 %v4675, %v4676
      %v4678 = vsel %vm3934, %v4645, 0.0
      %v4679 = vadd.f32 %v4677, %v4678
      %v4680 = vsel %vm3934, %v4646, 0.0
      %v4681 = vadd.f32 %v4679, %v4680
      %v4682 = vsel %vm3934, %v4647, 0.0
      %v4683 = vadd.f32 %v4681, %v4682
      %v4684 = vsel %vm3934, %v4648, 0.0
      %v4685 = vadd.f32 %v4683, %v4684
      %v4686 = vsel %vm3934, %v4649, 0.0
      %v4687 = vadd.f32 %v4685, %v4686
      %v4688 = vsel %vm3934, %v4650, 0.0
      %v4689 = vadd.f32 %v4687, %v4688
      %v4690 = vsel %vm3934, %v4651, 0.0
      %v4691 = vadd.f32 %v4689, %v4690
      %v4692 = vsel %vm3934, %v4652, 0.0
      %v4693 = vadd.f32 %v4691, %v4692
      %v4694 = vsel %vm3934, %v4653, 0.0
      %v4695 = vadd.f32 %v4693, %v4694
      %v4696 = vsel %vm3934, %v4654, 0.0
      %v4697 = vadd.f32 %v4695, %v4696
      %v4698 = vsel %vm3934, %v4655, 0.0
      %v4699 = vadd.f32 %v4697, %v4698
      %v4700 = vsel %vm3934, %v4656, 0.0
      %v4701 = vadd.f32 %v4699, %v4700
      %v4702 = vsel %vm3934, %v4657, 0.0
      %v4703 = vadd.f32 %v4701, %v4702
      %v4704 = vsel %vm3934, %v4658, 0.0
      %v4705 = vadd.f32 %v4703, %v4704
      %v4706 = vsel %vm3934, %v4659, 0.0
      %v4707 = vadd.f32 %v4705, %v4706
      %v4708 = vsel %vm3934, %v4660, 0.0
      %v4709 = vadd.f32 %v4707, %v4708
      %v4710 = vsel %vm3934, %v4661, 0.0
      %v4711 = vadd.f32 %v4709, %v4710
      %v4712 = vsel %vm3934, %v4662, 0.0
      %v4713 = vadd.f32 %v4711, %v4712
      %v4714 = vsel %vm3934, %v4663, 0.0
      %v4715 = vadd.f32 %v4713, %v4714
      %v4716 = vsel %vm3934, %v4664, 0.0
      %v4717 = vadd.f32 %v4715, %v4716
      %v4718 = vsel %vm3934, %v4665, 0.0
      %v4719 = vadd.f32 %v4717, %v4718
      %v4720 = vsel %vm3934, %v4666, 0.0
      %v4721 = vadd.f32 %v4719, %v4720
      %v4722 = vsel %vm3934, %v4667, 0.0
      %v4723 = vadd.f32 %v4721, %v4722
      %v4724 = vsel %vm3934, %v4668, 0.0
      %v4725 = vadd.f32 %v4723, %v4724
      %v4726 = vsel %vm3934, %v4669, 0.0
      %v4727 = vadd.f32 %v4725, %v4726
      %v4728 = vsel %vm3934, %v4670, 0.0
      %v4729 = vadd.f32 %v4727, %v4728
      %v4730 = vsel %vm3934, %v4671, 0.0
      %v4731 = vadd.f32 %v4729, %v4730
      %v4732 = vsel %vm3934, %v4672, 0.0
      %v4733 = vadd.f32 %v4731, %v4732
      %v4734 = vsel %vm3934, %v4673, 0.0
      %v4735 = vadd.f32 %v4733, %v4734
      %v4736 = vsel %vm3934, %v4674, 0.0
      %v4737 = vadd.f32 %v4735, %v4736
      %v4738 = vrot.slane %v4737, 4
      %v4739 = vadd.f32 %v4737, %v4738
      %v4740 = vrot.slane %v4739, 2
      %v4741 = vadd.f32 %v4739, %v4740
      %v4742 = vrot.slane %v4741, 1
      %v4743 = vadd.f32 %v4741, %v4742
      %v4744 = vmul.f32 %v4743, %v1062
      %v4745 = vadd.f32 %v4744, 1e-05
      %v4746 = vrsqrt.pop %v4745
      %v4747 = vmul.f32 %v4611, %v4746
      %v4748 = vmul.f32 %v4612, %v4746
      %v4749 = vmul.f32 %v4613, %v4746
      %v4750 = vmul.f32 %v4614, %v4746
      %v4751 = vmul.f32 %v4615, %v4746
      %v4752 = vmul.f32 %v4616, %v4746
      %v4753 = vmul.f32 %v4617, %v4746
      %v4754 = vmul.f32 %v4618, %v4746
      %v4755 = vmul.f32 %v4619, %v4746
      %v4756 = vmul.f32 %v4620, %v4746
      %v4757 = vmul.f32 %v4621, %v4746
      %v4758 = vmul.f32 %v4622, %v4746
      %v4759 = vmul.f32 %v4623, %v4746
      %v4760 = vmul.f32 %v4624, %v4746
      %v4761 = vmul.f32 %v4625, %v4746
      %v4762 = vmul.f32 %v4626, %v4746
      %v4763 = vmul.f32 %v4627, %v4746
      %v4764 = vmul.f32 %v4628, %v4746
      %v4765 = vmul.f32 %v4629, %v4746
      %v4766 = vmul.f32 %v4630, %v4746
      %v4767 = vmul.f32 %v4631, %v4746
      %v4768 = vmul.f32 %v4632, %v4746
      %v4769 = vmul.f32 %v4633, %v4746
      %v4770 = vmul.f32 %v4634, %v4746
      %v4771 = vmul.f32 %v4635, %v4746
      %v4772 = vmul.f32 %v4636, %v4746
      %v4773 = vmul.f32 %v4637, %v4746
      %v4774 = vmul.f32 %v4638, %v4746
      %v4775 = vmul.f32 %v4639, %v4746
      %v4776 = vmul.f32 %v4640, %v4746
      %v4777 = vmul.f32 %v4641, %v4746
      %v4778 = vmul.f32 %v4642, %v4746
      %v4779 = vld [vmem:[%s6] sm:$0x1]
      %v4781 = vlaneseq
      %v4782 = vshrl.u32 %v4781, 7
      %v4783 = vsub.s32 0, %v4782
      %v4784 = vrot.slane %v4779, %v4783
      %4785 = vrot.lane.b32.xlu0 %v4784, 8
      %v4786 = vpop.permute.xlu0 %4785
      %v4788 = vmul.f32 %v4747, %v4786
      %v4789 = vmul.f32 %v4748, %v4786
      %v4790 = vmul.f32 %v4749, %v4786
      %v4791 = vmul.f32 %v4750, %v4786
      %v4792 = vmul.f32 %v4751, %v4786
      %v4793 = vmul.f32 %v4752, %v4786
      %v4794 = vmul.f32 %v4753, %v4786
      %v4795 = vmul.f32 %v4754, %v4786
      %v4796 = vmul.f32 %v4755, %v4786
      %v4797 = vmul.f32 %v4756, %v4786
      %v4798 = vmul.f32 %v4757, %v4786
      %v4799 = vmul.f32 %v4758, %v4786
      %v4800 = vmul.f32 %v4759, %v4786
      %v4801 = vmul.f32 %v4760, %v4786
      %v4802 = vmul.f32 %v4761, %v4786
      %v4803 = vmul.f32 %v4762, %v4786
      %v4804 = vmul.f32 %v4763, %v4786
      %v4805 = vmul.f32 %v4764, %v4786
      %v4806 = vmul.f32 %v4765, %v4786
      %v4807 = vmul.f32 %v4766, %v4786
      %v4808 = vmul.f32 %v4767, %v4786
      %v4809 = vmul.f32 %v4768, %v4786
      %v4810 = vmul.f32 %v4769, %v4786
      %v4811 = vmul.f32 %v4770, %v4786
      %v4812 = vmul.f32 %v4771, %v4786
      %v4813 = vmul.f32 %v4772, %v4786
      %v4814 = vmul.f32 %v4773, %v4786
      %v4815 = vmul.f32 %v4774, %v4786
      %v4816 = vmul.f32 %v4775, %v4786
      %v4817 = vmul.f32 %v4776, %v4786
      %v4818 = vmul.f32 %v4777, %v4786
      %v4819 = vmul.f32 %v4778, %v4786
      %v4820 = vld [vmem:[%s7] sm:$0x1]
      %v4822 = vlaneseq
      %v4823 = vshrl.u32 %v4822, 7
      %v4824 = vsub.s32 0, %v4823
      %v4825 = vrot.slane %v4820, %v4824
      %4826 = vrot.lane.b32.xlu0 %v4825, 8
      %v4827 = vpop.permute.xlu0 %4826
      %v4829 = vadd.f32 %v4788, %v4827
      %v4830 = vadd.f32 %v4789, %v4827
      %v4831 = vadd.f32 %v4790, %v4827
      %v4832 = vadd.f32 %v4791, %v4827
      %v4833 = vadd.f32 %v4792, %v4827
      %v4834 = vadd.f32 %v4793, %v4827
      %v4835 = vadd.f32 %v4794, %v4827
      %v4836 = vadd.f32 %v4795, %v4827
      %v4837 = vadd.f32 %v4796, %v4827
      %v4838 = vadd.f32 %v4797, %v4827
      %v4839 = vadd.f32 %v4798, %v4827
      %v4840 = vadd.f32 %v4799, %v4827
      %v4841 = vadd.f32 %v4800, %v4827
      %v4842 = vadd.f32 %v4801, %v4827
      %v4843 = vadd.f32 %v4802, %v4827
      %v4844 = vadd.f32 %v4803, %v4827
      %v4845 = vadd.f32 %v4804, %v4827
      %v4846 = vadd.f32 %v4805, %v4827
      %v4847 = vadd.f32 %v4806, %v4827
      %v4848 = vadd.f32 %v4807, %v4827
      %v4849 = vadd.f32 %v4808, %v4827
      %v4850 = vadd.f32 %v4809, %v4827
      %v4851 = vadd.f32 %v4810, %v4827
      %v4852 = vadd.f32 %v4811, %v4827
      %v4853 = vadd.f32 %v4812, %v4827
      %v4854 = vadd.f32 %v4813, %v4827
      %v4855 = vadd.f32 %v4814, %v4827
      %v4856 = vadd.f32 %v4815, %v4827
      %v4857 = vadd.f32 %v4816, %v4827
      %v4858 = vadd.f32 %v4817, %v4827
      %v4859 = vadd.f32 %v4818, %v4827
      %v4860 = vadd.f32 %v4819, %v4827
      %4861 = vst.msk [vmem:[#allocation2] sm:$0xf] %vm1310, 0
      %4862 = vst.msk [vmem:[#allocation2 + $0x4] sm:$0xf] %vm1310, 0
      %4863 = vst.msk [vmem:[#allocation2 + $0x8] sm:$0x1] %vm1313, 0
      %4864 = vst.msk [vmem:[#allocation2 + $0xc] sm:$0xf] %vm1310, 0
      %4865 = vst.msk [vmem:[#allocation2 + $0x10] sm:$0xf] %vm1310, 0
      %4866 = vst.msk [vmem:[#allocation2 + $0x14] sm:$0x1] %vm1313, 0
      %4867 = vst.msk [vmem:[#allocation2 + $0x18] sm:$0xf] %vm1310, 0
      %4868 = vst.msk [vmem:[#allocation2 + $0x1c] sm:$0xf] %vm1310, 0
      %4869 = vst.msk [vmem:[#allocation2 + $0x20] sm:$0x1] %vm1313, 0
      %4870 = vst.msk [vmem:[#allocation2 + $0x24] sm:$0xf] %vm1310, 0
      %4871 = vst.msk [vmem:[#allocation2 + $0x28] sm:$0xf] %vm1310, 0
      %4872 = vst.msk [vmem:[#allocation2 + $0x2c] sm:$0x1] %vm1313, 0
      %4873 = vst.msk [vmem:[#allocation2 + $0x30] sm:$0xf] %vm1310, 0
      %4874 = vst.msk [vmem:[#allocation2 + $0x34] sm:$0xf] %vm1310, 0
      %4875 = vst.msk [vmem:[#allocation2 + $0x38] sm:$0x1] %vm1313, 0
      %4876 = vst.msk [vmem:[#allocation2 + $0x3c] sm:$0xf] %vm1310, 0
      %4877 = vst.msk [vmem:[#allocation2 + $0x40] sm:$0xf] %vm1310, 0
      %4878 = vst.msk [vmem:[#allocation2 + $0x44] sm:$0x1] %vm1313, 0
      %4879 = vst.msk [vmem:[#allocation2 + $0x48] sm:$0xf] %vm1310, 0
      %4880 = vst.msk [vmem:[#allocation2 + $0x4c] sm:$0xf] %vm1310, 0
      %4881 = vst.msk [vmem:[#allocation2 + $0x50] sm:$0x1] %vm1313, 0
      %4882 = vst.msk [vmem:[#allocation2 + $0x54] sm:$0xf] %vm1310, 0
      %4883 = vst.msk [vmem:[#allocation2 + $0x58] sm:$0xf] %vm1310, 0
      %4884 = vst.msk [vmem:[#allocation2 + $0x5c] sm:$0x1] %vm1313, 0
      %4885 = vst.msk [vmem:[#allocation2 + $0x60] sm:$0xf] %vm1310, 0
      %4886 = vst.msk [vmem:[#allocation2 + $0x64] sm:$0xf] %vm1310, 0
      %4887 = vst.msk [vmem:[#allocation2 + $0x68] sm:$0x1] %vm1313, 0
      %4888 = vst.msk [vmem:[#allocation2 + $0x6c] sm:$0xf] %vm1310, 0
      %4889 = vst.msk [vmem:[#allocation2 + $0x70] sm:$0xf] %vm1310, 0
      %4890 = vst.msk [vmem:[#allocation2 + $0x74] sm:$0x1] %vm1313, 0
      %4891 = vst.msk [vmem:[#allocation2 + $0x78] sm:$0xf] %vm1310, 0
      %4892 = vst.msk [vmem:[#allocation2 + $0x7c] sm:$0xf] %vm1310, 0
      %4893 = vst.msk [vmem:[#allocation2 + $0x80] sm:$0x1] %vm1313, 0
      %4894 = vst.msk [vmem:[#allocation2 + $0x84] sm:$0xf] %vm1310, 0
      %4895 = vst.msk [vmem:[#allocation2 + $0x88] sm:$0xf] %vm1310, 0
      %4896 = vst.msk [vmem:[#allocation2 + $0x8c] sm:$0x1] %vm1313, 0
      %4897 = vst.msk [vmem:[#allocation2 + $0x90] sm:$0xf] %vm1310, 0
      %4898 = vst.msk [vmem:[#allocation2 + $0x94] sm:$0xf] %vm1310, 0
      %4899 = vst.msk [vmem:[#allocation2 + $0x98] sm:$0x1] %vm1313, 0
      %4900 = vst.msk [vmem:[#allocation2 + $0x9c] sm:$0xf] %vm1310, 0
      %4901 = vst.msk [vmem:[#allocation2 + $0xa0] sm:$0xf] %vm1310, 0
      %4902 = vst.msk [vmem:[#allocation2 + $0xa4] sm:$0x1] %vm1313, 0
      %4903 = vst.msk [vmem:[#allocation2 + $0xa8] sm:$0xf] %vm1310, 0
      %4904 = vst.msk [vmem:[#allocation2 + $0xac] sm:$0xf] %vm1310, 0
      %4905 = vst.msk [vmem:[#allocation2 + $0xb0] sm:$0x1] %vm1313, 0
      %4906 = vst.msk [vmem:[#allocation2 + $0xb4] sm:$0xf] %vm1310, 0
      %4907 = vst.msk [vmem:[#allocation2 + $0xb8] sm:$0xf] %vm1310, 0
      %4908 = vst.msk [vmem:[#allocation2 + $0xbc] sm:$0x1] %vm1313, 0
      %4909 = vst.msk [vmem:[#allocation2 + $0xc0] sm:$0xf] %vm1310, 0
      %4910 = vst.msk [vmem:[#allocation2 + $0xc4] sm:$0xf] %vm1310, 0
      %4911 = vst.msk [vmem:[#allocation2 + $0xc8] sm:$0x1] %vm1313, 0
      %4912 = vst.msk [vmem:[#allocation2 + $0xcc] sm:$0xf] %vm1310, 0
      %4913 = vst.msk [vmem:[#allocation2 + $0xd0] sm:$0xf] %vm1310, 0
      %4914 = vst.msk [vmem:[#allocation2 + $0xd4] sm:$0x1] %vm1313, 0
      %4915 = vrot.lane.b32.xlu0 %v1375, 120
      %v4916 = vpop.permute.xlu0 %4915
      %4917 = vrot.lane.b32.xlu0 %v1384, 120
      %v4918 = vpop.permute.xlu0 %4917
      %4919 = vrot.lane.b32.xlu0 %v1385, 120
      %v4920 = vpop.permute.xlu0 %4919
      %4921 = vrot.lane.b32.xlu0 %v1392, 120
      %v4922 = vpop.permute.xlu0 %4921
      %4923 = vrot.lane.b32.xlu0 %v1401, 120
      %v4924 = vpop.permute.xlu0 %4923
      %4925 = vrot.lane.b32.xlu0 %v1402, 120
      %v4926 = vpop.permute.xlu0 %4925
      %4927 = vrot.lane.b32.xlu0 %v1409, 120
      %v4928 = vpop.permute.xlu0 %4927
      %4929 = vrot.lane.b32.xlu0 %v1418, 120
      %v4930 = vpop.permute.xlu0 %4929
      %4931 = vrot.lane.b32.xlu0 %v1419, 120
      %v4932 = vpop.permute.xlu0 %4931
      %4933 = vrot.lane.b32.xlu0 %v1426, 120
      %v4934 = vpop.permute.xlu0 %4933
      %4935 = vrot.lane.b32.xlu0 %v1435, 120
      %v4936 = vpop.permute.xlu0 %4935
      %4937 = vrot.lane.b32.xlu0 %v1436, 120
      %v4938 = vpop.permute.xlu0 %4937
      %4939 = vrot.lane.b32.xlu0 %v1443, 120
      %v4940 = vpop.permute.xlu0 %4939
      %4941 = vrot.lane.b32.xlu0 %v1452, 120
      %v4942 = vpop.permute.xlu0 %4941
      %4943 = vrot.lane.b32.xlu0 %v1453, 120
      %v4944 = vpop.permute.xlu0 %4943
      %4945 = vrot.lane.b32.xlu0 %v1460, 120
      %v4946 = vpop.permute.xlu0 %4945
      %4947 = vrot.lane.b32.xlu0 %v1469, 120
      %v4948 = vpop.permute.xlu0 %4947
      %4949 = vrot.lane.b32.xlu0 %v1470, 120
      %v4950 = vpop.permute.xlu0 %4949
      %4951 = vrot.lane.b32.xlu0 %v1477, 120
      %v4952 = vpop.permute.xlu0 %4951
      %4953 = vrot.lane.b32.xlu0 %v1486, 120
      %v4954 = vpop.permute.xlu0 %4953
      %4955 = vrot.lane.b32.xlu0 %v1487, 120
      %v4956 = vpop.permute.xlu0 %4955
      %4957 = vrot.lane.b32.xlu0 %v1494, 120
      %v4958 = vpop.permute.xlu0 %4957
      %4959 = vrot.lane.b32.xlu0 %v1503, 120
      %v4960 = vpop.permute.xlu0 %4959
      %4961 = vrot.lane.b32.xlu0 %v1504, 120
      %v4962 = vpop.permute.xlu0 %4961
      %4963 = vrot.lane.b32.xlu0 %v1511, 120
      %v4964 = vpop.permute.xlu0 %4963
      %4965 = vrot.lane.b32.xlu0 %v1520, 120
      %v4966 = vpop.permute.xlu0 %4965
      %4967 = vrot.lane.b32.xlu0 %v1521, 120
      %v4968 = vpop.permute.xlu0 %4967
      %4969 = vrot.lane.b32.xlu0 %v1528, 120
      %v4970 = vpop.permute.xlu0 %4969
      %4971 = vrot.lane.b32.xlu0 %v1537, 120
      %v4972 = vpop.permute.xlu0 %4971
      %4973 = vrot.lane.b32.xlu0 %v1538, 120
      %v4974 = vpop.permute.xlu0 %4973
      %4975 = vrot.lane.b32.xlu0 %v1545, 120
      %v4976 = vpop.permute.xlu0 %4975
      %4977 = vrot.lane.b32.xlu0 %v1554, 120
      %v4978 = vpop.permute.xlu0 %4977
      %4979 = vrot.lane.b32.xlu0 %v1555, 120
      %v4980 = vpop.permute.xlu0 %4979
      %4981 = vrot.lane.b32.xlu0 %v1562, 120
      %v4982 = vpop.permute.xlu0 %4981
      %4983 = vrot.lane.b32.xlu0 %v1571, 120
      %v4984 = vpop.permute.xlu0 %4983
      %4985 = vrot.lane.b32.xlu0 %v1572, 120
      %v4986 = vpop.permute.xlu0 %4985
      %4987 = vrot.lane.b32.xlu0 %v1579, 120
      %v4988 = vpop.permute.xlu0 %4987
      %4989 = vrot.lane.b32.xlu0 %v1588, 120
      %v4990 = vpop.permute.xlu0 %4989
      %4991 = vrot.lane.b32.xlu0 %v1589, 120
      %v4992 = vpop.permute.xlu0 %4991
      %4993 = vrot.lane.b32.xlu0 %v1596, 120
      %v4994 = vpop.permute.xlu0 %4993
      %4995 = vrot.lane.b32.xlu0 %v1605, 120
      %v4996 = vpop.permute.xlu0 %4995
      %4997 = vrot.lane.b32.xlu0 %v1606, 120
      %v4998 = vpop.permute.xlu0 %4997
      %4999 = vrot.lane.b32.xlu0 %v1613, 120
      %v5000 = vpop.permute.xlu0 %4999
      %5001 = vrot.lane.b32.xlu0 %v1622, 120
      %v5002 = vpop.permute.xlu0 %5001
      %5003 = vrot.lane.b32.xlu0 %v1623, 120
      %v5004 = vpop.permute.xlu0 %5003
      %5005 = vrot.lane.b32.xlu0 %v1630, 120
      %v5006 = vpop.permute.xlu0 %5005
      %5007 = vrot.lane.b32.xlu0 %v1639, 120
      %v5008 = vpop.permute.xlu0 %5007
      %5009 = vrot.lane.b32.xlu0 %v1640, 120
      %v5010 = vpop.permute.xlu0 %5009
      %v5059 = vld [vmem:[%s1689] sm:$0xf]
      %v5060 = vsel %vm1692, %v4916, %v5059
      %5061 = vst [vmem:[%s1689] sm:$0xf] %v5060
      %5062 = vst.msk [vmem:[%s1689 + $0x4] sm:$0xf] %vm1310, %v4918
      %v5063 = vld [vmem:[%s1689 + $0x8] sm:$0x1]
      %v5064 = vsel %vm1698, %v4920, %v5063
      %5065 = vst [vmem:[%s1689 + $0x8] sm:$0x1] %v5064
      %v5066 = vld [vmem:[%s1689 + $0xc] sm:$0xf]
      %v5067 = vsel %vm1692, %v4922, %v5066
      %5068 = vst [vmem:[%s1689 + $0xc] sm:$0xf] %v5067
      %5069 = vst.msk [vmem:[%s1689 + $0x10] sm:$0xf] %vm1310, %v4924
      %v5070 = vld [vmem:[%s1689 + $0x14] sm:$0x1]
      %v5071 = vsel %vm1698, %v4926, %v5070
      %5072 = vst [vmem:[%s1689 + $0x14] sm:$0x1] %v5071
      %v5073 = vld [vmem:[%s1689 + $0x18] sm:$0xf]
      %v5074 = vsel %vm1692, %v4928, %v5073
      %5075 = vst [vmem:[%s1689 + $0x18] sm:$0xf] %v5074
      %5076 = vst.msk [vmem:[%s1689 + $0x1c] sm:$0xf] %vm1310, %v4930
      %v5077 = vld [vmem:[%s1689 + $0x20] sm:$0x1]
      %v5078 = vsel %vm1698, %v4932, %v5077
      %5079 = vst [vmem:[%s1689 + $0x20] sm:$0x1] %v5078
      %v5080 = vld [vmem:[%s1689 + $0x24] sm:$0xf]
      %v5081 = vsel %vm1692, %v4934, %v5080
      %5082 = vst [vmem:[%s1689 + $0x24] sm:$0xf] %v5081
      %5083 = vst.msk [vmem:[%s1689 + $0x28] sm:$0xf] %vm1310, %v4936
      %v5084 = vld [vmem:[%s1689 + $0x2c] sm:$0x1]
      %v5085 = vsel %vm1698, %v4938, %v5084
      %5086 = vst [vmem:[%s1689 + $0x2c] sm:$0x1] %v5085
      %v5087 = vld [vmem:[%s1689 + $0x30] sm:$0xf]
      %v5088 = vsel %vm1692, %v4940, %v5087
      %5089 = vst [vmem:[%s1689 + $0x30] sm:$0xf] %v5088
      %5090 = vst.msk [vmem:[%s1689 + $0x34] sm:$0xf] %vm1310, %v4942
      %v5091 = vld [vmem:[%s1689 + $0x38] sm:$0x1]
      %v5092 = vsel %vm1698, %v4944, %v5091
      %5093 = vst [vmem:[%s1689 + $0x38] sm:$0x1] %v5092
      %v5094 = vld [vmem:[%s1689 + $0x3c] sm:$0xf]
      %v5095 = vsel %vm1692, %v4946, %v5094
      %5096 = vst [vmem:[%s1689 + $0x3c] sm:$0xf] %v5095
      %5097 = vst.msk [vmem:[%s1689 + $0x40] sm:$0xf] %vm1310, %v4948
      %v5098 = vld [vmem:[%s1689 + $0x44] sm:$0x1]
      %v5099 = vsel %vm1698, %v4950, %v5098
      %5100 = vst [vmem:[%s1689 + $0x44] sm:$0x1] %v5099
      %v5101 = vld [vmem:[%s1689 + $0x48] sm:$0xf]
      %v5102 = vsel %vm1692, %v4952, %v5101
      %5103 = vst [vmem:[%s1689 + $0x48] sm:$0xf] %v5102
      %5104 = vst.msk [vmem:[%s1689 + $0x4c] sm:$0xf] %vm1310, %v4954
      %v5105 = vld [vmem:[%s1689 + $0x50] sm:$0x1]
      %v5106 = vsel %vm1698, %v4956, %v5105
      %5107 = vst [vmem:[%s1689 + $0x50] sm:$0x1] %v5106
      %v5108 = vld [vmem:[%s1689 + $0x54] sm:$0xf]
      %v5109 = vsel %vm1692, %v4958, %v5108
      %5110 = vst [vmem:[%s1689 + $0x54] sm:$0xf] %v5109
      %5111 = vst.msk [vmem:[%s1689 + $0x58] sm:$0xf] %vm1310, %v4960
      %v5112 = vld [vmem:[%s1689 + $0x5c] sm:$0x1]
      %v5113 = vsel %vm1698, %v4962, %v5112
      %5114 = vst [vmem:[%s1689 + $0x5c] sm:$0x1] %v5113
      %v5115 = vld [vmem:[%s1689 + $0x60] sm:$0xf]
      %v5116 = vsel %vm1692, %v4964, %v5115
      %5117 = vst [vmem:[%s1689 + $0x60] sm:$0xf] %v5116
      %5118 = vst.msk [vmem:[%s1689 + $0x64] sm:$0xf] %vm1310, %v4966
      %v5119 = vld [vmem:[%s1689 + $0x68] sm:$0x1]
      %v5120 = vsel %vm1698, %v4968, %v5119
      %5121 = vst [vmem:[%s1689 + $0x68] sm:$0x1] %v5120
      %v5122 = vld [vmem:[%s1689 + $0x6c] sm:$0xf]
      %v5123 = vsel %vm1692, %v4970, %v5122
      %5124 = vst [vmem:[%s1689 + $0x6c] sm:$0xf] %v5123
      %5125 = vst.msk [vmem:[%s1689 + $0x70] sm:$0xf] %vm1310, %v4972
      %v5126 = vld [vmem:[%s1689 + $0x74] sm:$0x1]
      %v5127 = vsel %vm1698, %v4974, %v5126
      %5128 = vst [vmem:[%s1689 + $0x74] sm:$0x1] %v5127
      %v5129 = vld [vmem:[%s1689 + $0x78] sm:$0xf]
      %v5130 = vsel %vm1692, %v4976, %v5129
      %5131 = vst [vmem:[%s1689 + $0x78] sm:$0xf] %v5130
      %5132 = vst.msk [vmem:[%s1689 + $0x7c] sm:$0xf] %vm1310, %v4978
      %v5133 = vld [vmem:[%s1689 + $0x80] sm:$0x1]
      %v5134 = vsel %vm1698, %v4980, %v5133
      %5135 = vst [vmem:[%s1689 + $0x80] sm:$0x1] %v5134
      %v5136 = vld [vmem:[%s1689 + $0x84] sm:$0xf]
      %v5137 = vsel %vm1692, %v4982, %v5136
      %5138 = vst [vmem:[%s1689 + $0x84] sm:$0xf] %v5137
      %5139 = vst.msk [vmem:[%s1689 + $0x88] sm:$0xf] %vm1310, %v4984
      %v5140 = vld [vmem:[%s1689 + $0x8c] sm:$0x1]
      %v5141 = vsel %vm1698, %v4986, %v5140
      %5142 = vst [vmem:[%s1689 + $0x8c] sm:$0x1] %v5141
      %v5143 = vld [vmem:[%s1689 + $0x90] sm:$0xf]
      %v5144 = vsel %vm1692, %v4988, %v5143
      %5145 = vst [vmem:[%s1689 + $0x90] sm:$0xf] %v5144
      %5146 = vst.msk [vmem:[%s1689 + $0x94] sm:$0xf] %vm1310, %v4990
      %v5147 = vld [vmem:[%s1689 + $0x98] sm:$0x1]
      %v5148 = vsel %vm1698, %v4992, %v5147
      %5149 = vst [vmem:[%s1689 + $0x98] sm:$0x1] %v5148
      %v5150 = vld [vmem:[%s1689 + $0x9c] sm:$0xf]
      %v5151 = vsel %vm1692, %v4994, %v5150
      %5152 = vst [vmem:[%s1689 + $0x9c] sm:$0xf] %v5151
      %5153 = vst.msk [vmem:[%s1689 + $0xa0] sm:$0xf] %vm1310, %v4996
      %v5154 = vld [vmem:[%s1689 + $0xa4] sm:$0x1]
      %v5155 = vsel %vm1698, %v4998, %v5154
      %5156 = vst [vmem:[%s1689 + $0xa4] sm:$0x1] %v5155
      %v5157 = vld [vmem:[%s1689 + $0xa8] sm:$0xf]
      %v5158 = vsel %vm1692, %v5000, %v5157
      %5159 = vst [vmem:[%s1689 + $0xa8] sm:$0xf] %v5158
      %5160 = vst.msk [vmem:[%s1689 + $0xac] sm:$0xf] %vm1310, %v5002
      %v5161 = vld [vmem:[%s1689 + $0xb0] sm:$0x1]
      %v5162 = vsel %vm1698, %v5004, %v5161
      %5163 = vst [vmem:[%s1689 + $0xb0] sm:$0x1] %v5162
      %v5164 = vld [vmem:[%s1689 + $0xb4] sm:$0xf]
      %v5165 = vsel %vm1692, %v5006, %v5164
      %5166 = vst [vmem:[%s1689 + $0xb4] sm:$0xf] %v5165
      %5167 = vst.msk [vmem:[%s1689 + $0xb8] sm:$0xf] %vm1310, %v5008
      %v5168 = vld [vmem:[%s1689 + $0xbc] sm:$0x1]
      %v5169 = vsel %vm1698, %v5010, %v5168
      %5170 = vst [vmem:[%s1689 + $0xbc] sm:$0x1] %v5169
      %v5171 = vld [vmem:[#allocation2] sm:$0xf]
      %v5172 = vld [vmem:[#allocation2 + $0x4] sm:$0xf]
      %v5173 = vld [vmem:[#allocation2 + $0x8] sm:$0x1]
      %v5174 = vld [vmem:[#allocation2 + $0xc] sm:$0xf]
      %v5175 = vld [vmem:[#allocation2 + $0x10] sm:$0xf]
      %v5176 = vld [vmem:[#allocation2 + $0x14] sm:$0x1]
      %v5177 = vld [vmem:[#allocation2 + $0x18] sm:$0xf]
      %v5178 = vld [vmem:[#allocation2 + $0x1c] sm:$0xf]
      %v5179 = vld [vmem:[#allocation2 + $0x20] sm:$0x1]
      %v5180 = vld [vmem:[#allocation2 + $0x24] sm:$0xf]
      %v5181 = vld [vmem:[#allocation2 + $0x28] sm:$0xf]
      %v5182 = vld [vmem:[#allocation2 + $0x2c] sm:$0x1]
      %v5183 = vld [vmem:[#allocation2 + $0x30] sm:$0xf]
      %v5184 = vld [vmem:[#allocation2 + $0x34] sm:$0xf]
      %v5185 = vld [vmem:[#allocation2 + $0x38] sm:$0x1]
      %v5186 = vld [vmem:[#allocation2 + $0x3c] sm:$0xf]
      %v5187 = vld [vmem:[#allocation2 + $0x40] sm:$0xf]
      %v5188 = vld [vmem:[#allocation2 + $0x44] sm:$0x1]
      %v5189 = vld [vmem:[#allocation2 + $0x48] sm:$0xf]
      %v5190 = vld [vmem:[#allocation2 + $0x4c] sm:$0xf]
      %v5191 = vld [vmem:[#allocation2 + $0x50] sm:$0x1]
      %v5192 = vld [vmem:[#allocation2 + $0x54] sm:$0xf]
      %v5193 = vld [vmem:[#allocation2 + $0x58] sm:$0xf]
      %v5194 = vld [vmem:[#allocation2 + $0x5c] sm:$0x1]
      %v5195 = vld [vmem:[#allocation2 + $0x60] sm:$0xf]
      %v5196 = vld [vmem:[#allocation2 + $0x64] sm:$0xf]
      %v5197 = vld [vmem:[#allocation2 + $0x68] sm:$0x1]
      %v5198 = vld [vmem:[#allocation2 + $0x6c] sm:$0xf]
      %v5199 = vld [vmem:[#allocation2 + $0x70] sm:$0xf]
      %v5200 = vld [vmem:[#allocation2 + $0x74] sm:$0x1]
      %v5201 = vld [vmem:[#allocation2 + $0x78] sm:$0xf]
      %v5202 = vld [vmem:[#allocation2 + $0x7c] sm:$0xf]
      %v5203 = vld [vmem:[#allocation2 + $0x80] sm:$0x1]
      %v5204 = vld [vmem:[#allocation2 + $0x84] sm:$0xf]
      %v5205 = vld [vmem:[#allocation2 + $0x88] sm:$0xf]
      %v5206 = vld [vmem:[#allocation2 + $0x8c] sm:$0x1]
      %v5207 = vld [vmem:[#allocation2 + $0x90] sm:$0xf]
      %v5208 = vld [vmem:[#allocation2 + $0x94] sm:$0xf]
      %v5209 = vld [vmem:[#allocation2 + $0x98] sm:$0x1]
      %v5210 = vld [vmem:[#allocation2 + $0x9c] sm:$0xf]
      %v5211 = vld [vmem:[#allocation2 + $0xa0] sm:$0xf]
      %v5212 = vld [vmem:[#allocation2 + $0xa4] sm:$0x1]
      %v5213 = vld [vmem:[#allocation2 + $0xa8] sm:$0xf]
      %v5214 = vld [vmem:[#allocation2 + $0xac] sm:$0xf]
      %v5215 = vld [vmem:[#allocation2 + $0xb0] sm:$0x1]
      %v5216 = vld [vmem:[#allocation2 + $0xb4] sm:$0xf]
      %v5217 = vld [vmem:[#allocation2 + $0xb8] sm:$0xf]
      %v5218 = vld [vmem:[#allocation2 + $0xbc] sm:$0x1]
      %v5219 = vld [vmem:[#allocation2 + $0xc0] sm:$0xf]
      %v5220 = vld [vmem:[#allocation2 + $0xc4] sm:$0xf]
      %v5221 = vld [vmem:[#allocation2 + $0xc8] sm:$0x1]
      %v5222 = vld [vmem:[#allocation2 + $0xcc] sm:$0xf]
      %v5223 = vld [vmem:[#allocation2 + $0xd0] sm:$0xf]
      %v5224 = vld [vmem:[#allocation2 + $0xd4] sm:$0x1]
      %v5257 = vunpack.c.l.b16 %v5171
      %v5258 = vunpack.c.l.b16 %v5172
      %v5259 = vunpack.c.l.b16 %v5174
      %v5260 = vunpack.c.l.b16 %v5175
      %v5261 = vunpack.c.l.b16 %v5177
      %v5262 = vunpack.c.l.b16 %v5178
      %v5263 = vunpack.c.l.b16 %v5180
      %v5264 = vunpack.c.l.b16 %v5181
      %v5265 = vunpack.c.l.b16 %v5183
      %v5266 = vunpack.c.l.b16 %v5184
      %v5267 = vunpack.c.l.b16 %v5186
      %v5268 = vunpack.c.l.b16 %v5187
      %v5269 = vunpack.c.l.b16 %v5189
      %v5270 = vunpack.c.l.b16 %v5190
      %v5271 = vunpack.c.l.b16 %v5192
      %v5272 = vunpack.c.l.b16 %v5193
      %v5273 = vunpack.c.l.b16 %v5195
      %v5274 = vunpack.c.l.b16 %v5196
      %v5275 = vunpack.c.l.b16 %v5198
      %v5276 = vunpack.c.l.b16 %v5199
      %v5277 = vunpack.c.l.b16 %v5201
      %v5278 = vunpack.c.l.b16 %v5202
      %v5279 = vunpack.c.l.b16 %v5204
      %v5280 = vunpack.c.l.b16 %v5205
      %v5281 = vunpack.c.l.b16 %v5207
      %v5282 = vunpack.c.l.b16 %v5208
      %v5283 = vunpack.c.l.b16 %v5210
      %v5284 = vunpack.c.l.b16 %v5211
      %v5285 = vunpack.c.l.b16 %v5213
      %v5286 = vunpack.c.l.b16 %v5214
      %v5287 = vunpack.c.l.b16 %v5216
      %v5288 = vunpack.c.l.b16 %v5217
      %v5289 = vpack.c.b16 %v5258, %v5257
      %v5290 = vpack.c.b16 %v5260, %v5259
      %v5291 = vpack.c.b16 %v5262, %v5261
      %v5292 = vpack.c.b16 %v5264, %v5263
      %v5293 = vpack.c.b16 %v5266, %v5265
      %v5294 = vpack.c.b16 %v5268, %v5267
      %v5295 = vpack.c.b16 %v5270, %v5269
      %v5296 = vpack.c.b16 %v5272, %v5271
      %v5297 = vpack.c.b16 %v5274, %v5273
      %v5298 = vpack.c.b16 %v5276, %v5275
      %v5299 = vpack.c.b16 %v5278, %v5277
      %v5300 = vpack.c.b16 %v5280, %v5279
      %v5301 = vpack.c.b16 %v5282, %v5281
      %v5302 = vpack.c.b16 %v5284, %v5283
      %v5303 = vpack.c.b16 %v5286, %v5285
      %v5304 = vpack.c.b16 %v5288, %v5287
      %v5321 = vunpack.c.l.b16 %v5173
      %v5322 = vunpack.c.l.b16 %v5176
      %v5323 = vunpack.c.l.b16 %v5179
      %v5324 = vunpack.c.l.b16 %v5182
      %v5325 = vunpack.c.l.b16 %v5185
      %v5326 = vunpack.c.l.b16 %v5188
      %v5327 = vunpack.c.l.b16 %v5191
      %v5328 = vunpack.c.l.b16 %v5194
      %v5329 = vunpack.c.l.b16 %v5197
      %v5330 = vunpack.c.l.b16 %v5200
      %v5331 = vunpack.c.l.b16 %v5203
      %v5332 = vunpack.c.l.b16 %v5206
      %v5333 = vunpack.c.l.b16 %v5209
      %v5334 = vunpack.c.l.b16 %v5212
      %v5335 = vunpack.c.l.b16 %v5215
      %v5336 = vunpack.c.l.b16 %v5218
      %v5337 = vpack.c.b16 %v5321, %v5321
      %v5338 = vpack.c.b16 %v5322, %v5322
      %v5339 = vpack.c.b16 %v5323, %v5323
      %v5340 = vpack.c.b16 %v5324, %v5324
      %v5341 = vpack.c.b16 %v5325, %v5325
      %v5342 = vpack.c.b16 %v5326, %v5326
      %v5343 = vpack.c.b16 %v5327, %v5327
      %v5344 = vpack.c.b16 %v5328, %v5328
      %v5345 = vpack.c.b16 %v5329, %v5329
      %v5346 = vpack.c.b16 %v5330, %v5330
      %v5347 = vpack.c.b16 %v5331, %v5331
      %v5348 = vpack.c.b16 %v5332, %v5332
      %v5349 = vpack.c.b16 %v5333, %v5333
      %v5350 = vpack.c.b16 %v5334, %v5334
      %v5351 = vpack.c.b16 %v5335, %v5335
      %v5352 = vpack.c.b16 %v5336, %v5336
      %v5354 = vshrl.u32 %v5289, 16
      %v5356 = vshll.u32 %v5289, 16
      %v5358 = vrot.slane %v5356, 1
      %v5359 = vor.u32 %v5354, %v5358
      %v5361 = vshll.u32 %v5337, 16
      %v5363 = vrot.slane %v5361, 1
      %v5364 = vsel %vm1989, %v5359, %v5363
      %v5366 = vshrl.u32 %v5290, 16
      %v5368 = vshll.u32 %v5290, 16
      %v5370 = vrot.slane %v5368, 1
      %v5371 = vor.u32 %v5366, %v5370
      %v5373 = vshll.u32 %v5338, 16
      %v5375 = vrot.slane %v5373, 1
      %v5376 = vsel %vm1989, %v5371, %v5375
      %v5378 = vshrl.u32 %v5291, 16
      %v5380 = vshll.u32 %v5291, 16
      %v5382 = vrot.slane %v5380, 1
      %v5383 = vor.u32 %v5378, %v5382
      %v5385 = vshll.u32 %v5339, 16
      %v5387 = vrot.slane %v5385, 1
      %v5388 = vsel %vm1989, %v5383, %v5387
      %v5390 = vshrl.u32 %v5292, 16
      %v5392 = vshll.u32 %v5292, 16
      %v5394 = vrot.slane %v5392, 1
      %v5395 = vor.u32 %v5390, %v5394
      %v5397 = vshll.u32 %v5340, 16
      %v5399 = vrot.slane %v5397, 1
      %v5400 = vsel %vm1989, %v5395, %v5399
      %v5402 = vshrl.u32 %v5293, 16
      %v5404 = vshll.u32 %v5293, 16
      %v5406 = vrot.slane %v5404, 1
      %v5407 = vor.u32 %v5402, %v5406
      %v5409 = vshll.u32 %v5341, 16
      %v5411 = vrot.slane %v5409, 1
      %v5412 = vsel %vm1989, %v5407, %v5411
      %v5414 = vshrl.u32 %v5294, 16
      %v5416 = vshll.u32 %v5294, 16
      %v5418 = vrot.slane %v5416, 1
      %v5419 = vor.u32 %v5414, %v5418
      %v5421 = vshll.u32 %v5342, 16
      %v5423 = vrot.slane %v5421, 1
      %v5424 = vsel %vm1989, %v5419, %v5423
      %v5426 = vshrl.u32 %v5295, 16
      %v5428 = vshll.u32 %v5295, 16
      %v5430 = vrot.slane %v5428, 1
      %v5431 = vor.u32 %v5426, %v5430
      %v5433 = vshll.u32 %v5343, 16
      %v5435 = vrot.slane %v5433, 1
      %v5436 = vsel %vm1989, %v5431, %v5435
      %v5438 = vshrl.u32 %v5296, 16
      %v5440 = vshll.u32 %v5296, 16
      %v5442 = vrot.slane %v5440, 1
      %v5443 = vor.u32 %v5438, %v5442
      %v5445 = vshll.u32 %v5344, 16
      %v5447 = vrot.slane %v5445, 1
      %v5448 = vsel %vm1989, %v5443, %v5447
      %v5450 = vshrl.u32 %v5297, 16
      %v5452 = vshll.u32 %v5297, 16
      %v5454 = vrot.slane %v5452, 1
      %v5455 = vor.u32 %v5450, %v5454
      %v5457 = vshll.u32 %v5345, 16
      %v5459 = vrot.slane %v5457, 1
      %v5460 = vsel %vm1989, %v5455, %v5459
      %v5462 = vshrl.u32 %v5298, 16
      %v5464 = vshll.u32 %v5298, 16
      %v5466 = vrot.slane %v5464, 1
      %v5467 = vor.u32 %v5462, %v5466
      %v5469 = vshll.u32 %v5346, 16
      %v5471 = vrot.slane %v5469, 1
      %v5472 = vsel %vm1989, %v5467, %v5471
      %v5474 = vshrl.u32 %v5299, 16
      %v5476 = vshll.u32 %v5299, 16
      %v5478 = vrot.slane %v5476, 1
      %v5479 = vor.u32 %v5474, %v5478
      %v5481 = vshll.u32 %v5347, 16
      %v5483 = vrot.slane %v5481, 1
      %v5484 = vsel %vm1989, %v5479, %v5483
      %v5486 = vshrl.u32 %v5300, 16
      %v5488 = vshll.u32 %v5300, 16
      %v5490 = vrot.slane %v5488, 1
      %v5491 = vor.u32 %v5486, %v5490
      %v5493 = vshll.u32 %v5348, 16
      %v5495 = vrot.slane %v5493, 1
      %v5496 = vsel %vm1989, %v5491, %v5495
      %v5498 = vshrl.u32 %v5301, 16
      %v5500 = vshll.u32 %v5301, 16
      %v5502 = vrot.slane %v5500, 1
      %v5503 = vor.u32 %v5498, %v5502
      %v5505 = vshll.u32 %v5349, 16
      %v5507 = vrot.slane %v5505, 1
      %v5508 = vsel %vm1989, %v5503, %v5507
      %v5510 = vshrl.u32 %v5302, 16
      %v5512 = vshll.u32 %v5302, 16
      %v5514 = vrot.slane %v5512, 1
      %v5515 = vor.u32 %v5510, %v5514
      %v5517 = vshll.u32 %v5350, 16
      %v5519 = vrot.slane %v5517, 1
      %v5520 = vsel %vm1989, %v5515, %v5519
      %v5522 = vshrl.u32 %v5303, 16
      %v5524 = vshll.u32 %v5303, 16
      %v5526 = vrot.slane %v5524, 1
      %v5527 = vor.u32 %v5522, %v5526
      %v5529 = vshll.u32 %v5351, 16
      %v5531 = vrot.slane %v5529, 1
      %v5532 = vsel %vm1989, %v5527, %v5531
      %v5534 = vshrl.u32 %v5304, 16
      %v5536 = vshll.u32 %v5304, 16
      %v5538 = vrot.slane %v5536, 1
      %v5539 = vor.u32 %v5534, %v5538
      %v5541 = vshll.u32 %v5352, 16
      %v5543 = vrot.slane %v5541, 1
      %v5544 = vsel %vm1989, %v5539, %v5543
      %5545 = vrot.lane.b32.xlu0 %v5364, 8
      %v5546 = vpop.permute.xlu0 %5545
      %5547 = vrot.lane.b32.xlu0 %v5376, 8
      %v5548 = vpop.permute.xlu0 %5547
      %5549 = vrot.lane.b32.xlu0 %v5388, 8
      %v5550 = vpop.permute.xlu0 %5549
      %5551 = vrot.lane.b32.xlu0 %v5400, 8
      %v5552 = vpop.permute.xlu0 %5551
      %5553 = vrot.lane.b32.xlu0 %v5412, 8
      %v5554 = vpop.permute.xlu0 %5553
      %5555 = vrot.lane.b32.xlu0 %v5424, 8
      %v5556 = vpop.permute.xlu0 %5555
      %5557 = vrot.lane.b32.xlu0 %v5436, 8
      %v5558 = vpop.permute.xlu0 %5557
      %5559 = vrot.lane.b32.xlu0 %v5448, 8
      %v5560 = vpop.permute.xlu0 %5559
      %5561 = vrot.lane.b32.xlu0 %v5460, 8
      %v5562 = vpop.permute.xlu0 %5561
      %5563 = vrot.lane.b32.xlu0 %v5472, 8
      %v5564 = vpop.permute.xlu0 %5563
      %5565 = vrot.lane.b32.xlu0 %v5484, 8
      %v5566 = vpop.permute.xlu0 %5565
      %5567 = vrot.lane.b32.xlu0 %v5496, 8
      %v5568 = vpop.permute.xlu0 %5567
      %5569 = vrot.lane.b32.xlu0 %v5508, 8
      %v5570 = vpop.permute.xlu0 %5569
      %5571 = vrot.lane.b32.xlu0 %v5520, 8
      %v5572 = vpop.permute.xlu0 %5571
      %5573 = vrot.lane.b32.xlu0 %v5532, 8
      %v5574 = vpop.permute.xlu0 %5573
      %5575 = vrot.lane.b32.xlu0 %v5544, 8
      %v5576 = vpop.permute.xlu0 %5575
      %v5577 = vrot.slane %v5289, 1
      %v5578 = vrot.slane %v5337, 1
      %v5579 = vsel %vm2214, %v5577, %v5578
      %v5580 = vrot.slane %v5290, 1
      %v5581 = vrot.slane %v5338, 1
      %v5582 = vsel %vm2214, %v5580, %v5581
      %v5583 = vrot.slane %v5291, 1
      %v5584 = vrot.slane %v5339, 1
      %v5585 = vsel %vm2214, %v5583, %v5584
      %v5586 = vrot.slane %v5292, 1
      %v5587 = vrot.slane %v5340, 1
      %v5588 = vsel %vm2214, %v5586, %v5587
      %v5589 = vrot.slane %v5293, 1
      %v5590 = vrot.slane %v5341, 1
      %v5591 = vsel %vm2214, %v5589, %v5590
      %v5592 = vrot.slane %v5294, 1
      %v5593 = vrot.slane %v5342, 1
      %v5594 = vsel %vm2214, %v5592, %v5593
      %v5595 = vrot.slane %v5295, 1
      %v5596 = vrot.slane %v5343, 1
      %v5597 = vsel %vm2214, %v5595, %v5596
      %v5598 = vrot.slane %v5296, 1
      %v5599 = vrot.slane %v5344, 1
      %v5600 = vsel %vm2214, %v5598, %v5599
      %v5601 = vrot.slane %v5297, 1
      %v5602 = vrot.slane %v5345, 1
      %v5603 = vsel %vm2214, %v5601, %v5602
      %v5604 = vrot.slane %v5298, 1
      %v5605 = vrot.slane %v5346, 1
      %v5606 = vsel %vm2214, %v5604, %v5605
      %v5607 = vrot.slane %v5299, 1
      %v5608 = vrot.slane %v5347, 1
      %v5609 = vsel %vm2214, %v5607, %v5608
      %v5610 = vrot.slane %v5300, 1
      %v5611 = vrot.slane %v5348, 1
      %v5612 = vsel %vm2214, %v5610, %v5611
      %v5613 = vrot.slane %v5301, 1
      %v5614 = vrot.slane %v5349, 1
      %v5615 = vsel %vm2214, %v5613, %v5614
      %v5616 = vrot.slane %v5302, 1
      %v5617 = vrot.slane %v5350, 1
      %v5618 = vsel %vm2214, %v5616, %v5617
      %v5619 = vrot.slane %v5303, 1
      %v5620 = vrot.slane %v5351, 1
      %v5621 = vsel %vm2214, %v5619, %v5620
      %v5622 = vrot.slane %v5304, 1
      %v5623 = vrot.slane %v5352, 1
      %v5624 = vsel %vm2214, %v5622, %v5623
      %5625 = vrot.lane.b32.xlu0 %v5579, 16
      %v5626 = vpop.permute.xlu0 %5625
      %5627 = vrot.lane.b32.xlu0 %v5582, 16
      %v5628 = vpop.permute.xlu0 %5627
      %5629 = vrot.lane.b32.xlu0 %v5585, 16
      %v5630 = vpop.permute.xlu0 %5629
      %5631 = vrot.lane.b32.xlu0 %v5588, 16
      %v5632 = vpop.permute.xlu0 %5631
      %5633 = vrot.lane.b32.xlu0 %v5591, 16
      %v5634 = vpop.permute.xlu0 %5633
      %5635 = vrot.lane.b32.xlu0 %v5594, 16
      %v5636 = vpop.permute.xlu0 %5635
      %5637 = vrot.lane.b32.xlu0 %v5597, 16
      %v5638 = vpop.permute.xlu0 %5637
      %5639 = vrot.lane.b32.xlu0 %v5600, 16
      %v5640 = vpop.permute.xlu0 %5639
      %5641 = vrot.lane.b32.xlu0 %v5603, 16
      %v5642 = vpop.permute.xlu0 %5641
      %5643 = vrot.lane.b32.xlu0 %v5606, 16
      %v5644 = vpop.permute.xlu0 %5643
      %5645 = vrot.lane.b32.xlu0 %v5609, 16
      %v5646 = vpop.permute.xlu0 %5645
      %5647 = vrot.lane.b32.xlu0 %v5612, 16
      %v5648 = vpop.permute.xlu0 %5647
      %5649 = vrot.lane.b32.xlu0 %v5615, 16
      %v5650 = vpop.permute.xlu0 %5649
      %5651 = vrot.lane.b32.xlu0 %v5618, 16
      %v5652 = vpop.permute.xlu0 %5651
      %5653 = vrot.lane.b32.xlu0 %v5621, 16
      %v5654 = vpop.permute.xlu0 %5653
      %5655 = vrot.lane.b32.xlu0 %v5624, 16
      %v5656 = vpop.permute.xlu0 %5655
      %v5659 = vunpack.c.l.b16 %v5219
      %v5660 = vunpack.c.l.b16 %v5220
      %v5661 = vpack.c.b16 %v5660, %v5659
      %5662 = vrot.lane.b32.xlu0 %v5290, 24
      %v5663 = vpop.permute.xlu0 %5662
      %5664 = vrot.lane.b32.xlu0 %v5291, 24
      %v5665 = vpop.permute.xlu0 %5664
      %5666 = vrot.lane.b32.xlu0 %v5292, 24
      %v5667 = vpop.permute.xlu0 %5666
      %5668 = vrot.lane.b32.xlu0 %v5293, 24
      %v5669 = vpop.permute.xlu0 %5668
      %5670 = vrot.lane.b32.xlu0 %v5294, 24
      %v5671 = vpop.permute.xlu0 %5670
      %5672 = vrot.lane.b32.xlu0 %v5295, 24
      %v5673 = vpop.permute.xlu0 %5672
      %5674 = vrot.lane.b32.xlu0 %v5296, 24
      %v5675 = vpop.permute.xlu0 %5674
      %5676 = vrot.lane.b32.xlu0 %v5297, 24
      %v5677 = vpop.permute.xlu0 %5676
      %5678 = vrot.lane.b32.xlu0 %v5298, 24
      %v5679 = vpop.permute.xlu0 %5678
      %5680 = vrot.lane.b32.xlu0 %v5299, 24
      %v5681 = vpop.permute.xlu0 %5680
      %5682 = vrot.lane.b32.xlu0 %v5300, 24
      %v5683 = vpop.permute.xlu0 %5682
      %5684 = vrot.lane.b32.xlu0 %v5301, 24
      %v5685 = vpop.permute.xlu0 %5684
      %5686 = vrot.lane.b32.xlu0 %v5302, 24
      %v5687 = vpop.permute.xlu0 %5686
      %5688 = vrot.lane.b32.xlu0 %v5303, 24
      %v5689 = vpop.permute.xlu0 %5688
      %5690 = vrot.lane.b32.xlu0 %v5304, 24
      %v5691 = vpop.permute.xlu0 %5690
      %5692 = vrot.lane.b32.xlu0 %v5661, 24
      %v5693 = vpop.permute.xlu0 %5692
      %v5695 = vunpack.c.l.b16 %v5221
      %v5696 = vpack.c.b16 %v5695, %v5695
      %v5698 = vshrl.u32 %v5661, 16
      %v5700 = vshll.u32 %v5661, 16
      %v5702 = vrot.slane %v5700, 1
      %v5703 = vor.u32 %v5698, %v5702
      %v5705 = vshll.u32 %v5696, 16
      %v5707 = vrot.slane %v5705, 1
      %v5708 = vsel %vm1989, %v5703, %v5707
      %5709 = vrot.lane.b32.xlu0 %v5376, 32
      %v5710 = vpop.permute.xlu0 %5709
      %5711 = vrot.lane.b32.xlu0 %v5388, 32
      %v5712 = vpop.permute.xlu0 %5711
      %5713 = vrot.lane.b32.xlu0 %v5400, 32
      %v5714 = vpop.permute.xlu0 %5713
      %5715 = vrot.lane.b32.xlu0 %v5412, 32
      %v5716 = vpop.permute.xlu0 %5715
      %5717 = vrot.lane.b32.xlu0 %v5424, 32
      %v5718 = vpop.permute.xlu0 %5717
      %5719 = vrot.lane.b32.xlu0 %v5436, 32
      %v5720 = vpop.permute.xlu0 %5719
      %5721 = vrot.lane.b32.xlu0 %v5448, 32
      %v5722 = vpop.permute.xlu0 %5721
      %5723 = vrot.lane.b32.xlu0 %v5460, 32
      %v5724 = vpop.permute.xlu0 %5723
      %5725 = vrot.lane.b32.xlu0 %v5472, 32
      %v5726 = vpop.permute.xlu0 %5725
      %5727 = vrot.lane.b32.xlu0 %v5484, 32
      %v5728 = vpop.permute.xlu0 %5727
      %5729 = vrot.lane.b32.xlu0 %v5496, 32
      %v5730 = vpop.permute.xlu0 %5729
      %5731 = vrot.lane.b32.xlu0 %v5508, 32
      %v5732 = vpop.permute.xlu0 %5731
      %5733 = vrot.lane.b32.xlu0 %v5520, 32
      %v5734 = vpop.permute.xlu0 %5733
      %5735 = vrot.lane.b32.xlu0 %v5532, 32
      %v5736 = vpop.permute.xlu0 %5735
      %5737 = vrot.lane.b32.xlu0 %v5544, 32
      %v5738 = vpop.permute.xlu0 %5737
      %5739 = vrot.lane.b32.xlu0 %v5708, 32
      %v5740 = vpop.permute.xlu0 %5739
      %v5741 = vrot.slane %v5661, 1
      %v5742 = vrot.slane %v5696, 1
      %v5743 = vsel %vm2214, %v5741, %v5742
      %5744 = vrot.lane.b32.xlu0 %v5582, 40
      %v5745 = vpop.permute.xlu0 %5744
      %5746 = vrot.lane.b32.xlu0 %v5585, 40
      %v5747 = vpop.permute.xlu0 %5746
      %5748 = vrot.lane.b32.xlu0 %v5588, 40
      %v5749 = vpop.permute.xlu0 %5748
      %5750 = vrot.lane.b32.xlu0 %v5591, 40
      %v5751 = vpop.permute.xlu0 %5750
      %5752 = vrot.lane.b32.xlu0 %v5594, 40
      %v5753 = vpop.permute.xlu0 %5752
      %5754 = vrot.lane.b32.xlu0 %v5597, 40
      %v5755 = vpop.permute.xlu0 %5754
      %5756 = vrot.lane.b32.xlu0 %v5600, 40
      %v5757 = vpop.permute.xlu0 %5756
      %5758 = vrot.lane.b32.xlu0 %v5603, 40
      %v5759 = vpop.permute.xlu0 %5758
      %5760 = vrot.lane.b32.xlu0 %v5606, 40
      %v5761 = vpop.permute.xlu0 %5760
      %5762 = vrot.lane.b32.xlu0 %v5609, 40
      %v5763 = vpop.permute.xlu0 %5762
      %5764 = vrot.lane.b32.xlu0 %v5612, 40
      %v5765 = vpop.permute.xlu0 %5764
      %5766 = vrot.lane.b32.xlu0 %v5615, 40
      %v5767 = vpop.permute.xlu0 %5766
      %5768 = vrot.lane.b32.xlu0 %v5618, 40
      %v5769 = vpop.permute.xlu0 %5768
      %5770 = vrot.lane.b32.xlu0 %v5621, 40
      %v5771 = vpop.permute.xlu0 %5770
      %5772 = vrot.lane.b32.xlu0 %v5624, 40
      %v5773 = vpop.permute.xlu0 %5772
      %5774 = vrot.lane.b32.xlu0 %v5743, 40
      %v5775 = vpop.permute.xlu0 %5774
      %v5778 = vunpack.c.l.b16 %v5222
      %v5779 = vunpack.c.l.b16 %v5223
      %v5780 = vpack.c.b16 %v5779, %v5778
      %5781 = vrot.lane.b32.xlu0 %v5291, 48
      %v5782 = vpop.permute.xlu0 %5781
      %5783 = vrot.lane.b32.xlu0 %v5292, 48
      %v5784 = vpop.permute.xlu0 %5783
      %5785 = vrot.lane.b32.xlu0 %v5293, 48
      %v5786 = vpop.permute.xlu0 %5785
      %5787 = vrot.lane.b32.xlu0 %v5294, 48
      %v5788 = vpop.permute.xlu0 %5787
      %5789 = vrot.lane.b32.xlu0 %v5295, 48
      %v5790 = vpop.permute.xlu0 %5789
      %5791 = vrot.lane.b32.xlu0 %v5296, 48
      %v5792 = vpop.permute.xlu0 %5791
      %5793 = vrot.lane.b32.xlu0 %v5297, 48
      %v5794 = vpop.permute.xlu0 %5793
      %5795 = vrot.lane.b32.xlu0 %v5298, 48
      %v5796 = vpop.permute.xlu0 %5795
      %5797 = vrot.lane.b32.xlu0 %v5299, 48
      %v5798 = vpop.permute.xlu0 %5797
      %5799 = vrot.lane.b32.xlu0 %v5300, 48
      %v5800 = vpop.permute.xlu0 %5799
      %5801 = vrot.lane.b32.xlu0 %v5301, 48
      %v5802 = vpop.permute.xlu0 %5801
      %5803 = vrot.lane.b32.xlu0 %v5302, 48
      %v5804 = vpop.permute.xlu0 %5803
      %5805 = vrot.lane.b32.xlu0 %v5303, 48
      %v5806 = vpop.permute.xlu0 %5805
      %5807 = vrot.lane.b32.xlu0 %v5304, 48
      %v5808 = vpop.permute.xlu0 %5807
      %5809 = vrot.lane.b32.xlu0 %v5661, 48
      %v5810 = vpop.permute.xlu0 %5809
      %5811 = vrot.lane.b32.xlu0 %v5780, 48
      %v5812 = vpop.permute.xlu0 %5811
      %v5814 = vunpack.c.l.b16 %v5224
      %v5815 = vpack.c.b16 %v5814, %v5814
      %v5817 = vshrl.u32 %v5780, 16
      %v5819 = vshll.u32 %v5780, 16
      %v5821 = vrot.slane %v5819, 1
      %v5822 = vor.u32 %v5817, %v5821
      %v5824 = vshll.u32 %v5815, 16
      %v5826 = vrot.slane %v5824, 1
      %v5827 = vsel %vm1989, %v5822, %v5826
      %5828 = vrot.lane.b32.xlu0 %v5388, 56
      %v5829 = vpop.permute.xlu0 %5828
      %5830 = vrot.lane.b32.xlu0 %v5400, 56
      %v5831 = vpop.permute.xlu0 %5830
      %5832 = vrot.lane.b32.xlu0 %v5412, 56
      %v5833 = vpop.permute.xlu0 %5832
      %5834 = vrot.lane.b32.xlu0 %v5424, 56
      %v5835 = vpop.permute.xlu0 %5834
      %5836 = vrot.lane.b32.xlu0 %v5436, 56
      %v5837 = vpop.permute.xlu0 %5836
      %5838 = vrot.lane.b32.xlu0 %v5448, 56
      %v5839 = vpop.permute.xlu0 %5838
      %5840 = vrot.lane.b32.xlu0 %v5460, 56
      %v5841 = vpop.permute.xlu0 %5840
      %5842 = vrot.lane.b32.xlu0 %v5472, 56
      %v5843 = vpop.permute.xlu0 %5842
      %5844 = vrot.lane.b32.xlu0 %v5484, 56
      %v5845 = vpop.permute.xlu0 %5844
      %5846 = vrot.lane.b32.xlu0 %v5496, 56
      %v5847 = vpop.permute.xlu0 %5846
      %5848 = vrot.lane.b32.xlu0 %v5508, 56
      %v5849 = vpop.permute.xlu0 %5848
      %5850 = vrot.lane.b32.xlu0 %v5520, 56
      %v5851 = vpop.permute.xlu0 %5850
      %5852 = vrot.lane.b32.xlu0 %v5532, 56
      %v5853 = vpop.permute.xlu0 %5852
      %5854 = vrot.lane.b32.xlu0 %v5544, 56
      %v5855 = vpop.permute.xlu0 %5854
      %5856 = vrot.lane.b32.xlu0 %v5708, 56
      %v5857 = vpop.permute.xlu0 %5856
      %5858 = vrot.lane.b32.xlu0 %v5827, 56
      %v5859 = vpop.permute.xlu0 %5858
      %v5860 = vrot.slane %v5780, 1
      %v5861 = vrot.slane %v5815, 1
      %v5862 = vsel %vm2214, %v5860, %v5861
      %5863 = vrot.lane.b32.xlu0 %v5585, 64
      %v5864 = vpop.permute.xlu0 %5863
      %5865 = vrot.lane.b32.xlu0 %v5588, 64
      %v5866 = vpop.permute.xlu0 %5865
      %5867 = vrot.lane.b32.xlu0 %v5591, 64
      %v5868 = vpop.permute.xlu0 %5867
      %5869 = vrot.lane.b32.xlu0 %v5594, 64
      %v5870 = vpop.permute.xlu0 %5869
      %5871 = vrot.lane.b32.xlu0 %v5597, 64
      %v5872 = vpop.permute.xlu0 %5871
      %5873 = vrot.lane.b32.xlu0 %v5600, 64
      %v5874 = vpop.permute.xlu0 %5873
      %5875 = vrot.lane.b32.xlu0 %v5603, 64
      %v5876 = vpop.permute.xlu0 %5875
      %5877 = vrot.lane.b32.xlu0 %v5606, 64
      %v5878 = vpop.permute.xlu0 %5877
      %5879 = vrot.lane.b32.xlu0 %v5609, 64
      %v5880 = vpop.permute.xlu0 %5879
      %5881 = vrot.lane.b32.xlu0 %v5612, 64
      %v5882 = vpop.permute.xlu0 %5881
      %5883 = vrot.lane.b32.xlu0 %v5615, 64
      %v5884 = vpop.permute.xlu0 %5883
      %5885 = vrot.lane.b32.xlu0 %v5618, 64
      %v5886 = vpop.permute.xlu0 %5885
      %5887 = vrot.lane.b32.xlu0 %v5621, 64
      %v5888 = vpop.permute.xlu0 %5887
      %5889 = vrot.lane.b32.xlu0 %v5624, 64
      %v5890 = vpop.permute.xlu0 %5889
      %5891 = vrot.lane.b32.xlu0 %v5743, 64
      %v5892 = vpop.permute.xlu0 %5891
      %5893 = vrot.lane.b32.xlu0 %v5862, 64
      %v5894 = vpop.permute.xlu0 %5893
      %v5896 = vsel %vm423, %v5289, %v5546
      %v5898 = vsel %vm423, %v5290, %v5548
      %v5900 = vsel %vm423, %v5291, %v5550
      %v5902 = vsel %vm423, %v5292, %v5552
      %v5904 = vsel %vm423, %v5293, %v5554
      %v5906 = vsel %vm423, %v5294, %v5556
      %v5908 = vsel %vm423, %v5295, %v5558
      %v5910 = vsel %vm423, %v5296, %v5560
      %v5912 = vsel %vm423, %v5297, %v5562
      %v5914 = vsel %vm423, %v5298, %v5564
      %v5916 = vsel %vm423, %v5299, %v5566
      %v5918 = vsel %vm423, %v5300, %v5568
      %v5920 = vsel %vm423, %v5301, %v5570
      %v5922 = vsel %vm423, %v5302, %v5572
      %v5924 = vsel %vm423, %v5303, %v5574
      %v5926 = vsel %vm423, %v5304, %v5576
      %v5928 = vsel %vm2565, %v5896, %v5626
      %v5930 = vsel %vm2565, %v5898, %v5628
      %v5932 = vsel %vm2565, %v5900, %v5630
      %v5934 = vsel %vm2565, %v5902, %v5632
      %v5936 = vsel %vm2565, %v5904, %v5634
      %v5938 = vsel %vm2565, %v5906, %v5636
      %v5940 = vsel %vm2565, %v5908, %v5638
      %v5942 = vsel %vm2565, %v5910, %v5640
      %v5944 = vsel %vm2565, %v5912, %v5642
      %v5946 = vsel %vm2565, %v5914, %v5644
      %v5948 = vsel %vm2565, %v5916, %v5646
      %v5950 = vsel %vm2565, %v5918, %v5648
      %v5952 = vsel %vm2565, %v5920, %v5650
      %v5954 = vsel %vm2565, %v5922, %v5652
      %v5956 = vsel %vm2565, %v5924, %v5654
      %v5958 = vsel %vm2565, %v5926, %v5656
      %v5960 = vsel %vm2598, %v5928, %v5663
      %v5962 = vsel %vm2598, %v5930, %v5665
      %v5964 = vsel %vm2598, %v5932, %v5667
      %v5966 = vsel %vm2598, %v5934, %v5669
      %v5968 = vsel %vm2598, %v5936, %v5671
      %v5970 = vsel %vm2598, %v5938, %v5673
      %v5972 = vsel %vm2598, %v5940, %v5675
      %v5974 = vsel %vm2598, %v5942, %v5677
      %v5976 = vsel %vm2598, %v5944, %v5679
      %v5978 = vsel %vm2598, %v5946, %v5681
      %v5980 = vsel %vm2598, %v5948, %v5683
      %v5982 = vsel %vm2598, %v5950, %v5685
      %v5984 = vsel %vm2598, %v5952, %v5687
      %v5986 = vsel %vm2598, %v5954, %v5689
      %v5988 = vsel %vm2598, %v5956, %v5691
      %v5990 = vsel %vm2598, %v5958, %v5693
      %v5992 = vsel %vm2631, %v5960, %v5710
      %v5994 = vsel %vm2631, %v5962, %v5712
      %v5996 = vsel %vm2631, %v5964, %v5714
      %v5998 = vsel %vm2631, %v5966, %v5716
      %v6000 = vsel %vm2631, %v5968, %v5718
      %v6002 = vsel %vm2631, %v5970, %v5720
      %v6004 = vsel %vm2631, %v5972, %v5722
      %v6006 = vsel %vm2631, %v5974, %v5724
      %v6008 = vsel %vm2631, %v5976, %v5726
      %v6010 = vsel %vm2631, %v5978, %v5728
      %v6012 = vsel %vm2631, %v5980, %v5730
      %v6014 = vsel %vm2631, %v5982, %v5732
      %v6016 = vsel %vm2631, %v5984, %v5734
      %v6018 = vsel %vm2631, %v5986, %v5736
      %v6020 = vsel %vm2631, %v5988, %v5738
      %v6022 = vsel %vm2631, %v5990, %v5740
      %v6024 = vsel %vm2664, %v5992, %v5745
      %v6026 = vsel %vm2664, %v5994, %v5747
      %v6028 = vsel %vm2664, %v5996, %v5749
      %v6030 = vsel %vm2664, %v5998, %v5751
      %v6032 = vsel %vm2664, %v6000, %v5753
      %v6034 = vsel %vm2664, %v6002, %v5755
      %v6036 = vsel %vm2664, %v6004, %v5757
      %v6038 = vsel %vm2664, %v6006, %v5759
      %v6040 = vsel %vm2664, %v6008, %v5761
      %v6042 = vsel %vm2664, %v6010, %v5763
      %v6044 = vsel %vm2664, %v6012, %v5765
      %v6046 = vsel %vm2664, %v6014, %v5767
      %v6048 = vsel %vm2664, %v6016, %v5769
      %v6050 = vsel %vm2664, %v6018, %v5771
      %v6052 = vsel %vm2664, %v6020, %v5773
      %v6054 = vsel %vm2664, %v6022, %v5775
      %v6056 = vsel %vm2697, %v6024, %v5782
      %v6058 = vsel %vm2697, %v6026, %v5784
      %v6060 = vsel %vm2697, %v6028, %v5786
      %v6062 = vsel %vm2697, %v6030, %v5788
      %v6064 = vsel %vm2697, %v6032, %v5790
      %v6066 = vsel %vm2697, %v6034, %v5792
      %v6068 = vsel %vm2697, %v6036, %v5794
      %v6070 = vsel %vm2697, %v6038, %v5796
      %v6072 = vsel %vm2697, %v6040, %v5798
      %v6074 = vsel %vm2697, %v6042, %v5800
      %v6076 = vsel %vm2697, %v6044, %v5802
      %v6078 = vsel %vm2697, %v6046, %v5804
      %v6080 = vsel %vm2697, %v6048, %v5806
      %v6082 = vsel %vm2697, %v6050, %v5808
      %v6084 = vsel %vm2697, %v6052, %v5810
      %v6086 = vsel %vm2697, %v6054, %v5812
      %v6088 = vsel %vm2730, %v6056, %v5829
      %v6090 = vsel %vm2730, %v6058, %v5831
      %v6092 = vsel %vm2730, %v6060, %v5833
      %v6094 = vsel %vm2730, %v6062, %v5835
      %v6096 = vsel %vm2730, %v6064, %v5837
      %v6098 = vsel %vm2730, %v6066, %v5839
      %v6100 = vsel %vm2730, %v6068, %v5841
      %v6102 = vsel %vm2730, %v6070, %v5843
      %v6104 = vsel %vm2730, %v6072, %v5845
      %v6106 = vsel %vm2730, %v6074, %v5847
      %v6108 = vsel %vm2730, %v6076, %v5849
      %v6110 = vsel %vm2730, %v6078, %v5851
      %v6112 = vsel %vm2730, %v6080, %v5853
      %v6114 = vsel %vm2730, %v6082, %v5855
      %v6116 = vsel %vm2730, %v6084, %v5857
      %v6118 = vsel %vm2730, %v6086, %v5859
      %v6120 = vsel %vm2763, %v6088, %v5864
      %v6122 = vsel %vm2763, %v6090, %v5866
      %v6124 = vsel %vm2763, %v6092, %v5868
      %v6126 = vsel %vm2763, %v6094, %v5870
      %v6128 = vsel %vm2763, %v6096, %v5872
      %v6130 = vsel %vm2763, %v6098, %v5874
      %v6132 = vsel %vm2763, %v6100, %v5876
      %v6134 = vsel %vm2763, %v6102, %v5878
      %v6136 = vsel %vm2763, %v6104, %v5880
      %v6138 = vsel %vm2763, %v6106, %v5882
      %v6140 = vsel %vm2763, %v6108, %v5884
      %v6142 = vsel %vm2763, %v6110, %v5886
      %v6144 = vsel %vm2763, %v6112, %v5888
      %v6146 = vsel %vm2763, %v6114, %v5890
      %v6148 = vsel %vm2763, %v6116, %v5892
      %v6150 = vsel %vm2763, %v6118, %v5894
      %v6151 = vld [vmem:[%s4] sm:$0xf]
      %v6152 = vld [vmem:[%s4 + $0x4] sm:$0xf]
      %v6153 = vld [vmem:[%s4 + $0x8] sm:$0xf]
      %v6154 = vld [vmem:[%s4 + $0xc] sm:$0xf]
      %v6155 = vld [vmem:[%s4 + $0x10] sm:$0xf]
      %v6156 = vld [vmem:[%s4 + $0x14] sm:$0xf]
      %v6157 = vld [vmem:[%s4 + $0x18] sm:$0xf]
      %v6158 = vld [vmem:[%s4 + $0x1c] sm:$0xf]
      %v6159 = vld [vmem:[%s4 + $0x20] sm:$0xf]
      %v6160 = vld [vmem:[%s5] sm:$0x1]
      %v6162 = vlaneseq
      %v6163 = vshrl.u32 %v6162, 7
      %v6164 = vsub.s32 0, %v6163
      %v6165 = vrot.slane %v6160, %v6164
      %v6176 = vunpack.c.l.b16 %v6151
      %v6177 = vunpack.c.l.b16 %v6152
      %v6178 = vunpack.c.l.b16 %v6153
      %v6179 = vunpack.c.l.b16 %v6154
      %v6180 = vunpack.c.l.b16 %v6155
      %v6181 = vunpack.c.l.b16 %v6156
      %v6182 = vunpack.c.l.b16 %v6157
      %v6183 = vunpack.c.l.b16 %v6158
      %v6184 = vunpack.c.l.b16 %v6159
      %v6185 = vpack.c.b16 %v6177, %v6176
      %v6186 = vpack.c.b16 %v6179, %v6178
      %v6187 = vpack.c.b16 %v6181, %v6180
      %v6188 = vpack.c.b16 %v6183, %v6182
      %v6189 = vpack.c.b16 %v6184, %v6184
      %v6194 = vsel %vm2839, %v6120, 0
      %v6196 = vsel %vm2839, %v6122, 0
      %v6198 = vsel %vm2839, %v6124, 0
      %v6200 = vsel %vm2839, %v6126, 0
      %v6202 = vsel %vm2839, %v6128, 0
      %v6204 = vsel %vm2839, %v6130, 0
      %v6206 = vsel %vm2839, %v6132, 0
      %v6208 = vsel %vm2839, %v6134, 0
      %v6210 = vsel %vm2839, %v6136, 0
      %v6212 = vsel %vm2839, %v6138, 0
      %v6214 = vsel %vm2839, %v6140, 0
      %v6216 = vsel %vm2839, %v6142, 0
      %v6218 = vsel %vm2839, %v6144, 0
      %v6220 = vsel %vm2839, %v6146, 0
      %v6222 = vsel %vm2839, %v6148, 0
      %v6224 = vsel %vm2839, %v6150, 0
      %v6227 = vsel %vm672, %v6189, 0
      %6229 = vmatprep.subr.bf16.mxu0 0
      %6230 = vmatpush1.bf16.msra.mxu0 0
      %6231 = vmatprep.subr.bf16.mxu0 0
      %6232 = vmatpush1.bf16.msra.mxu0 0
      %6233 = vmatprep.subr.bf16.mxu0 0
      %6234 = vmatpush1.bf16.msra.mxu0 0
      %6235 = vmatprep.subr.bf16.mxu0 0
      %6236 = vmatpush1.bf16.msra.mxu0 %v6227
      %6237 = vmatprep.subr.bf16.mxu0 0
      %6238 = vmatpush1.bf16.msra.mxu0 %v6188
      %6239 = vmatprep.subr.bf16.mxu0 0
      %6240 = vmatpush1.bf16.msra.mxu0 %v6187
      %6241 = vmatprep.subr.bf16.mxu0 0
      %6242 = vmatpush1.bf16.msra.mxu0 %v6186
      %6243 = vmatprep.subr.bf16.mxu0 0
      %6244 = vmatpush1.bf16.msra.mxu0 %v6185
      %6245 = vmatprep.subr.bf16.mxu0 0
      %6246 = vmatpush2.bf16.msra.mxu0 0
      %6247 = vmatprep.subr.bf16.mxu0 0
      %6248 = vmatpush2.bf16.msra.mxu0 0
      %6249 = vmatprep.subr.bf16.mxu0 0
      %6250 = vmatpush2.bf16.msra.mxu0 0
      %6251 = vmatprep.subr.bf16.mxu0 0
      %6252 = vmatpush2.bf16.msra.mxu0 0
      %6253 = vmatprep.subr.bf16.mxu0 0
      %6254 = vmatpush2.bf16.msra.mxu0 0
      %6255 = vmatprep.subr.bf16.mxu0 0
      %6256 = vmatpush2.bf16.msra.mxu0 0
      %6257 = vmatprep.subr.bf16.mxu0 0
      %6258 = vmatpush2.bf16.msra.mxu0 0
      %6259 = vmatprep.subr.bf16.mxu0 0
      %6260 = vmatpush2.bf16.msra.mxu0 0
      %6261 = vmatprep.mubr.bf16.mxu0 0
      %6262 = vmatmul.mubr.bf16.gmra.mxu0 %v6194
      %v6263 = vpop.f32.mrf.mxu0
      %v6264 = vadd.f32 %v6165, %v6263
      %v6265 = vpop.f32.mrf.mxu0
      %v6266 = vpop.f32.mrf.mxu0
      %v6267 = vadd.f32 %v6165, %v6266
      %v6268 = vpop.f32.mrf.mxu0
      %6269 = vmatprep.mubr.bf16.mxu0 0
      %6270 = vmatmul.mubr.bf16.gmra.mxu0 %v6196
      %v6271 = vpop.f32.mrf.mxu0
      %v6272 = vadd.f32 %v6165, %v6271
      %v6273 = vpop.f32.mrf.mxu0
      %v6274 = vpop.f32.mrf.mxu0
      %v6275 = vadd.f32 %v6165, %v6274
      %v6276 = vpop.f32.mrf.mxu0
      %6277 = vmatprep.mubr.bf16.mxu0 0
      %6278 = vmatmul.mubr.bf16.gmra.mxu0 %v6198
      %v6279 = vpop.f32.mrf.mxu0
      %v6280 = vadd.f32 %v6165, %v6279
      %v6281 = vpop.f32.mrf.mxu0
      %v6282 = vpop.f32.mrf.mxu0
      %v6283 = vadd.f32 %v6165, %v6282
      %v6284 = vpop.f32.mrf.mxu0
      %6285 = vmatprep.mubr.bf16.mxu0 0
      %6286 = vmatmul.mubr.bf16.gmra.mxu0 %v6200
      %v6287 = vpop.f32.mrf.mxu0
      %v6288 = vadd.f32 %v6165, %v6287
      %v6289 = vpop.f32.mrf.mxu0
      %v6290 = vpop.f32.mrf.mxu0
      %v6291 = vadd.f32 %v6165, %v6290
      %v6292 = vpop.f32.mrf.mxu0
      %6293 = vmatprep.mubr.bf16.mxu0 0
      %6294 = vmatmul.mubr.bf16.gmra.mxu0 %v6202
      %v6295 = vpop.f32.mrf.mxu0
      %v6296 = vadd.f32 %v6165, %v6295
      %v6297 = vpop.f32.mrf.mxu0
      %v6298 = vpop.f32.mrf.mxu0
      %v6299 = vadd.f32 %v6165, %v6298
      %v6300 = vpop.f32.mrf.mxu0
      %6301 = vmatprep.mubr.bf16.mxu0 0
      %6302 = vmatmul.mubr.bf16.gmra.mxu0 %v6204
      %v6303 = vpop.f32.mrf.mxu0
      %v6304 = vadd.f32 %v6165, %v6303
      %v6305 = vpop.f32.mrf.mxu0
      %v6306 = vpop.f32.mrf.mxu0
      %v6307 = vadd.f32 %v6165, %v6306
      %v6308 = vpop.f32.mrf.mxu0
      %6309 = vmatprep.mubr.bf16.mxu0 0
      %6310 = vmatmul.mubr.bf16.gmra.mxu0 %v6206
      %v6311 = vpop.f32.mrf.mxu0
      %v6312 = vadd.f32 %v6165, %v6311
      %v6313 = vpop.f32.mrf.mxu0
      %v6314 = vpop.f32.mrf.mxu0
      %v6315 = vadd.f32 %v6165, %v6314
      %v6316 = vpop.f32.mrf.mxu0
      %6317 = vmatprep.mubr.bf16.mxu0 0
      %6318 = vmatmul.mubr.bf16.gmra.mxu0 %v6208
      %v6319 = vpop.f32.mrf.mxu0
      %v6320 = vadd.f32 %v6165, %v6319
      %v6321 = vpop.f32.mrf.mxu0
      %v6322 = vpop.f32.mrf.mxu0
      %v6323 = vadd.f32 %v6165, %v6322
      %v6324 = vpop.f32.mrf.mxu0
      %6325 = vmatprep.mubr.bf16.mxu0 0
      %6326 = vmatmul.mubr.bf16.gmra.mxu0 %v6210
      %v6327 = vpop.f32.mrf.mxu0
      %v6328 = vadd.f32 %v6165, %v6327
      %v6329 = vpop.f32.mrf.mxu0
      %v6330 = vpop.f32.mrf.mxu0
      %v6331 = vadd.f32 %v6165, %v6330
      %v6332 = vpop.f32.mrf.mxu0
      %6333 = vmatprep.mubr.bf16.mxu0 0
      %6334 = vmatmul.mubr.bf16.gmra.mxu0 %v6212
      %v6335 = vpop.f32.mrf.mxu0
      %v6336 = vadd.f32 %v6165, %v6335
      %v6337 = vpop.f32.mrf.mxu0
      %v6338 = vpop.f32.mrf.mxu0
      %v6339 = vadd.f32 %v6165, %v6338
      %v6340 = vpop.f32.mrf.mxu0
      %6341 = vmatprep.mubr.bf16.mxu0 0
      %6342 = vmatmul.mubr.bf16.gmra.mxu0 %v6214
      %v6343 = vpop.f32.mrf.mxu0
      %v6344 = vadd.f32 %v6165, %v6343
      %v6345 = vpop.f32.mrf.mxu0
      %v6346 = vpop.f32.mrf.mxu0
      %v6347 = vadd.f32 %v6165, %v6346
      %v6348 = vpop.f32.mrf.mxu0
      %6349 = vmatprep.mubr.bf16.mxu0 0
      %6350 = vmatmul.mubr.bf16.gmra.mxu0 %v6216
      %v6351 = vpop.f32.mrf.mxu0
      %v6352 = vadd.f32 %v6165, %v6351
      %v6353 = vpop.f32.mrf.mxu0
      %v6354 = vpop.f32.mrf.mxu0
      %v6355 = vadd.f32 %v6165, %v6354
      %v6356 = vpop.f32.mrf.mxu0
      %6357 = vmatprep.mubr.bf16.mxu0 0
      %6358 = vmatmul.mubr.bf16.gmra.mxu0 %v6218
      %v6359 = vpop.f32.mrf.mxu0
      %v6360 = vadd.f32 %v6165, %v6359
      %v6361 = vpop.f32.mrf.mxu0
      %v6362 = vpop.f32.mrf.mxu0
      %v6363 = vadd.f32 %v6165, %v6362
      %v6364 = vpop.f32.mrf.mxu0
      %6365 = vmatprep.mubr.bf16.mxu0 0
      %6366 = vmatmul.mubr.bf16.gmra.mxu0 %v6220
      %v6367 = vpop.f32.mrf.mxu0
      %v6368 = vadd.f32 %v6165, %v6367
      %v6369 = vpop.f32.mrf.mxu0
      %v6370 = vpop.f32.mrf.mxu0
      %v6371 = vadd.f32 %v6165, %v6370
      %v6372 = vpop.f32.mrf.mxu0
      %6373 = vmatprep.mubr.bf16.mxu0 0
      %6374 = vmatmul.mubr.bf16.gmra.mxu0 %v6222
      %v6375 = vpop.f32.mrf.mxu0
      %v6376 = vadd.f32 %v6165, %v6375
      %v6377 = vpop.f32.mrf.mxu0
      %v6378 = vpop.f32.mrf.mxu0
      %v6379 = vadd.f32 %v6165, %v6378
      %v6380 = vpop.f32.mrf.mxu0
      %6381 = vmatprep.mubr.bf16.mxu0 0
      %6382 = vmatmul.mubr.bf16.gmra.mxu0 %v6224
      %v6383 = vpop.f32.mrf.mxu0
      %v6384 = vadd.f32 %v6165, %v6383
      %v6385 = vpop.f32.mrf.mxu0
      %v6386 = vpop.f32.mrf.mxu0
      %v6387 = vadd.f32 %v6165, %v6386
      %v6388 = vpop.f32.mrf.mxu0
      %6389 = vdwg.mxu0
      %v6390 = vsel %vm3934, %v4829, 0.0
      %v6391 = vsel %vm3934, %v4830, 0.0
      %v6392 = vadd.f32 %v6390, %v6391
      %v6393 = vsel %vm3934, %v4831, 0.0
      %v6394 = vadd.f32 %v6392, %v6393
      %v6395 = vsel %vm3934, %v4832, 0.0
      %v6396 = vadd.f32 %v6394, %v6395
      %v6397 = vsel %vm3934, %v4833, 0.0
      %v6398 = vadd.f32 %v6396, %v6397
      %v6399 = vsel %vm3934, %v4834, 0.0
      %v6400 = vadd.f32 %v6398, %v6399
      %v6401 = vsel %vm3934, %v4835, 0.0
      %v6402 = vadd.f32 %v6400, %v6401
      %v6403 = vsel %vm3934, %v4836, 0.0
      %v6404 = vadd.f32 %v6402, %v6403
      %v6405 = vsel %vm3934, %v4837, 0.0
      %v6406 = vadd.f32 %v6404, %v6405
      %v6407 = vsel %vm3934, %v4838, 0.0
      %v6408 = vadd.f32 %v6406, %v6407
      %v6409 = vsel %vm3934, %v4839, 0.0
      %v6410 = vadd.f32 %v6408, %v6409
      %v6411 = vsel %vm3934, %v4840, 0.0
      %v6412 = vadd.f32 %v6410, %v6411
      %v6413 = vsel %vm3934, %v4841, 0.0
      %v6414 = vadd.f32 %v6412, %v6413
      %v6415 = vsel %vm3934, %v4842, 0.0
      %v6416 = vadd.f32 %v6414, %v6415
      %v6417 = vsel %vm3934, %v4843, 0.0
      %v6418 = vadd.f32 %v6416, %v6417
      %v6419 = vsel %vm3934, %v4844, 0.0
      %v6420 = vadd.f32 %v6418, %v6419
      %v6421 = vsel %vm3934, %v4845, 0.0
      %v6422 = vadd.f32 %v6420, %v6421
      %v6423 = vsel %vm3934, %v4846, 0.0
      %v6424 = vadd.f32 %v6422, %v6423
      %v6425 = vsel %vm3934, %v4847, 0.0
      %v6426 = vadd.f32 %v6424, %v6425
      %v6427 = vsel %vm3934, %v4848, 0.0
      %v6428 = vadd.f32 %v6426, %v6427
      %v6429 = vsel %vm3934, %v4849, 0.0
      %v6430 = vadd.f32 %v6428, %v6429
      %v6431 = vsel %vm3934, %v4850, 0.0
      %v6432 = vadd.f32 %v6430, %v6431
      %v6433 = vsel %vm3934, %v4851, 0.0
      %v6434 = vadd.f32 %v6432, %v6433
      %v6435 = vsel %vm3934, %v4852, 0.0
      %v6436 = vadd.f32 %v6434, %v6435
      %v6437 = vsel %vm3934, %v4853, 0.0
      %v6438 = vadd.f32 %v6436, %v6437
      %v6439 = vsel %vm3934, %v4854, 0.0
      %v6440 = vadd.f32 %v6438, %v6439
      %v6441 = vsel %vm3934, %v4855, 0.0
      %v6442 = vadd.f32 %v6440, %v6441
      %v6443 = vsel %vm3934, %v4856, 0.0
      %v6444 = vadd.f32 %v6442, %v6443
      %v6445 = vsel %vm3934, %v4857, 0.0
      %v6446 = vadd.f32 %v6444, %v6445
      %v6447 = vsel %vm3934, %v4858, 0.0
      %v6448 = vadd.f32 %v6446, %v6447
      %v6449 = vsel %vm3934, %v4859, 0.0
      %v6450 = vadd.f32 %v6448, %v6449
      %v6451 = vsel %vm3934, %v4860, 0.0
      %v6452 = vadd.f32 %v6450, %v6451
      %v6453 = vrot.slane %v6452, 4
      %v6454 = vadd.f32 %v6452, %v6453
      %v6455 = vrot.slane %v6454, 2
      %v6456 = vadd.f32 %v6454, %v6455
      %v6457 = vrot.slane %v6456, 1
      %v6458 = vadd.f32 %v6456, %v6457
      %v6459 = vmul.f32 %v6458, %v1062
      %v6460 = vsel %vm423, %v6264, 0.0
      %v6461 = vsel %vm423, %v6267, 0.0
      %v6462 = vadd.f32 %v6460, %v6461
      %v6463 = vsel %vm423, %v6272, 0.0
      %v6464 = vadd.f32 %v6462, %v6463
      %v6465 = vsel %vm423, %v6275, 0.0
      %v6466 = vadd.f32 %v6464, %v6465
      %v6467 = vsel %vm423, %v6280, 0.0
      %v6468 = vadd.f32 %v6466, %v6467
      %v6469 = vsel %vm423, %v6283, 0.0
      %v6470 = vadd.f32 %v6468, %v6469
      %v6471 = vsel %vm423, %v6288, 0.0
      %v6472 = vadd.f32 %v6470, %v6471
      %v6473 = vsel %vm423, %v6291, 0.0
      %v6474 = vadd.f32 %v6472, %v6473
      %v6475 = vsel %vm423, %v6296, 0.0
      %v6476 = vadd.f32 %v6474, %v6475
      %v6477 = vsel %vm423, %v6299, 0.0
      %v6478 = vadd.f32 %v6476, %v6477
      %v6479 = vsel %vm423, %v6304, 0.0
      %v6480 = vadd.f32 %v6478, %v6479
      %v6481 = vsel %vm423, %v6307, 0.0
      %v6482 = vadd.f32 %v6480, %v6481
      %v6483 = vsel %vm423, %v6312, 0.0
      %v6484 = vadd.f32 %v6482, %v6483
      %v6485 = vsel %vm423, %v6315, 0.0
      %v6486 = vadd.f32 %v6484, %v6485
      %v6487 = vsel %vm423, %v6320, 0.0
      %v6488 = vadd.f32 %v6486, %v6487
      %v6489 = vsel %vm423, %v6323, 0.0
      %v6490 = vadd.f32 %v6488, %v6489
      %v6491 = vsel %vm423, %v6328, 0.0
      %v6492 = vadd.f32 %v6490, %v6491
      %v6493 = vsel %vm423, %v6331, 0.0
      %v6494 = vadd.f32 %v6492, %v6493
      %v6495 = vsel %vm423, %v6336, 0.0
      %v6496 = vadd.f32 %v6494, %v6495
      %v6497 = vsel %vm423, %v6339, 0.0
      %v6498 = vadd.f32 %v6496, %v6497
      %v6499 = vsel %vm423, %v6344, 0.0
      %v6500 = vadd.f32 %v6498, %v6499
      %v6501 = vsel %vm423, %v6347, 0.0
      %v6502 = vadd.f32 %v6500, %v6501
      %v6503 = vsel %vm423, %v6352, 0.0
      %v6504 = vadd.f32 %v6502, %v6503
      %v6505 = vsel %vm423, %v6355, 0.0
      %v6506 = vadd.f32 %v6504, %v6505
      %v6507 = vsel %vm423, %v6360, 0.0
      %v6508 = vadd.f32 %v6506, %v6507
      %v6509 = vsel %vm423, %v6363, 0.0
      %v6510 = vadd.f32 %v6508, %v6509
      %v6511 = vsel %vm423, %v6368, 0.0
      %v6512 = vadd.f32 %v6510, %v6511
      %v6513 = vsel %vm423, %v6371, 0.0
      %v6514 = vadd.f32 %v6512, %v6513
      %v6515 = vsel %vm423, %v6376, 0.0
      %v6516 = vadd.f32 %v6514, %v6515
      %v6517 = vsel %vm423, %v6379, 0.0
      %v6518 = vadd.f32 %v6516, %v6517
      %v6519 = vsel %vm423, %v6384, 0.0
      %v6520 = vadd.f32 %v6518, %v6519
      %v6521 = vsel %vm423, %v6387, 0.0
      %v6522 = vadd.f32 %v6520, %v6521
      %v6523 = vrot.slane %v6522, 4
      %v6524 = vadd.f32 %v6522, %v6523
      %v6525 = vrot.slane %v6524, 2
      %v6526 = vadd.f32 %v6524, %v6525
      %v6527 = vrot.slane %v6526, 1
      %v6528 = vadd.f32 %v6526, %v6527
      %v6529 = vmul.f32 %v6528, %v1062
      %v6530 = vsel %vm3934, %v6459, -inf
      %6531 = vmax.xlane.f32.xlu0 %v6530
      %v6532 = vpop.xlane.xlu0 %6531
      %v6533 = vsub.f32 %v6459, %v6532
      %v6534 = vmul.f32 %v6533, 1.442695
      %v6535 = vpow.pop %v6534
      %v6536 = vsel %vm423, %v6529, -inf
      %6537 = vmax.xlane.f32.xlu0 %v6536
      %v6538 = vpop.xlane.xlu0 %6537
      %v6539 = vsub.f32 %v6529, %v6538
      %v6540 = vmul.f32 %v6539, 1.442695
      %v6541 = vpow.pop %v6540
      %6543 = vrot.lane.b32.xlu0 %v6535, 120
      %v6544 = vpop.permute.xlu0 %6543
      %v6546 = vsel %vm423, %v6544, 0.0
      %6547 = vadd.xlane.f32.xlu0 %v6546
      %v6548 = vpop.xlane.xlu0 %6547
      %v6549 = vrcp.pop %v6548
      %v6550 = vmul.f32 %v6535, %v6549
      %v6551 = vsel %vm423, %v6541, 0.0
      %6552 = vadd.xlane.f32.xlu0 %v6551
      %v6553 = vpop.xlane.xlu0 %6552
      %v6554 = vrcp.pop %v6553
      %v6555 = vmul.f32 %v6541, %v6554
      %6557 = vrot.lane.b32.xlu0 %v6550, 120
      %v6558 = vpop.permute.xlu0 %6557
      %v6560 = vmul.f32 %v6264, %v6558
      %v6561 = vmul.f32 %v6267, %v6558
      %v6562 = vmul.f32 %v6272, %v6558
      %v6563 = vmul.f32 %v6275, %v6558
      %v6564 = vmul.f32 %v6280, %v6558
      %v6565 = vmul.f32 %v6283, %v6558
      %v6566 = vmul.f32 %v6288, %v6558
      %v6567 = vmul.f32 %v6291, %v6558
      %v6568 = vmul.f32 %v6296, %v6558
      %v6569 = vmul.f32 %v6299, %v6558
      %v6570 = vmul.f32 %v6304, %v6558
      %v6571 = vmul.f32 %v6307, %v6558
      %v6572 = vmul.f32 %v6312, %v6558
      %v6573 = vmul.f32 %v6315, %v6558
      %v6574 = vmul.f32 %v6320, %v6558
      %v6575 = vmul.f32 %v6323, %v6558
      %v6576 = vmul.f32 %v6328, %v6558
      %v6577 = vmul.f32 %v6331, %v6558
      %v6578 = vmul.f32 %v6336, %v6558
      %v6579 = vmul.f32 %v6339, %v6558
      %v6580 = vmul.f32 %v6344, %v6558
      %v6581 = vmul.f32 %v6347, %v6558
      %v6582 = vmul.f32 %v6352, %v6558
      %v6583 = vmul.f32 %v6355, %v6558
      %v6584 = vmul.f32 %v6360, %v6558
      %v6585 = vmul.f32 %v6363, %v6558
      %v6586 = vmul.f32 %v6368, %v6558
      %v6587 = vmul.f32 %v6371, %v6558
      %v6588 = vmul.f32 %v6376, %v6558
      %v6589 = vmul.f32 %v6379, %v6558
      %v6590 = vmul.f32 %v6384, %v6558
      %v6591 = vmul.f32 %v6387, %v6558
      %v6592 = vsel %vm423, %v6560, 0.0
      %6593 = vadd.xlane.f32.xlu0 %v6592
      %v6594 = vpop.xlane.xlu0 %6593
      %v6595 = vsel %vm423, %v6561, 0.0
      %6596 = vadd.xlane.f32.xlu0 %v6595
      %v6597 = vpop.xlane.xlu0 %6596
      %v6598 = vsel %vm423, %v6562, 0.0
      %6599 = vadd.xlane.f32.xlu0 %v6598
      %v6600 = vpop.xlane.xlu0 %6599
      %v6601 = vsel %vm423, %v6563, 0.0
      %6602 = vadd.xlane.f32.xlu0 %v6601
      %v6603 = vpop.xlane.xlu0 %6602
      %v6604 = vsel %vm423, %v6564, 0.0
      %6605 = vadd.xlane.f32.xlu0 %v6604
      %v6606 = vpop.xlane.xlu0 %6605
      %v6607 = vsel %vm423, %v6565, 0.0
      %6608 = vadd.xlane.f32.xlu0 %v6607
      %v6609 = vpop.xlane.xlu0 %6608
      %v6610 = vsel %vm423, %v6566, 0.0
      %6611 = vadd.xlane.f32.xlu0 %v6610
      %v6612 = vpop.xlane.xlu0 %6611
      %v6613 = vsel %vm423, %v6567, 0.0
      %6614 = vadd.xlane.f32.xlu0 %v6613
      %v6615 = vpop.xlane.xlu0 %6614
      %v6616 = vsel %vm423, %v6568, 0.0
      %6617 = vadd.xlane.f32.xlu0 %v6616
      %v6618 = vpop.xlane.xlu0 %6617
      %v6619 = vsel %vm423, %v6569, 0.0
      %6620 = vadd.xlane.f32.xlu0 %v6619
      %v6621 = vpop.xlane.xlu0 %6620
      %v6622 = vsel %vm423, %v6570, 0.0
      %6623 = vadd.xlane.f32.xlu0 %v6622
      %v6624 = vpop.xlane.xlu0 %6623
      %v6625 = vsel %vm423, %v6571, 0.0
      %6626 = vadd.xlane.f32.xlu0 %v6625
      %v6627 = vpop.xlane.xlu0 %6626
      %v6628 = vsel %vm423, %v6572, 0.0
      %6629 = vadd.xlane.f32.xlu0 %v6628
      %v6630 = vpop.xlane.xlu0 %6629
      %v6631 = vsel %vm423, %v6573, 0.0
      %6632 = vadd.xlane.f32.xlu0 %v6631
      %v6633 = vpop.xlane.xlu0 %6632
      %v6634 = vsel %vm423, %v6574, 0.0
      %6635 = vadd.xlane.f32.xlu0 %v6634
      %v6636 = vpop.xlane.xlu0 %6635
      %v6637 = vsel %vm423, %v6575, 0.0
      %6638 = vadd.xlane.f32.xlu0 %v6637
      %v6639 = vpop.xlane.xlu0 %6638
      %v6640 = vsel %vm423, %v6576, 0.0
      %6641 = vadd.xlane.f32.xlu0 %v6640
      %v6642 = vpop.xlane.xlu0 %6641
      %v6643 = vsel %vm423, %v6577, 0.0
      %6644 = vadd.xlane.f32.xlu0 %v6643
      %v6645 = vpop.xlane.xlu0 %6644
      %v6646 = vsel %vm423, %v6578, 0.0
      %6647 = vadd.xlane.f32.xlu0 %v6646
      %v6648 = vpop.xlane.xlu0 %6647
      %v6649 = vsel %vm423, %v6579, 0.0
      %6650 = vadd.xlane.f32.xlu0 %v6649
      %v6651 = vpop.xlane.xlu0 %6650
      %v6652 = vsel %vm423, %v6580, 0.0
      %6653 = vadd.xlane.f32.xlu0 %v6652
      %v6654 = vpop.xlane.xlu0 %6653
      %v6655 = vsel %vm423, %v6581, 0.0
      %6656 = vadd.xlane.f32.xlu0 %v6655
      %v6657 = vpop.xlane.xlu0 %6656
      %v6658 = vsel %vm423, %v6582, 0.0
      %6659 = vadd.xlane.f32.xlu0 %v6658
      %v6660 = vpop.xlane.xlu0 %6659
      %v6661 = vsel %vm423, %v6583, 0.0
      %6662 = vadd.xlane.f32.xlu0 %v6661
      %v6663 = vpop.xlane.xlu0 %6662
      %v6664 = vsel %vm423, %v6584, 0.0
      %6665 = vadd.xlane.f32.xlu0 %v6664
      %v6666 = vpop.xlane.xlu0 %6665
      %v6667 = vsel %vm423, %v6585, 0.0
      %6668 = vadd.xlane.f32.xlu0 %v6667
      %v6669 = vpop.xlane.xlu0 %6668
      %v6670 = vsel %vm423, %v6586, 0.0
      %6671 = vadd.xlane.f32.xlu0 %v6670
      %v6672 = vpop.xlane.xlu0 %6671
      %v6673 = vsel %vm423, %v6587, 0.0
      %6674 = vadd.xlane.f32.xlu0 %v6673
      %v6675 = vpop.xlane.xlu0 %6674
      %v6676 = vsel %vm423, %v6588, 0.0
      %6677 = vadd.xlane.f32.xlu0 %v6676
      %v6678 = vpop.xlane.xlu0 %6677
      %v6679 = vsel %vm423, %v6589, 0.0
      %6680 = vadd.xlane.f32.xlu0 %v6679
      %v6681 = vpop.xlane.xlu0 %6680
      %v6682 = vsel %vm423, %v6590, 0.0
      %6683 = vadd.xlane.f32.xlu0 %v6682
      %v6684 = vpop.xlane.xlu0 %6683
      %v6685 = vsel %vm423, %v6591, 0.0
      %6686 = vadd.xlane.f32.xlu0 %v6685
      %v6687 = vpop.xlane.xlu0 %6686
      %6689 = vrot.lane.b32.xlu0 %v6555, 8
      %v6690 = vpop.permute.xlu0 %6689
      %v6692 = vmul.f32 %v4829, %v6690
      %v6693 = vmul.f32 %v4830, %v6690
      %v6694 = vmul.f32 %v4831, %v6690
      %v6695 = vmul.f32 %v4832, %v6690
      %v6696 = vmul.f32 %v4833, %v6690
      %v6697 = vmul.f32 %v4834, %v6690
      %v6698 = vmul.f32 %v4835, %v6690
      %v6699 = vmul.f32 %v4836, %v6690
      %v6700 = vmul.f32 %v4837, %v6690
      %v6701 = vmul.f32 %v4838, %v6690
      %v6702 = vmul.f32 %v4839, %v6690
      %v6703 = vmul.f32 %v4840, %v6690
      %v6704 = vmul.f32 %v4841, %v6690
      %v6705 = vmul.f32 %v4842, %v6690
      %v6706 = vmul.f32 %v4843, %v6690
      %v6707 = vmul.f32 %v4844, %v6690
      %v6708 = vmul.f32 %v4845, %v6690
      %v6709 = vmul.f32 %v4846, %v6690
      %v6710 = vmul.f32 %v4847, %v6690
      %v6711 = vmul.f32 %v4848, %v6690
      %v6712 = vmul.f32 %v4849, %v6690
      %v6713 = vmul.f32 %v4850, %v6690
      %v6714 = vmul.f32 %v4851, %v6690
      %v6715 = vmul.f32 %v4852, %v6690
      %v6716 = vmul.f32 %v4853, %v6690
      %v6717 = vmul.f32 %v4854, %v6690
      %v6718 = vmul.f32 %v4855, %v6690
      %v6719 = vmul.f32 %v4856, %v6690
      %v6720 = vmul.f32 %v4857, %v6690
      %v6721 = vmul.f32 %v4858, %v6690
      %v6722 = vmul.f32 %v4859, %v6690
      %v6723 = vmul.f32 %v4860, %v6690
      %6756 = vrot.lane.b32.xlu0 %v6692, 120
      %v6757 = vpop.permute.xlu0 %6756
      %6758 = vrot.lane.b32.xlu0 %v6693, 120
      %v6759 = vpop.permute.xlu0 %6758
      %6760 = vrot.lane.b32.xlu0 %v6694, 120
      %v6761 = vpop.permute.xlu0 %6760
      %6762 = vrot.lane.b32.xlu0 %v6695, 120
      %v6763 = vpop.permute.xlu0 %6762
      %6764 = vrot.lane.b32.xlu0 %v6696, 120
      %v6765 = vpop.permute.xlu0 %6764
      %6766 = vrot.lane.b32.xlu0 %v6697, 120
      %v6767 = vpop.permute.xlu0 %6766
      %6768 = vrot.lane.b32.xlu0 %v6698, 120
      %v6769 = vpop.permute.xlu0 %6768
      %6770 = vrot.lane.b32.xlu0 %v6699, 120
      %v6771 = vpop.permute.xlu0 %6770
      %6772 = vrot.lane.b32.xlu0 %v6700, 120
      %v6773 = vpop.permute.xlu0 %6772
      %6774 = vrot.lane.b32.xlu0 %v6701, 120
      %v6775 = vpop.permute.xlu0 %6774
      %6776 = vrot.lane.b32.xlu0 %v6702, 120
      %v6777 = vpop.permute.xlu0 %6776
      %6778 = vrot.lane.b32.xlu0 %v6703, 120
      %v6779 = vpop.permute.xlu0 %6778
      %6780 = vrot.lane.b32.xlu0 %v6704, 120
      %v6781 = vpop.permute.xlu0 %6780
      %6782 = vrot.lane.b32.xlu0 %v6705, 120
      %v6783 = vpop.permute.xlu0 %6782
      %6784 = vrot.lane.b32.xlu0 %v6706, 120
      %v6785 = vpop.permute.xlu0 %6784
      %6786 = vrot.lane.b32.xlu0 %v6707, 120
      %v6787 = vpop.permute.xlu0 %6786
      %6788 = vrot.lane.b32.xlu0 %v6708, 120
      %v6789 = vpop.permute.xlu0 %6788
      %6790 = vrot.lane.b32.xlu0 %v6709, 120
      %v6791 = vpop.permute.xlu0 %6790
      %6792 = vrot.lane.b32.xlu0 %v6710, 120
      %v6793 = vpop.permute.xlu0 %6792
      %6794 = vrot.lane.b32.xlu0 %v6711, 120
      %v6795 = vpop.permute.xlu0 %6794
      %6796 = vrot.lane.b32.xlu0 %v6712, 120
      %v6797 = vpop.permute.xlu0 %6796
      %6798 = vrot.lane.b32.xlu0 %v6713, 120
      %v6799 = vpop.permute.xlu0 %6798
      %6800 = vrot.lane.b32.xlu0 %v6714, 120
      %v6801 = vpop.permute.xlu0 %6800
      %6802 = vrot.lane.b32.xlu0 %v6715, 120
      %v6803 = vpop.permute.xlu0 %6802
      %6804 = vrot.lane.b32.xlu0 %v6716, 120
      %v6805 = vpop.permute.xlu0 %6804
      %6806 = vrot.lane.b32.xlu0 %v6717, 120
      %v6807 = vpop.permute.xlu0 %6806
      %6808 = vrot.lane.b32.xlu0 %v6718, 120
      %v6809 = vpop.permute.xlu0 %6808
      %6810 = vrot.lane.b32.xlu0 %v6719, 120
      %v6811 = vpop.permute.xlu0 %6810
      %6812 = vrot.lane.b32.xlu0 %v6720, 120
      %v6813 = vpop.permute.xlu0 %6812
      %6814 = vrot.lane.b32.xlu0 %v6721, 120
      %v6815 = vpop.permute.xlu0 %6814
      %6816 = vrot.lane.b32.xlu0 %v6722, 120
      %v6817 = vpop.permute.xlu0 %6816
      %6818 = vrot.lane.b32.xlu0 %v6723, 120
      %v6819 = vpop.permute.xlu0 %6818
      %v6852 = vsel %vm423, %v6757, 0.0
      %6853 = vadd.xlane.f32.xlu0 %v6852
      %v6854 = vpop.xlane.xlu0 %6853
      %v6855 = vsel %vm423, %v6759, 0.0
      %6856 = vadd.xlane.f32.xlu0 %v6855
      %v6857 = vpop.xlane.xlu0 %6856
      %v6858 = vsel %vm423, %v6761, 0.0
      %6859 = vadd.xlane.f32.xlu0 %v6858
      %v6860 = vpop.xlane.xlu0 %6859
      %v6861 = vsel %vm423, %v6763, 0.0
      %6862 = vadd.xlane.f32.xlu0 %v6861
      %v6863 = vpop.xlane.xlu0 %6862
      %v6864 = vsel %vm423, %v6765, 0.0
      %6865 = vadd.xlane.f32.xlu0 %v6864
      %v6866 = vpop.xlane.xlu0 %6865
      %v6867 = vsel %vm423, %v6767, 0.0
      %6868 = vadd.xlane.f32.xlu0 %v6867
      %v6869 = vpop.xlane.xlu0 %6868
      %v6870 = vsel %vm423, %v6769, 0.0
      %6871 = vadd.xlane.f32.xlu0 %v6870
      %v6872 = vpop.xlane.xlu0 %6871
      %v6873 = vsel %vm423, %v6771, 0.0
      %6874 = vadd.xlane.f32.xlu0 %v6873
      %v6875 = vpop.xlane.xlu0 %6874
      %v6876 = vsel %vm423, %v6773, 0.0
      %6877 = vadd.xlane.f32.xlu0 %v6876
      %v6878 = vpop.xlane.xlu0 %6877
      %v6879 = vsel %vm423, %v6775, 0.0
      %6880 = vadd.xlane.f32.xlu0 %v6879
      %v6881 = vpop.xlane.xlu0 %6880
      %v6882 = vsel %vm423, %v6777, 0.0
      %6883 = vadd.xlane.f32.xlu0 %v6882
      %v6884 = vpop.xlane.xlu0 %6883
      %v6885 = vsel %vm423, %v6779, 0.0
      %6886 = vadd.xlane.f32.xlu0 %v6885
      %v6887 = vpop.xlane.xlu0 %6886
      %v6888 = vsel %vm423, %v6781, 0.0
      %6889 = vadd.xlane.f32.xlu0 %v6888
      %v6890 = vpop.xlane.xlu0 %6889
      %v6891 = vsel %vm423, %v6783, 0.0
      %6892 = vadd.xlane.f32.xlu0 %v6891
      %v6893 = vpop.xlane.xlu0 %6892
      %v6894 = vsel %vm423, %v6785, 0.0
      %6895 = vadd.xlane.f32.xlu0 %v6894
      %v6896 = vpop.xlane.xlu0 %6895
      %v6897 = vsel %vm423, %v6787, 0.0
      %6898 = vadd.xlane.f32.xlu0 %v6897
      %v6899 = vpop.xlane.xlu0 %6898
      %v6900 = vsel %vm423, %v6789, 0.0
      %6901 = vadd.xlane.f32.xlu0 %v6900
      %v6902 = vpop.xlane.xlu0 %6901
      %v6903 = vsel %vm423, %v6791, 0.0
      %6904 = vadd.xlane.f32.xlu0 %v6903
      %v6905 = vpop.xlane.xlu0 %6904
      %v6906 = vsel %vm423, %v6793, 0.0
      %6907 = vadd.xlane.f32.xlu0 %v6906
      %v6908 = vpop.xlane.xlu0 %6907
      %v6909 = vsel %vm423, %v6795, 0.0
      %6910 = vadd.xlane.f32.xlu0 %v6909
      %v6911 = vpop.xlane.xlu0 %6910
      %v6912 = vsel %vm423, %v6797, 0.0
      %6913 = vadd.xlane.f32.xlu0 %v6912
      %v6914 = vpop.xlane.xlu0 %6913
      %v6915 = vsel %vm423, %v6799, 0.0
      %6916 = vadd.xlane.f32.xlu0 %v6915
      %v6917 = vpop.xlane.xlu0 %6916
      %v6918 = vsel %vm423, %v6801, 0.0
      %6919 = vadd.xlane.f32.xlu0 %v6918
      %v6920 = vpop.xlane.xlu0 %6919
      %v6921 = vsel %vm423, %v6803, 0.0
      %6922 = vadd.xlane.f32.xlu0 %v6921
      %v6923 = vpop.xlane.xlu0 %6922
      %v6924 = vsel %vm423, %v6805, 0.0
      %6925 = vadd.xlane.f32.xlu0 %v6924
      %v6926 = vpop.xlane.xlu0 %6925
      %v6927 = vsel %vm423, %v6807, 0.0
      %6928 = vadd.xlane.f32.xlu0 %v6927
      %v6929 = vpop.xlane.xlu0 %6928
      %v6930 = vsel %vm423, %v6809, 0.0
      %6931 = vadd.xlane.f32.xlu0 %v6930
      %v6932 = vpop.xlane.xlu0 %6931
      %v6933 = vsel %vm423, %v6811, 0.0
      %6934 = vadd.xlane.f32.xlu0 %v6933
      %v6935 = vpop.xlane.xlu0 %6934
      %v6936 = vsel %vm423, %v6813, 0.0
      %6937 = vadd.xlane.f32.xlu0 %v6936
      %v6938 = vpop.xlane.xlu0 %6937
      %v6939 = vsel %vm423, %v6815, 0.0
      %6940 = vadd.xlane.f32.xlu0 %v6939
      %v6941 = vpop.xlane.xlu0 %6940
      %v6942 = vsel %vm423, %v6817, 0.0
      %6943 = vadd.xlane.f32.xlu0 %v6942
      %v6944 = vpop.xlane.xlu0 %6943
      %v6945 = vsel %vm423, %v6819, 0.0
      %6946 = vadd.xlane.f32.xlu0 %v6945
      %v6947 = vpop.xlane.xlu0 %6946
      %v6948 = vadd.f32 %v6594, %v6854
      %v6949 = vadd.f32 %v6597, %v6857
      %v6950 = vadd.f32 %v6600, %v6860
      %v6951 = vadd.f32 %v6603, %v6863
      %v6952 = vadd.f32 %v6606, %v6866
      %v6953 = vadd.f32 %v6609, %v6869
      %v6954 = vadd.f32 %v6612, %v6872
      %v6955 = vadd.f32 %v6615, %v6875
      %v6956 = vadd.f32 %v6618, %v6878
      %v6957 = vadd.f32 %v6621, %v6881
      %v6958 = vadd.f32 %v6624, %v6884
      %v6959 = vadd.f32 %v6627, %v6887
      %v6960 = vadd.f32 %v6630, %v6890
      %v6961 = vadd.f32 %v6633, %v6893
      %v6962 = vadd.f32 %v6636, %v6896
      %v6963 = vadd.f32 %v6639, %v6899
      %v6964 = vadd.f32 %v6642, %v6902
      %v6965 = vadd.f32 %v6645, %v6905
      %v6966 = vadd.f32 %v6648, %v6908
      %v6967 = vadd.f32 %v6651, %v6911
      %v6968 = vadd.f32 %v6654, %v6914
      %v6969 = vadd.f32 %v6657, %v6917
      %v6970 = vadd.f32 %v6660, %v6920
      %v6971 = vadd.f32 %v6663, %v6923
      %v6972 = vadd.f32 %v6666, %v6926
      %v6973 = vadd.f32 %v6669, %v6929
      %v6974 = vadd.f32 %v6672, %v6932
      %v6975 = vadd.f32 %v6675, %v6935
      %v6976 = vadd.f32 %v6678, %v6938
      %v6977 = vadd.f32 %v6681, %v6941
      %v6978 = vadd.f32 %v6684, %v6944
      %v6979 = vadd.f32 %v6687, %v6947
      %v6980 = vxor.u32 %v6948, 2147483648
      %v6981 = vxor.u32 %v6949, 2147483648
      %v6982 = vxor.u32 %v6950, 2147483648
      %v6983 = vxor.u32 %v6951, 2147483648
      %v6984 = vxor.u32 %v6952, 2147483648
      %v6985 = vxor.u32 %v6953, 2147483648
      %v6986 = vxor.u32 %v6954, 2147483648
      %v6987 = vxor.u32 %v6955, 2147483648
      %v6988 = vxor.u32 %v6956, 2147483648
      %v6989 = vxor.u32 %v6957, 2147483648
      %v6990 = vxor.u32 %v6958, 2147483648
      %v6991 = vxor.u32 %v6959, 2147483648
      %v6992 = vxor.u32 %v6960, 2147483648
      %v6993 = vxor.u32 %v6961, 2147483648
      %v6994 = vxor.u32 %v6962, 2147483648
      %v6995 = vxor.u32 %v6963, 2147483648
      %v6996 = vxor.u32 %v6964, 2147483648
      %v6997 = vxor.u32 %v6965, 2147483648
      %v6998 = vxor.u32 %v6966, 2147483648
      %v6999 = vxor.u32 %v6967, 2147483648
      %v7000 = vxor.u32 %v6968, 2147483648
      %v7001 = vxor.u32 %v6969, 2147483648
      %v7002 = vxor.u32 %v6970, 2147483648
      %v7003 = vxor.u32 %v6971, 2147483648
      %v7004 = vxor.u32 %v6972, 2147483648
      %v7005 = vxor.u32 %v6973, 2147483648
      %v7006 = vxor.u32 %v6974, 2147483648
      %v7007 = vxor.u32 %v6975, 2147483648
      %v7008 = vxor.u32 %v6976, 2147483648
      %v7009 = vxor.u32 %v6977, 2147483648
      %v7010 = vxor.u32 %v6978, 2147483648
      %v7011 = vxor.u32 %v6979, 2147483648
      %v7012 = vmul.f32 %v6980, 1.442695
      %v7013 = vpow.pop %v7012
      %v7014 = vmul.f32 %v6981, 1.442695
      %v7015 = vpow.pop %v7014
      %v7016 = vmul.f32 %v6982, 1.442695
      %v7017 = vpow.pop %v7016
      %v7018 = vmul.f32 %v6983, 1.442695
      %v7019 = vpow.pop %v7018
      %v7020 = vmul.f32 %v6984, 1.442695
      %v7021 = vpow.pop %v7020
      %v7022 = vmul.f32 %v6985, 1.442695
      %v7023 = vpow.pop %v7022
      %v7024 = vmul.f32 %v6986, 1.442695
      %v7025 = vpow.pop %v7024
      %v7026 = vmul.f32 %v6987, 1.442695
      %v7027 = vpow.pop %v7026
      %v7028 = vmul.f32 %v6988, 1.442695
      %v7029 = vpow.pop %v7028
      %v7030 = vmul.f32 %v6989, 1.442695
      %v7031 = vpow.pop %v7030
      %v7032 = vmul.f32 %v6990, 1.442695
      %v7033 = vpow.pop %v7032
      %v7034 = vmul.f32 %v6991, 1.442695
      %v7035 = vpow.pop %v7034
      %v7036 = vmul.f32 %v6992, 1.442695
      %v7037 = vpow.pop %v7036
      %v7038 = vmul.f32 %v6993, 1.442695
      %v7039 = vpow.pop %v7038
      %v7040 = vmul.f32 %v6994, 1.442695
      %v7041 = vpow.pop %v7040
      %v7042 = vmul.f32 %v6995, 1.442695
      %v7043 = vpow.pop %v7042
      %v7044 = vmul.f32 %v6996, 1.442695
      %v7045 = vpow.pop %v7044
      %v7046 = vmul.f32 %v6997, 1.442695
      %v7047 = vpow.pop %v7046
      %v7048 = vmul.f32 %v6998, 1.442695
      %v7049 = vpow.pop %v7048
      %v7050 = vmul.f32 %v6999, 1.442695
      %v7051 = vpow.pop %v7050
      %v7052 = vmul.f32 %v7000, 1.442695
      %v7053 = vpow.pop %v7052
      %v7054 = vmul.f32 %v7001, 1.442695
      %v7055 = vpow.pop %v7054
      %v7056 = vmul.f32 %v7002, 1.442695
      %v7057 = vpow.pop %v7056
      %v7058 = vmul.f32 %v7003, 1.442695
      %v7059 = vpow.pop %v7058
      %v7060 = vmul.f32 %v7004, 1.442695
      %v7061 = vpow.pop %v7060
      %v7062 = vmul.f32 %v7005, 1.442695
      %v7063 = vpow.pop %v7062
      %v7064 = vmul.f32 %v7006, 1.442695
      %v7065 = vpow.pop %v7064
      %v7066 = vmul.f32 %v7007, 1.442695
      %v7067 = vpow.pop %v7066
      %v7068 = vmul.f32 %v7008, 1.442695
      %v7069 = vpow.pop %v7068
      %v7070 = vmul.f32 %v7009, 1.442695
      %v7071 = vpow.pop %v7070
      %v7072 = vmul.f32 %v7010, 1.442695
      %v7073 = vpow.pop %v7072
      %v7074 = vmul.f32 %v7011, 1.442695
      %v7075 = vpow.pop %v7074
      %v7076 = vadd.f32 %v7013, 1.0
      %v7077 = vadd.f32 %v7015, 1.0
      %v7078 = vadd.f32 %v7017, 1.0
      %v7079 = vadd.f32 %v7019, 1.0
      %v7080 = vadd.f32 %v7021, 1.0
      %v7081 = vadd.f32 %v7023, 1.0
      %v7082 = vadd.f32 %v7025, 1.0
      %v7083 = vadd.f32 %v7027, 1.0
      %v7084 = vadd.f32 %v7029, 1.0
      %v7085 = vadd.f32 %v7031, 1.0
      %v7086 = vadd.f32 %v7033, 1.0
      %v7087 = vadd.f32 %v7035, 1.0
      %v7088 = vadd.f32 %v7037, 1.0
      %v7089 = vadd.f32 %v7039, 1.0
      %v7090 = vadd.f32 %v7041, 1.0
      %v7091 = vadd.f32 %v7043, 1.0
      %v7092 = vadd.f32 %v7045, 1.0
      %v7093 = vadd.f32 %v7047, 1.0
      %v7094 = vadd.f32 %v7049, 1.0
      %v7095 = vadd.f32 %v7051, 1.0
      %v7096 = vadd.f32 %v7053, 1.0
      %v7097 = vadd.f32 %v7055, 1.0
      %v7098 = vadd.f32 %v7057, 1.0
      %v7099 = vadd.f32 %v7059, 1.0
      %v7100 = vadd.f32 %v7061, 1.0
      %v7101 = vadd.f32 %v7063, 1.0
      %v7102 = vadd.f32 %v7065, 1.0
      %v7103 = vadd.f32 %v7067, 1.0
      %v7104 = vadd.f32 %v7069, 1.0
      %v7105 = vadd.f32 %v7071, 1.0
      %v7106 = vadd.f32 %v7073, 1.0
      %v7107 = vadd.f32 %v7075, 1.0
      %v7108 = vrcp.pop %v7076
      %v7109 = vmul.f32 1.0, %v7108
      %v7110 = vrcp.pop %v7077
      %v7111 = vmul.f32 1.0, %v7110
      %v7112 = vrcp.pop %v7078
      %v7113 = vmul.f32 1.0, %v7112
      %v7114 = vrcp.pop %v7079
      %v7115 = vmul.f32 1.0, %v7114
      %v7116 = vrcp.pop %v7080
      %v7117 = vmul.f32 1.0, %v7116
      %v7118 = vrcp.pop %v7081
      %v7119 = vmul.f32 1.0, %v7118
      %v7120 = vrcp.pop %v7082
      %v7121 = vmul.f32 1.0, %v7120
      %v7122 = vrcp.pop %v7083
      %v7123 = vmul.f32 1.0, %v7122
      %v7124 = vrcp.pop %v7084
      %v7125 = vmul.f32 1.0, %v7124
      %v7126 = vrcp.pop %v7085
      %v7127 = vmul.f32 1.0, %v7126
      %v7128 = vrcp.pop %v7086
      %v7129 = vmul.f32 1.0, %v7128
      %v7130 = vrcp.pop %v7087
      %v7131 = vmul.f32 1.0, %v7130
      %v7132 = vrcp.pop %v7088
      %v7133 = vmul.f32 1.0, %v7132
      %v7134 = vrcp.pop %v7089
      %v7135 = vmul.f32 1.0, %v7134
      %v7136 = vrcp.pop %v7090
      %v7137 = vmul.f32 1.0, %v7136
      %v7138 = vrcp.pop %v7091
      %v7139 = vmul.f32 1.0, %v7138
      %v7140 = vrcp.pop %v7092
      %v7141 = vmul.f32 1.0, %v7140
      %v7142 = vrcp.pop %v7093
      %v7143 = vmul.f32 1.0, %v7142
      %v7144 = vrcp.pop %v7094
      %v7145 = vmul.f32 1.0, %v7144
      %v7146 = vrcp.pop %v7095
      %v7147 = vmul.f32 1.0, %v7146
      %v7148 = vrcp.pop %v7096
      %v7149 = vmul.f32 1.0, %v7148
      %v7150 = vrcp.pop %v7097
      %v7151 = vmul.f32 1.0, %v7150
      %v7152 = vrcp.pop %v7098
      %v7153 = vmul.f32 1.0, %v7152
      %v7154 = vrcp.pop %v7099
      %v7155 = vmul.f32 1.0, %v7154
      %v7156 = vrcp.pop %v7100
      %v7157 = vmul.f32 1.0, %v7156
      %v7158 = vrcp.pop %v7101
      %v7159 = vmul.f32 1.0, %v7158
      %v7160 = vrcp.pop %v7102
      %v7161 = vmul.f32 1.0, %v7160
      %v7162 = vrcp.pop %v7103
      %v7163 = vmul.f32 1.0, %v7162
      %v7164 = vrcp.pop %v7104
      %v7165 = vmul.f32 1.0, %v7164
      %v7166 = vrcp.pop %v7105
      %v7167 = vmul.f32 1.0, %v7166
      %v7168 = vrcp.pop %v7106
      %v7169 = vmul.f32 1.0, %v7168
      %v7170 = vrcp.pop %v7107
      %v7171 = vmul.f32 1.0, %v7170
      %v7172 = vmul.f32 %v391, %v7109
      %v7173 = vmul.f32 %v392, %v7111
      %v7174 = vmul.f32 %v393, %v7113
      %v7175 = vmul.f32 %v394, %v7115
      %v7176 = vmul.f32 %v395, %v7117
      %v7177 = vmul.f32 %v396, %v7119
      %v7178 = vmul.f32 %v397, %v7121
      %v7179 = vmul.f32 %v398, %v7123
      %v7180 = vmul.f32 %v399, %v7125
      %v7181 = vmul.f32 %v400, %v7127
      %v7182 = vmul.f32 %v401, %v7129
      %v7183 = vmul.f32 %v402, %v7131
      %v7184 = vmul.f32 %v403, %v7133
      %v7185 = vmul.f32 %v404, %v7135
      %v7186 = vmul.f32 %v405, %v7137
      %v7187 = vmul.f32 %v406, %v7139
      %v7188 = vmul.f32 %v407, %v7141
      %v7189 = vmul.f32 %v408, %v7143
      %v7190 = vmul.f32 %v409, %v7145
      %v7191 = vmul.f32 %v410, %v7147
      %v7192 = vmul.f32 %v411, %v7149
      %v7193 = vmul.f32 %v412, %v7151
      %v7194 = vmul.f32 %v413, %v7153
      %v7195 = vmul.f32 %v414, %v7155
      %v7196 = vmul.f32 %v415, %v7157
      %v7197 = vmul.f32 %v416, %v7159
      %v7198 = vmul.f32 %v417, %v7161
      %v7199 = vmul.f32 %v418, %v7163
      %v7200 = vmul.f32 %v419, %v7165
      %v7201 = vmul.f32 %v420, %v7167
      %v7202 = vmul.f32 %v421, %v7169
      %v7203 = vmul.f32 %v422, %v7171
      %v7204 = vadd.f32 %v3710, %v7172
      %v7205 = vadd.f32 %v3711, %v7173
      %v7206 = vadd.f32 %v3712, %v7174
      %v7207 = vadd.f32 %v3713, %v7175
      %v7208 = vadd.f32 %v3714, %v7176
      %v7209 = vadd.f32 %v3715, %v7177
      %v7210 = vadd.f32 %v3716, %v7178
      %v7211 = vadd.f32 %v3717, %v7179
      %v7212 = vadd.f32 %v3718, %v7180
      %v7213 = vadd.f32 %v3719, %v7181
      %v7214 = vadd.f32 %v3720, %v7182
      %v7215 = vadd.f32 %v3721, %v7183
      %v7216 = vadd.f32 %v3722, %v7184
      %v7217 = vadd.f32 %v3723, %v7185
      %v7218 = vadd.f32 %v3724, %v7186
      %v7219 = vadd.f32 %v3725, %v7187
      %v7220 = vadd.f32 %v3726, %v7188
      %v7221 = vadd.f32 %v3727, %v7189
      %v7222 = vadd.f32 %v3728, %v7190
      %v7223 = vadd.f32 %v3729, %v7191
      %v7224 = vadd.f32 %v3730, %v7192
      %v7225 = vadd.f32 %v3731, %v7193
      %v7226 = vadd.f32 %v3732, %v7194
      %v7227 = vadd.f32 %v3733, %v7195
      %v7228 = vadd.f32 %v3734, %v7196
      %v7229 = vadd.f32 %v3735, %v7197
      %v7230 = vadd.f32 %v3736, %v7198
      %v7231 = vadd.f32 %v3737, %v7199
      %v7232 = vadd.f32 %v3738, %v7200
      %v7233 = vadd.f32 %v3739, %v7201
      %v7234 = vadd.f32 %v3740, %v7202
      %v7235 = vadd.f32 %v3741, %v7203
      %v7236 = vpack.c.bf16 %v7205, %v7204
      %v7237 = vpack.c.bf16 %v7207, %v7206
      %v7238 = vpack.c.bf16 %v7209, %v7208
      %v7239 = vpack.c.bf16 %v7211, %v7210
      %v7240 = vpack.c.bf16 %v7213, %v7212
      %v7241 = vpack.c.bf16 %v7215, %v7214
      %v7242 = vpack.c.bf16 %v7217, %v7216
      %v7243 = vpack.c.bf16 %v7219, %v7218
      %v7244 = vpack.c.bf16 %v7221, %v7220
      %v7245 = vpack.c.bf16 %v7223, %v7222
      %v7246 = vpack.c.bf16 %v7225, %v7224
      %v7247 = vpack.c.bf16 %v7227, %v7226
      %v7248 = vpack.c.bf16 %v7229, %v7228
      %v7249 = vpack.c.bf16 %v7231, %v7230
      %v7250 = vpack.c.bf16 %v7233, %v7232
      %v7251 = vpack.c.bf16 %v7235, %v7234
      %v7268 = vunpack.c.l.b16 %v7236
      %v7269 = vunpack.c.h.b16 %v7236
      %v7270 = vunpack.c.l.b16 %v7237
      %v7271 = vunpack.c.h.b16 %v7237
      %v7272 = vunpack.c.l.b16 %v7238
      %v7273 = vunpack.c.h.b16 %v7238
      %v7274 = vunpack.c.l.b16 %v7239
      %v7275 = vunpack.c.h.b16 %v7239
      %v7276 = vunpack.c.l.b16 %v7240
      %v7277 = vunpack.c.h.b16 %v7240
      %v7278 = vunpack.c.l.b16 %v7241
      %v7279 = vunpack.c.h.b16 %v7241
      %v7280 = vunpack.c.l.b16 %v7242
      %v7281 = vunpack.c.h.b16 %v7242
      %v7282 = vunpack.c.l.b16 %v7243
      %v7283 = vunpack.c.h.b16 %v7243
      %v7284 = vunpack.c.l.b16 %v7244
      %v7285 = vunpack.c.h.b16 %v7244
      %v7286 = vunpack.c.l.b16 %v7245
      %v7287 = vunpack.c.h.b16 %v7245
      %v7288 = vunpack.c.l.b16 %v7246
      %v7289 = vunpack.c.h.b16 %v7246
      %v7290 = vunpack.c.l.b16 %v7247
      %v7291 = vunpack.c.h.b16 %v7247
      %v7292 = vunpack.c.l.b16 %v7248
      %v7293 = vunpack.c.h.b16 %v7248
      %v7294 = vunpack.c.l.b16 %v7249
      %v7295 = vunpack.c.h.b16 %v7249
      %v7296 = vunpack.c.l.b16 %v7250
      %v7297 = vunpack.c.h.b16 %v7250
      %v7298 = vunpack.c.l.b16 %v7251
      %v7299 = vunpack.c.h.b16 %v7251
      %v7300 = vpack.c.b16 %v7268, %v7268
      %v7301 = vpack.c.b16 %v7269, %v7269
      %v7302 = vpack.c.b16 %v7270, %v7270
      %v7303 = vpack.c.b16 %v7271, %v7271
      %v7304 = vpack.c.b16 %v7272, %v7272
      %v7305 = vpack.c.b16 %v7273, %v7273
      %v7306 = vpack.c.b16 %v7274, %v7274
      %v7307 = vpack.c.b16 %v7275, %v7275
      %v7308 = vpack.c.b16 %v7276, %v7276
      %v7309 = vpack.c.b16 %v7277, %v7277
      %v7310 = vpack.c.b16 %v7278, %v7278
      %v7311 = vpack.c.b16 %v7279, %v7279
      %v7312 = vpack.c.b16 %v7280, %v7280
      %v7313 = vpack.c.b16 %v7281, %v7281
      %v7314 = vpack.c.b16 %v7282, %v7282
      %v7315 = vpack.c.b16 %v7283, %v7283
      %v7316 = vpack.c.b16 %v7284, %v7284
      %v7317 = vpack.c.b16 %v7285, %v7285
      %v7318 = vpack.c.b16 %v7286, %v7286
      %v7319 = vpack.c.b16 %v7287, %v7287
      %v7320 = vpack.c.b16 %v7288, %v7288
      %v7321 = vpack.c.b16 %v7289, %v7289
      %v7322 = vpack.c.b16 %v7290, %v7290
      %v7323 = vpack.c.b16 %v7291, %v7291
      %v7324 = vpack.c.b16 %v7292, %v7292
      %v7325 = vpack.c.b16 %v7293, %v7293
      %v7326 = vpack.c.b16 %v7294, %v7294
      %v7327 = vpack.c.b16 %v7295, %v7295
      %v7328 = vpack.c.b16 %v7296, %v7296
      %v7329 = vpack.c.b16 %v7297, %v7297
      %v7330 = vpack.c.b16 %v7298, %v7298
      %v7331 = vpack.c.b16 %v7299, %v7299
      %vm7364 = vcmask 126016
      %7365 = vst.msk [vmem:[%s325] sm:$0xf] %vm7364, %v7300
      %7366 = vst.msk [vmem:[%s325 + $0x4] sm:$0xf] %vm7364, %v7301
      %7367 = vst.msk [vmem:[%s325 + $0x8] sm:$0xf] %vm7364, %v7302
      %7368 = vst.msk [vmem:[%s325 + $0xc] sm:$0xf] %vm7364, %v7303
      %7369 = vst.msk [vmem:[%s325 + $0x10] sm:$0xf] %vm7364, %v7304
      %7370 = vst.msk [vmem:[%s325 + $0x14] sm:$0xf] %vm7364, %v7305
      %7371 = vst.msk [vmem:[%s325 + $0x18] sm:$0xf] %vm7364, %v7306
      %7372 = vst.msk [vmem:[%s325 + $0x1c] sm:$0xf] %vm7364, %v7307
      %7373 = vst.msk [vmem:[%s325 + $0x20] sm:$0xf] %vm7364, %v7308
      %7374 = vst.msk [vmem:[%s325 + $0x24] sm:$0xf] %vm7364, %v7309
      %7375 = vst.msk [vmem:[%s325 + $0x28] sm:$0xf] %vm7364, %v7310
      %7376 = vst.msk [vmem:[%s325 + $0x2c] sm:$0xf] %vm7364, %v7311
      %7377 = vst.msk [vmem:[%s325 + $0x30] sm:$0xf] %vm7364, %v7312
      %7378 = vst.msk [vmem:[%s325 + $0x34] sm:$0xf] %vm7364, %v7313
      %7379 = vst.msk [vmem:[%s325 + $0x38] sm:$0xf] %vm7364, %v7314
      %7380 = vst.msk [vmem:[%s325 + $0x3c] sm:$0xf] %vm7364, %v7315
      %7381 = vst.msk [vmem:[%s325 + $0x40] sm:$0xf] %vm7364, %v7316
      %7382 = vst.msk [vmem:[%s325 + $0x44] sm:$0xf] %vm7364, %v7317
      %7383 = vst.msk [vmem:[%s325 + $0x48] sm:$0xf] %vm7364, %v7318
      %7384 = vst.msk [vmem:[%s325 + $0x4c] sm:$0xf] %vm7364, %v7319
      %7385 = vst.msk [vmem:[%s325 + $0x50] sm:$0xf] %vm7364, %v7320
      %7386 = vst.msk [vmem:[%s325 + $0x54] sm:$0xf] %vm7364, %v7321
      %7387 = vst.msk [vmem:[%s325 + $0x58] sm:$0xf] %vm7364, %v7322
      %7388 = vst.msk [vmem:[%s325 + $0x5c] sm:$0xf] %vm7364, %v7323
      %7389 = vst.msk [vmem:[%s325 + $0x60] sm:$0xf] %vm7364, %v7324
      %7390 = vst.msk [vmem:[%s325 + $0x64] sm:$0xf] %vm7364, %v7325
      %7391 = vst.msk [vmem:[%s325 + $0x68] sm:$0xf] %vm7364, %v7326
      %7392 = vst.msk [vmem:[%s325 + $0x6c] sm:$0xf] %vm7364, %v7327
      %7393 = vst.msk [vmem:[%s325 + $0x70] sm:$0xf] %vm7364, %v7328
      %7394 = vst.msk [vmem:[%s325 + $0x74] sm:$0xf] %vm7364, %v7329
      %7395 = vst.msk [vmem:[%s325 + $0x78] sm:$0xf] %vm7364, %v7330
      %7396 = vst.msk [vmem:[%s325 + $0x7c] sm:$0xf] %vm7364, %v7331
      %p7397 = scmp.lt.s32.totalorder %s19, 1
      %s7398 = scalar_select %p7397, %s19, 1
      %s7399 = smul.addr %s7398, 32
      %s7400 = smul.addr %s7399, 4
      %s7401 = scalar_lea.vmem %s8, %s7400
      // Predicated region
      $region53: #{_lambda_.6} parent=51 // pred_check
        %p7402 = pneg %p215
      $region54: #{_lambda_.6} parent=51 // pred_check_branch
        %7404 = sbr.rel (%p7402) target = $region56
      $region55: #{_lambda_.6} parent=51 // pred_region
        _
      $region56: #{_lambda_.6} parent=51 // pred_fallthru
        _
    $region52: #{_lambda_.6} parent=5 // pred_fallthru
      _
    %p7405 = scmp.le.s32.totalorder 2, %s14
    // Predicated region
    $region57: #{_lambda_.6} parent=5 // pred_check
      %p7406 = pneg %p7405
    $region58: #{_lambda_.6} parent=5 // pred_check_branch
      %7408 = sbr.rel (%p7406) target = $region60
    $region59: #{_lambda_.6} parent=5 // pred_region
      %s7409 = ssub.s32 %s14, 2
      // Predicated region
      $region61: #{_lambda_.6} parent=59 // pred_check
        %p7410 = pneg %p221
      $region62: #{_lambda_.6} parent=59 // pred_check_branch
        %7412 = sbr.rel (%p7410) target = $region64
      $region63: #{_lambda_.6} parent=59 // pred_region
        %p7413 = scmp.lt.s32.totalorder %s20, 1
        %s7414 = scalar_select %p7413, %s20, 1
        %s7415 = smul.addr %s7414, 32
        %s7416 = smul.addr %s7415, 4
        %s7417 = scalar_lea.vmem %s8, %s7416
      $region64: #{_lambda_.6} parent=59 // pred_fallthru
        _
    $region60: #{_lambda_.6} parent=5 // pred_fallthru
      _
  $region6: #{_lambda_.6} parent=0 // loop_footer
    %s18 = sadd.s32 1, %s14
  $region7: #{_lambda_.6} parent=0 // loop_footer_branch
    %13 = sbr.rel target = $region3
  $region8: #{_lambda_.6} parent=0 // loop_exit
    _

</llo_original>
